<compile_context>
chip_gen: v6e
topology: v6e:2x2x1
jax: 0.10.0
libtpu: 0.0.40
codegen_flags: <defaults>
</compile_context>

<pallas_src>
import math
from types import SimpleNamespace

import jax
import jax.numpy as jnp
from jax.experimental import pallas as pl
from jax.experimental.pallas import tpu as pltpu

_INV_SQRT2 = 0.7071067811865476


# ----------------------------- in-kernel math ------------------------------

def _erf(x):
    # Abramowitz & Stegun 7.1.26, |error| <= 1.5e-7 (exact-GELU accuracy in f32).
    p = 0.3275911
    a1, a2, a3, a4, a5 = (0.254829592, -0.284496736, 1.421413741,
                          -1.453152027, 1.061405429)
    ax = jnp.abs(x)
    t = 1.0 / (1.0 + p * ax)
    poly = ((((a5 * t + a4) * t + a3) * t + a2) * t + a1) * t
    y = 1.0 - poly * jnp.exp(-ax * ax)
    return jnp.where(x < 0.0, -y, y)


def _gelu_exact(x):
    # PyTorch nn.GELU() default (erf-based).
    return 0.5 * x * (1.0 + _erf(x * jnp.float32(_INV_SQRT2)))


# ------------------------------ fused kernel -------------------------------

def _make_fused_kernel(cfg, N):
    P = cfg.pred_len
    dsl = cfg.down_sampling_layers
    S = dsl + 1
    L = cfg.e_layers

    def dot(a, b):
        return jnp.dot(a, b, preferred_element_type=jnp.float32)

    def kernel(*refs):
        refs = list(refs)
        o_ref = refs.pop()          # single output ref (N, pred_len)
        it = iter(refs)

        x_ref = next(it)                                        # (N, T0)
        pool = [next(it) for _ in range(dsl)]                   # (T_i, T_{i+1})
        shifts = [(next(it), next(it)) for _ in range(S)]       # (T_i, T_i) x2
        w_rep = [next(it) for _ in range(3)]                    # (N*D, N)
        blocks = []
        for _ in range(L):
            resamp = [tuple(next(it) for _ in range(4)) for _ in range(dsl)]
            ocross = tuple(next(it) for _ in range(4))
            blocks.append((resamp, ocross))
        sj_ref = next(it)                                       # (N, N*D)
        predict = [(next(it), next(it)) for _ in range(S)]      # (T_i, P), (1, P)

        # ---- __multi_scale_process_inputs: AvgPool1d as a matmul on the time axis.
        x0 = x_ref[...]
        xs = [x0]
        for i in range(dsl):
            xs.append(dot(xs[-1], pool[i][...]))                # (N, T_{i+1})

        # ---- DataEmbedding_wo_pos: circular Conv1d(1, D, k=3, bias=False).
        # enc_i rows = (series n major, d_model minor), cols = time.
        enc = []
        for i in range(S):
            xi = xs[i]
            mm_ref, mp_ref = shifts[i]
            xm = dot(xi, mm_ref[...])                           # x[t-1] (circular)
            xp = dot(xi, mp_ref[...])                           # x[t+1] (circular)
            e = (dot(w_rep[0][...], xm)
                 + dot(w_rep[1][...], xi)
                 + dot(w_rep[2][...], xp))                      # (N*D, T_i)
            enc.append(e)

        # ---- PastDecomposableMixing blocks (decomp 'none' => single component).
        for resamp, (bw1t_r, bb1_r, bw2t_r, bb2_r) in blocks:
            # bottom-up MultiScaleMixing (Linear -> GELU -> Linear over time).
            out_list = [enc[0]]
            a = enc[0]
            for i in range(dsl):
                w1_r, b1_r, w2_r, b2_r = resamp[i]
                h = _gelu_exact(dot(a, w1_r[...]) + b1_r[...])
                low = dot(h, w2_r[...]) + b2_r[...]             # (N*D, T_{i+1})
                a = enc[i + 1] + low
                out_list.append(a)
            # out_cross_layer over d_model, as block-diagonal matmuls (all N series
            # in one matmul per layer, no transposes / per-series loop).
            bw1t, bb1 = bw1t_r[...], bb1_r[...]
            bw2t, bb2 = bw2t_r[...], bb2_r[...]
            new_enc = []
            for x_in, m in zip(enc, out_list):
                h = _gelu_exact(dot(bw1t, m) + bb1)             # (N*d_ff, T_i)
                cc = dot(bw2t, h) + bb2                         # (N*D, T_i)
                new_enc.append(x_in + cc)
            enc = new_enc

        # ---- future_multi_mixing with proj (D->1) commuted BEFORE predict
        # (exact: combined bias folded in the wrapper), summed over scales.
        sj = sj_ref[...]
        dec = jnp.zeros((N, P), jnp.float32)
        for i in range(S):
            wp_r, bcomb_r = predict[i]
            z = dot(sj, enc[i])                                 # (N, T_i)
            dec = dec + dot(z, wp_r[...]) + bcomb_r[...]        # (N, P)
        o_ref[...] = dec

    return kernel


# ------------------------- operand packing / wrapper ------------------------

def _pack_operands(params, cfg, N):
    D = cfg.d_model
    dff = cfg.d_ff
    w = cfg.down_sampling_window
    dsl = cfg.down_sampling_layers
    S = dsl + 1
    T = [cfg.seq_len // w ** i for i in range(S)]
    eye_n = jnp.eye(N, dtype=jnp.float32)

    ops = []

    # AvgPool1d(window=w, stride=w) as a (T_i, T_{i+1}) matrix.
    for i in range(dsl):
        t_in, t_out = T[i], T[i + 1]
        pool = (jnp.arange(t_in)[:, None] // w ==
                jnp.arange(t_out)[None, :]).astype(jnp.float32) / float(w)
        ops.append(pool)

    # Circular time-shift matrices:  x @ M_minus -> x[t-1],  x @ M_plus -> x[t+1].
    for i in range(S):
        eye_t = jnp.eye(T[i], dtype=jnp.float32)
        ops.append(jnp.roll(eye_t, 1, axis=1))
        ops.append(jnp.roll(eye_t, -1, axis=1))

    # TokenEmbedding taps replicated over the N independent series: kron(I_N, w_k).
    ew = params["embed_w"]                                     # (3, D)
    for k in range(3):
        ops.append(jnp.kron(eye_n, ew[k].reshape(D, 1)))        # (N*D, N)

    # PDM blocks.
    for blk in params["pdm"]:
        for (w1, b1, w2, b2) in blk["resamp"]:
            ops += [w1, b1, w2, b2]
        w1, b1, w2, b2 = blk["out_cross"]                       # (D,dff),(1,dff),(dff,D),(1,D)
        ops.append(jnp.kron(eye_n, w1.T))                       # (N*dff, N*D)
        ops.append(jnp.tile(b1.reshape(-1), N).reshape(N * dff, 1))
        ops.append(jnp.kron(eye_n, w2.T))                       # (N*D, N*dff)
        ops.append(jnp.tile(b2.reshape(-1), N).reshape(N * D, 1))

    # projection_layer (d_model -> 1) folded across the N series.
    wj, bj = params["proj"]                                     # (D, 1), (1, 1)
    ops.append(jnp.kron(eye_n, wj.reshape(1, D)))               # (N, N*D)

    # predict_layers + exact combined bias for proj-before-predict:
    #   bias_comb = bp * sum_d(Wj) + bj.
    sum_wj = jnp.sum(wj)
    for i in range(S):
        wp, bp = params["predict"][i]                           # (T_i, P), (1, P)
        ops.append(wp)
        ops.append(bp * sum_wj + bj)

    return [jnp.asarray(o, jnp.float32) for o in ops]


def build_fused_forward(params, cfg, B, N):
    operands = _pack_operands(params, cfg, N)
    kernel = _make_fused_kernel(cfg, N)

    def _full_spec(arr):
        nd = arr.ndim
        return pl.BlockSpec(arr.shape, lambda b, _nd=nd: (0,) * _nd)

    in_specs = [pl.BlockSpec((None, N, cfg.seq_len), lambda b: (b, 0, 0))]
    in_specs += [_full_spec(a) for a in operands]

    call = pl.pallas_call(
        kernel,
        grid=(B,),
        in_specs=in_specs,
        out_specs=pl.BlockSpec((None, N, cfg.pred_len), lambda b: (b, 0, 0)),
        out_shape=jax.ShapeDtypeStruct((B, N, cfg.pred_len), jnp.float32),
        compiler_params=pltpu.CompilerParams(
            dimension_semantics=("parallel",)),
    )

    @jax.jit
    def forward(x_enc):
        # Equivalent of Model.forward(x_enc, None, None, None); output
        # (B, c_out, pred_len) with c_out == enc_in == N (channel independence).
        return call(x_enc, *operands)

    return forward


# ------------------------------- parameters --------------------------------

def _init_linear(key, fan_in, fan_out):
    k1, k2 = jax.random.split(key)
    bound = 1.0 / math.sqrt(fan_in)
    w = jax.random.uniform(k1, (fan_in, fan_out), jnp.float32, -bound, bound)
    b = jax.random.uniform(k2, (1, fan_out), jnp.float32, -bound, bound)
    return w, b


def init_params(key, cfg):
    keys = iter(jax.random.split(key, 64))
    params = {}
    # TokenEmbedding Conv1d(1, d_model, k=3, circular, bias=False); stored as
    # (3, d_model) taps (x[t-1], x[t], x[t+1]); ~kaiming fan_in=3 init.
    params["embed_w"] = jax.random.normal(next(keys), (3, cfg.d_model), jnp.float32) * (
        math.sqrt(2.0) / math.sqrt(3.0))

    pdm = []
    for _ in range(cfg.e_layers):
        blk = {"resamp": [], "out_cross": None}
        for i in range(cfg.down_sampling_layers):
            t_in = cfg.seq_len // cfg.down_sampling_window ** i
            t_out = cfg.seq_len // cfg.down_sampling_window ** (i + 1)
            w1, b1 = _init_linear(next(keys), t_in, t_out)
            w2, b2 = _init_linear(next(keys), t_out, t_out)
            blk["resamp"].append((w1, b1, w2, b2))
        w1, b1 = _init_linear(next(keys), cfg.d_model, cfg.d_ff)
        w2, b2 = _init_linear(next(keys), cfg.d_ff, cfg.d_model)
        blk["out_cross"] = (w1, b1, w2, b2)
        pdm.append(blk)
    params["pdm"] = pdm

    params["predict"] = []
    for i in range(cfg.down_sampling_layers + 1):
        t_in = cfg.seq_len // cfg.down_sampling_window ** i
        params["predict"].append(_init_linear(next(keys), t_in, cfg.pred_len))

    params["proj"] = _init_linear(next(keys), cfg.d_model, 1)
    return params


# ----------------------------------- main -----------------------------------

if __name__ == "__main__":
    cfg = SimpleNamespace(
        seq_len=16,
        label_len=8,
        pred_len=8,
        down_sampling_window=2,
        down_sampling_layers=1,
        down_sampling_method="avg",
        channel_independence=True,
        e_layers=2,
        enc_in=4,
        c_out=4,
        d_model=32,
        d_ff=32,
        dropout=0.0,
        embed="fixed",
        freq="h",
        use_norm=0,
        moving_avg=25,
        decomp_method="none",
        decomposition_variables=("original",),
    )
    # PyTorch's dec_out.reshape(B, c_out, pred_len) silently requires c_out == enc_in.
    assert cfg.c_out == cfg.enc_in

    key = jax.random.PRNGKey(0)
    k_params, k_x = jax.random.split(key)
    params = init_params(k_params, cfg)

    B, N = 2, cfg.enc_in
    # x_enc: (B, N=enc_in, T=seq_len); x_mark_enc / x_dec / x_mark_dec = None.
    x_enc = jax.random.normal(k_x, (B, N, cfg.seq_len), jnp.float32)

    forward = build_fused_forward(params, cfg, B, N)
    out = jax.block_until_ready(forward(x_enc))

    assert out.shape == (B, cfg.c_out, cfg.pred_len), out.shape
    assert bool(jnp.all(jnp.isfinite(out)))
    print("KERNEL_OK")
</pallas_src>

<mosaic_0001>
module attributes {stable_mosaic.version = 11 : i64} {
  func.func @kernel(%arg0: i32, %arg1: memref<1x4x16xf32, #tpu.memory_space<vmem>>, %arg2: memref<16x8xf32, #tpu.memory_space<vmem>>, %arg3: memref<16x16xf32, #tpu.memory_space<vmem>>, %arg4: memref<16x16xf32, #tpu.memory_space<vmem>>, %arg5: memref<8x8xf32, #tpu.memory_space<vmem>>, %arg6: memref<8x8xf32, #tpu.memory_space<vmem>>, %arg7: memref<128x4xf32, #tpu.memory_space<vmem>>, %arg8: memref<128x4xf32, #tpu.memory_space<vmem>>, %arg9: memref<128x4xf32, #tpu.memory_space<vmem>>, %arg10: memref<16x8xf32, #tpu.memory_space<vmem>>, %arg11: memref<1x8xf32, #tpu.memory_space<vmem>>, %arg12: memref<8x8xf32, #tpu.memory_space<vmem>>, %arg13: memref<1x8xf32, #tpu.memory_space<vmem>>, %arg14: memref<128x128xf32, #tpu.memory_space<vmem>>, %arg15: memref<128x1xf32, #tpu.memory_space<vmem>>, %arg16: memref<128x128xf32, #tpu.memory_space<vmem>>, %arg17: memref<128x1xf32, #tpu.memory_space<vmem>>, %arg18: memref<16x8xf32, #tpu.memory_space<vmem>>, %arg19: memref<1x8xf32, #tpu.memory_space<vmem>>, %arg20: memref<8x8xf32, #tpu.memory_space<vmem>>, %arg21: memref<1x8xf32, #tpu.memory_space<vmem>>, %arg22: memref<128x128xf32, #tpu.memory_space<vmem>>, %arg23: memref<128x1xf32, #tpu.memory_space<vmem>>, %arg24: memref<128x128xf32, #tpu.memory_space<vmem>>, %arg25: memref<128x1xf32, #tpu.memory_space<vmem>>, %arg26: memref<4x128xf32, #tpu.memory_space<vmem>>, %arg27: memref<16x8xf32, #tpu.memory_space<vmem>>, %arg28: memref<1x8xf32, #tpu.memory_space<vmem>>, %arg29: memref<8x8xf32, #tpu.memory_space<vmem>>, %arg30: memref<1x8xf32, #tpu.memory_space<vmem>>, %arg31: memref<1x4x8xf32, #tpu.memory_space<vmem>>) attributes {dimension_semantics = [#tpu.dimension_semantics<parallel>], iteration_bounds = array<i64: 2>, scalar_prefetch = 0 : i64, scratch_operands = 0 : i64, tpu.core_type = #tpu.core_type<tc>, window_params = [{transform_indices = @transform_0, window_bounds = array<i64: 1, 4, 16>}, {pipeline_mode = #tpu.pipeline_mode<synchronous>, transform_indices = @transform_1, window_bounds = array<i64: 16, 8>}, {pipeline_mode = #tpu.pipeline_mode<synchronous>, transform_indices = @transform_2, window_bounds = array<i64: 16, 16>}, {pipeline_mode = #tpu.pipeline_mode<synchronous>, transform_indices = @transform_3, window_bounds = array<i64: 16, 16>}, {pipeline_mode = #tpu.pipeline_mode<synchronous>, transform_indices = @transform_4, window_bounds = array<i64: 8, 8>}, {pipeline_mode = #tpu.pipeline_mode<synchronous>, transform_indices = @transform_5, window_bounds = array<i64: 8, 8>}, {pipeline_mode = #tpu.pipeline_mode<synchronous>, transform_indices = @transform_6, window_bounds = array<i64: 128, 4>}, {pipeline_mode = #tpu.pipeline_mode<synchronous>, transform_indices = @transform_7, window_bounds = array<i64: 128, 4>}, {pipeline_mode = #tpu.pipeline_mode<synchronous>, transform_indices = @transform_8, window_bounds = array<i64: 128, 4>}, {pipeline_mode = #tpu.pipeline_mode<synchronous>, transform_indices = @transform_9, window_bounds = array<i64: 16, 8>}, {pipeline_mode = #tpu.pipeline_mode<synchronous>, transform_indices = @transform_10, window_bounds = array<i64: 1, 8>}, {pipeline_mode = #tpu.pipeline_mode<synchronous>, transform_indices = @transform_11, window_bounds = array<i64: 8, 8>}, {pipeline_mode = #tpu.pipeline_mode<synchronous>, transform_indices = @transform_12, window_bounds = array<i64: 1, 8>}, {pipeline_mode = #tpu.pipeline_mode<synchronous>, transform_indices = @transform_13, window_bounds = array<i64: 128, 128>}, {pipeline_mode = #tpu.pipeline_mode<synchronous>, transform_indices = @transform_14, window_bounds = array<i64: 128, 1>}, {pipeline_mode = #tpu.pipeline_mode<synchronous>, transform_indices = @transform_15, window_bounds = array<i64: 128, 128>}, {pipeline_mode = #tpu.pipeline_mode<synchronous>, transform_indices = @transform_16, window_bounds = array<i64: 128, 1>}, {pipeline_mode = #tpu.pipeline_mode<synchronous>, transform_indices = @transform_17, window_bounds = array<i64: 16, 8>}, {pipeline_mode = #tpu.pipeline_mode<synchronous>, transform_indices = @transform_18, window_bounds = array<i64: 1, 8>}, {pipeline_mode = #tpu.pipeline_mode<synchronous>, transform_indices = @transform_19, window_bounds = array<i64: 8, 8>}, {pipeline_mode = #tpu.pipeline_mode<synchronous>, transform_indices = @transform_20, window_bounds = array<i64: 1, 8>}, {pipeline_mode = #tpu.pipeline_mode<synchronous>, transform_indices = @transform_21, window_bounds = array<i64: 128, 128>}, {pipeline_mode = #tpu.pipeline_mode<synchronous>, transform_indices = @transform_22, window_bounds = array<i64: 128, 1>}, {pipeline_mode = #tpu.pipeline_mode<synchronous>, transform_indices = @transform_23, window_bounds = array<i64: 128, 128>}, {pipeline_mode = #tpu.pipeline_mode<synchronous>, transform_indices = @transform_24, window_bounds = array<i64: 128, 1>}, {pipeline_mode = #tpu.pipeline_mode<synchronous>, transform_indices = @transform_25, window_bounds = array<i64: 4, 128>}, {pipeline_mode = #tpu.pipeline_mode<synchronous>, transform_indices = @transform_26, window_bounds = array<i64: 16, 8>}, {pipeline_mode = #tpu.pipeline_mode<synchronous>, transform_indices = @transform_27, window_bounds = array<i64: 1, 8>}, {pipeline_mode = #tpu.pipeline_mode<synchronous>, transform_indices = @transform_28, window_bounds = array<i64: 8, 8>}, {pipeline_mode = #tpu.pipeline_mode<synchronous>, transform_indices = @transform_29, window_bounds = array<i64: 1, 8>}, {transform_indices = @transform_30, window_bounds = array<i64: 1, 4, 8>}]} {
    %c0 = arith.constant 0 : index
    %c0_0 = arith.constant 0 : index
    %c0_1 = arith.constant 0 : index
    %0 = vector.load %arg1[%c0, %c0_0, %c0_1] : memref<1x4x16xf32, #tpu.memory_space<vmem>>, vector<1x4x16xf32>
    %1 = vector.shape_cast %0 : vector<1x4x16xf32> to vector<4x16xf32>
    %c0_2 = arith.constant 0 : index
    %c0_3 = arith.constant 0 : index
    %2 = vector.load %arg2[%c0_2, %c0_3] : memref<16x8xf32, #tpu.memory_space<vmem>>, vector<16x8xf32>
    %cst = arith.constant dense<0.000000e+00> : vector<4x8xf32>
    %3 = tpu.matmul %1, %2, %cst {dimension_numbers = #tpu.dot_dimension_numbers<[1], [0], [0], [1], [0, 0, 1, 1], [], []>} : vector<4x16xf32>, vector<16x8xf32>, vector<4x8xf32> -> vector<4x8xf32>
    %c0_4 = arith.constant 0 : index
    %c0_5 = arith.constant 0 : index
    %4 = vector.load %arg3[%c0_4, %c0_5] : memref<16x16xf32, #tpu.memory_space<vmem>>, vector<16x16xf32>
    %cst_6 = arith.constant dense<0.000000e+00> : vector<4x16xf32>
    %5 = tpu.matmul %1, %4, %cst_6 {dimension_numbers = #tpu.dot_dimension_numbers<[1], [0], [0], [1], [0, 0, 1, 1], [], []>} : vector<4x16xf32>, vector<16x16xf32>, vector<4x16xf32> -> vector<4x16xf32>
    %c0_7 = arith.constant 0 : index
    %c0_8 = arith.constant 0 : index
    %6 = vector.load %arg4[%c0_7, %c0_8] : memref<16x16xf32, #tpu.memory_space<vmem>>, vector<16x16xf32>
    %cst_9 = arith.constant dense<0.000000e+00> : vector<4x16xf32>
    %7 = tpu.matmul %1, %6, %cst_9 {dimension_numbers = #tpu.dot_dimension_numbers<[1], [0], [0], [1], [0, 0, 1, 1], [], []>} : vector<4x16xf32>, vector<16x16xf32>, vector<4x16xf32> -> vector<4x16xf32>
    %c0_10 = arith.constant 0 : index
    %c0_11 = arith.constant 0 : index
    %8 = vector.load %arg7[%c0_10, %c0_11] : memref<128x4xf32, #tpu.memory_space<vmem>>, vector<128x4xf32>
    %cst_12 = arith.constant dense<0.000000e+00> : vector<128x16xf32>
    %9 = tpu.matmul %8, %5, %cst_12 {dimension_numbers = #tpu.dot_dimension_numbers<[1], [0], [0], [1], [0, 0, 1, 1], [], []>} : vector<128x4xf32>, vector<4x16xf32>, vector<128x16xf32> -> vector<128x16xf32>
    %c0_13 = arith.constant 0 : index
    %c0_14 = arith.constant 0 : index
    %10 = vector.load %arg8[%c0_13, %c0_14] : memref<128x4xf32, #tpu.memory_space<vmem>>, vector<128x4xf32>
    %cst_15 = arith.constant dense<0.000000e+00> : vector<128x16xf32>
    %11 = tpu.matmul %10, %1, %cst_15 {dimension_numbers = #tpu.dot_dimension_numbers<[1], [0], [0], [1], [0, 0, 1, 1], [], []>} : vector<128x4xf32>, vector<4x16xf32>, vector<128x16xf32> -> vector<128x16xf32>
    %12 = arith.addf %9, %11 : vector<128x16xf32>
    %c0_16 = arith.constant 0 : index
    %c0_17 = arith.constant 0 : index
    %13 = vector.load %arg9[%c0_16, %c0_17] : memref<128x4xf32, #tpu.memory_space<vmem>>, vector<128x4xf32>
    %cst_18 = arith.constant dense<0.000000e+00> : vector<128x16xf32>
    %14 = tpu.matmul %13, %7, %cst_18 {dimension_numbers = #tpu.dot_dimension_numbers<[1], [0], [0], [1], [0, 0, 1, 1], [], []>} : vector<128x4xf32>, vector<4x16xf32>, vector<128x16xf32> -> vector<128x16xf32>
    %15 = arith.addf %12, %14 : vector<128x16xf32>
    %c0_19 = arith.constant 0 : index
    %c0_20 = arith.constant 0 : index
    %16 = vector.load %arg5[%c0_19, %c0_20] : memref<8x8xf32, #tpu.memory_space<vmem>>, vector<8x8xf32>
    %cst_21 = arith.constant dense<0.000000e+00> : vector<4x8xf32>
    %17 = tpu.matmul %3, %16, %cst_21 {dimension_numbers = #tpu.dot_dimension_numbers<[1], [0], [0], [1], [0, 0, 1, 1], [], []>} : vector<4x8xf32>, vector<8x8xf32>, vector<4x8xf32> -> vector<4x8xf32>
    %c0_22 = arith.constant 0 : index
    %c0_23 = arith.constant 0 : index
    %18 = vector.load %arg6[%c0_22, %c0_23] : memref<8x8xf32, #tpu.memory_space<vmem>>, vector<8x8xf32>
    %cst_24 = arith.constant dense<0.000000e+00> : vector<4x8xf32>
    %19 = tpu.matmul %3, %18, %cst_24 {dimension_numbers = #tpu.dot_dimension_numbers<[1], [0], [0], [1], [0, 0, 1, 1], [], []>} : vector<4x8xf32>, vector<8x8xf32>, vector<4x8xf32> -> vector<4x8xf32>
    %c0_25 = arith.constant 0 : index
    %c0_26 = arith.constant 0 : index
    %20 = vector.load %arg7[%c0_25, %c0_26] : memref<128x4xf32, #tpu.memory_space<vmem>>, vector<128x4xf32>
    %cst_27 = arith.constant dense<0.000000e+00> : vector<128x8xf32>
    %21 = tpu.matmul %20, %17, %cst_27 {dimension_numbers = #tpu.dot_dimension_numbers<[1], [0], [0], [1], [0, 0, 1, 1], [], []>} : vector<128x4xf32>, vector<4x8xf32>, vector<128x8xf32> -> vector<128x8xf32>
    %c0_28 = arith.constant 0 : index
    %c0_29 = arith.constant 0 : index
    %22 = vector.load %arg8[%c0_28, %c0_29] : memref<128x4xf32, #tpu.memory_space<vmem>>, vector<128x4xf32>
    %cst_30 = arith.constant dense<0.000000e+00> : vector<128x8xf32>
    %23 = tpu.matmul %22, %3, %cst_30 {dimension_numbers = #tpu.dot_dimension_numbers<[1], [0], [0], [1], [0, 0, 1, 1], [], []>} : vector<128x4xf32>, vector<4x8xf32>, vector<128x8xf32> -> vector<128x8xf32>
    %24 = arith.addf %21, %23 : vector<128x8xf32>
    %c0_31 = arith.constant 0 : index
    %c0_32 = arith.constant 0 : index
    %25 = vector.load %arg9[%c0_31, %c0_32] : memref<128x4xf32, #tpu.memory_space<vmem>>, vector<128x4xf32>
    %cst_33 = arith.constant dense<0.000000e+00> : vector<128x8xf32>
    %26 = tpu.matmul %25, %19, %cst_33 {dimension_numbers = #tpu.dot_dimension_numbers<[1], [0], [0], [1], [0, 0, 1, 1], [], []>} : vector<128x4xf32>, vector<4x8xf32>, vector<128x8xf32> -> vector<128x8xf32>
    %27 = arith.addf %24, %26 : vector<128x8xf32>
    %c0_34 = arith.constant 0 : index
    %c0_35 = arith.constant 0 : index
    %28 = vector.load %arg10[%c0_34, %c0_35] : memref<16x8xf32, #tpu.memory_space<vmem>>, vector<16x8xf32>
    %cst_36 = arith.constant dense<0.000000e+00> : vector<128x8xf32>
    %29 = tpu.matmul %15, %28, %cst_36 {dimension_numbers = #tpu.dot_dimension_numbers<[1], [0], [0], [1], [0, 0, 1, 1], [], []>} : vector<128x16xf32>, vector<16x8xf32>, vector<128x8xf32> -> vector<128x8xf32>
    %c0_37 = arith.constant 0 : index
    %c0_38 = arith.constant 0 : index
    %30 = vector.load %arg11[%c0_37, %c0_38] : memref<1x8xf32, #tpu.memory_space<vmem>>, vector<1x8xf32>
    %31 = vector.broadcast %30 : vector<1x8xf32> to vector<128x8xf32>
    %32 = arith.addf %29, %31 : vector<128x8xf32>
    %cst_39 = arith.constant 5.000000e-01 : f32
    %33 = vector.broadcast %cst_39 : f32 to vector<128x8xf32>
    %34 = arith.mulf %33, %32 : vector<128x8xf32>
    %cst_40 = arith.constant 0.707106769 : f32
    %35 = vector.broadcast %cst_40 : f32 to vector<128x8xf32>
    %36 = arith.mulf %32, %35 : vector<128x8xf32>
    %37 = math.absf %36 : vector<128x8xf32>
    %cst_41 = arith.constant 0.327591091 : f32
    %38 = vector.broadcast %cst_41 : f32 to vector<128x8xf32>
    %39 = arith.mulf %38, %37 : vector<128x8xf32>
    %cst_42 = arith.constant 1.000000e+00 : f32
    %40 = vector.broadcast %cst_42 : f32 to vector<128x8xf32>
    %41 = arith.addf %40, %39 : vector<128x8xf32>
    %cst_43 = arith.constant 1.000000e+00 : f32
    %42 = vector.broadcast %cst_43 : f32 to vector<128x8xf32>
    %43 = arith.divf %42, %41 : vector<128x8xf32>
    %cst_44 = arith.constant 1.06140542 : f32
    %44 = vector.broadcast %cst_44 : f32 to vector<128x8xf32>
    %45 = arith.mulf %44, %43 : vector<128x8xf32>
    %cst_45 = arith.constant -1.45315206 : f32
    %46 = vector.broadcast %cst_45 : f32 to vector<128x8xf32>
    %47 = arith.addf %45, %46 : vector<128x8xf32>
    %48 = arith.mulf %47, %43 : vector<128x8xf32>
    %cst_46 = arith.constant 1.42141378 : f32
    %49 = vector.broadcast %cst_46 : f32 to vector<128x8xf32>
    %50 = arith.addf %48, %49 : vector<128x8xf32>
    %51 = arith.mulf %50, %43 : vector<128x8xf32>
    %cst_47 = arith.constant -0.284496725 : f32
    %52 = vector.broadcast %cst_47 : f32 to vector<128x8xf32>
    %53 = arith.addf %51, %52 : vector<128x8xf32>
    %54 = arith.mulf %53, %43 : vector<128x8xf32>
    %cst_48 = arith.constant 0.254829586 : f32
    %55 = vector.broadcast %cst_48 : f32 to vector<128x8xf32>
    %56 = arith.addf %54, %55 : vector<128x8xf32>
    %57 = arith.mulf %56, %43 : vector<128x8xf32>
    %cst_49 = arith.constant 0.000000e+00 : f32
    %58 = vector.broadcast %cst_49 : f32 to vector<128x8xf32>
    %59 = arith.subf %58, %37 : vector<128x8xf32>
    %60 = arith.mulf %59, %37 : vector<128x8xf32>
    %61 = math.exp %60 : vector<128x8xf32>
    %62 = arith.mulf %57, %61 : vector<128x8xf32>
    %cst_50 = arith.constant 1.000000e+00 : f32
    %63 = vector.broadcast %cst_50 : f32 to vector<128x8xf32>
    %64 = arith.subf %63, %62 : vector<128x8xf32>
    %cst_51 = arith.constant 0.000000e+00 : f32
    %65 = vector.broadcast %cst_51 : f32 to vector<128x8xf32>
    %66 = arith.cmpf olt, %36, %65 : vector<128x8xf32>
    %cst_52 = arith.constant 0.000000e+00 : f32
    %67 = vector.broadcast %cst_52 : f32 to vector<128x8xf32>
    %68 = arith.subf %67, %64 : vector<128x8xf32>
    %69 = arith.select %66, %68, %64 : vector<128x8xi1>, vector<128x8xf32>
    %cst_53 = arith.constant 1.000000e+00 : f32
    %70 = vector.broadcast %cst_53 : f32 to vector<128x8xf32>
    %71 = arith.addf %70, %69 : vector<128x8xf32>
    %72 = arith.mulf %34, %71 : vector<128x8xf32>
    %c0_54 = arith.constant 0 : index
    %c0_55 = arith.constant 0 : index
    %73 = vector.load %arg12[%c0_54, %c0_55] : memref<8x8xf32, #tpu.memory_space<vmem>>, vector<8x8xf32>
    %cst_56 = arith.constant dense<0.000000e+00> : vector<128x8xf32>
    %74 = tpu.matmul %72, %73, %cst_56 {dimension_numbers = #tpu.dot_dimension_numbers<[1], [0], [0], [1], [0, 0, 1, 1], [], []>} : vector<128x8xf32>, vector<8x8xf32>, vector<128x8xf32> -> vector<128x8xf32>
    %c0_57 = arith.constant 0 : index
    %c0_58 = arith.constant 0 : index
    %75 = vector.load %arg13[%c0_57, %c0_58] : memref<1x8xf32, #tpu.memory_space<vmem>>, vector<1x8xf32>
    %76 = vector.broadcast %75 : vector<1x8xf32> to vector<128x8xf32>
    %77 = arith.addf %74, %76 : vector<128x8xf32>
    %78 = arith.addf %27, %77 : vector<128x8xf32>
    %c0_59 = arith.constant 0 : index
    %c0_60 = arith.constant 0 : index
    %79 = vector.load %arg14[%c0_59, %c0_60] : memref<128x128xf32, #tpu.memory_space<vmem>>, vector<128x128xf32>
    %c0_61 = arith.constant 0 : index
    %c0_62 = arith.constant 0 : index
    %80 = vector.load %arg15[%c0_61, %c0_62] : memref<128x1xf32, #tpu.memory_space<vmem>>, vector<128x1xf32>
    %c0_63 = arith.constant 0 : index
    %c0_64 = arith.constant 0 : index
    %81 = vector.load %arg16[%c0_63, %c0_64] : memref<128x128xf32, #tpu.memory_space<vmem>>, vector<128x128xf32>
    %c0_65 = arith.constant 0 : index
    %c0_66 = arith.constant 0 : index
    %82 = vector.load %arg17[%c0_65, %c0_66] : memref<128x1xf32, #tpu.memory_space<vmem>>, vector<128x1xf32>
    %cst_67 = arith.constant dense<0.000000e+00> : vector<128x16xf32>
    %83 = tpu.matmul %79, %15, %cst_67 {dimension_numbers = #tpu.dot_dimension_numbers<[1], [0], [0], [1], [0, 0, 1, 1], [], []>} : vector<128x128xf32>, vector<128x16xf32>, vector<128x16xf32> -> vector<128x16xf32>
    %84 = vector.broadcast %80 : vector<128x1xf32> to vector<128x16xf32>
    %85 = arith.addf %83, %84 : vector<128x16xf32>
    %cst_68 = arith.constant 5.000000e-01 : f32
    %86 = vector.broadcast %cst_68 : f32 to vector<128x16xf32>
    %87 = arith.mulf %86, %85 : vector<128x16xf32>
    %cst_69 = arith.constant 0.707106769 : f32
    %88 = vector.broadcast %cst_69 : f32 to vector<128x16xf32>
    %89 = arith.mulf %85, %88 : vector<128x16xf32>
    %90 = math.absf %89 : vector<128x16xf32>
    %cst_70 = arith.constant 0.327591091 : f32
    %91 = vector.broadcast %cst_70 : f32 to vector<128x16xf32>
    %92 = arith.mulf %91, %90 : vector<128x16xf32>
    %cst_71 = arith.constant 1.000000e+00 : f32
    %93 = vector.broadcast %cst_71 : f32 to vector<128x16xf32>
    %94 = arith.addf %93, %92 : vector<128x16xf32>
    %cst_72 = arith.constant 1.000000e+00 : f32
    %95 = vector.broadcast %cst_72 : f32 to vector<128x16xf32>
    %96 = arith.divf %95, %94 : vector<128x16xf32>
    %cst_73 = arith.constant 1.06140542 : f32
    %97 = vector.broadcast %cst_73 : f32 to vector<128x16xf32>
    %98 = arith.mulf %97, %96 : vector<128x16xf32>
    %cst_74 = arith.constant -1.45315206 : f32
    %99 = vector.broadcast %cst_74 : f32 to vector<128x16xf32>
    %100 = arith.addf %98, %99 : vector<128x16xf32>
    %101 = arith.mulf %100, %96 : vector<128x16xf32>
    %cst_75 = arith.constant 1.42141378 : f32
    %102 = vector.broadcast %cst_75 : f32 to vector<128x16xf32>
    %103 = arith.addf %101, %102 : vector<128x16xf32>
    %104 = arith.mulf %103, %96 : vector<128x16xf32>
    %cst_76 = arith.constant -0.284496725 : f32
    %105 = vector.broadcast %cst_76 : f32 to vector<128x16xf32>
    %106 = arith.addf %104, %105 : vector<128x16xf32>
    %107 = arith.mulf %106, %96 : vector<128x16xf32>
    %cst_77 = arith.constant 0.254829586 : f32
    %108 = vector.broadcast %cst_77 : f32 to vector<128x16xf32>
    %109 = arith.addf %107, %108 : vector<128x16xf32>
    %110 = arith.mulf %109, %96 : vector<128x16xf32>
    %cst_78 = arith.constant 0.000000e+00 : f32
    %111 = vector.broadcast %cst_78 : f32 to vector<128x16xf32>
    %112 = arith.subf %111, %90 : vector<128x16xf32>
    %113 = arith.mulf %112, %90 : vector<128x16xf32>
    %114 = math.exp %113 : vector<128x16xf32>
    %115 = arith.mulf %110, %114 : vector<128x16xf32>
    %cst_79 = arith.constant 1.000000e+00 : f32
    %116 = vector.broadcast %cst_79 : f32 to vector<128x16xf32>
    %117 = arith.subf %116, %115 : vector<128x16xf32>
    %cst_80 = arith.constant 0.000000e+00 : f32
    %118 = vector.broadcast %cst_80 : f32 to vector<128x16xf32>
    %119 = arith.cmpf olt, %89, %118 : vector<128x16xf32>
    %cst_81 = arith.constant 0.000000e+00 : f32
    %120 = vector.broadcast %cst_81 : f32 to vector<128x16xf32>
    %121 = arith.subf %120, %117 : vector<128x16xf32>
    %122 = arith.select %119, %121, %117 : vector<128x16xi1>, vector<128x16xf32>
    %cst_82 = arith.constant 1.000000e+00 : f32
    %123 = vector.broadcast %cst_82 : f32 to vector<128x16xf32>
    %124 = arith.addf %123, %122 : vector<128x16xf32>
    %125 = arith.mulf %87, %124 : vector<128x16xf32>
    %cst_83 = arith.constant dense<0.000000e+00> : vector<128x16xf32>
    %126 = tpu.matmul %81, %125, %cst_83 {dimension_numbers = #tpu.dot_dimension_numbers<[1], [0], [0], [1], [0, 0, 1, 1], [], []>} : vector<128x128xf32>, vector<128x16xf32>, vector<128x16xf32> -> vector<128x16xf32>
    %127 = vector.broadcast %82 : vector<128x1xf32> to vector<128x16xf32>
    %128 = arith.addf %126, %127 : vector<128x16xf32>
    %129 = arith.addf %15, %128 : vector<128x16xf32>
    %cst_84 = arith.constant dense<0.000000e+00> : vector<128x8xf32>
    %130 = tpu.matmul %79, %78, %cst_84 {dimension_numbers = #tpu.dot_dimension_numbers<[1], [0], [0], [1], [0, 0, 1, 1], [], []>} : vector<128x128xf32>, vector<128x8xf32>, vector<128x8xf32> -> vector<128x8xf32>
    %131 = vector.broadcast %80 : vector<128x1xf32> to vector<128x8xf32>
    %132 = arith.addf %130, %131 : vector<128x8xf32>
    %cst_85 = arith.constant 5.000000e-01 : f32
    %133 = vector.broadcast %cst_85 : f32 to vector<128x8xf32>
    %134 = arith.mulf %133, %132 : vector<128x8xf32>
    %cst_86 = arith.constant 0.707106769 : f32
    %135 = vector.broadcast %cst_86 : f32 to vector<128x8xf32>
    %136 = arith.mulf %132, %135 : vector<128x8xf32>
    %137 = math.absf %136 : vector<128x8xf32>
    %cst_87 = arith.constant 0.327591091 : f32
    %138 = vector.broadcast %cst_87 : f32 to vector<128x8xf32>
    %139 = arith.mulf %138, %137 : vector<128x8xf32>
    %cst_88 = arith.constant 1.000000e+00 : f32
    %140 = vector.broadcast %cst_88 : f32 to vector<128x8xf32>
    %141 = arith.addf %140, %139 : vector<128x8xf32>
    %cst_89 = arith.constant 1.000000e+00 : f32
    %142 = vector.broadcast %cst_89 : f32 to vector<128x8xf32>
    %143 = arith.divf %142, %141 : vector<128x8xf32>
    %cst_90 = arith.constant 1.06140542 : f32
    %144 = vector.broadcast %cst_90 : f32 to vector<128x8xf32>
    %145 = arith.mulf %144, %143 : vector<128x8xf32>
    %cst_91 = arith.constant -1.45315206 : f32
    %146 = vector.broadcast %cst_91 : f32 to vector<128x8xf32>
    %147 = arith.addf %145, %146 : vector<128x8xf32>
    %148 = arith.mulf %147, %143 : vector<128x8xf32>
    %cst_92 = arith.constant 1.42141378 : f32
    %149 = vector.broadcast %cst_92 : f32 to vector<128x8xf32>
    %150 = arith.addf %148, %149 : vector<128x8xf32>
    %151 = arith.mulf %150, %143 : vector<128x8xf32>
    %cst_93 = arith.constant -0.284496725 : f32
    %152 = vector.broadcast %cst_93 : f32 to vector<128x8xf32>
    %153 = arith.addf %151, %152 : vector<128x8xf32>
    %154 = arith.mulf %153, %143 : vector<128x8xf32>
    %cst_94 = arith.constant 0.254829586 : f32
    %155 = vector.broadcast %cst_94 : f32 to vector<128x8xf32>
    %156 = arith.addf %154, %155 : vector<128x8xf32>
    %157 = arith.mulf %156, %143 : vector<128x8xf32>
    %cst_95 = arith.constant 0.000000e+00 : f32
    %158 = vector.broadcast %cst_95 : f32 to vector<128x8xf32>
    %159 = arith.subf %158, %137 : vector<128x8xf32>
    %160 = arith.mulf %159, %137 : vector<128x8xf32>
    %161 = math.exp %160 : vector<128x8xf32>
    %162 = arith.mulf %157, %161 : vector<128x8xf32>
    %cst_96 = arith.constant 1.000000e+00 : f32
    %163 = vector.broadcast %cst_96 : f32 to vector<128x8xf32>
    %164 = arith.subf %163, %162 : vector<128x8xf32>
    %cst_97 = arith.constant 0.000000e+00 : f32
    %165 = vector.broadcast %cst_97 : f32 to vector<128x8xf32>
    %166 = arith.cmpf olt, %136, %165 : vector<128x8xf32>
    %cst_98 = arith.constant 0.000000e+00 : f32
    %167 = vector.broadcast %cst_98 : f32 to vector<128x8xf32>
    %168 = arith.subf %167, %164 : vector<128x8xf32>
    %169 = arith.select %166, %168, %164 : vector<128x8xi1>, vector<128x8xf32>
    %cst_99 = arith.constant 1.000000e+00 : f32
    %170 = vector.broadcast %cst_99 : f32 to vector<128x8xf32>
    %171 = arith.addf %170, %169 : vector<128x8xf32>
    %172 = arith.mulf %134, %171 : vector<128x8xf32>
    %cst_100 = arith.constant dense<0.000000e+00> : vector<128x8xf32>
    %173 = tpu.matmul %81, %172, %cst_100 {dimension_numbers = #tpu.dot_dimension_numbers<[1], [0], [0], [1], [0, 0, 1, 1], [], []>} : vector<128x128xf32>, vector<128x8xf32>, vector<128x8xf32> -> vector<128x8xf32>
    %174 = vector.broadcast %82 : vector<128x1xf32> to vector<128x8xf32>
    %175 = arith.addf %173, %174 : vector<128x8xf32>
    %176 = arith.addf %27, %175 : vector<128x8xf32>
    %c0_101 = arith.constant 0 : index
    %c0_102 = arith.constant 0 : index
    %177 = vector.load %arg18[%c0_101, %c0_102] : memref<16x8xf32, #tpu.memory_space<vmem>>, vector<16x8xf32>
    %cst_103 = arith.constant dense<0.000000e+00> : vector<128x8xf32>
    %178 = tpu.matmul %129, %177, %cst_103 {dimension_numbers = #tpu.dot_dimension_numbers<[1], [0], [0], [1], [0, 0, 1, 1], [], []>} : vector<128x16xf32>, vector<16x8xf32>, vector<128x8xf32> -> vector<128x8xf32>
    %c0_104 = arith.constant 0 : index
    %c0_105 = arith.constant 0 : index
    %179 = vector.load %arg19[%c0_104, %c0_105] : memref<1x8xf32, #tpu.memory_space<vmem>>, vector<1x8xf32>
    %180 = vector.broadcast %179 : vector<1x8xf32> to vector<128x8xf32>
    %181 = arith.addf %178, %180 : vector<128x8xf32>
    %cst_106 = arith.constant 5.000000e-01 : f32
    %182 = vector.broadcast %cst_106 : f32 to vector<128x8xf32>
    %183 = arith.mulf %182, %181 : vector<128x8xf32>
    %cst_107 = arith.constant 0.707106769 : f32
    %184 = vector.broadcast %cst_107 : f32 to vector<128x8xf32>
    %185 = arith.mulf %181, %184 : vector<128x8xf32>
    %186 = math.absf %185 : vector<128x8xf32>
    %cst_108 = arith.constant 0.327591091 : f32
    %187 = vector.broadcast %cst_108 : f32 to vector<128x8xf32>
    %188 = arith.mulf %187, %186 : vector<128x8xf32>
    %cst_109 = arith.constant 1.000000e+00 : f32
    %189 = vector.broadcast %cst_109 : f32 to vector<128x8xf32>
    %190 = arith.addf %189, %188 : vector<128x8xf32>
    %cst_110 = arith.constant 1.000000e+00 : f32
    %191 = vector.broadcast %cst_110 : f32 to vector<128x8xf32>
    %192 = arith.divf %191, %190 : vector<128x8xf32>
    %cst_111 = arith.constant 1.06140542 : f32
    %193 = vector.broadcast %cst_111 : f32 to vector<128x8xf32>
    %194 = arith.mulf %193, %192 : vector<128x8xf32>
    %cst_112 = arith.constant -1.45315206 : f32
    %195 = vector.broadcast %cst_112 : f32 to vector<128x8xf32>
    %196 = arith.addf %194, %195 : vector<128x8xf32>
    %197 = arith.mulf %196, %192 : vector<128x8xf32>
    %cst_113 = arith.constant 1.42141378 : f32
    %198 = vector.broadcast %cst_113 : f32 to vector<128x8xf32>
    %199 = arith.addf %197, %198 : vector<128x8xf32>
    %200 = arith.mulf %199, %192 : vector<128x8xf32>
    %cst_114 = arith.constant -0.284496725 : f32
    %201 = vector.broadcast %cst_114 : f32 to vector<128x8xf32>
    %202 = arith.addf %200, %201 : vector<128x8xf32>
    %203 = arith.mulf %202, %192 : vector<128x8xf32>
    %cst_115 = arith.constant 0.254829586 : f32
    %204 = vector.broadcast %cst_115 : f32 to vector<128x8xf32>
    %205 = arith.addf %203, %204 : vector<128x8xf32>
    %206 = arith.mulf %205, %192 : vector<128x8xf32>
    %cst_116 = arith.constant 0.000000e+00 : f32
    %207 = vector.broadcast %cst_116 : f32 to vector<128x8xf32>
    %208 = arith.subf %207, %186 : vector<128x8xf32>
    %209 = arith.mulf %208, %186 : vector<128x8xf32>
    %210 = math.exp %209 : vector<128x8xf32>
    %211 = arith.mulf %206, %210 : vector<128x8xf32>
    %cst_117 = arith.constant 1.000000e+00 : f32
    %212 = vector.broadcast %cst_117 : f32 to vector<128x8xf32>
    %213 = arith.subf %212, %211 : vector<128x8xf32>
    %cst_118 = arith.constant 0.000000e+00 : f32
    %214 = vector.broadcast %cst_118 : f32 to vector<128x8xf32>
    %215 = arith.cmpf olt, %185, %214 : vector<128x8xf32>
    %cst_119 = arith.constant 0.000000e+00 : f32
    %216 = vector.broadcast %cst_119 : f32 to vector<128x8xf32>
    %217 = arith.subf %216, %213 : vector<128x8xf32>
    %218 = arith.select %215, %217, %213 : vector<128x8xi1>, vector<128x8xf32>
    %cst_120 = arith.constant 1.000000e+00 : f32
    %219 = vector.broadcast %cst_120 : f32 to vector<128x8xf32>
    %220 = arith.addf %219, %218 : vector<128x8xf32>
    %221 = arith.mulf %183, %220 : vector<128x8xf32>
    %c0_121 = arith.constant 0 : index
    %c0_122 = arith.constant 0 : index
    %222 = vector.load %arg20[%c0_121, %c0_122] : memref<8x8xf32, #tpu.memory_space<vmem>>, vector<8x8xf32>
    %cst_123 = arith.constant dense<0.000000e+00> : vector<128x8xf32>
    %223 = tpu.matmul %221, %222, %cst_123 {dimension_numbers = #tpu.dot_dimension_numbers<[1], [0], [0], [1], [0, 0, 1, 1], [], []>} : vector<128x8xf32>, vector<8x8xf32>, vector<128x8xf32> -> vector<128x8xf32>
    %c0_124 = arith.constant 0 : index
    %c0_125 = arith.constant 0 : index
    %224 = vector.load %arg21[%c0_124, %c0_125] : memref<1x8xf32, #tpu.memory_space<vmem>>, vector<1x8xf32>
    %225 = vector.broadcast %224 : vector<1x8xf32> to vector<128x8xf32>
    %226 = arith.addf %223, %225 : vector<128x8xf32>
    %227 = arith.addf %176, %226 : vector<128x8xf32>
    %c0_126 = arith.constant 0 : index
    %c0_127 = arith.constant 0 : index
    %228 = vector.load %arg22[%c0_126, %c0_127] : memref<128x128xf32, #tpu.memory_space<vmem>>, vector<128x128xf32>
    %c0_128 = arith.constant 0 : index
    %c0_129 = arith.constant 0 : index
    %229 = vector.load %arg23[%c0_128, %c0_129] : memref<128x1xf32, #tpu.memory_space<vmem>>, vector<128x1xf32>
    %c0_130 = arith.constant 0 : index
    %c0_131 = arith.constant 0 : index
    %230 = vector.load %arg24[%c0_130, %c0_131] : memref<128x128xf32, #tpu.memory_space<vmem>>, vector<128x128xf32>
    %c0_132 = arith.constant 0 : index
    %c0_133 = arith.constant 0 : index
    %231 = vector.load %arg25[%c0_132, %c0_133] : memref<128x1xf32, #tpu.memory_space<vmem>>, vector<128x1xf32>
    %cst_134 = arith.constant dense<0.000000e+00> : vector<128x16xf32>
    %232 = tpu.matmul %228, %129, %cst_134 {dimension_numbers = #tpu.dot_dimension_numbers<[1], [0], [0], [1], [0, 0, 1, 1], [], []>} : vector<128x128xf32>, vector<128x16xf32>, vector<128x16xf32> -> vector<128x16xf32>
    %233 = vector.broadcast %229 : vector<128x1xf32> to vector<128x16xf32>
    %234 = arith.addf %232, %233 : vector<128x16xf32>
    %cst_135 = arith.constant 5.000000e-01 : f32
    %235 = vector.broadcast %cst_135 : f32 to vector<128x16xf32>
    %236 = arith.mulf %235, %234 : vector<128x16xf32>
    %cst_136 = arith.constant 0.707106769 : f32
    %237 = vector.broadcast %cst_136 : f32 to vector<128x16xf32>
    %238 = arith.mulf %234, %237 : vector<128x16xf32>
    %239 = math.absf %238 : vector<128x16xf32>
    %cst_137 = arith.constant 0.327591091 : f32
    %240 = vector.broadcast %cst_137 : f32 to vector<128x16xf32>
    %241 = arith.mulf %240, %239 : vector<128x16xf32>
    %cst_138 = arith.constant 1.000000e+00 : f32
    %242 = vector.broadcast %cst_138 : f32 to vector<128x16xf32>
    %243 = arith.addf %242, %241 : vector<128x16xf32>
    %cst_139 = arith.constant 1.000000e+00 : f32
    %244 = vector.broadcast %cst_139 : f32 to vector<128x16xf32>
    %245 = arith.divf %244, %243 : vector<128x16xf32>
    %cst_140 = arith.constant 1.06140542 : f32
    %246 = vector.broadcast %cst_140 : f32 to vector<128x16xf32>
    %247 = arith.mulf %246, %245 : vector<128x16xf32>
    %cst_141 = arith.constant -1.45315206 : f32
    %248 = vector.broadcast %cst_141 : f32 to vector<128x16xf32>
    %249 = arith.addf %247, %248 : vector<128x16xf32>
    %250 = arith.mulf %249, %245 : vector<128x16xf32>
    %cst_142 = arith.constant 1.42141378 : f32
    %251 = vector.broadcast %cst_142 : f32 to vector<128x16xf32>
    %252 = arith.addf %250, %251 : vector<128x16xf32>
    %253 = arith.mulf %252, %245 : vector<128x16xf32>
    %cst_143 = arith.constant -0.284496725 : f32
    %254 = vector.broadcast %cst_143 : f32 to vector<128x16xf32>
    %255 = arith.addf %253, %254 : vector<128x16xf32>
    %256 = arith.mulf %255, %245 : vector<128x16xf32>
    %cst_144 = arith.constant 0.254829586 : f32
    %257 = vector.broadcast %cst_144 : f32 to vector<128x16xf32>
    %258 = arith.addf %256, %257 : vector<128x16xf32>
    %259 = arith.mulf %258, %245 : vector<128x16xf32>
    %cst_145 = arith.constant 0.000000e+00 : f32
    %260 = vector.broadcast %cst_145 : f32 to vector<128x16xf32>
    %261 = arith.subf %260, %239 : vector<128x16xf32>
    %262 = arith.mulf %261, %239 : vector<128x16xf32>
    %263 = math.exp %262 : vector<128x16xf32>
    %264 = arith.mulf %259, %263 : vector<128x16xf32>
    %cst_146 = arith.constant 1.000000e+00 : f32
    %265 = vector.broadcast %cst_146 : f32 to vector<128x16xf32>
    %266 = arith.subf %265, %264 : vector<128x16xf32>
    %cst_147 = arith.constant 0.000000e+00 : f32
    %267 = vector.broadcast %cst_147 : f32 to vector<128x16xf32>
    %268 = arith.cmpf olt, %238, %267 : vector<128x16xf32>
    %cst_148 = arith.constant 0.000000e+00 : f32
    %269 = vector.broadcast %cst_148 : f32 to vector<128x16xf32>
    %270 = arith.subf %269, %266 : vector<128x16xf32>
    %271 = arith.select %268, %270, %266 : vector<128x16xi1>, vector<128x16xf32>
    %cst_149 = arith.constant 1.000000e+00 : f32
    %272 = vector.broadcast %cst_149 : f32 to vector<128x16xf32>
    %273 = arith.addf %272, %271 : vector<128x16xf32>
    %274 = arith.mulf %236, %273 : vector<128x16xf32>
    %cst_150 = arith.constant dense<0.000000e+00> : vector<128x16xf32>
    %275 = tpu.matmul %230, %274, %cst_150 {dimension_numbers = #tpu.dot_dimension_numbers<[1], [0], [0], [1], [0, 0, 1, 1], [], []>} : vector<128x128xf32>, vector<128x16xf32>, vector<128x16xf32> -> vector<128x16xf32>
    %276 = vector.broadcast %231 : vector<128x1xf32> to vector<128x16xf32>
    %277 = arith.addf %275, %276 : vector<128x16xf32>
    %278 = arith.addf %129, %277 : vector<128x16xf32>
    %cst_151 = arith.constant dense<0.000000e+00> : vector<128x8xf32>
    %279 = tpu.matmul %228, %227, %cst_151 {dimension_numbers = #tpu.dot_dimension_numbers<[1], [0], [0], [1], [0, 0, 1, 1], [], []>} : vector<128x128xf32>, vector<128x8xf32>, vector<128x8xf32> -> vector<128x8xf32>
    %280 = vector.broadcast %229 : vector<128x1xf32> to vector<128x8xf32>
    %281 = arith.addf %279, %280 : vector<128x8xf32>
    %cst_152 = arith.constant 5.000000e-01 : f32
    %282 = vector.broadcast %cst_152 : f32 to vector<128x8xf32>
    %283 = arith.mulf %282, %281 : vector<128x8xf32>
    %cst_153 = arith.constant 0.707106769 : f32
    %284 = vector.broadcast %cst_153 : f32 to vector<128x8xf32>
    %285 = arith.mulf %281, %284 : vector<128x8xf32>
    %286 = math.absf %285 : vector<128x8xf32>
    %cst_154 = arith.constant 0.327591091 : f32
    %287 = vector.broadcast %cst_154 : f32 to vector<128x8xf32>
    %288 = arith.mulf %287, %286 : vector<128x8xf32>
    %cst_155 = arith.constant 1.000000e+00 : f32
    %289 = vector.broadcast %cst_155 : f32 to vector<128x8xf32>
    %290 = arith.addf %289, %288 : vector<128x8xf32>
    %cst_156 = arith.constant 1.000000e+00 : f32
    %291 = vector.broadcast %cst_156 : f32 to vector<128x8xf32>
    %292 = arith.divf %291, %290 : vector<128x8xf32>
    %cst_157 = arith.constant 1.06140542 : f32
    %293 = vector.broadcast %cst_157 : f32 to vector<128x8xf32>
    %294 = arith.mulf %293, %292 : vector<128x8xf32>
    %cst_158 = arith.constant -1.45315206 : f32
    %295 = vector.broadcast %cst_158 : f32 to vector<128x8xf32>
    %296 = arith.addf %294, %295 : vector<128x8xf32>
    %297 = arith.mulf %296, %292 : vector<128x8xf32>
    %cst_159 = arith.constant 1.42141378 : f32
    %298 = vector.broadcast %cst_159 : f32 to vector<128x8xf32>
    %299 = arith.addf %297, %298 : vector<128x8xf32>
    %300 = arith.mulf %299, %292 : vector<128x8xf32>
    %cst_160 = arith.constant -0.284496725 : f32
    %301 = vector.broadcast %cst_160 : f32 to vector<128x8xf32>
    %302 = arith.addf %300, %301 : vector<128x8xf32>
    %303 = arith.mulf %302, %292 : vector<128x8xf32>
    %cst_161 = arith.constant 0.254829586 : f32
    %304 = vector.broadcast %cst_161 : f32 to vector<128x8xf32>
    %305 = arith.addf %303, %304 : vector<128x8xf32>
    %306 = arith.mulf %305, %292 : vector<128x8xf32>
    %cst_162 = arith.constant 0.000000e+00 : f32
    %307 = vector.broadcast %cst_162 : f32 to vector<128x8xf32>
    %308 = arith.subf %307, %286 : vector<128x8xf32>
    %309 = arith.mulf %308, %286 : vector<128x8xf32>
    %310 = math.exp %309 : vector<128x8xf32>
    %311 = arith.mulf %306, %310 : vector<128x8xf32>
    %cst_163 = arith.constant 1.000000e+00 : f32
    %312 = vector.broadcast %cst_163 : f32 to vector<128x8xf32>
    %313 = arith.subf %312, %311 : vector<128x8xf32>
    %cst_164 = arith.constant 0.000000e+00 : f32
    %314 = vector.broadcast %cst_164 : f32 to vector<128x8xf32>
    %315 = arith.cmpf olt, %285, %314 : vector<128x8xf32>
    %cst_165 = arith.constant 0.000000e+00 : f32
    %316 = vector.broadcast %cst_165 : f32 to vector<128x8xf32>
    %317 = arith.subf %316, %313 : vector<128x8xf32>
    %318 = arith.select %315, %317, %313 : vector<128x8xi1>, vector<128x8xf32>
    %cst_166 = arith.constant 1.000000e+00 : f32
    %319 = vector.broadcast %cst_166 : f32 to vector<128x8xf32>
    %320 = arith.addf %319, %318 : vector<128x8xf32>
    %321 = arith.mulf %283, %320 : vector<128x8xf32>
    %cst_167 = arith.constant dense<0.000000e+00> : vector<128x8xf32>
    %322 = tpu.matmul %230, %321, %cst_167 {dimension_numbers = #tpu.dot_dimension_numbers<[1], [0], [0], [1], [0, 0, 1, 1], [], []>} : vector<128x128xf32>, vector<128x8xf32>, vector<128x8xf32> -> vector<128x8xf32>
    %323 = vector.broadcast %231 : vector<128x1xf32> to vector<128x8xf32>
    %324 = arith.addf %322, %323 : vector<128x8xf32>
    %325 = arith.addf %176, %324 : vector<128x8xf32>
    %c0_168 = arith.constant 0 : index
    %c0_169 = arith.constant 0 : index
    %326 = vector.load %arg26[%c0_168, %c0_169] : memref<4x128xf32, #tpu.memory_space<vmem>>, vector<4x128xf32>
    %cst_170 = arith.constant 0.000000e+00 : f32
    %327 = vector.broadcast %cst_170 : f32 to vector<4x8xf32>
    %cst_171 = arith.constant dense<0.000000e+00> : vector<4x16xf32>
    %328 = tpu.matmul %326, %278, %cst_171 {dimension_numbers = #tpu.dot_dimension_numbers<[1], [0], [0], [1], [0, 0, 1, 1], [], []>} : vector<4x128xf32>, vector<128x16xf32>, vector<4x16xf32> -> vector<4x16xf32>
    %c0_172 = arith.constant 0 : index
    %c0_173 = arith.constant 0 : index
    %329 = vector.load %arg27[%c0_172, %c0_173] : memref<16x8xf32, #tpu.memory_space<vmem>>, vector<16x8xf32>
    %cst_174 = arith.constant dense<0.000000e+00> : vector<4x8xf32>
    %330 = tpu.matmul %328, %329, %cst_174 {dimension_numbers = #tpu.dot_dimension_numbers<[1], [0], [0], [1], [0, 0, 1, 1], [], []>} : vector<4x16xf32>, vector<16x8xf32>, vector<4x8xf32> -> vector<4x8xf32>
    %331 = arith.addf %327, %330 : vector<4x8xf32>
    %c0_175 = arith.constant 0 : index
    %c0_176 = arith.constant 0 : index
    %332 = vector.load %arg28[%c0_175, %c0_176] : memref<1x8xf32, #tpu.memory_space<vmem>>, vector<1x8xf32>
    %333 = vector.broadcast %332 : vector<1x8xf32> to vector<4x8xf32>
    %334 = arith.addf %331, %333 : vector<4x8xf32>
    %cst_177 = arith.constant dense<0.000000e+00> : vector<4x8xf32>
    %335 = tpu.matmul %326, %325, %cst_177 {dimension_numbers = #tpu.dot_dimension_numbers<[1], [0], [0], [1], [0, 0, 1, 1], [], []>} : vector<4x128xf32>, vector<128x8xf32>, vector<4x8xf32> -> vector<4x8xf32>
    %c0_178 = arith.constant 0 : index
    %c0_179 = arith.constant 0 : index
    %336 = vector.load %arg29[%c0_178, %c0_179] : memref<8x8xf32, #tpu.memory_space<vmem>>, vector<8x8xf32>
    %cst_180 = arith.constant dense<0.000000e+00> : vector<4x8xf32>
    %337 = tpu.matmul %335, %336, %cst_180 {dimension_numbers = #tpu.dot_dimension_numbers<[1], [0], [0], [1], [0, 0, 1, 1], [], []>} : vector<4x8xf32>, vector<8x8xf32>, vector<4x8xf32> -> vector<4x8xf32>
    %338 = arith.addf %334, %337 : vector<4x8xf32>
    %c0_181 = arith.constant 0 : index
    %c0_182 = arith.constant 0 : index
    %339 = vector.load %arg30[%c0_181, %c0_182] : memref<1x8xf32, #tpu.memory_space<vmem>>, vector<1x8xf32>
    %340 = vector.broadcast %339 : vector<1x8xf32> to vector<4x8xf32>
    %341 = arith.addf %338, %340 : vector<4x8xf32>
    %c0_183 = arith.constant 0 : index
    %c0_184 = arith.constant 0 : index
    %c0_185 = arith.constant 0 : index
    %342 = vector.load %arg31[%c0_183, %c0_184, %c0_185] : memref<1x4x8xf32, #tpu.memory_space<vmem>>, vector<1x4x8xf32>
    %343 = vector.shape_cast %342 : vector<1x4x8xf32> to vector<4x8xf32>
    %344 = vector.shape_cast %341 : vector<4x8xf32> to vector<1x4x8xf32>
    tpu.vector_store %arg31[%c0_183, %c0_184, %c0_185], %344 {strides = array<i32>} : memref<1x4x8xf32, #tpu.memory_space<vmem>>, vector<1x4x8xf32>,
    return
  }
  func.func @transform_0(%arg0: i32) -> (i32, i32, i32) {
    %c0_i32 = arith.constant 0 : i32
    %c0_i32_0 = arith.constant 0 : i32
    %c0_i32_1 = arith.constant 0 : i32
    return %arg0, %c0_i32, %c0_i32_0 : i32, i32, i32
  }
  func.func @transform_1(%arg0: i32) -> (i32, i32) {
    %c0_i32 = arith.constant 0 : i32
    %c0_i32_0 = arith.constant 0 : i32
    %c0_i32_1 = arith.constant 0 : i32
    return %c0_i32, %c0_i32_0 : i32, i32
  }
  func.func @transform_2(%arg0: i32) -> (i32, i32) {
    %c0_i32 = arith.constant 0 : i32
    %c0_i32_0 = arith.constant 0 : i32
    %c0_i32_1 = arith.constant 0 : i32
    return %c0_i32, %c0_i32_0 : i32, i32
  }
  func.func @transform_3(%arg0: i32) -> (i32, i32) {
    %c0_i32 = arith.constant 0 : i32
    %c0_i32_0 = arith.constant 0 : i32
    %c0_i32_1 = arith.constant 0 : i32
    return %c0_i32, %c0_i32_0 : i32, i32
  }
  func.func @transform_4(%arg0: i32) -> (i32, i32) {
    %c0_i32 = arith.constant 0 : i32
    %c0_i32_0 = arith.constant 0 : i32
    %c0_i32_1 = arith.constant 0 : i32
    return %c0_i32, %c0_i32_0 : i32, i32
  }
  func.func @transform_5(%arg0: i32) -> (i32, i32) {
    %c0_i32 = arith.constant 0 : i32
    %c0_i32_0 = arith.constant 0 : i32
    %c0_i32_1 = arith.constant 0 : i32
    return %c0_i32, %c0_i32_0 : i32, i32
  }
  func.func @transform_6(%arg0: i32) -> (i32, i32) {
    %c0_i32 = arith.constant 0 : i32
    %c0_i32_0 = arith.constant 0 : i32
    %c0_i32_1 = arith.constant 0 : i32
    return %c0_i32, %c0_i32_0 : i32, i32
  }
  func.func @transform_7(%arg0: i32) -> (i32, i32) {
    %c0_i32 = arith.constant 0 : i32
    %c0_i32_0 = arith.constant 0 : i32
    %c0_i32_1 = arith.constant 0 : i32
    return %c0_i32, %c0_i32_0 : i32, i32
  }
  func.func @transform_8(%arg0: i32) -> (i32, i32) {
    %c0_i32 = arith.constant 0 : i32
    %c0_i32_0 = arith.constant 0 : i32
    %c0_i32_1 = arith.constant 0 : i32
    return %c0_i32, %c0_i32_0 : i32, i32
  }
  func.func @transform_9(%arg0: i32) -> (i32, i32) {
    %c0_i32 = arith.constant 0 : i32
    %c0_i32_0 = arith.constant 0 : i32
    %c0_i32_1 = arith.constant 0 : i32
    return %c0_i32, %c0_i32_0 : i32, i32
  }
  func.func @transform_10(%arg0: i32) -> (i32, i32) {
    %c0_i32 = arith.constant 0 : i32
    %c0_i32_0 = arith.constant 0 : i32
    %c0_i32_1 = arith.constant 0 : i32
    return %c0_i32, %c0_i32_0 : i32, i32
  }
  func.func @transform_11(%arg0: i32) -> (i32, i32) {
    %c0_i32 = arith.constant 0 : i32
    %c0_i32_0 = arith.constant 0 : i32
    %c0_i32_1 = arith.constant 0 : i32
    return %c0_i32, %c0_i32_0 : i32, i32
  }
  func.func @transform_12(%arg0: i32) -> (i32, i32) {
    %c0_i32 = arith.constant 0 : i32
    %c0_i32_0 = arith.constant 0 : i32
    %c0_i32_1 = arith.constant 0 : i32
    return %c0_i32, %c0_i32_0 : i32, i32
  }
  func.func @transform_13(%arg0: i32) -> (i32, i32) {
    %c0_i32 = arith.constant 0 : i32
    %c0_i32_0 = arith.constant 0 : i32
    %c0_i32_1 = arith.constant 0 : i32
    return %c0_i32, %c0_i32_0 : i32, i32
  }
  func.func @transform_14(%arg0: i32) -> (i32, i32) {
    %c0_i32 = arith.constant 0 : i32
    %c0_i32_0 = arith.constant 0 : i32
    %c0_i32_1 = arith.constant 0 : i32
    return %c0_i32, %c0_i32_0 : i32, i32
  }
  func.func @transform_15(%arg0: i32) -> (i32, i32) {
    %c0_i32 = arith.constant 0 : i32
    %c0_i32_0 = arith.constant 0 : i32
    %c0_i32_1 = arith.constant 0 : i32
    return %c0_i32, %c0_i32_0 : i32, i32
  }
  func.func @transform_16(%arg0: i32) -> (i32, i32) {
    %c0_i32 = arith.constant 0 : i32
    %c0_i32_0 = arith.constant 0 : i32
    %c0_i32_1 = arith.constant 0 : i32
    return %c0_i32, %c0_i32_0 : i32, i32
  }
  func.func @transform_17(%arg0: i32) -> (i32, i32) {
    %c0_i32 = arith.constant 0 : i32
    %c0_i32_0 = arith.constant 0 : i32
    %c0_i32_1 = arith.constant 0 : i32
    return %c0_i32, %c0_i32_0 : i32, i32
  }
  func.func @transform_18(%arg0: i32) -> (i32, i32) {
    %c0_i32 = arith.constant 0 : i32
    %c0_i32_0 = arith.constant 0 : i32
    %c0_i32_1 = arith.constant 0 : i32
    return %c0_i32, %c0_i32_0 : i32, i32
  }
  func.func @transform_19(%arg0: i32) -> (i32, i32) {
    %c0_i32 = arith.constant 0 : i32
    %c0_i32_0 = arith.constant 0 : i32
    %c0_i32_1 = arith.constant 0 : i32
    return %c0_i32, %c0_i32_0 : i32, i32
  }
  func.func @transform_20(%arg0: i32) -> (i32, i32) {
    %c0_i32 = arith.constant 0 : i32
    %c0_i32_0 = arith.constant 0 : i32
    %c0_i32_1 = arith.constant 0 : i32
    return %c0_i32, %c0_i32_0 : i32, i32
  }
  func.func @transform_21(%arg0: i32) -> (i32, i32) {
    %c0_i32 = arith.constant 0 : i32
    %c0_i32_0 = arith.constant 0 : i32
    %c0_i32_1 = arith.constant 0 : i32
    return %c0_i32, %c0_i32_0 : i32, i32
  }
  func.func @transform_22(%arg0: i32) -> (i32, i32) {
    %c0_i32 = arith.constant 0 : i32
    %c0_i32_0 = arith.constant 0 : i32
    %c0_i32_1 = arith.constant 0 : i32
    return %c0_i32, %c0_i32_0 : i32, i32
  }
  func.func @transform_23(%arg0: i32) -> (i32, i32) {
    %c0_i32 = arith.constant 0 : i32
    %c0_i32_0 = arith.constant 0 : i32
    %c0_i32_1 = arith.constant 0 : i32
    return %c0_i32, %c0_i32_0 : i32, i32
  }
  func.func @transform_24(%arg0: i32) -> (i32, i32) {
    %c0_i32 = arith.constant 0 : i32
    %c0_i32_0 = arith.constant 0 : i32
    %c0_i32_1 = arith.constant 0 : i32
    return %c0_i32, %c0_i32_0 : i32, i32
  }
  func.func @transform_25(%arg0: i32) -> (i32, i32) {
    %c0_i32 = arith.constant 0 : i32
    %c0_i32_0 = arith.constant 0 : i32
    %c0_i32_1 = arith.constant 0 : i32
    return %c0_i32, %c0_i32_0 : i32, i32
  }
  func.func @transform_26(%arg0: i32) -> (i32, i32) {
    %c0_i32 = arith.constant 0 : i32
    %c0_i32_0 = arith.constant 0 : i32
    %c0_i32_1 = arith.constant 0 : i32
    return %c0_i32, %c0_i32_0 : i32, i32
  }
  func.func @transform_27(%arg0: i32) -> (i32, i32) {
    %c0_i32 = arith.constant 0 : i32
    %c0_i32_0 = arith.constant 0 : i32
    %c0_i32_1 = arith.constant 0 : i32
    return %c0_i32, %c0_i32_0 : i32, i32
  }
  func.func @transform_28(%arg0: i32) -> (i32, i32) {
    %c0_i32 = arith.constant 0 : i32
    %c0_i32_0 = arith.constant 0 : i32
    %c0_i32_1 = arith.constant 0 : i32
    return %c0_i32, %c0_i32_0 : i32, i32
  }
  func.func @transform_29(%arg0: i32) -> (i32, i32) {
    %c0_i32 = arith.constant 0 : i32
    %c0_i32_0 = arith.constant 0 : i32
    %c0_i32_1 = arith.constant 0 : i32
    return %c0_i32, %c0_i32_0 : i32, i32
  }
  func.func @transform_30(%arg0: i32) -> (i32, i32, i32) {
    %c0_i32 = arith.constant 0 : i32
    %c0_i32_0 = arith.constant 0 : i32
    %c0_i32_1 = arith.constant 0 : i32
    return %arg0, %c0_i32, %c0_i32_0 : i32, i32, i32
  }
}

</mosaic_0001>

<llo_original>
// kernel: forward.1
$region0: #{forward.1}
  #allocation0 [shape = 'u32[]', space=smem, size = 0x4, offset = 0x4, fixed_abs, tag = 'smem constant byte address 0x4 - core index']
  #allocation1 [shape = 'u32[144,128]{1,0:T(1,128)}', space=vmem, size = 0x12000, scoped, tag = 'internal scratch']
  %s0 = inlined_call_operand.smem [shape: u32[31], index: -1, kind: input, shape index: {}]
  %s1 = sld [smem:[%s0]]
  %s2 = scalar_lea.smem %s0, 1
  %s3 = sld [smem:[%s2]]
  %s4 = scalar_lea.smem %s0, 2
  %s5 = sld [smem:[%s4]]
  %s6 = scalar_lea.smem %s0, 3
  %s7 = sld [smem:[%s6]]
  %s8 = scalar_lea.smem %s0, 4
  %s9 = sld [smem:[%s8]]
  %s10 = scalar_lea.smem %s0, 5
  %s11 = sld [smem:[%s10]]
  %s12 = scalar_lea.smem %s0, 6
  %s13 = sld [smem:[%s12]]
  %s14 = scalar_lea.smem %s0, 7
  %s15 = sld [smem:[%s14]]
  %s16 = scalar_lea.smem %s0, 8
  %s17 = sld [smem:[%s16]]
  %s18 = scalar_lea.smem %s0, 9
  %s19 = sld [smem:[%s18]]
  %s20 = scalar_lea.smem %s0, 10
  %s21 = sld [smem:[%s20]]
  %s22 = scalar_lea.smem %s0, 11
  %s23 = sld [smem:[%s22]]
  %s24 = scalar_lea.smem %s0, 12
  %s25 = sld [smem:[%s24]]
  %s26 = scalar_lea.smem %s0, 13
  %s27 = sld [smem:[%s26]]
  %s28 = scalar_lea.smem %s0, 14
  %s29 = sld [smem:[%s28]]
  %s30 = scalar_lea.smem %s0, 15
  %s31 = sld [smem:[%s30]]
  %s32 = scalar_lea.smem %s0, 16
  %s33 = sld [smem:[%s32]]
  %s34 = scalar_lea.smem %s0, 17
  %s35 = sld [smem:[%s34]]
  %s36 = scalar_lea.smem %s0, 18
  %s37 = sld [smem:[%s36]]
  %s38 = scalar_lea.smem %s0, 19
  %s39 = sld [smem:[%s38]]
  %s40 = scalar_lea.smem %s0, 20
  %s41 = sld [smem:[%s40]]
  %s42 = scalar_lea.smem %s0, 21
  %s43 = sld [smem:[%s42]]
  %s44 = scalar_lea.smem %s0, 22
  %s45 = sld [smem:[%s44]]
  %s46 = scalar_lea.smem %s0, 23
  %s47 = sld [smem:[%s46]]
  %s48 = scalar_lea.smem %s0, 24
  %s49 = sld [smem:[%s48]]
  %s50 = scalar_lea.smem %s0, 25
  %s51 = sld [smem:[%s50]]
  %s52 = scalar_lea.smem %s0, 26
  %s53 = sld [smem:[%s52]]
  %s54 = scalar_lea.smem %s0, 27
  %s55 = sld [smem:[%s54]]
  %s56 = scalar_lea.smem %s0, 28
  %s57 = sld [smem:[%s56]]
  %s58 = scalar_lea.smem %s0, 29
  %s59 = sld [smem:[%s58]]
  %s60 = scalar_lea.smem %s0, 30
  %s61 = sld [smem:[%s60]]
  %s62 = sld [smem:[#allocation0]]
  $region249: #{forward.1} parent=0
    _
  %s64 = ssub.s32 1, %s62
  %s65 = scalar_select 0, %s64, %s62
  $region1: #{forward.1} parent=0
    #allocation2 [shape = 'u8[4096]{0}', space=vmem, size = 0x1000, scoped, tag = 'input window, operand 0']
    #allocation3 [shape = 's32[2]{0}', space=sflag, size = 0x8, scoped, tag = 'scoped memory for forward.1']
    #allocation4 [shape = 's32[2]{0}', space=sflag, size = 0x8, scoped, tag = 'scoped memory for forward.1']
    #allocation5 [shape = 'u8[8192]{0}', space=vmem, size = 0x2000, scoped, tag = 'input window, operand 1, single buffered']
    #allocation6 [shape = 's32[1]{0}', space=sflag, size = 0x4, scoped, tag = 'scoped memory for forward.1']
    #allocation7 [shape = 'u8[8192]{0}', space=vmem, size = 0x2000, scoped, tag = 'input window, operand 2, single buffered']
    #allocation8 [shape = 'u8[8192]{0}', space=vmem, size = 0x2000, scoped, tag = 'input window, operand 3, single buffered']
    #allocation9 [shape = 's32[1]{0}', space=sflag, size = 0x4, scoped, tag = 'scoped memory for forward.1']
    #allocation10 [shape = 'u8[4096]{0}', space=vmem, size = 0x1000, scoped, tag = 'input window, operand 4, single buffered']
    #allocation11 [shape = 'u8[4096]{0}', space=vmem, size = 0x1000, scoped, tag = 'input window, operand 5, single buffered']
    #allocation12 [shape = 's32[1]{0}', space=sflag, size = 0x4, scoped, tag = 'scoped memory for forward.1']
    #allocation13 [shape = 'u8[65536]{0}', space=vmem, size = 0x10000, scoped, tag = 'input window, operand 6, single buffered']
    #allocation14 [shape = 'u8[65536]{0}', space=vmem, size = 0x10000, scoped, tag = 'input window, operand 7, single buffered']
    #allocation15 [shape = 's32[1]{0}', space=sflag, size = 0x4, scoped, tag = 'scoped memory for forward.1']
    #allocation16 [shape = 'u8[65536]{0}', space=vmem, size = 0x10000, scoped, tag = 'input window, operand 8, single buffered']
    #allocation17 [shape = 'u8[8192]{0}', space=vmem, size = 0x2000, scoped, tag = 'input window, operand 9, single buffered']
    #allocation18 [shape = 's32[1]{0}', space=sflag, size = 0x4, scoped, tag = 'scoped memory for forward.1']
    #allocation19 [shape = 'u8[512]{0}', space=vmem, size = 0x400, scoped, tag = 'input window, operand 10, single buffered']
    #allocation20 [shape = 'u8[4096]{0}', space=vmem, size = 0x1000, scoped, tag = 'input window, operand 11, single buffered']
    #allocation21 [shape = 's32[1]{0}', space=sflag, size = 0x4, scoped, tag = 'scoped memory for forward.1']
    #allocation22 [shape = 'u8[512]{0}', space=vmem, size = 0x400, scoped, tag = 'input window, operand 12, single buffered']
    #allocation23 [shape = 'u8[65536]{0}', space=vmem, size = 0x10000, scoped, tag = 'input window, operand 13, single buffered']
    #allocation24 [shape = 's32[1]{0}', space=sflag, size = 0x4, scoped, tag = 'scoped memory for forward.1']
    #allocation25 [shape = 'u8[65536]{0}', space=vmem, size = 0x10000, scoped, tag = 'input window, operand 14, single buffered']
    #allocation26 [shape = 'u8[65536]{0}', space=vmem, size = 0x10000, scoped, tag = 'input window, operand 15, single buffered']
    #allocation27 [shape = 's32[1]{0}', space=sflag, size = 0x4, scoped, tag = 'scoped memory for forward.1']
    #allocation28 [shape = 'u8[65536]{0}', space=vmem, size = 0x10000, scoped, tag = 'input window, operand 16, single buffered']
    #allocation29 [shape = 'u8[512]{0}', space=vmem, size = 0x400, scoped, tag = 'input window, operand 18, single buffered']
    #allocation30 [shape = 's32[1]{0}', space=sflag, size = 0x4, scoped, tag = 'scoped memory for forward.1']
    #allocation31 [shape = 'u8[4096]{0}', space=vmem, size = 0x1000, scoped, tag = 'input window, operand 19, single buffered']
    #allocation32 [shape = 'u8[512]{0}', space=vmem, size = 0x400, scoped, tag = 'input window, operand 20, single buffered']
    #allocation33 [shape = 's32[1]{0}', space=sflag, size = 0x4, scoped, tag = 'scoped memory for forward.1']
    #allocation34 [shape = 'u8[65536]{0}', space=vmem, size = 0x10000, scoped, tag = 'input window, operand 21, single buffered']
    #allocation35 [shape = 'u8[65536]{0}', space=vmem, size = 0x10000, scoped, tag = 'input window, operand 22, single buffered']
    #allocation36 [shape = 's32[1]{0}', space=sflag, size = 0x4, scoped, tag = 'scoped memory for forward.1']
    #allocation37 [shape = 'u8[65536]{0}', space=vmem, size = 0x10000, scoped, tag = 'input window, operand 23, single buffered']
    #allocation38 [shape = 'u8[65536]{0}', space=vmem, size = 0x10000, scoped, tag = 'input window, operand 24, single buffered']
    #allocation39 [shape = 's32[1]{0}', space=sflag, size = 0x4, scoped, tag = 'scoped memory for forward.1']
    #allocation40 [shape = 'u8[4096]{0}', space=vmem, size = 0x1000, scoped, tag = 'output window, operand 0']
    %66 = vsyncpa [#allocation3], 0
    %s67 = scalar_lea.sflag [#allocation3], 1
    %68 = vsyncpa %s67, 0
    %69 = vsyncpa [#allocation6], 0
    %70 = vsyncpa [#allocation9], 0
    %71 = vsyncpa [#allocation12], 0
    %72 = vsyncpa [#allocation15], 0
    %73 = vsyncpa [#allocation18], 0
    %74 = vsyncpa [#allocation21], 0
    %75 = vsyncpa [#allocation24], 0
    %76 = vsyncpa [#allocation27], 0
    %77 = vsyncpa [#allocation30], 0
    %78 = vsyncpa [#allocation33], 0
    %79 = vsyncpa [#allocation36], 0
    %80 = vsyncpa [#allocation39], 0
    %81 = vsyncpa [#allocation4], 0
    %s82 = scalar_lea.sflag [#allocation4], 1
    %83 = vsyncpa %s82, 0
    loop: start=0, step=1, limit=4
    $region2: #{forward.1} parent=1 // loop_pre_header
      _
    $region3: #{forward.1} parent=1 // loop_header
      %s85 = sphi 0, %s89
      %p86 = scmp.ge.s32.totalorder %s85, 4
      %s95 = sphi 0, %s97
      %s98 = sphi 0, %s95
      %s99 = sphi 0, %s98
      %s115 = sphi 0, %s99
      %s119 = sphi 0, %s119
      %s121 = sphi 0, %s119
      %s122 = sphi 0, %s121
      %s136 = sphi 0, %s122
      %s140 = sphi 0, %s140
      %s142 = sphi 0, %s140
      %s143 = sphi 0, %s142
      %s157 = sphi 0, %s143
      %s161 = sphi 0, %s161
      %s163 = sphi 0, %s161
      %s164 = sphi 0, %s163
      %s178 = sphi 0, %s164
      %s182 = sphi 0, %s182
      %s184 = sphi 0, %s182
      %s185 = sphi 0, %s184
      %s199 = sphi 0, %s185
      %s203 = sphi 0, %s203
      %s205 = sphi 0, %s203
      %s206 = sphi 0, %s205
      %s220 = sphi 0, %s206
      %s224 = sphi 0, %s224
      %s226 = sphi 0, %s224
      %s227 = sphi 0, %s226
      %s241 = sphi 0, %s227
      %s245 = sphi 0, %s245
      %s247 = sphi 0, %s245
      %s248 = sphi 0, %s247
      %s262 = sphi 0, %s248
      %s266 = sphi 0, %s266
      %s268 = sphi 0, %s266
      %s269 = sphi 0, %s268
      %s283 = sphi 0, %s269
      %s287 = sphi 0, %s287
      %s289 = sphi 0, %s287
      %s290 = sphi 0, %s289
      %s304 = sphi 0, %s290
      %s308 = sphi 0, %s308
      %s310 = sphi 0, %s308
      %s311 = sphi 0, %s310
      %s325 = sphi 0, %s311
      %s329 = sphi 0, %s329
      %s331 = sphi 0, %s329
      %s332 = sphi 0, %s331
      %s346 = sphi 0, %s332
      %s350 = sphi 0, %s350
      %s352 = sphi 0, %s350
      %s353 = sphi 0, %s352
      %s367 = sphi 0, %s353
      %s371 = sphi 0, %s371
      %s373 = sphi 0, %s371
      %s374 = sphi 0, %s373
      %s388 = sphi 0, %s374
      %s392 = sphi 0, %s392
      %s394 = sphi 0, %s392
      %s395 = sphi 0, %s394
      %s409 = sphi 0, %s395
      %s413 = sphi 0, %s413
      %s415 = sphi 0, %s413
      %s416 = sphi 0, %s415
      %s430 = sphi 0, %s416
      %s434 = sphi 0, %s434
      %s436 = sphi 0, %s434
      %s437 = sphi 0, %s436
      %s451 = sphi 0, %s437
      %s455 = sphi 0, %s455
      %s457 = sphi 0, %s455
      %s458 = sphi 0, %s457
      %s472 = sphi 0, %s458
      %s476 = sphi 0, %s476
      %s478 = sphi 0, %s476
      %s479 = sphi 0, %s478
      %s493 = sphi 0, %s479
      %s497 = sphi 0, %s497
      %s499 = sphi 0, %s497
      %s500 = sphi 0, %s499
      %s514 = sphi 0, %s500
      %s518 = sphi 0, %s518
      %s520 = sphi 0, %s518
      %s521 = sphi 0, %s520
      %s535 = sphi 0, %s521
      %s539 = sphi 0, %s539
      %s541 = sphi 0, %s539
      %s542 = sphi 0, %s541
      %s556 = sphi 0, %s542
      %s560 = sphi 0, %s560
      %s562 = sphi 0, %s560
      %s563 = sphi 0, %s562
      %s577 = sphi 0, %s563
      %s581 = sphi 0, %s581
      %s583 = sphi 0, %s581
      %s584 = sphi 0, %s583
      %s598 = sphi 0, %s584
      %s602 = sphi 0, %s602
      %s604 = sphi 0, %s602
      %s605 = sphi 0, %s604
      %s619 = sphi 0, %s605
      %s623 = sphi 0, %s623
      %s625 = sphi 0, %s623
      %s626 = sphi 0, %s625
      %s640 = sphi 0, %s626
      %s644 = sphi 0, %s644
      %s646 = sphi 0, %s644
      %s647 = sphi 0, %s646
      %s661 = sphi 0, %s647
      %s665 = sphi 0, %s665
      %s667 = sphi 0, %s665
      %s668 = sphi 0, %s667
      %s682 = sphi 0, %s668
      %s686 = sphi 0, %s686
      %s688 = sphi 0, %s686
      %s689 = sphi 0, %s688
      %s703 = sphi 0, %s689
      %s707 = sphi 0, %s707
      %s709 = sphi 0, %s707
      %s710 = sphi 0, %s709
      %s724 = sphi 0, %s710
      %s730 = sphi 0, %s732
      %s733 = sphi 0, %s730
      %s734 = sphi 0, %s733
      %s750 = sphi 0, %s734
    $region4: #{forward.1} parent=1 // loop_header_branch
      %88 = sbr.rel (%p86) target = $region8
    $region5: #{forward.1} parent=1 // loop_body
      %s90 = ssub.s32 %s85, 1
      %s91 = ssub.s32 %s85, 2
      %s92 = sadd.s32 %s85, 1
      %s93 = ssub.s32 %s85, %s92
      %p94 = scmp.eq.s32.totalorder %s93, 0
      %s96 = sadd.s32 %s95, 1
      %s97 = scalar_select %p94, %s95, %s96
      %p100 = pneg %p94
      %p101 = scmp.eq.s32.totalorder %s85, 1
      %p102 = por %p100, %p101
      %p103 = scmp.ne.s32.totalorder %s95, %s98
      %p104 = scmp.eq.s32.totalorder %s85, 0
      %p105 = por %p103, %p104
      %p106 = scmp.ne.s32.totalorder %s95, %s98
      %p107 = scmp.eq.s32.totalorder %s90, 1
      %p108 = por %p106, %p107
      %p109 = scmp.ne.s32.totalorder %s98, %s99
      %p110 = scmp.eq.s32.totalorder %s90, 0
      %p111 = por %p109, %p110
      %p112 = scmp.ne.s32.totalorder %s98, %s99
      %p113 = scmp.eq.s32.totalorder %s91, 1
      %p114 = por %p112, %p113
      %p116 = scmp.ne.s32.totalorder %s99, %s115
      %p117 = scmp.eq.s32.totalorder %s91, 0
      %p118 = por %p116, %p117
      %s120 = sadd.s32 %s119, 1
      %p123 = scmp.eq.s32.totalorder %s85, 1
      %p124 = scmp.ne.s32.totalorder %s119, %s121
      %p125 = scmp.eq.s32.totalorder %s85, 0
      %p126 = por %p124, %p125
      %p127 = scmp.ne.s32.totalorder %s119, %s121
      %p128 = scmp.eq.s32.totalorder %s90, 1
      %p129 = por %p127, %p128
      %p130 = scmp.ne.s32.totalorder %s121, %s122
      %p131 = scmp.eq.s32.totalorder %s90, 0
      %p132 = por %p130, %p131
      %p133 = scmp.ne.s32.totalorder %s121, %s122
      %p134 = scmp.eq.s32.totalorder %s91, 1
      %p135 = por %p133, %p134
      %p137 = scmp.ne.s32.totalorder %s122, %s136
      %p138 = scmp.eq.s32.totalorder %s91, 0
      %p139 = por %p137, %p138
      %s141 = sadd.s32 %s140, 1
      %p144 = scmp.eq.s32.totalorder %s85, 1
      %p145 = scmp.ne.s32.totalorder %s140, %s142
      %p146 = scmp.eq.s32.totalorder %s85, 0
      %p147 = por %p145, %p146
      %p148 = scmp.ne.s32.totalorder %s140, %s142
      %p149 = scmp.eq.s32.totalorder %s90, 1
      %p150 = por %p148, %p149
      %p151 = scmp.ne.s32.totalorder %s142, %s143
      %p152 = scmp.eq.s32.totalorder %s90, 0
      %p153 = por %p151, %p152
      %p154 = scmp.ne.s32.totalorder %s142, %s143
      %p155 = scmp.eq.s32.totalorder %s91, 1
      %p156 = por %p154, %p155
      %p158 = scmp.ne.s32.totalorder %s143, %s157
      %p159 = scmp.eq.s32.totalorder %s91, 0
      %p160 = por %p158, %p159
      %s162 = sadd.s32 %s161, 1
      %p165 = scmp.eq.s32.totalorder %s85, 1
      %p166 = scmp.ne.s32.totalorder %s161, %s163
      %p167 = scmp.eq.s32.totalorder %s85, 0
      %p168 = por %p166, %p167
      %p169 = scmp.ne.s32.totalorder %s161, %s163
      %p170 = scmp.eq.s32.totalorder %s90, 1
      %p171 = por %p169, %p170
      %p172 = scmp.ne.s32.totalorder %s163, %s164
      %p173 = scmp.eq.s32.totalorder %s90, 0
      %p174 = por %p172, %p173
      %p175 = scmp.ne.s32.totalorder %s163, %s164
      %p176 = scmp.eq.s32.totalorder %s91, 1
      %p177 = por %p175, %p176
      %p179 = scmp.ne.s32.totalorder %s164, %s178
      %p180 = scmp.eq.s32.totalorder %s91, 0
      %p181 = por %p179, %p180
      %s183 = sadd.s32 %s182, 1
      %p186 = scmp.eq.s32.totalorder %s85, 1
      %p187 = scmp.ne.s32.totalorder %s182, %s184
      %p188 = scmp.eq.s32.totalorder %s85, 0
      %p189 = por %p187, %p188
      %p190 = scmp.ne.s32.totalorder %s182, %s184
      %p191 = scmp.eq.s32.totalorder %s90, 1
      %p192 = por %p190, %p191
      %p193 = scmp.ne.s32.totalorder %s184, %s185
      %p194 = scmp.eq.s32.totalorder %s90, 0
      %p195 = por %p193, %p194
      %p196 = scmp.ne.s32.totalorder %s184, %s185
      %p197 = scmp.eq.s32.totalorder %s91, 1
      %p198 = por %p196, %p197
      %p200 = scmp.ne.s32.totalorder %s185, %s199
      %p201 = scmp.eq.s32.totalorder %s91, 0
      %p202 = por %p200, %p201
      %s204 = sadd.s32 %s203, 1
      %p207 = scmp.eq.s32.totalorder %s85, 1
      %p208 = scmp.ne.s32.totalorder %s203, %s205
      %p209 = scmp.eq.s32.totalorder %s85, 0
      %p210 = por %p208, %p209
      %p211 = scmp.ne.s32.totalorder %s203, %s205
      %p212 = scmp.eq.s32.totalorder %s90, 1
      %p213 = por %p211, %p212
      %p214 = scmp.ne.s32.totalorder %s205, %s206
      %p215 = scmp.eq.s32.totalorder %s90, 0
      %p216 = por %p214, %p215
      %p217 = scmp.ne.s32.totalorder %s205, %s206
      %p218 = scmp.eq.s32.totalorder %s91, 1
      %p219 = por %p217, %p218
      %p221 = scmp.ne.s32.totalorder %s206, %s220
      %p222 = scmp.eq.s32.totalorder %s91, 0
      %p223 = por %p221, %p222
      %s225 = sadd.s32 %s224, 1
      %p228 = scmp.eq.s32.totalorder %s85, 1
      %p229 = scmp.ne.s32.totalorder %s224, %s226
      %p230 = scmp.eq.s32.totalorder %s85, 0
      %p231 = por %p229, %p230
      %p232 = scmp.ne.s32.totalorder %s224, %s226
      %p233 = scmp.eq.s32.totalorder %s90, 1
      %p234 = por %p232, %p233
      %p235 = scmp.ne.s32.totalorder %s226, %s227
      %p236 = scmp.eq.s32.totalorder %s90, 0
      %p237 = por %p235, %p236
      %p238 = scmp.ne.s32.totalorder %s226, %s227
      %p239 = scmp.eq.s32.totalorder %s91, 1
      %p240 = por %p238, %p239
      %p242 = scmp.ne.s32.totalorder %s227, %s241
      %p243 = scmp.eq.s32.totalorder %s91, 0
      %p244 = por %p242, %p243
      %s246 = sadd.s32 %s245, 1
      %p249 = scmp.eq.s32.totalorder %s85, 1
      %p250 = scmp.ne.s32.totalorder %s245, %s247
      %p251 = scmp.eq.s32.totalorder %s85, 0
      %p252 = por %p250, %p251
      %p253 = scmp.ne.s32.totalorder %s245, %s247
      %p254 = scmp.eq.s32.totalorder %s90, 1
      %p255 = por %p253, %p254
      %p256 = scmp.ne.s32.totalorder %s247, %s248
      %p257 = scmp.eq.s32.totalorder %s90, 0
      %p258 = por %p256, %p257
      %p259 = scmp.ne.s32.totalorder %s247, %s248
      %p260 = scmp.eq.s32.totalorder %s91, 1
      %p261 = por %p259, %p260
      %p263 = scmp.ne.s32.totalorder %s248, %s262
      %p264 = scmp.eq.s32.totalorder %s91, 0
      %p265 = por %p263, %p264
      %s267 = sadd.s32 %s266, 1
      %p270 = scmp.eq.s32.totalorder %s85, 1
      %p271 = scmp.ne.s32.totalorder %s266, %s268
      %p272 = scmp.eq.s32.totalorder %s85, 0
      %p273 = por %p271, %p272
      %p274 = scmp.ne.s32.totalorder %s266, %s268
      %p275 = scmp.eq.s32.totalorder %s90, 1
      %p276 = por %p274, %p275
      %p277 = scmp.ne.s32.totalorder %s268, %s269
      %p278 = scmp.eq.s32.totalorder %s90, 0
      %p279 = por %p277, %p278
      %p280 = scmp.ne.s32.totalorder %s268, %s269
      %p281 = scmp.eq.s32.totalorder %s91, 1
      %p282 = por %p280, %p281
      %p284 = scmp.ne.s32.totalorder %s269, %s283
      %p285 = scmp.eq.s32.totalorder %s91, 0
      %p286 = por %p284, %p285
      %s288 = sadd.s32 %s287, 1
      %p291 = scmp.eq.s32.totalorder %s85, 1
      %p292 = scmp.ne.s32.totalorder %s287, %s289
      %p293 = scmp.eq.s32.totalorder %s85, 0
      %p294 = por %p292, %p293
      %p295 = scmp.ne.s32.totalorder %s287, %s289
      %p296 = scmp.eq.s32.totalorder %s90, 1
      %p297 = por %p295, %p296
      %p298 = scmp.ne.s32.totalorder %s289, %s290
      %p299 = scmp.eq.s32.totalorder %s90, 0
      %p300 = por %p298, %p299
      %p301 = scmp.ne.s32.totalorder %s289, %s290
      %p302 = scmp.eq.s32.totalorder %s91, 1
      %p303 = por %p301, %p302
      %p305 = scmp.ne.s32.totalorder %s290, %s304
      %p306 = scmp.eq.s32.totalorder %s91, 0
      %p307 = por %p305, %p306
      %s309 = sadd.s32 %s308, 1
      %p312 = scmp.eq.s32.totalorder %s85, 1
      %p313 = scmp.ne.s32.totalorder %s308, %s310
      %p314 = scmp.eq.s32.totalorder %s85, 0
      %p315 = por %p313, %p314
      %p316 = scmp.ne.s32.totalorder %s308, %s310
      %p317 = scmp.eq.s32.totalorder %s90, 1
      %p318 = por %p316, %p317
      %p319 = scmp.ne.s32.totalorder %s310, %s311
      %p320 = scmp.eq.s32.totalorder %s90, 0
      %p321 = por %p319, %p320
      %p322 = scmp.ne.s32.totalorder %s310, %s311
      %p323 = scmp.eq.s32.totalorder %s91, 1
      %p324 = por %p322, %p323
      %p326 = scmp.ne.s32.totalorder %s311, %s325
      %p327 = scmp.eq.s32.totalorder %s91, 0
      %p328 = por %p326, %p327
      %s330 = sadd.s32 %s329, 1
      %p333 = scmp.eq.s32.totalorder %s85, 1
      %p334 = scmp.ne.s32.totalorder %s329, %s331
      %p335 = scmp.eq.s32.totalorder %s85, 0
      %p336 = por %p334, %p335
      %p337 = scmp.ne.s32.totalorder %s329, %s331
      %p338 = scmp.eq.s32.totalorder %s90, 1
      %p339 = por %p337, %p338
      %p340 = scmp.ne.s32.totalorder %s331, %s332
      %p341 = scmp.eq.s32.totalorder %s90, 0
      %p342 = por %p340, %p341
      %p343 = scmp.ne.s32.totalorder %s331, %s332
      %p344 = scmp.eq.s32.totalorder %s91, 1
      %p345 = por %p343, %p344
      %p347 = scmp.ne.s32.totalorder %s332, %s346
      %p348 = scmp.eq.s32.totalorder %s91, 0
      %p349 = por %p347, %p348
      %s351 = sadd.s32 %s350, 1
      %p354 = scmp.eq.s32.totalorder %s85, 1
      %p355 = scmp.ne.s32.totalorder %s350, %s352
      %p356 = scmp.eq.s32.totalorder %s85, 0
      %p357 = por %p355, %p356
      %p358 = scmp.ne.s32.totalorder %s350, %s352
      %p359 = scmp.eq.s32.totalorder %s90, 1
      %p360 = por %p358, %p359
      %p361 = scmp.ne.s32.totalorder %s352, %s353
      %p362 = scmp.eq.s32.totalorder %s90, 0
      %p363 = por %p361, %p362
      %p364 = scmp.ne.s32.totalorder %s352, %s353
      %p365 = scmp.eq.s32.totalorder %s91, 1
      %p366 = por %p364, %p365
      %p368 = scmp.ne.s32.totalorder %s353, %s367
      %p369 = scmp.eq.s32.totalorder %s91, 0
      %p370 = por %p368, %p369
      %s372 = sadd.s32 %s371, 1
      %p375 = scmp.eq.s32.totalorder %s85, 1
      %p376 = scmp.ne.s32.totalorder %s371, %s373
      %p377 = scmp.eq.s32.totalorder %s85, 0
      %p378 = por %p376, %p377
      %p379 = scmp.ne.s32.totalorder %s371, %s373
      %p380 = scmp.eq.s32.totalorder %s90, 1
      %p381 = por %p379, %p380
      %p382 = scmp.ne.s32.totalorder %s373, %s374
      %p383 = scmp.eq.s32.totalorder %s90, 0
      %p384 = por %p382, %p383
      %p385 = scmp.ne.s32.totalorder %s373, %s374
      %p386 = scmp.eq.s32.totalorder %s91, 1
      %p387 = por %p385, %p386
      %p389 = scmp.ne.s32.totalorder %s374, %s388
      %p390 = scmp.eq.s32.totalorder %s91, 0
      %p391 = por %p389, %p390
      %s393 = sadd.s32 %s392, 1
      %p396 = scmp.eq.s32.totalorder %s85, 1
      %p397 = scmp.ne.s32.totalorder %s392, %s394
      %p398 = scmp.eq.s32.totalorder %s85, 0
      %p399 = por %p397, %p398
      %p400 = scmp.ne.s32.totalorder %s392, %s394
      %p401 = scmp.eq.s32.totalorder %s90, 1
      %p402 = por %p400, %p401
      %p403 = scmp.ne.s32.totalorder %s394, %s395
      %p404 = scmp.eq.s32.totalorder %s90, 0
      %p405 = por %p403, %p404
      %p406 = scmp.ne.s32.totalorder %s394, %s395
      %p407 = scmp.eq.s32.totalorder %s91, 1
      %p408 = por %p406, %p407
      %p410 = scmp.ne.s32.totalorder %s395, %s409
      %p411 = scmp.eq.s32.totalorder %s91, 0
      %p412 = por %p410, %p411
      %s414 = sadd.s32 %s413, 1
      %p417 = scmp.eq.s32.totalorder %s85, 1
      %p418 = scmp.ne.s32.totalorder %s413, %s415
      %p419 = scmp.eq.s32.totalorder %s85, 0
      %p420 = por %p418, %p419
      %p421 = scmp.ne.s32.totalorder %s413, %s415
      %p422 = scmp.eq.s32.totalorder %s90, 1
      %p423 = por %p421, %p422
      %p424 = scmp.ne.s32.totalorder %s415, %s416
      %p425 = scmp.eq.s32.totalorder %s90, 0
      %p426 = por %p424, %p425
      %p427 = scmp.ne.s32.totalorder %s415, %s416
      %p428 = scmp.eq.s32.totalorder %s91, 1
      %p429 = por %p427, %p428
      %p431 = scmp.ne.s32.totalorder %s416, %s430
      %p432 = scmp.eq.s32.totalorder %s91, 0
      %p433 = por %p431, %p432
      %s435 = sadd.s32 %s434, 1
      %p438 = scmp.eq.s32.totalorder %s85, 1
      %p439 = scmp.ne.s32.totalorder %s434, %s436
      %p440 = scmp.eq.s32.totalorder %s85, 0
      %p441 = por %p439, %p440
      %p442 = scmp.ne.s32.totalorder %s434, %s436
      %p443 = scmp.eq.s32.totalorder %s90, 1
      %p444 = por %p442, %p443
      %p445 = scmp.ne.s32.totalorder %s436, %s437
      %p446 = scmp.eq.s32.totalorder %s90, 0
      %p447 = por %p445, %p446
      %p448 = scmp.ne.s32.totalorder %s436, %s437
      %p449 = scmp.eq.s32.totalorder %s91, 1
      %p450 = por %p448, %p449
      %p452 = scmp.ne.s32.totalorder %s437, %s451
      %p453 = scmp.eq.s32.totalorder %s91, 0
      %p454 = por %p452, %p453
      %s456 = sadd.s32 %s455, 1
      %p459 = scmp.eq.s32.totalorder %s85, 1
      %p460 = scmp.ne.s32.totalorder %s455, %s457
      %p461 = scmp.eq.s32.totalorder %s85, 0
      %p462 = por %p460, %p461
      %p463 = scmp.ne.s32.totalorder %s455, %s457
      %p464 = scmp.eq.s32.totalorder %s90, 1
      %p465 = por %p463, %p464
      %p466 = scmp.ne.s32.totalorder %s457, %s458
      %p467 = scmp.eq.s32.totalorder %s90, 0
      %p468 = por %p466, %p467
      %p469 = scmp.ne.s32.totalorder %s457, %s458
      %p470 = scmp.eq.s32.totalorder %s91, 1
      %p471 = por %p469, %p470
      %p473 = scmp.ne.s32.totalorder %s458, %s472
      %p474 = scmp.eq.s32.totalorder %s91, 0
      %p475 = por %p473, %p474
      %s477 = sadd.s32 %s476, 1
      %p480 = scmp.eq.s32.totalorder %s85, 1
      %p481 = scmp.ne.s32.totalorder %s476, %s478
      %p482 = scmp.eq.s32.totalorder %s85, 0
      %p483 = por %p481, %p482
      %p484 = scmp.ne.s32.totalorder %s476, %s478
      %p485 = scmp.eq.s32.totalorder %s90, 1
      %p486 = por %p484, %p485
      %p487 = scmp.ne.s32.totalorder %s478, %s479
      %p488 = scmp.eq.s32.totalorder %s90, 0
      %p489 = por %p487, %p488
      %p490 = scmp.ne.s32.totalorder %s478, %s479
      %p491 = scmp.eq.s32.totalorder %s91, 1
      %p492 = por %p490, %p491
      %p494 = scmp.ne.s32.totalorder %s479, %s493
      %p495 = scmp.eq.s32.totalorder %s91, 0
      %p496 = por %p494, %p495
      %s498 = sadd.s32 %s497, 1
      %p501 = scmp.eq.s32.totalorder %s85, 1
      %p502 = scmp.ne.s32.totalorder %s497, %s499
      %p503 = scmp.eq.s32.totalorder %s85, 0
      %p504 = por %p502, %p503
      %p505 = scmp.ne.s32.totalorder %s497, %s499
      %p506 = scmp.eq.s32.totalorder %s90, 1
      %p507 = por %p505, %p506
      %p508 = scmp.ne.s32.totalorder %s499, %s500
      %p509 = scmp.eq.s32.totalorder %s90, 0
      %p510 = por %p508, %p509
      %p511 = scmp.ne.s32.totalorder %s499, %s500
      %p512 = scmp.eq.s32.totalorder %s91, 1
      %p513 = por %p511, %p512
      %p515 = scmp.ne.s32.totalorder %s500, %s514
      %p516 = scmp.eq.s32.totalorder %s91, 0
      %p517 = por %p515, %p516
      %s519 = sadd.s32 %s518, 1
      %p522 = scmp.eq.s32.totalorder %s85, 1
      %p523 = scmp.ne.s32.totalorder %s518, %s520
      %p524 = scmp.eq.s32.totalorder %s85, 0
      %p525 = por %p523, %p524
      %p526 = scmp.ne.s32.totalorder %s518, %s520
      %p527 = scmp.eq.s32.totalorder %s90, 1
      %p528 = por %p526, %p527
      %p529 = scmp.ne.s32.totalorder %s520, %s521
      %p530 = scmp.eq.s32.totalorder %s90, 0
      %p531 = por %p529, %p530
      %p532 = scmp.ne.s32.totalorder %s520, %s521
      %p533 = scmp.eq.s32.totalorder %s91, 1
      %p534 = por %p532, %p533
      %p536 = scmp.ne.s32.totalorder %s521, %s535
      %p537 = scmp.eq.s32.totalorder %s91, 0
      %p538 = por %p536, %p537
      %s540 = sadd.s32 %s539, 1
      %p543 = scmp.eq.s32.totalorder %s85, 1
      %p544 = scmp.ne.s32.totalorder %s539, %s541
      %p545 = scmp.eq.s32.totalorder %s85, 0
      %p546 = por %p544, %p545
      %p547 = scmp.ne.s32.totalorder %s539, %s541
      %p548 = scmp.eq.s32.totalorder %s90, 1
      %p549 = por %p547, %p548
      %p550 = scmp.ne.s32.totalorder %s541, %s542
      %p551 = scmp.eq.s32.totalorder %s90, 0
      %p552 = por %p550, %p551
      %p553 = scmp.ne.s32.totalorder %s541, %s542
      %p554 = scmp.eq.s32.totalorder %s91, 1
      %p555 = por %p553, %p554
      %p557 = scmp.ne.s32.totalorder %s542, %s556
      %p558 = scmp.eq.s32.totalorder %s91, 0
      %p559 = por %p557, %p558
      %s561 = sadd.s32 %s560, 1
      %p564 = scmp.eq.s32.totalorder %s85, 1
      %p565 = scmp.ne.s32.totalorder %s560, %s562
      %p566 = scmp.eq.s32.totalorder %s85, 0
      %p567 = por %p565, %p566
      %p568 = scmp.ne.s32.totalorder %s560, %s562
      %p569 = scmp.eq.s32.totalorder %s90, 1
      %p570 = por %p568, %p569
      %p571 = scmp.ne.s32.totalorder %s562, %s563
      %p572 = scmp.eq.s32.totalorder %s90, 0
      %p573 = por %p571, %p572
      %p574 = scmp.ne.s32.totalorder %s562, %s563
      %p575 = scmp.eq.s32.totalorder %s91, 1
      %p576 = por %p574, %p575
      %p578 = scmp.ne.s32.totalorder %s563, %s577
      %p579 = scmp.eq.s32.totalorder %s91, 0
      %p580 = por %p578, %p579
      %s582 = sadd.s32 %s581, 1
      %p585 = scmp.eq.s32.totalorder %s85, 1
      %p586 = scmp.ne.s32.totalorder %s581, %s583
      %p587 = scmp.eq.s32.totalorder %s85, 0
      %p588 = por %p586, %p587
      %p589 = scmp.ne.s32.totalorder %s581, %s583
      %p590 = scmp.eq.s32.totalorder %s90, 1
      %p591 = por %p589, %p590
      %p592 = scmp.ne.s32.totalorder %s583, %s584
      %p593 = scmp.eq.s32.totalorder %s90, 0
      %p594 = por %p592, %p593
      %p595 = scmp.ne.s32.totalorder %s583, %s584
      %p596 = scmp.eq.s32.totalorder %s91, 1
      %p597 = por %p595, %p596
      %p599 = scmp.ne.s32.totalorder %s584, %s598
      %p600 = scmp.eq.s32.totalorder %s91, 0
      %p601 = por %p599, %p600
      %s603 = sadd.s32 %s602, 1
      %p606 = scmp.eq.s32.totalorder %s85, 1
      %p607 = scmp.ne.s32.totalorder %s602, %s604
      %p608 = scmp.eq.s32.totalorder %s85, 0
      %p609 = por %p607, %p608
      %p610 = scmp.ne.s32.totalorder %s602, %s604
      %p611 = scmp.eq.s32.totalorder %s90, 1
      %p612 = por %p610, %p611
      %p613 = scmp.ne.s32.totalorder %s604, %s605
      %p614 = scmp.eq.s32.totalorder %s90, 0
      %p615 = por %p613, %p614
      %p616 = scmp.ne.s32.totalorder %s604, %s605
      %p617 = scmp.eq.s32.totalorder %s91, 1
      %p618 = por %p616, %p617
      %p620 = scmp.ne.s32.totalorder %s605, %s619
      %p621 = scmp.eq.s32.totalorder %s91, 0
      %p622 = por %p620, %p621
      %s624 = sadd.s32 %s623, 1
      %p627 = scmp.eq.s32.totalorder %s85, 1
      %p628 = scmp.ne.s32.totalorder %s623, %s625
      %p629 = scmp.eq.s32.totalorder %s85, 0
      %p630 = por %p628, %p629
      %p631 = scmp.ne.s32.totalorder %s623, %s625
      %p632 = scmp.eq.s32.totalorder %s90, 1
      %p633 = por %p631, %p632
      %p634 = scmp.ne.s32.totalorder %s625, %s626
      %p635 = scmp.eq.s32.totalorder %s90, 0
      %p636 = por %p634, %p635
      %p637 = scmp.ne.s32.totalorder %s625, %s626
      %p638 = scmp.eq.s32.totalorder %s91, 1
      %p639 = por %p637, %p638
      %p641 = scmp.ne.s32.totalorder %s626, %s640
      %p642 = scmp.eq.s32.totalorder %s91, 0
      %p643 = por %p641, %p642
      %s645 = sadd.s32 %s644, 1
      %p648 = scmp.eq.s32.totalorder %s85, 1
      %p649 = scmp.ne.s32.totalorder %s644, %s646
      %p650 = scmp.eq.s32.totalorder %s85, 0
      %p651 = por %p649, %p650
      %p652 = scmp.ne.s32.totalorder %s644, %s646
      %p653 = scmp.eq.s32.totalorder %s90, 1
      %p654 = por %p652, %p653
      %p655 = scmp.ne.s32.totalorder %s646, %s647
      %p656 = scmp.eq.s32.totalorder %s90, 0
      %p657 = por %p655, %p656
      %p658 = scmp.ne.s32.totalorder %s646, %s647
      %p659 = scmp.eq.s32.totalorder %s91, 1
      %p660 = por %p658, %p659
      %p662 = scmp.ne.s32.totalorder %s647, %s661
      %p663 = scmp.eq.s32.totalorder %s91, 0
      %p664 = por %p662, %p663
      %s666 = sadd.s32 %s665, 1
      %p669 = scmp.eq.s32.totalorder %s85, 1
      %p670 = scmp.ne.s32.totalorder %s665, %s667
      %p671 = scmp.eq.s32.totalorder %s85, 0
      %p672 = por %p670, %p671
      %p673 = scmp.ne.s32.totalorder %s665, %s667
      %p674 = scmp.eq.s32.totalorder %s90, 1
      %p675 = por %p673, %p674
      %p676 = scmp.ne.s32.totalorder %s667, %s668
      %p677 = scmp.eq.s32.totalorder %s90, 0
      %p678 = por %p676, %p677
      %p679 = scmp.ne.s32.totalorder %s667, %s668
      %p680 = scmp.eq.s32.totalorder %s91, 1
      %p681 = por %p679, %p680
      %p683 = scmp.ne.s32.totalorder %s668, %s682
      %p684 = scmp.eq.s32.totalorder %s91, 0
      %p685 = por %p683, %p684
      %s687 = sadd.s32 %s686, 1
      %p690 = scmp.eq.s32.totalorder %s85, 1
      %p691 = scmp.ne.s32.totalorder %s686, %s688
      %p692 = scmp.eq.s32.totalorder %s85, 0
      %p693 = por %p691, %p692
      %p694 = scmp.ne.s32.totalorder %s686, %s688
      %p695 = scmp.eq.s32.totalorder %s90, 1
      %p696 = por %p694, %p695
      %p697 = scmp.ne.s32.totalorder %s688, %s689
      %p698 = scmp.eq.s32.totalorder %s90, 0
      %p699 = por %p697, %p698
      %p700 = scmp.ne.s32.totalorder %s688, %s689
      %p701 = scmp.eq.s32.totalorder %s91, 1
      %p702 = por %p700, %p701
      %p704 = scmp.ne.s32.totalorder %s689, %s703
      %p705 = scmp.eq.s32.totalorder %s91, 0
      %p706 = por %p704, %p705
      %s708 = sadd.s32 %s707, 1
      %p711 = scmp.eq.s32.totalorder %s85, 1
      %p712 = scmp.ne.s32.totalorder %s707, %s709
      %p713 = scmp.eq.s32.totalorder %s85, 0
      %p714 = por %p712, %p713
      %p715 = scmp.ne.s32.totalorder %s707, %s709
      %p716 = scmp.eq.s32.totalorder %s90, 1
      %p717 = por %p715, %p716
      %p718 = scmp.ne.s32.totalorder %s709, %s710
      %p719 = scmp.eq.s32.totalorder %s90, 0
      %p720 = por %p718, %p719
      %p721 = scmp.ne.s32.totalorder %s709, %s710
      %p722 = scmp.eq.s32.totalorder %s91, 1
      %p723 = por %p721, %p722
      %p725 = scmp.ne.s32.totalorder %s710, %s724
      %p726 = scmp.eq.s32.totalorder %s91, 0
      %p727 = por %p725, %p726
      %s728 = ssub.s32 %s85, %s92
      %p729 = scmp.eq.s32.totalorder %s728, 0
      %s731 = sadd.s32 %s730, 1
      %s732 = scalar_select %p729, %s730, %s731
      %p735 = pneg %p729
      %p736 = scmp.eq.s32.totalorder %s85, 1
      %p737 = por %p735, %p736
      %p738 = scmp.ne.s32.totalorder %s730, %s733
      %p739 = scmp.eq.s32.totalorder %s85, 0
      %p740 = por %p738, %p739
      %p741 = scmp.ne.s32.totalorder %s730, %s733
      %p742 = scmp.eq.s32.totalorder %s90, 1
      %p743 = por %p741, %p742
      %p744 = scmp.ne.s32.totalorder %s733, %s734
      %p745 = scmp.eq.s32.totalorder %s90, 0
      %p746 = por %p744, %p745
      %p747 = scmp.ne.s32.totalorder %s733, %s734
      %p748 = scmp.eq.s32.totalorder %s91, 1
      %p749 = por %p747, %p748
      %p751 = scmp.ne.s32.totalorder %s734, %s750
      %p752 = scmp.eq.s32.totalorder %s91, 0
      %p753 = por %p751, %p752
      %p754 = scmp.le.s32.totalorder 1, %s85
      %p755 = scmp.lt.s32.totalorder %s85, 3
      %p756 = pnand %p754, %p755
      %p757 = pneg %p756
      // Predicated region
      $region9: #{forward.1} parent=5 // pred_check
        _
      $region10: #{forward.1} parent=5 // pred_check_branch
        %759 = sbr.rel (%p756) target = $region12
      $region11: #{forward.1} parent=5 // pred_region
        %s760 = ssub.s32 %s85, 1
        // Predicated region
        $region13: #{forward.1} parent=11 // pred_check
          %p761 = pneg %p132
        $region14: #{forward.1} parent=11 // pred_check_branch
          %763 = sbr.rel (%p761) target = $region16
        $region15: #{forward.1} parent=11 // pred_region
          %s765 = ssub.s32 256, 256
          %766 = vsyncadd [#allocation6], %s765
          %s767 = sshll.u32 [#allocation5], 4
          %s768 = int_to_ptr.vmem [resolvable:$true] %s767
          %773 = dma.hbm_to_vmem [thread:$0]  %s3, 256, %s768, [#allocation6], 128, 128, 8
        $region16: #{forward.1} parent=11 // pred_fallthru
          _
        // Predicated region
        $region17: #{forward.1} parent=11 // pred_check
          %p774 = pneg %p153
        $region18: #{forward.1} parent=11 // pred_check_branch
          %776 = sbr.rel (%p774) target = $region20
        $region19: #{forward.1} parent=11 // pred_region
          %s778 = ssub.s32 256, 256
          %779 = vsyncadd [#allocation6], %s778
          %s780 = sshll.u32 [#allocation7], 4
          %s781 = int_to_ptr.vmem [resolvable:$true] %s780
          %786 = dma.hbm_to_vmem [thread:$0]  %s5, 256, %s781, [#allocation6], 128, 128, 8
        $region20: #{forward.1} parent=11 // pred_fallthru
          _
        // Predicated region
        $region21: #{forward.1} parent=11 // pred_check
          %p787 = pneg %p174
        $region22: #{forward.1} parent=11 // pred_check_branch
          %789 = sbr.rel (%p787) target = $region24
        $region23: #{forward.1} parent=11 // pred_region
          %s791 = ssub.s32 256, 256
          %792 = vsyncadd [#allocation9], %s791
          %s793 = sshll.u32 [#allocation8], 4
          %s794 = int_to_ptr.vmem [resolvable:$true] %s793
          %799 = dma.hbm_to_vmem [thread:$0]  %s7, 256, %s794, [#allocation9], 128, 128, 8
        $region24: #{forward.1} parent=11 // pred_fallthru
          _
        // Predicated region
        $region25: #{forward.1} parent=11 // pred_check
          %p800 = pneg %p195
        $region26: #{forward.1} parent=11 // pred_check_branch
          %802 = sbr.rel (%p800) target = $region28
        $region27: #{forward.1} parent=11 // pred_region
          %s804 = ssub.s32 128, 128
          %805 = vsyncadd [#allocation9], %s804
          %s807 = sshll.u32 [#allocation10], 4
          %s808 = int_to_ptr.vmem [resolvable:$true] %s807
          %810 = dma.hbm_to_vmem [thread:$0]  %s9, 128, %s808, [#allocation9]
        $region28: #{forward.1} parent=11 // pred_fallthru
          _
        // Predicated region
        $region29: #{forward.1} parent=11 // pred_check
          %p811 = pneg %p216
        $region30: #{forward.1} parent=11 // pred_check_branch
          %813 = sbr.rel (%p811) target = $region32
        $region31: #{forward.1} parent=11 // pred_region
          %s815 = ssub.s32 128, 128
          %816 = vsyncadd [#allocation12], %s815
          %s818 = sshll.u32 [#allocation11], 4
          %s819 = int_to_ptr.vmem [resolvable:$true] %s818
          %821 = dma.hbm_to_vmem [thread:$0]  %s11, 128, %s819, [#allocation12]
        $region32: #{forward.1} parent=11 // pred_fallthru
          _
        // Predicated region
        $region33: #{forward.1} parent=11 // pred_check
          %p822 = pneg %p237
        $region34: #{forward.1} parent=11 // pred_check_branch
          %824 = sbr.rel (%p822) target = $region36
        $region35: #{forward.1} parent=11 // pred_region
          %s826 = ssub.s32 2048, 2048
          %827 = vsyncadd [#allocation12], %s826
          %s828 = sshll.u32 [#allocation13], 4
          %s829 = int_to_ptr.vmem [resolvable:$true] %s828
          %834 = dma.hbm_to_vmem [thread:$0]  %s13, 2048, %s829, [#allocation12], 128, 128, 8
        $region36: #{forward.1} parent=11 // pred_fallthru
          _
        // Predicated region
        $region37: #{forward.1} parent=11 // pred_check
          %p835 = pneg %p258
        $region38: #{forward.1} parent=11 // pred_check_branch
          %837 = sbr.rel (%p835) target = $region40
        $region39: #{forward.1} parent=11 // pred_region
          %s839 = ssub.s32 2048, 2048
          %840 = vsyncadd [#allocation15], %s839
          %s841 = sshll.u32 [#allocation14], 4
          %s842 = int_to_ptr.vmem [resolvable:$true] %s841
          %847 = dma.hbm_to_vmem [thread:$0]  %s15, 2048, %s842, [#allocation15], 128, 128, 8
        $region40: #{forward.1} parent=11 // pred_fallthru
          _
        // Predicated region
        $region41: #{forward.1} parent=11 // pred_check
          %p848 = pneg %p279
        $region42: #{forward.1} parent=11 // pred_check_branch
          %850 = sbr.rel (%p848) target = $region44
        $region43: #{forward.1} parent=11 // pred_region
          %s852 = ssub.s32 2048, 2048
          %853 = vsyncadd [#allocation15], %s852
          %s854 = sshll.u32 [#allocation16], 4
          %s855 = int_to_ptr.vmem [resolvable:$true] %s854
          %860 = dma.hbm_to_vmem [thread:$0]  %s17, 2048, %s855, [#allocation15], 128, 128, 8
        $region44: #{forward.1} parent=11 // pred_fallthru
          _
        // Predicated region
        $region45: #{forward.1} parent=11 // pred_check
          %p861 = pneg %p300
        $region46: #{forward.1} parent=11 // pred_check_branch
          %863 = sbr.rel (%p861) target = $region48
        $region47: #{forward.1} parent=11 // pred_region
          %s865 = ssub.s32 256, 256
          %866 = vsyncadd [#allocation18], %s865
          %s867 = sshll.u32 [#allocation17], 4
          %s868 = int_to_ptr.vmem [resolvable:$true] %s867
          %873 = dma.hbm_to_vmem [thread:$0]  %s19, 256, %s868, [#allocation18], 128, 128, 8
        $region48: #{forward.1} parent=11 // pred_fallthru
          _
        // Predicated region
        $region49: #{forward.1} parent=11 // pred_check
          %p874 = pneg %p321
        $region50: #{forward.1} parent=11 // pred_check_branch
          %876 = sbr.rel (%p874) target = $region52
        $region51: #{forward.1} parent=11 // pred_region
          %s878 = ssub.s32 16, 16
          %879 = vsyncadd [#allocation18], %s878
          %s881 = sshll.u32 [#allocation19], 4
          %s882 = int_to_ptr.vmem [resolvable:$true] %s881
          %884 = dma.hbm_to_vmem [thread:$0]  %s21, 16, %s882, [#allocation18]
        $region52: #{forward.1} parent=11 // pred_fallthru
          _
        // Predicated region
        $region53: #{forward.1} parent=11 // pred_check
          %p885 = pneg %p342
        $region54: #{forward.1} parent=11 // pred_check_branch
          %887 = sbr.rel (%p885) target = $region56
        $region55: #{forward.1} parent=11 // pred_region
          %s889 = ssub.s32 128, 128
          %890 = vsyncadd [#allocation21], %s889
          %s892 = sshll.u32 [#allocation20], 4
          %s893 = int_to_ptr.vmem [resolvable:$true] %s892
          %895 = dma.hbm_to_vmem [thread:$0]  %s23, 128, %s893, [#allocation21]
        $region56: #{forward.1} parent=11 // pred_fallthru
          _
        // Predicated region
        $region57: #{forward.1} parent=11 // pred_check
          %p896 = pneg %p363
        $region58: #{forward.1} parent=11 // pred_check_branch
          %898 = sbr.rel (%p896) target = $region60
        $region59: #{forward.1} parent=11 // pred_region
          %s900 = ssub.s32 16, 16
          %901 = vsyncadd [#allocation21], %s900
          %s903 = sshll.u32 [#allocation22], 4
          %s904 = int_to_ptr.vmem [resolvable:$true] %s903
          %906 = dma.hbm_to_vmem [thread:$0]  %s25, 16, %s904, [#allocation21]
        $region60: #{forward.1} parent=11 // pred_fallthru
          _
        // Predicated region
        $region61: #{forward.1} parent=11 // pred_check
          %p907 = pneg %p384
        $region62: #{forward.1} parent=11 // pred_check_branch
          %909 = sbr.rel (%p907) target = $region64
        $region63: #{forward.1} parent=11 // pred_region
          %s911 = ssub.s32 2048, 2048
          %912 = vsyncadd [#allocation24], %s911
          %s913 = sshll.u32 [#allocation23], 4
          %s914 = int_to_ptr.vmem [resolvable:$true] %s913
          %919 = dma.hbm_to_vmem [thread:$0]  %s27, 2048, %s914, [#allocation24], 128, 128, 8
        $region64: #{forward.1} parent=11 // pred_fallthru
          _
        // Predicated region
        $region65: #{forward.1} parent=11 // pred_check
          %p920 = pneg %p405
        $region66: #{forward.1} parent=11 // pred_check_branch
          %922 = sbr.rel (%p920) target = $region68
        $region67: #{forward.1} parent=11 // pred_region
          %s924 = ssub.s32 2048, 2048
          %925 = vsyncadd [#allocation24], %s924
          %s926 = sshll.u32 [#allocation25], 4
          %s927 = int_to_ptr.vmem [resolvable:$true] %s926
          %932 = dma.hbm_to_vmem [thread:$0]  %s29, 2048, %s927, [#allocation24], 128, 128, 8
        $region68: #{forward.1} parent=11 // pred_fallthru
          _
        // Predicated region
        $region69: #{forward.1} parent=11 // pred_check
          %p933 = pneg %p426
        $region70: #{forward.1} parent=11 // pred_check_branch
          %935 = sbr.rel (%p933) target = $region72
        $region71: #{forward.1} parent=11 // pred_region
          %s937 = ssub.s32 2048, 2048
          %938 = vsyncadd [#allocation27], %s937
          %s939 = sshll.u32 [#allocation26], 4
          %s940 = int_to_ptr.vmem [resolvable:$true] %s939
          %945 = dma.hbm_to_vmem [thread:$0]  %s31, 2048, %s940, [#allocation27], 128, 128, 8
        $region72: #{forward.1} parent=11 // pred_fallthru
          _
        // Predicated region
        $region73: #{forward.1} parent=11 // pred_check
          %p946 = pneg %p447
        $region74: #{forward.1} parent=11 // pred_check_branch
          %948 = sbr.rel (%p946) target = $region76
        $region75: #{forward.1} parent=11 // pred_region
          %s950 = ssub.s32 2048, 2048
          %951 = vsyncadd [#allocation27], %s950
          %s952 = sshll.u32 [#allocation28], 4
          %s953 = int_to_ptr.vmem [resolvable:$true] %s952
          %958 = dma.hbm_to_vmem [thread:$0]  %s33, 2048, %s953, [#allocation27], 128, 128, 8
        $region76: #{forward.1} parent=11 // pred_fallthru
          _
        // Predicated region
        $region77: #{forward.1} parent=11 // pred_check
          %p959 = pneg %p468
        $region78: #{forward.1} parent=11 // pred_check_branch
          %961 = sbr.rel (%p959) target = $region80
        $region79: #{forward.1} parent=11 // pred_region
          _
        $region80: #{forward.1} parent=11 // pred_fallthru
          _
        // Predicated region
        $region81: #{forward.1} parent=11 // pred_check
          %p962 = pneg %p489
        $region82: #{forward.1} parent=11 // pred_check_branch
          %964 = sbr.rel (%p962) target = $region84
        $region83: #{forward.1} parent=11 // pred_region
          %s966 = ssub.s32 16, 16
          %967 = vsyncadd [#allocation30], %s966
          %s969 = sshll.u32 [#allocation29], 4
          %s970 = int_to_ptr.vmem [resolvable:$true] %s969
          %972 = dma.hbm_to_vmem [thread:$0]  %s37, 16, %s970, [#allocation30]
        $region84: #{forward.1} parent=11 // pred_fallthru
          _
        // Predicated region
        $region85: #{forward.1} parent=11 // pred_check
          %p973 = pneg %p510
        $region86: #{forward.1} parent=11 // pred_check_branch
          %975 = sbr.rel (%p973) target = $region88
        $region87: #{forward.1} parent=11 // pred_region
          %s977 = ssub.s32 128, 128
          %978 = vsyncadd [#allocation30], %s977
          %s980 = sshll.u32 [#allocation31], 4
          %s981 = int_to_ptr.vmem [resolvable:$true] %s980
          %983 = dma.hbm_to_vmem [thread:$0]  %s39, 128, %s981, [#allocation30]
        $region88: #{forward.1} parent=11 // pred_fallthru
          _
        // Predicated region
        $region89: #{forward.1} parent=11 // pred_check
          %p984 = pneg %p531
        $region90: #{forward.1} parent=11 // pred_check_branch
          %986 = sbr.rel (%p984) target = $region92
        $region91: #{forward.1} parent=11 // pred_region
          %s988 = ssub.s32 16, 16
          %989 = vsyncadd [#allocation33], %s988
          %s991 = sshll.u32 [#allocation32], 4
          %s992 = int_to_ptr.vmem [resolvable:$true] %s991
          %994 = dma.hbm_to_vmem [thread:$0]  %s41, 16, %s992, [#allocation33]
        $region92: #{forward.1} parent=11 // pred_fallthru
          _
        // Predicated region
        $region93: #{forward.1} parent=11 // pred_check
          %p995 = pneg %p552
        $region94: #{forward.1} parent=11 // pred_check_branch
          %997 = sbr.rel (%p995) target = $region96
        $region95: #{forward.1} parent=11 // pred_region
          %s999 = ssub.s32 2048, 2048
          %1000 = vsyncadd [#allocation33], %s999
          %s1001 = sshll.u32 [#allocation34], 4
          %s1002 = int_to_ptr.vmem [resolvable:$true] %s1001
          %1007 = dma.hbm_to_vmem [thread:$0]  %s43, 2048, %s1002, [#allocation33], 128, 128, 8
        $region96: #{forward.1} parent=11 // pred_fallthru
          _
        // Predicated region
        $region97: #{forward.1} parent=11 // pred_check
          %p1008 = pneg %p573
        $region98: #{forward.1} parent=11 // pred_check_branch
          %1010 = sbr.rel (%p1008) target = $region100
        $region99: #{forward.1} parent=11 // pred_region
          %s1012 = ssub.s32 2048, 2048
          %1013 = vsyncadd [#allocation36], %s1012
          %s1014 = sshll.u32 [#allocation35], 4
          %s1015 = int_to_ptr.vmem [resolvable:$true] %s1014
          %1020 = dma.hbm_to_vmem [thread:$0]  %s45, 2048, %s1015, [#allocation36], 128, 128, 8
        $region100: #{forward.1} parent=11 // pred_fallthru
          _
        // Predicated region
        $region101: #{forward.1} parent=11 // pred_check
          %p1021 = pneg %p594
        $region102: #{forward.1} parent=11 // pred_check_branch
          %1023 = sbr.rel (%p1021) target = $region104
        $region103: #{forward.1} parent=11 // pred_region
          %s1025 = ssub.s32 2048, 2048
          %1026 = vsyncadd [#allocation36], %s1025
          %s1027 = sshll.u32 [#allocation37], 4
          %s1028 = int_to_ptr.vmem [resolvable:$true] %s1027
          %1033 = dma.hbm_to_vmem [thread:$0]  %s47, 2048, %s1028, [#allocation36], 128, 128, 8
        $region104: #{forward.1} parent=11 // pred_fallthru
          _
        // Predicated region
        $region105: #{forward.1} parent=11 // pred_check
          %p1034 = pneg %p615
        $region106: #{forward.1} parent=11 // pred_check_branch
          %1036 = sbr.rel (%p1034) target = $region108
        $region107: #{forward.1} parent=11 // pred_region
          %s1038 = ssub.s32 2048, 2048
          %1039 = vsyncadd [#allocation39], %s1038
          %s1040 = sshll.u32 [#allocation38], 4
          %s1041 = int_to_ptr.vmem [resolvable:$true] %s1040
          %1046 = dma.hbm_to_vmem [thread:$0]  %s49, 2048, %s1041, [#allocation39], 128, 128, 8
        $region108: #{forward.1} parent=11 // pred_fallthru
          _
        // Predicated region
        $region109: #{forward.1} parent=11 // pred_check
          %p1047 = pneg %p636
        $region110: #{forward.1} parent=11 // pred_check_branch
          %1049 = sbr.rel (%p1047) target = $region112
        $region111: #{forward.1} parent=11 // pred_region
          _
        $region112: #{forward.1} parent=11 // pred_fallthru
          _
        // Predicated region
        $region113: #{forward.1} parent=11 // pred_check
          %p1050 = pneg %p657
        $region114: #{forward.1} parent=11 // pred_check_branch
          %1052 = sbr.rel (%p1050) target = $region116
        $region115: #{forward.1} parent=11 // pred_region
          _
        $region116: #{forward.1} parent=11 // pred_fallthru
          _
        // Predicated region
        $region117: #{forward.1} parent=11 // pred_check
          %p1053 = pneg %p678
        $region118: #{forward.1} parent=11 // pred_check_branch
          %1055 = sbr.rel (%p1053) target = $region120
        $region119: #{forward.1} parent=11 // pred_region
          _
        $region120: #{forward.1} parent=11 // pred_fallthru
          _
        // Predicated region
        $region121: #{forward.1} parent=11 // pred_check
          %p1056 = pneg %p699
        $region122: #{forward.1} parent=11 // pred_check_branch
          %1058 = sbr.rel (%p1056) target = $region124
        $region123: #{forward.1} parent=11 // pred_region
          _
        $region124: #{forward.1} parent=11 // pred_fallthru
          _
        // Predicated region
        $region125: #{forward.1} parent=11 // pred_check
          %p1059 = pneg %p720
        $region126: #{forward.1} parent=11 // pred_check_branch
          %1061 = sbr.rel (%p1059) target = $region128
        $region127: #{forward.1} parent=11 // pred_region
          _
        $region128: #{forward.1} parent=11 // pred_fallthru
          _
      $region12: #{forward.1} parent=5 // pred_fallthru
        _
      %p1062 = scmp.lt.s32.totalorder %s85, 2
      // Predicated region
      $region129: #{forward.1} parent=5 // pred_check
        %p1063 = pneg %p1062
      $region130: #{forward.1} parent=5 // pred_check_branch
        %1065 = sbr.rel (%p1063) target = $region132
      $region131: #{forward.1} parent=5 // pred_region
        // Predicated region
        $region133: #{forward.1} parent=131 // pred_check
          %p1066 = pneg %p105
        $region134: #{forward.1} parent=131 // pred_check_branch
          %1068 = sbr.rel (%p1066) target = $region136
        $region135: #{forward.1} parent=131 // pred_region
          %s1069 = sand.u32 %s95, 1
          %s1070 = scalar_lea.sflag [#allocation3], %s1069
          %s1071 = sand.u32 %s95, 1
          %s1072 = smul.addr %s1071, 4
          %s1073 = scalar_lea.vmem [#allocation2], %s1072
          %s1075 = ssub.s32 64, 64
          %1076 = vsyncadd %s1070, %s1075
          %s1077 = smul.addr %s85, 64
          %s1078 = scalar_lea.hbm %s1, %s1077
          %s1080 = sshll.u32 %s1073, 4
          %s1081 = int_to_ptr.vmem [resolvable:$true] %s1080
          %1083 = dma.hbm_to_vmem [thread:$0]  %s1078, 64, %s1081, %s1070
        $region136: #{forward.1} parent=131 // pred_fallthru
          _
      $region132: #{forward.1} parent=5 // pred_fallthru
        _
      %p1084 = scmp.le.s32.totalorder 1, %s85
      %p1085 = scmp.lt.s32.totalorder %s85, 3
      %p1086 = pnand %p1084, %p1085
      %p1087 = pneg %p1086
      // Predicated region
      $region137: #{forward.1} parent=5 // pred_check
        _
      $region138: #{forward.1} parent=5 // pred_check_branch
        %1089 = sbr.rel (%p1086) target = $region140
      $region139: #{forward.1} parent=5 // pred_region
        %s1090 = ssub.s32 %s85, 1
        %s1091 = sand.u32 %s98, 1
        %s1092 = scalar_lea.sflag [#allocation3], %s1091
        %s1093 = sand.u32 %s98, 1
        %s1094 = smul.addr %s1093, 4
        %s1095 = scalar_lea.vmem [#allocation2], %s1094
        // Predicated region
        $region141: #{forward.1} parent=139 // pred_check
          %p1096 = pneg %p111
        $region142: #{forward.1} parent=139 // pred_check_branch
          %1098 = sbr.rel (%p1096) target = $region144
        $region143: #{forward.1} parent=139 // pred_region
          %1099 = dma.done %s1092, 64
        $region144: #{forward.1} parent=139 // pred_fallthru
          _
        // Predicated region
        $region145: #{forward.1} parent=139 // pred_check
          %p1100 = pneg %p132
        $region146: #{forward.1} parent=139 // pred_check_branch
          %1102 = sbr.rel (%p1100) target = $region148
        $region147: #{forward.1} parent=139 // pred_region
          %1103 = dma.done [#allocation6], 256
        $region148: #{forward.1} parent=139 // pred_fallthru
          _
        // Predicated region
        $region149: #{forward.1} parent=139 // pred_check
          %p1104 = pneg %p153
        $region150: #{forward.1} parent=139 // pred_check_branch
          %1106 = sbr.rel (%p1104) target = $region152
        $region151: #{forward.1} parent=139 // pred_region
          %1107 = dma.done [#allocation6], 256
        $region152: #{forward.1} parent=139 // pred_fallthru
          _
        // Predicated region
        $region153: #{forward.1} parent=139 // pred_check
          %p1108 = pneg %p174
        $region154: #{forward.1} parent=139 // pred_check_branch
          %1110 = sbr.rel (%p1108) target = $region156
        $region155: #{forward.1} parent=139 // pred_region
          %1111 = dma.done [#allocation9], 256
        $region156: #{forward.1} parent=139 // pred_fallthru
          _
        // Predicated region
        $region157: #{forward.1} parent=139 // pred_check
          %p1112 = pneg %p195
        $region158: #{forward.1} parent=139 // pred_check_branch
          %1114 = sbr.rel (%p1112) target = $region160
        $region159: #{forward.1} parent=139 // pred_region
          %1115 = dma.done [#allocation9], 128
        $region160: #{forward.1} parent=139 // pred_fallthru
          _
        // Predicated region
        $region161: #{forward.1} parent=139 // pred_check
          %p1116 = pneg %p216
        $region162: #{forward.1} parent=139 // pred_check_branch
          %1118 = sbr.rel (%p1116) target = $region164
        $region163: #{forward.1} parent=139 // pred_region
          %1119 = dma.done [#allocation12], 128
        $region164: #{forward.1} parent=139 // pred_fallthru
          _
        // Predicated region
        $region165: #{forward.1} parent=139 // pred_check
          %p1120 = pneg %p237
        $region166: #{forward.1} parent=139 // pred_check_branch
          %1122 = sbr.rel (%p1120) target = $region168
        $region167: #{forward.1} parent=139 // pred_region
          %1123 = dma.done [#allocation12], 2048
        $region168: #{forward.1} parent=139 // pred_fallthru
          _
        // Predicated region
        $region169: #{forward.1} parent=139 // pred_check
          %p1124 = pneg %p258
        $region170: #{forward.1} parent=139 // pred_check_branch
          %1126 = sbr.rel (%p1124) target = $region172
        $region171: #{forward.1} parent=139 // pred_region
          %1127 = dma.done [#allocation15], 2048
        $region172: #{forward.1} parent=139 // pred_fallthru
          _
        // Predicated region
        $region173: #{forward.1} parent=139 // pred_check
          %p1128 = pneg %p279
        $region174: #{forward.1} parent=139 // pred_check_branch
          %1130 = sbr.rel (%p1128) target = $region176
        $region175: #{forward.1} parent=139 // pred_region
          %1131 = dma.done [#allocation15], 2048
        $region176: #{forward.1} parent=139 // pred_fallthru
          _
        // Predicated region
        $region177: #{forward.1} parent=139 // pred_check
          %p1132 = pneg %p300
        $region178: #{forward.1} parent=139 // pred_check_branch
          %1134 = sbr.rel (%p1132) target = $region180
        $region179: #{forward.1} parent=139 // pred_region
          %1135 = dma.done [#allocation18], 256
        $region180: #{forward.1} parent=139 // pred_fallthru
          _
        // Predicated region
        $region181: #{forward.1} parent=139 // pred_check
          %p1136 = pneg %p321
        $region182: #{forward.1} parent=139 // pred_check_branch
          %1138 = sbr.rel (%p1136) target = $region184
        $region183: #{forward.1} parent=139 // pred_region
          %1139 = dma.done [#allocation18], 16
        $region184: #{forward.1} parent=139 // pred_fallthru
          _
        // Predicated region
        $region185: #{forward.1} parent=139 // pred_check
          %p1140 = pneg %p342
        $region186: #{forward.1} parent=139 // pred_check_branch
          %1142 = sbr.rel (%p1140) target = $region188
        $region187: #{forward.1} parent=139 // pred_region
          %1143 = dma.done [#allocation21], 128
        $region188: #{forward.1} parent=139 // pred_fallthru
          _
        // Predicated region
        $region189: #{forward.1} parent=139 // pred_check
          %p1144 = pneg %p363
        $region190: #{forward.1} parent=139 // pred_check_branch
          %1146 = sbr.rel (%p1144) target = $region192
        $region191: #{forward.1} parent=139 // pred_region
          %1147 = dma.done [#allocation21], 16
        $region192: #{forward.1} parent=139 // pred_fallthru
          _
        // Predicated region
        $region193: #{forward.1} parent=139 // pred_check
          %p1148 = pneg %p384
        $region194: #{forward.1} parent=139 // pred_check_branch
          %1150 = sbr.rel (%p1148) target = $region196
        $region195: #{forward.1} parent=139 // pred_region
          %1151 = dma.done [#allocation24], 2048
        $region196: #{forward.1} parent=139 // pred_fallthru
          _
        // Predicated region
        $region197: #{forward.1} parent=139 // pred_check
          %p1152 = pneg %p405
        $region198: #{forward.1} parent=139 // pred_check_branch
          %1154 = sbr.rel (%p1152) target = $region200
        $region199: #{forward.1} parent=139 // pred_region
          %1155 = dma.done [#allocation24], 2048
        $region200: #{forward.1} parent=139 // pred_fallthru
          _
        // Predicated region
        $region201: #{forward.1} parent=139 // pred_check
          %p1156 = pneg %p426
        $region202: #{forward.1} parent=139 // pred_check_branch
          %1158 = sbr.rel (%p1156) target = $region204
        $region203: #{forward.1} parent=139 // pred_region
          %1159 = dma.done [#allocation27], 2048
        $region204: #{forward.1} parent=139 // pred_fallthru
          _
        // Predicated region
        $region205: #{forward.1} parent=139 // pred_check
          %p1160 = pneg %p447
        $region206: #{forward.1} parent=139 // pred_check_branch
          %1162 = sbr.rel (%p1160) target = $region208
        $region207: #{forward.1} parent=139 // pred_region
          %1163 = dma.done [#allocation27], 2048
        $region208: #{forward.1} parent=139 // pred_fallthru
          _
        // Predicated region
        $region209: #{forward.1} parent=139 // pred_check
          %p1164 = pneg %p489
        $region210: #{forward.1} parent=139 // pred_check_branch
          %1166 = sbr.rel (%p1164) target = $region212
        $region211: #{forward.1} parent=139 // pred_region
          %1167 = dma.done [#allocation30], 16
        $region212: #{forward.1} parent=139 // pred_fallthru
          _
        // Predicated region
        $region213: #{forward.1} parent=139 // pred_check
          %p1168 = pneg %p510
        $region214: #{forward.1} parent=139 // pred_check_branch
          %1170 = sbr.rel (%p1168) target = $region216
        $region215: #{forward.1} parent=139 // pred_region
          %1171 = dma.done [#allocation30], 128
        $region216: #{forward.1} parent=139 // pred_fallthru
          _
        // Predicated region
        $region217: #{forward.1} parent=139 // pred_check
          %p1172 = pneg %p531
        $region218: #{forward.1} parent=139 // pred_check_branch
          %1174 = sbr.rel (%p1172) target = $region220
        $region219: #{forward.1} parent=139 // pred_region
          %1175 = dma.done [#allocation33], 16
        $region220: #{forward.1} parent=139 // pred_fallthru
          _
        // Predicated region
        $region221: #{forward.1} parent=139 // pred_check
          %p1176 = pneg %p552
        $region222: #{forward.1} parent=139 // pred_check_branch
          %1178 = sbr.rel (%p1176) target = $region224
        $region223: #{forward.1} parent=139 // pred_region
          %1179 = dma.done [#allocation33], 2048
        $region224: #{forward.1} parent=139 // pred_fallthru
          _
        // Predicated region
        $region225: #{forward.1} parent=139 // pred_check
          %p1180 = pneg %p573
        $region226: #{forward.1} parent=139 // pred_check_branch
          %1182 = sbr.rel (%p1180) target = $region228
        $region227: #{forward.1} parent=139 // pred_region
          %1183 = dma.done [#allocation36], 2048
        $region228: #{forward.1} parent=139 // pred_fallthru
          _
        // Predicated region
        $region229: #{forward.1} parent=139 // pred_check
          %p1184 = pneg %p594
        $region230: #{forward.1} parent=139 // pred_check_branch
          %1186 = sbr.rel (%p1184) target = $region232
        $region231: #{forward.1} parent=139 // pred_region
          %1187 = dma.done [#allocation36], 2048
        $region232: #{forward.1} parent=139 // pred_fallthru
          _
        // Predicated region
        $region233: #{forward.1} parent=139 // pred_check
          %p1188 = pneg %p615
        $region234: #{forward.1} parent=139 // pred_check_branch
          %1190 = sbr.rel (%p1188) target = $region236
        $region235: #{forward.1} parent=139 // pred_region
          %1191 = dma.done [#allocation39], 2048
        $region236: #{forward.1} parent=139 // pred_fallthru
          _
        %s1192 = sand.u32 %s98, 1
        %s1193 = scalar_lea.sflag [#allocation3], %s1192
        %s1194 = sand.u32 %s98, 1
        %s1195 = smul.addr %s1194, 4
        %s1196 = scalar_lea.vmem [#allocation2], %s1195
        %p1197 = pneg %p111
        %p1198 = pneg %p108
        %p1199 = pneg %p132
        %p1200 = pneg %p129
        %p1201 = pneg %p153
        %p1202 = pneg %p150
        %p1203 = pneg %p174
        %p1204 = pneg %p171
        %p1205 = pneg %p195
        %p1206 = pneg %p192
        %p1207 = pneg %p216
        %p1208 = pneg %p213
        %p1209 = pneg %p237
        %p1210 = pneg %p234
        %p1211 = pneg %p258
        %p1212 = pneg %p255
        %p1213 = pneg %p279
        %p1214 = pneg %p276
        %p1215 = pneg %p300
        %p1216 = pneg %p297
        %p1217 = pneg %p321
        %p1218 = pneg %p318
        %p1219 = pneg %p342
        %p1220 = pneg %p339
        %p1221 = pneg %p363
        %p1222 = pneg %p360
        %p1223 = pneg %p384
        %p1224 = pneg %p381
        %p1225 = pneg %p405
        %p1226 = pneg %p402
        %p1227 = pneg %p426
        %p1228 = pneg %p423
        %p1229 = pneg %p447
        %p1230 = pneg %p444
        %p1231 = pneg %p468
        %p1232 = pneg %p465
        %p1233 = pneg %p489
        %p1234 = pneg %p486
        %p1235 = pneg %p510
        %p1236 = pneg %p507
        %p1237 = pneg %p531
        %p1238 = pneg %p528
        %p1239 = pneg %p552
        %p1240 = pneg %p549
        %p1241 = pneg %p573
        %p1242 = pneg %p570
        %p1243 = pneg %p594
        %p1244 = pneg %p591
        %p1245 = pneg %p615
        %p1246 = pneg %p612
        %p1247 = pneg %p636
        %p1248 = pneg %p633
        %p1249 = pneg %p657
        %p1250 = pneg %p654
        %p1251 = pneg %p678
        %p1252 = pneg %p675
        %p1253 = pneg %p699
        %p1254 = pneg %p696
        %p1255 = pneg %p720
        %p1256 = pneg %p717
        %p1257 = pneg %p746
        %p1258 = pneg %p743
        %s1259 = sand.u32 %s733, 1
        %s1260 = scalar_lea.sflag [#allocation4], %s1259
        %s1261 = sand.u32 %s733, 1
        %s1262 = smul.addr %s1261, 4
        %s1263 = scalar_lea.vmem [#allocation40], %s1262
        %v1264 = vld [vmem:[%s1095] sm:$0xf]
        %v1265 = vld [vmem:[#allocation5] sm:$0xff]
        %v1266 = vld [vmem:[#allocation5 + $0x8] sm:$0xff]
        %vm1267 = vcmask 130048
        %v1269 = vsel %vm1267, %v1264, 0
        %1271 = vmatprep.subr.mxu0 0.0
        %1272 = vmatpush1.msra.mxu0 0.0
        %1273 = vmatprep.subr.mxu0 0.0
        %1274 = vmatpush1.msra.mxu0 0.0
        %1275 = vmatprep.subr.mxu0 0.0
        %1276 = vmatpush1.msra.mxu0 0.0
        %1277 = vmatprep.subr.mxu0 0.0
        %1278 = vmatpush1.msra.mxu0 0.0
        %1279 = vmatprep.subr.mxu0 0.0
        %1280 = vmatpush1.msra.mxu0 0.0
        %1281 = vmatprep.subr.mxu0 0.0
        %1282 = vmatpush1.msra.mxu0 0.0
        %1283 = vmatprep.subr.mxu0 0.0
        %1284 = vmatpush1.msra.mxu0 0.0
        %1285 = vmatprep.subr.mxu0 0.0
        %1286 = vmatpush1.msra.mxu0 0.0
        %1287 = vmatprep.subr.mxu0 0.0
        %1288 = vmatpush1.msra.mxu0 0.0
        %1289 = vmatprep.subr.mxu0 0.0
        %1290 = vmatpush1.msra.mxu0 0.0
        %1291 = vmatprep.subr.mxu0 0.0
        %1292 = vmatpush1.msra.mxu0 0.0
        %1293 = vmatprep.subr.mxu0 0.0
        %1294 = vmatpush1.msra.mxu0 0.0
        %1295 = vmatprep.subr.mxu0 0.0
        %1296 = vmatpush1.msra.mxu0 0.0
        %1297 = vmatprep.subr.mxu0 0.0
        %1298 = vmatpush1.msra.mxu0 0.0
        %1299 = vmatprep.subr.mxu0 0.0
        %1300 = vmatpush1.msra.mxu0 %v1266
        %1301 = vmatprep.subr.mxu0 0.0
        %1302 = vmatpush1.msra.mxu0 %v1265
        %1303 = vmatprep.subr.mxu0 0.0
        %1304 = vmatpush2.msra.mxu0 0.0
        %1305 = vmatprep.subr.mxu0 0.0
        %1306 = vmatpush2.msra.mxu0 0.0
        %1307 = vmatprep.subr.mxu0 0.0
        %1308 = vmatpush2.msra.mxu0 0.0
        %1309 = vmatprep.subr.mxu0 0.0
        %1310 = vmatpush2.msra.mxu0 0.0
        %1311 = vmatprep.subr.mxu0 0.0
        %1312 = vmatpush2.msra.mxu0 0.0
        %1313 = vmatprep.subr.mxu0 0.0
        %1314 = vmatpush2.msra.mxu0 0.0
        %1315 = vmatprep.subr.mxu0 0.0
        %1316 = vmatpush2.msra.mxu0 0.0
        %1317 = vmatprep.subr.mxu0 0.0
        %1318 = vmatpush2.msra.mxu0 0.0
        %1319 = vmatprep.subr.mxu0 0.0
        %1320 = vmatpush2.msra.mxu0 0.0
        %1321 = vmatprep.subr.mxu0 0.0
        %1322 = vmatpush2.msra.mxu0 0.0
        %1323 = vmatprep.subr.mxu0 0.0
        %1324 = vmatpush2.msra.mxu0 0.0
        %1325 = vmatprep.subr.mxu0 0.0
        %1326 = vmatpush2.msra.mxu0 0.0
        %1327 = vmatprep.subr.mxu0 0.0
        %1328 = vmatpush2.msra.mxu0 0.0
        %1329 = vmatprep.subr.mxu0 0.0
        %1330 = vmatpush2.msra.mxu0 0.0
        %1331 = vmatprep.subr.mxu0 0.0
        %1332 = vmatpush2.msra.mxu0 0.0
        %1333 = vmatprep.subr.mxu0 0.0
        %1334 = vmatpush2.msra.mxu0 0.0
        %1335 = vmatprep.mubr.f32.mxu0 0.0
        %1336 = vmatmul.mubr.f32.gmra.mxu0 %v1269
        %v1337 = vpop.f32.mrf.mxu0
        %v1338 = vadd.f32 0.0, %v1337
        %v1339 = vpop.f32.mrf.mxu0
        %1340 = vdwg.mxu0
        %v1341 = vld [vmem:[#allocation7] sm:$0xff]
        %v1342 = vld [vmem:[#allocation7 + $0x8] sm:$0xff]
        %1343 = vmatprep.subr.mxu0 0.0
        %1344 = vmatpush1.msra.mxu0 0.0
        %1345 = vmatprep.subr.mxu0 0.0
        %1346 = vmatpush1.msra.mxu0 0.0
        %1347 = vmatprep.subr.mxu0 0.0
        %1348 = vmatpush1.msra.mxu0 0.0
        %1349 = vmatprep.subr.mxu0 0.0
        %1350 = vmatpush1.msra.mxu0 0.0
        %1351 = vmatprep.subr.mxu0 0.0
        %1352 = vmatpush1.msra.mxu0 0.0
        %1353 = vmatprep.subr.mxu0 0.0
        %1354 = vmatpush1.msra.mxu0 0.0
        %1355 = vmatprep.subr.mxu0 0.0
        %1356 = vmatpush1.msra.mxu0 0.0
        %1357 = vmatprep.subr.mxu0 0.0
        %1358 = vmatpush1.msra.mxu0 0.0
        %1359 = vmatprep.subr.mxu0 0.0
        %1360 = vmatpush1.msra.mxu0 0.0
        %1361 = vmatprep.subr.mxu0 0.0
        %1362 = vmatpush1.msra.mxu0 0.0
        %1363 = vmatprep.subr.mxu0 0.0
        %1364 = vmatpush1.msra.mxu0 0.0
        %1365 = vmatprep.subr.mxu0 0.0
        %1366 = vmatpush1.msra.mxu0 0.0
        %1367 = vmatprep.subr.mxu0 0.0
        %1368 = vmatpush1.msra.mxu0 0.0
        %1369 = vmatprep.subr.mxu0 0.0
        %1370 = vmatpush1.msra.mxu0 0.0
        %1371 = vmatprep.subr.mxu0 0.0
        %1372 = vmatpush1.msra.mxu0 %v1342
        %1373 = vmatprep.subr.mxu0 0.0
        %1374 = vmatpush1.msra.mxu0 %v1341
        %1375 = vmatprep.subr.mxu0 0.0
        %1376 = vmatpush2.msra.mxu0 0.0
        %1377 = vmatprep.subr.mxu0 0.0
        %1378 = vmatpush2.msra.mxu0 0.0
        %1379 = vmatprep.subr.mxu0 0.0
        %1380 = vmatpush2.msra.mxu0 0.0
        %1381 = vmatprep.subr.mxu0 0.0
        %1382 = vmatpush2.msra.mxu0 0.0
        %1383 = vmatprep.subr.mxu0 0.0
        %1384 = vmatpush2.msra.mxu0 0.0
        %1385 = vmatprep.subr.mxu0 0.0
        %1386 = vmatpush2.msra.mxu0 0.0
        %1387 = vmatprep.subr.mxu0 0.0
        %1388 = vmatpush2.msra.mxu0 0.0
        %1389 = vmatprep.subr.mxu0 0.0
        %1390 = vmatpush2.msra.mxu0 0.0
        %1391 = vmatprep.subr.mxu0 0.0
        %1392 = vmatpush2.msra.mxu0 0.0
        %1393 = vmatprep.subr.mxu0 0.0
        %1394 = vmatpush2.msra.mxu0 0.0
        %1395 = vmatprep.subr.mxu0 0.0
        %1396 = vmatpush2.msra.mxu0 0.0
        %1397 = vmatprep.subr.mxu0 0.0
        %1398 = vmatpush2.msra.mxu0 0.0
        %1399 = vmatprep.subr.mxu0 0.0
        %1400 = vmatpush2.msra.mxu0 0.0
        %1401 = vmatprep.subr.mxu0 0.0
        %1402 = vmatpush2.msra.mxu0 0.0
        %1403 = vmatprep.subr.mxu0 0.0
        %1404 = vmatpush2.msra.mxu0 0.0
        %1405 = vmatprep.subr.mxu0 0.0
        %1406 = vmatpush2.msra.mxu0 0.0
        %1407 = vmatprep.mubr.f32.mxu0 0.0
        %1408 = vmatmul.mubr.f32.gmra.mxu0 %v1269
        %v1409 = vpop.f32.mrf.mxu0
        %v1410 = vadd.f32 0.0, %v1409
        %v1411 = vpop.f32.mrf.mxu0
        %1412 = vdwg.mxu0
        %v1413 = vld [vmem:[#allocation8] sm:$0xff]
        %v1414 = vld [vmem:[#allocation8 + $0x8] sm:$0xff]
        %1415 = vmatprep.subr.mxu0 0.0
        %1416 = vmatpush1.msra.mxu0 0.0
        %1417 = vmatprep.subr.mxu0 0.0
        %1418 = vmatpush1.msra.mxu0 0.0
        %1419 = vmatprep.subr.mxu0 0.0
        %1420 = vmatpush1.msra.mxu0 0.0
        %1421 = vmatprep.subr.mxu0 0.0
        %1422 = vmatpush1.msra.mxu0 0.0
        %1423 = vmatprep.subr.mxu0 0.0
        %1424 = vmatpush1.msra.mxu0 0.0
        %1425 = vmatprep.subr.mxu0 0.0
        %1426 = vmatpush1.msra.mxu0 0.0
        %1427 = vmatprep.subr.mxu0 0.0
        %1428 = vmatpush1.msra.mxu0 0.0
        %1429 = vmatprep.subr.mxu0 0.0
        %1430 = vmatpush1.msra.mxu0 0.0
        %1431 = vmatprep.subr.mxu0 0.0
        %1432 = vmatpush1.msra.mxu0 0.0
        %1433 = vmatprep.subr.mxu0 0.0
        %1434 = vmatpush1.msra.mxu0 0.0
        %1435 = vmatprep.subr.mxu0 0.0
        %1436 = vmatpush1.msra.mxu0 0.0
        %1437 = vmatprep.subr.mxu0 0.0
        %1438 = vmatpush1.msra.mxu0 0.0
        %1439 = vmatprep.subr.mxu0 0.0
        %1440 = vmatpush1.msra.mxu0 0.0
        %1441 = vmatprep.subr.mxu0 0.0
        %1442 = vmatpush1.msra.mxu0 0.0
        %1443 = vmatprep.subr.mxu0 0.0
        %1444 = vmatpush1.msra.mxu0 %v1414
        %1445 = vmatprep.subr.mxu0 0.0
        %1446 = vmatpush1.msra.mxu0 %v1413
        %1447 = vmatprep.subr.mxu0 0.0
        %1448 = vmatpush2.msra.mxu0 0.0
        %1449 = vmatprep.subr.mxu0 0.0
        %1450 = vmatpush2.msra.mxu0 0.0
        %1451 = vmatprep.subr.mxu0 0.0
        %1452 = vmatpush2.msra.mxu0 0.0
        %1453 = vmatprep.subr.mxu0 0.0
        %1454 = vmatpush2.msra.mxu0 0.0
        %1455 = vmatprep.subr.mxu0 0.0
        %1456 = vmatpush2.msra.mxu0 0.0
        %1457 = vmatprep.subr.mxu0 0.0
        %1458 = vmatpush2.msra.mxu0 0.0
        %1459 = vmatprep.subr.mxu0 0.0
        %1460 = vmatpush2.msra.mxu0 0.0
        %1461 = vmatprep.subr.mxu0 0.0
        %1462 = vmatpush2.msra.mxu0 0.0
        %1463 = vmatprep.subr.mxu0 0.0
        %1464 = vmatpush2.msra.mxu0 0.0
        %1465 = vmatprep.subr.mxu0 0.0
        %1466 = vmatpush2.msra.mxu0 0.0
        %1467 = vmatprep.subr.mxu0 0.0
        %1468 = vmatpush2.msra.mxu0 0.0
        %1469 = vmatprep.subr.mxu0 0.0
        %1470 = vmatpush2.msra.mxu0 0.0
        %1471 = vmatprep.subr.mxu0 0.0
        %1472 = vmatpush2.msra.mxu0 0.0
        %1473 = vmatprep.subr.mxu0 0.0
        %1474 = vmatpush2.msra.mxu0 0.0
        %1475 = vmatprep.subr.mxu0 0.0
        %1476 = vmatpush2.msra.mxu0 0.0
        %1477 = vmatprep.subr.mxu0 0.0
        %1478 = vmatpush2.msra.mxu0 0.0
        %1479 = vmatprep.mubr.f32.mxu0 0.0
        %1480 = vmatmul.mubr.f32.gmra.mxu0 %v1269
        %v1481 = vpop.f32.mrf.mxu0
        %v1482 = vadd.f32 0.0, %v1481
        %v1483 = vpop.f32.mrf.mxu0
        %1484 = vdwg.mxu0
        %v1485 = vld [vmem:[#allocation13] sm:$0xff]
        %v1486 = vld [vmem:[#allocation13 + $0x8] sm:$0xff]
        %v1487 = vld [vmem:[#allocation13 + $0x10] sm:$0xff]
        %v1488 = vld [vmem:[#allocation13 + $0x18] sm:$0xff]
        %v1489 = vld [vmem:[#allocation13 + $0x20] sm:$0xff]
        %v1490 = vld [vmem:[#allocation13 + $0x28] sm:$0xff]
        %v1491 = vld [vmem:[#allocation13 + $0x30] sm:$0xff]
        %v1492 = vld [vmem:[#allocation13 + $0x38] sm:$0xff]
        %v1493 = vld [vmem:[#allocation13 + $0x40] sm:$0xff]
        %v1494 = vld [vmem:[#allocation13 + $0x48] sm:$0xff]
        %v1495 = vld [vmem:[#allocation13 + $0x50] sm:$0xff]
        %v1496 = vld [vmem:[#allocation13 + $0x58] sm:$0xff]
        %v1497 = vld [vmem:[#allocation13 + $0x60] sm:$0xff]
        %v1498 = vld [vmem:[#allocation13 + $0x68] sm:$0xff]
        %v1499 = vld [vmem:[#allocation13 + $0x70] sm:$0xff]
        %v1500 = vld [vmem:[#allocation13 + $0x78] sm:$0xff]
        %v1501 = vld [vmem:[#allocation14] sm:$0xff]
        %v1502 = vld [vmem:[#allocation14 + $0x8] sm:$0xff]
        %v1503 = vld [vmem:[#allocation14 + $0x10] sm:$0xff]
        %v1504 = vld [vmem:[#allocation14 + $0x18] sm:$0xff]
        %v1505 = vld [vmem:[#allocation14 + $0x20] sm:$0xff]
        %v1506 = vld [vmem:[#allocation14 + $0x28] sm:$0xff]
        %v1507 = vld [vmem:[#allocation14 + $0x30] sm:$0xff]
        %v1508 = vld [vmem:[#allocation14 + $0x38] sm:$0xff]
        %v1509 = vld [vmem:[#allocation14 + $0x40] sm:$0xff]
        %v1510 = vld [vmem:[#allocation14 + $0x48] sm:$0xff]
        %v1511 = vld [vmem:[#allocation14 + $0x50] sm:$0xff]
        %v1512 = vld [vmem:[#allocation14 + $0x58] sm:$0xff]
        %v1513 = vld [vmem:[#allocation14 + $0x60] sm:$0xff]
        %v1514 = vld [vmem:[#allocation14 + $0x68] sm:$0xff]
        %v1515 = vld [vmem:[#allocation14 + $0x70] sm:$0xff]
        %v1516 = vld [vmem:[#allocation14 + $0x78] sm:$0xff]
        %vm1517 = vcmask 31744
        %v1519 = vsel %vm1517, %v1501, 0
        %v1522 = vsel %vm1517, %v1502, 0
        %v1525 = vsel %vm1517, %v1503, 0
        %v1528 = vsel %vm1517, %v1504, 0
        %v1531 = vsel %vm1517, %v1505, 0
        %v1534 = vsel %vm1517, %v1506, 0
        %v1537 = vsel %vm1517, %v1507, 0
        %v1540 = vsel %vm1517, %v1508, 0
        %v1543 = vsel %vm1517, %v1509, 0
        %v1546 = vsel %vm1517, %v1510, 0
        %v1549 = vsel %vm1517, %v1511, 0
        %v1552 = vsel %vm1517, %v1512, 0
        %v1555 = vsel %vm1517, %v1513, 0
        %v1558 = vsel %vm1517, %v1514, 0
        %v1561 = vsel %vm1517, %v1515, 0
        %v1564 = vsel %vm1517, %v1516, 0
        %vm1566 = vcmask 1043456
        %v1567 = vsel %vm1566, %v1264, 0
        %1569 = vmatprep.subr.mxu0 0.0
        %1570 = vmatpush1.msra.mxu0 0.0
        %1571 = vmatprep.subr.mxu0 0.0
        %1572 = vmatpush1.msra.mxu0 0.0
        %1573 = vmatprep.subr.mxu0 0.0
        %1574 = vmatpush1.msra.mxu0 0.0
        %1575 = vmatprep.subr.mxu0 0.0
        %1576 = vmatpush1.msra.mxu0 0.0
        %1577 = vmatprep.subr.mxu0 0.0
        %1578 = vmatpush1.msra.mxu0 0.0
        %1579 = vmatprep.subr.mxu0 0.0
        %1580 = vmatpush1.msra.mxu0 0.0
        %1581 = vmatprep.subr.mxu0 0.0
        %1582 = vmatpush1.msra.mxu0 0.0
        %1583 = vmatprep.subr.mxu0 0.0
        %1584 = vmatpush1.msra.mxu0 0.0
        %1585 = vmatprep.subr.mxu0 0.0
        %1586 = vmatpush1.msra.mxu0 0.0
        %1587 = vmatprep.subr.mxu0 0.0
        %1588 = vmatpush1.msra.mxu0 0.0
        %1589 = vmatprep.subr.mxu0 0.0
        %1590 = vmatpush1.msra.mxu0 0.0
        %1591 = vmatprep.subr.mxu0 0.0
        %1592 = vmatpush1.msra.mxu0 0.0
        %1593 = vmatprep.subr.mxu0 0.0
        %1594 = vmatpush1.msra.mxu0 0.0
        %1595 = vmatprep.subr.mxu0 0.0
        %1596 = vmatpush1.msra.mxu0 0.0
        %1597 = vmatprep.subr.mxu0 0.0
        %1598 = vmatpush1.msra.mxu0 0.0
        %1599 = vmatprep.subr.mxu0 0.0
        %1600 = vmatpush1.msra.mxu0 %v1567
        %1601 = vmatprep.subr.mxu0 0.0
        %1602 = vmatpush2.msra.mxu0 0.0
        %1603 = vmatprep.subr.mxu0 0.0
        %1604 = vmatpush2.msra.mxu0 0.0
        %1605 = vmatprep.subr.mxu0 0.0
        %1606 = vmatpush2.msra.mxu0 0.0
        %1607 = vmatprep.subr.mxu0 0.0
        %1608 = vmatpush2.msra.mxu0 0.0
        %1609 = vmatprep.subr.mxu0 0.0
        %1610 = vmatpush2.msra.mxu0 0.0
        %1611 = vmatprep.subr.mxu0 0.0
        %1612 = vmatpush2.msra.mxu0 0.0
        %1613 = vmatprep.subr.mxu0 0.0
        %1614 = vmatpush2.msra.mxu0 0.0
        %1615 = vmatprep.subr.mxu0 0.0
        %1616 = vmatpush2.msra.mxu0 0.0
        %1617 = vmatprep.subr.mxu0 0.0
        %1618 = vmatpush2.msra.mxu0 0.0
        %1619 = vmatprep.subr.mxu0 0.0
        %1620 = vmatpush2.msra.mxu0 0.0
        %1621 = vmatprep.subr.mxu0 0.0
        %1622 = vmatpush2.msra.mxu0 0.0
        %1623 = vmatprep.subr.mxu0 0.0
        %1624 = vmatpush2.msra.mxu0 0.0
        %1625 = vmatprep.subr.mxu0 0.0
        %1626 = vmatpush2.msra.mxu0 0.0
        %1627 = vmatprep.subr.mxu0 0.0
        %1628 = vmatpush2.msra.mxu0 0.0
        %1629 = vmatprep.subr.mxu0 0.0
        %1630 = vmatpush2.msra.mxu0 0.0
        %1631 = vmatprep.subr.mxu0 0.0
        %1632 = vmatpush2.msra.mxu0 0.0
        %1633 = vmatprep.mubr.f32.mxu0 0.0
        %1634 = vmatmul.mubr.f32.gmra.mxu0 %v1519
        %v1635 = vpop.f32.mrf.mxu0
        %v1636 = vadd.f32 0.0, %v1635
        %v1637 = vpop.f32.mrf.mxu0
        %1638 = vmatprep.mubr.f32.mxu0 0.0
        %1639 = vmatmul.mubr.f32.gmra.mxu0 %v1522
        %v1640 = vpop.f32.mrf.mxu0
        %v1641 = vadd.f32 0.0, %v1640
        %v1642 = vpop.f32.mrf.mxu0
        %1643 = vmatprep.mubr.f32.mxu0 0.0
        %1644 = vmatmul.mubr.f32.gmra.mxu0 %v1525
        %v1645 = vpop.f32.mrf.mxu0
        %v1646 = vadd.f32 0.0, %v1645
        %v1647 = vpop.f32.mrf.mxu0
        %1648 = vmatprep.mubr.f32.mxu0 0.0
        %1649 = vmatmul.mubr.f32.gmra.mxu0 %v1528
        %v1650 = vpop.f32.mrf.mxu0
        %v1651 = vadd.f32 0.0, %v1650
        %v1652 = vpop.f32.mrf.mxu0
        %1653 = vmatprep.mubr.f32.mxu0 0.0
        %1654 = vmatmul.mubr.f32.gmra.mxu0 %v1531
        %v1655 = vpop.f32.mrf.mxu0
        %v1656 = vadd.f32 0.0, %v1655
        %v1657 = vpop.f32.mrf.mxu0
        %1658 = vmatprep.mubr.f32.mxu0 0.0
        %1659 = vmatmul.mubr.f32.gmra.mxu0 %v1534
        %v1660 = vpop.f32.mrf.mxu0
        %v1661 = vadd.f32 0.0, %v1660
        %v1662 = vpop.f32.mrf.mxu0
        %1663 = vmatprep.mubr.f32.mxu0 0.0
        %1664 = vmatmul.mubr.f32.gmra.mxu0 %v1537
        %v1665 = vpop.f32.mrf.mxu0
        %v1666 = vadd.f32 0.0, %v1665
        %v1667 = vpop.f32.mrf.mxu0
        %1668 = vmatprep.mubr.f32.mxu0 0.0
        %1669 = vmatmul.mubr.f32.gmra.mxu0 %v1540
        %v1670 = vpop.f32.mrf.mxu0
        %v1671 = vadd.f32 0.0, %v1670
        %v1672 = vpop.f32.mrf.mxu0
        %1673 = vmatprep.mubr.f32.mxu0 0.0
        %1674 = vmatmul.mubr.f32.gmra.mxu0 %v1543
        %v1675 = vpop.f32.mrf.mxu0
        %v1676 = vadd.f32 0.0, %v1675
        %v1677 = vpop.f32.mrf.mxu0
        %1678 = vmatprep.mubr.f32.mxu0 0.0
        %1679 = vmatmul.mubr.f32.gmra.mxu0 %v1546
        %v1680 = vpop.f32.mrf.mxu0
        %v1681 = vadd.f32 0.0, %v1680
        %v1682 = vpop.f32.mrf.mxu0
        %1683 = vmatprep.mubr.f32.mxu0 0.0
        %1684 = vmatmul.mubr.f32.gmra.mxu0 %v1549
        %v1685 = vpop.f32.mrf.mxu0
        %v1686 = vadd.f32 0.0, %v1685
        %v1687 = vpop.f32.mrf.mxu0
        %1688 = vmatprep.mubr.f32.mxu0 0.0
        %1689 = vmatmul.mubr.f32.gmra.mxu0 %v1552
        %v1690 = vpop.f32.mrf.mxu0
        %v1691 = vadd.f32 0.0, %v1690
        %v1692 = vpop.f32.mrf.mxu0
        %1693 = vmatprep.mubr.f32.mxu0 0.0
        %1694 = vmatmul.mubr.f32.gmra.mxu0 %v1555
        %v1695 = vpop.f32.mrf.mxu0
        %v1696 = vadd.f32 0.0, %v1695
        %v1697 = vpop.f32.mrf.mxu0
        %1698 = vmatprep.mubr.f32.mxu0 0.0
        %1699 = vmatmul.mubr.f32.gmra.mxu0 %v1558
        %v1700 = vpop.f32.mrf.mxu0
        %v1701 = vadd.f32 0.0, %v1700
        %v1702 = vpop.f32.mrf.mxu0
        %1703 = vmatprep.mubr.f32.mxu0 0.0
        %1704 = vmatmul.mubr.f32.gmra.mxu0 %v1561
        %v1705 = vpop.f32.mrf.mxu0
        %v1706 = vadd.f32 0.0, %v1705
        %v1707 = vpop.f32.mrf.mxu0
        %1708 = vmatprep.mubr.f32.mxu0 0.0
        %1709 = vmatmul.mubr.f32.gmra.mxu0 %v1564
        %v1710 = vpop.f32.mrf.mxu0
        %v1711 = vadd.f32 0.0, %v1710
        %v1712 = vpop.f32.mrf.mxu0
        %1713 = vdwg.mxu0
        %v1715 = vsel %vm1517, %v1485, 0
        %v1718 = vsel %vm1517, %v1486, 0
        %v1721 = vsel %vm1517, %v1487, 0
        %v1724 = vsel %vm1517, %v1488, 0
        %v1727 = vsel %vm1517, %v1489, 0
        %v1730 = vsel %vm1517, %v1490, 0
        %v1733 = vsel %vm1517, %v1491, 0
        %v1736 = vsel %vm1517, %v1492, 0
        %v1739 = vsel %vm1517, %v1493, 0
        %v1742 = vsel %vm1517, %v1494, 0
        %v1745 = vsel %vm1517, %v1495, 0
        %v1748 = vsel %vm1517, %v1496, 0
        %v1751 = vsel %vm1517, %v1497, 0
        %v1754 = vsel %vm1517, %v1498, 0
        %v1757 = vsel %vm1517, %v1499, 0
        %v1760 = vsel %vm1517, %v1500, 0
        %v1763 = vsel %vm1566, %v1410, 0
        %1765 = vmatprep.subr.mxu0 0.0
        %1766 = vmatpush1.msra.mxu0 0.0
        %1767 = vmatprep.subr.mxu0 0.0
        %1768 = vmatpush1.msra.mxu0 0.0
        %1769 = vmatprep.subr.mxu0 0.0
        %1770 = vmatpush1.msra.mxu0 0.0
        %1771 = vmatprep.subr.mxu0 0.0
        %1772 = vmatpush1.msra.mxu0 0.0
        %1773 = vmatprep.subr.mxu0 0.0
        %1774 = vmatpush1.msra.mxu0 0.0
        %1775 = vmatprep.subr.mxu0 0.0
        %1776 = vmatpush1.msra.mxu0 0.0
        %1777 = vmatprep.subr.mxu0 0.0
        %1778 = vmatpush1.msra.mxu0 0.0
        %1779 = vmatprep.subr.mxu0 0.0
        %1780 = vmatpush1.msra.mxu0 0.0
        %1781 = vmatprep.subr.mxu0 0.0
        %1782 = vmatpush1.msra.mxu0 0.0
        %1783 = vmatprep.subr.mxu0 0.0
        %1784 = vmatpush1.msra.mxu0 0.0
        %1785 = vmatprep.subr.mxu0 0.0
        %1786 = vmatpush1.msra.mxu0 0.0
        %1787 = vmatprep.subr.mxu0 0.0
        %1788 = vmatpush1.msra.mxu0 0.0
        %1789 = vmatprep.subr.mxu0 0.0
        %1790 = vmatpush1.msra.mxu0 0.0
        %1791 = vmatprep.subr.mxu0 0.0
        %1792 = vmatpush1.msra.mxu0 0.0
        %1793 = vmatprep.subr.mxu0 0.0
        %1794 = vmatpush1.msra.mxu0 0.0
        %1795 = vmatprep.subr.mxu0 0.0
        %1796 = vmatpush1.msra.mxu0 %v1763
        %1797 = vmatprep.subr.mxu0 0.0
        %1798 = vmatpush2.msra.mxu0 0.0
        %1799 = vmatprep.subr.mxu0 0.0
        %1800 = vmatpush2.msra.mxu0 0.0
        %1801 = vmatprep.subr.mxu0 0.0
        %1802 = vmatpush2.msra.mxu0 0.0
        %1803 = vmatprep.subr.mxu0 0.0
        %1804 = vmatpush2.msra.mxu0 0.0
        %1805 = vmatprep.subr.mxu0 0.0
        %1806 = vmatpush2.msra.mxu0 0.0
        %1807 = vmatprep.subr.mxu0 0.0
        %1808 = vmatpush2.msra.mxu0 0.0
        %1809 = vmatprep.subr.mxu0 0.0
        %1810 = vmatpush2.msra.mxu0 0.0
        %1811 = vmatprep.subr.mxu0 0.0
        %1812 = vmatpush2.msra.mxu0 0.0
        %1813 = vmatprep.subr.mxu0 0.0
        %1814 = vmatpush2.msra.mxu0 0.0
        %1815 = vmatprep.subr.mxu0 0.0
        %1816 = vmatpush2.msra.mxu0 0.0
        %1817 = vmatprep.subr.mxu0 0.0
        %1818 = vmatpush2.msra.mxu0 0.0
        %1819 = vmatprep.subr.mxu0 0.0
        %1820 = vmatpush2.msra.mxu0 0.0
        %1821 = vmatprep.subr.mxu0 0.0
        %1822 = vmatpush2.msra.mxu0 0.0
        %1823 = vmatprep.subr.mxu0 0.0
        %1824 = vmatpush2.msra.mxu0 0.0
        %1825 = vmatprep.subr.mxu0 0.0
        %1826 = vmatpush2.msra.mxu0 0.0
        %1827 = vmatprep.subr.mxu0 0.0
        %1828 = vmatpush2.msra.mxu0 0.0
        %1829 = vmatprep.mubr.f32.mxu0 0.0
        %1830 = vmatmul.mubr.f32.gmra.mxu0 %v1715
        %v1831 = vpop.f32.mrf.mxu0
        %v1832 = vadd.f32 %v1636, %v1831
        %v1833 = vpop.f32.mrf.mxu0
        %1834 = vmatprep.mubr.f32.mxu0 0.0
        %1835 = vmatmul.mubr.f32.gmra.mxu0 %v1718
        %v1836 = vpop.f32.mrf.mxu0
        %v1837 = vadd.f32 %v1641, %v1836
        %v1838 = vpop.f32.mrf.mxu0
        %1839 = vmatprep.mubr.f32.mxu0 0.0
        %1840 = vmatmul.mubr.f32.gmra.mxu0 %v1721
        %v1841 = vpop.f32.mrf.mxu0
        %v1842 = vadd.f32 %v1646, %v1841
        %v1843 = vpop.f32.mrf.mxu0
        %1844 = vmatprep.mubr.f32.mxu0 0.0
        %1845 = vmatmul.mubr.f32.gmra.mxu0 %v1724
        %v1846 = vpop.f32.mrf.mxu0
        %v1847 = vadd.f32 %v1651, %v1846
        %v1848 = vpop.f32.mrf.mxu0
        %1849 = vmatprep.mubr.f32.mxu0 0.0
        %1850 = vmatmul.mubr.f32.gmra.mxu0 %v1727
        %v1851 = vpop.f32.mrf.mxu0
        %v1852 = vadd.f32 %v1656, %v1851
        %v1853 = vpop.f32.mrf.mxu0
        %1854 = vmatprep.mubr.f32.mxu0 0.0
        %1855 = vmatmul.mubr.f32.gmra.mxu0 %v1730
        %v1856 = vpop.f32.mrf.mxu0
        %v1857 = vadd.f32 %v1661, %v1856
        %v1858 = vpop.f32.mrf.mxu0
        %1859 = vmatprep.mubr.f32.mxu0 0.0
        %1860 = vmatmul.mubr.f32.gmra.mxu0 %v1733
        %v1861 = vpop.f32.mrf.mxu0
        %v1862 = vadd.f32 %v1666, %v1861
        %v1863 = vpop.f32.mrf.mxu0
        %1864 = vmatprep.mubr.f32.mxu0 0.0
        %1865 = vmatmul.mubr.f32.gmra.mxu0 %v1736
        %v1866 = vpop.f32.mrf.mxu0
        %v1867 = vadd.f32 %v1671, %v1866
        %v1868 = vpop.f32.mrf.mxu0
        %1869 = vmatprep.mubr.f32.mxu0 0.0
        %1870 = vmatmul.mubr.f32.gmra.mxu0 %v1739
        %v1871 = vpop.f32.mrf.mxu0
        %v1872 = vadd.f32 %v1676, %v1871
        %v1873 = vpop.f32.mrf.mxu0
        %1874 = vmatprep.mubr.f32.mxu0 0.0
        %1875 = vmatmul.mubr.f32.gmra.mxu0 %v1742
        %v1876 = vpop.f32.mrf.mxu0
        %v1877 = vadd.f32 %v1681, %v1876
        %v1878 = vpop.f32.mrf.mxu0
        %1879 = vmatprep.mubr.f32.mxu0 0.0
        %1880 = vmatmul.mubr.f32.gmra.mxu0 %v1745
        %v1881 = vpop.f32.mrf.mxu0
        %v1882 = vadd.f32 %v1686, %v1881
        %v1883 = vpop.f32.mrf.mxu0
        %1884 = vmatprep.mubr.f32.mxu0 0.0
        %1885 = vmatmul.mubr.f32.gmra.mxu0 %v1748
        %v1886 = vpop.f32.mrf.mxu0
        %v1887 = vadd.f32 %v1691, %v1886
        %v1888 = vpop.f32.mrf.mxu0
        %1889 = vmatprep.mubr.f32.mxu0 0.0
        %1890 = vmatmul.mubr.f32.gmra.mxu0 %v1751
        %v1891 = vpop.f32.mrf.mxu0
        %v1892 = vadd.f32 %v1696, %v1891
        %v1893 = vpop.f32.mrf.mxu0
        %1894 = vmatprep.mubr.f32.mxu0 0.0
        %1895 = vmatmul.mubr.f32.gmra.mxu0 %v1754
        %v1896 = vpop.f32.mrf.mxu0
        %v1897 = vadd.f32 %v1701, %v1896
        %v1898 = vpop.f32.mrf.mxu0
        %1899 = vmatprep.mubr.f32.mxu0 0.0
        %1900 = vmatmul.mubr.f32.gmra.mxu0 %v1757
        %v1901 = vpop.f32.mrf.mxu0
        %v1902 = vadd.f32 %v1706, %v1901
        %v1903 = vpop.f32.mrf.mxu0
        %1904 = vmatprep.mubr.f32.mxu0 0.0
        %1905 = vmatmul.mubr.f32.gmra.mxu0 %v1760
        %v1906 = vpop.f32.mrf.mxu0
        %v1907 = vadd.f32 %v1711, %v1906
        %v1908 = vpop.f32.mrf.mxu0
        %1909 = vdwg.mxu0
        %v1910 = vld [vmem:[#allocation16] sm:$0xff]
        %v1911 = vld [vmem:[#allocation16 + $0x8] sm:$0xff]
        %v1912 = vld [vmem:[#allocation16 + $0x10] sm:$0xff]
        %v1913 = vld [vmem:[#allocation16 + $0x18] sm:$0xff]
        %v1914 = vld [vmem:[#allocation16 + $0x20] sm:$0xff]
        %v1915 = vld [vmem:[#allocation16 + $0x28] sm:$0xff]
        %v1916 = vld [vmem:[#allocation16 + $0x30] sm:$0xff]
        %v1917 = vld [vmem:[#allocation16 + $0x38] sm:$0xff]
        %v1918 = vld [vmem:[#allocation16 + $0x40] sm:$0xff]
        %v1919 = vld [vmem:[#allocation16 + $0x48] sm:$0xff]
        %v1920 = vld [vmem:[#allocation16 + $0x50] sm:$0xff]
        %v1921 = vld [vmem:[#allocation16 + $0x58] sm:$0xff]
        %v1922 = vld [vmem:[#allocation16 + $0x60] sm:$0xff]
        %v1923 = vld [vmem:[#allocation16 + $0x68] sm:$0xff]
        %v1924 = vld [vmem:[#allocation16 + $0x70] sm:$0xff]
        %v1925 = vld [vmem:[#allocation16 + $0x78] sm:$0xff]
        %v1927 = vsel %vm1517, %v1910, 0
        %v1930 = vsel %vm1517, %v1911, 0
        %v1933 = vsel %vm1517, %v1912, 0
        %v1936 = vsel %vm1517, %v1913, 0
        %v1939 = vsel %vm1517, %v1914, 0
        %v1942 = vsel %vm1517, %v1915, 0
        %v1945 = vsel %vm1517, %v1916, 0
        %v1948 = vsel %vm1517, %v1917, 0
        %v1951 = vsel %vm1517, %v1918, 0
        %v1954 = vsel %vm1517, %v1919, 0
        %v1957 = vsel %vm1517, %v1920, 0
        %v1960 = vsel %vm1517, %v1921, 0
        %v1963 = vsel %vm1517, %v1922, 0
        %v1966 = vsel %vm1517, %v1923, 0
        %v1969 = vsel %vm1517, %v1924, 0
        %v1972 = vsel %vm1517, %v1925, 0
        %v1975 = vsel %vm1566, %v1482, 0
        %1977 = vmatprep.subr.mxu0 0.0
        %1978 = vmatpush1.msra.mxu0 0.0
        %1979 = vmatprep.subr.mxu0 0.0
        %1980 = vmatpush1.msra.mxu0 0.0
        %1981 = vmatprep.subr.mxu0 0.0
        %1982 = vmatpush1.msra.mxu0 0.0
        %1983 = vmatprep.subr.mxu0 0.0
        %1984 = vmatpush1.msra.mxu0 0.0
        %1985 = vmatprep.subr.mxu0 0.0
        %1986 = vmatpush1.msra.mxu0 0.0
        %1987 = vmatprep.subr.mxu0 0.0
        %1988 = vmatpush1.msra.mxu0 0.0
        %1989 = vmatprep.subr.mxu0 0.0
        %1990 = vmatpush1.msra.mxu0 0.0
        %1991 = vmatprep.subr.mxu0 0.0
        %1992 = vmatpush1.msra.mxu0 0.0
        %1993 = vmatprep.subr.mxu0 0.0
        %1994 = vmatpush1.msra.mxu0 0.0
        %1995 = vmatprep.subr.mxu0 0.0
        %1996 = vmatpush1.msra.mxu0 0.0
        %1997 = vmatprep.subr.mxu0 0.0
        %1998 = vmatpush1.msra.mxu0 0.0
        %1999 = vmatprep.subr.mxu0 0.0
        %2000 = vmatpush1.msra.mxu0 0.0
        %2001 = vmatprep.subr.mxu0 0.0
        %2002 = vmatpush1.msra.mxu0 0.0
        %2003 = vmatprep.subr.mxu0 0.0
        %2004 = vmatpush1.msra.mxu0 0.0
        %2005 = vmatprep.subr.mxu0 0.0
        %2006 = vmatpush1.msra.mxu0 0.0
        %2007 = vmatprep.subr.mxu0 0.0
        %2008 = vmatpush1.msra.mxu0 %v1975
        %2009 = vmatprep.subr.mxu0 0.0
        %2010 = vmatpush2.msra.mxu0 0.0
        %2011 = vmatprep.subr.mxu0 0.0
        %2012 = vmatpush2.msra.mxu0 0.0
        %2013 = vmatprep.subr.mxu0 0.0
        %2014 = vmatpush2.msra.mxu0 0.0
        %2015 = vmatprep.subr.mxu0 0.0
        %2016 = vmatpush2.msra.mxu0 0.0
        %2017 = vmatprep.subr.mxu0 0.0
        %2018 = vmatpush2.msra.mxu0 0.0
        %2019 = vmatprep.subr.mxu0 0.0
        %2020 = vmatpush2.msra.mxu0 0.0
        %2021 = vmatprep.subr.mxu0 0.0
        %2022 = vmatpush2.msra.mxu0 0.0
        %2023 = vmatprep.subr.mxu0 0.0
        %2024 = vmatpush2.msra.mxu0 0.0
        %2025 = vmatprep.subr.mxu0 0.0
        %2026 = vmatpush2.msra.mxu0 0.0
        %2027 = vmatprep.subr.mxu0 0.0
        %2028 = vmatpush2.msra.mxu0 0.0
        %2029 = vmatprep.subr.mxu0 0.0
        %2030 = vmatpush2.msra.mxu0 0.0
        %2031 = vmatprep.subr.mxu0 0.0
        %2032 = vmatpush2.msra.mxu0 0.0
        %2033 = vmatprep.subr.mxu0 0.0
        %2034 = vmatpush2.msra.mxu0 0.0
        %2035 = vmatprep.subr.mxu0 0.0
        %2036 = vmatpush2.msra.mxu0 0.0
        %2037 = vmatprep.subr.mxu0 0.0
        %2038 = vmatpush2.msra.mxu0 0.0
        %2039 = vmatprep.subr.mxu0 0.0
        %2040 = vmatpush2.msra.mxu0 0.0
        %2041 = vmatprep.mubr.f32.mxu0 0.0
        %2042 = vmatmul.mubr.f32.gmra.mxu0 %v1927
        %v2043 = vpop.f32.mrf.mxu0
        %v2044 = vadd.f32 0.0, %v2043
        %v2045 = vpop.f32.mrf.mxu0
        %2046 = vmatprep.mubr.f32.mxu0 0.0
        %2047 = vmatmul.mubr.f32.gmra.mxu0 %v1930
        %v2048 = vpop.f32.mrf.mxu0
        %v2049 = vadd.f32 0.0, %v2048
        %v2050 = vpop.f32.mrf.mxu0
        %2051 = vmatprep.mubr.f32.mxu0 0.0
        %2052 = vmatmul.mubr.f32.gmra.mxu0 %v1933
        %v2053 = vpop.f32.mrf.mxu0
        %v2054 = vadd.f32 0.0, %v2053
        %v2055 = vpop.f32.mrf.mxu0
        %2056 = vmatprep.mubr.f32.mxu0 0.0
        %2057 = vmatmul.mubr.f32.gmra.mxu0 %v1936
        %v2058 = vpop.f32.mrf.mxu0
        %v2059 = vadd.f32 0.0, %v2058
        %v2060 = vpop.f32.mrf.mxu0
        %2061 = vmatprep.mubr.f32.mxu0 0.0
        %2062 = vmatmul.mubr.f32.gmra.mxu0 %v1939
        %v2063 = vpop.f32.mrf.mxu0
        %v2064 = vadd.f32 0.0, %v2063
        %v2065 = vpop.f32.mrf.mxu0
        %2066 = vmatprep.mubr.f32.mxu0 0.0
        %2067 = vmatmul.mubr.f32.gmra.mxu0 %v1942
        %v2068 = vpop.f32.mrf.mxu0
        %v2069 = vadd.f32 0.0, %v2068
        %v2070 = vpop.f32.mrf.mxu0
        %2071 = vmatprep.mubr.f32.mxu0 0.0
        %2072 = vmatmul.mubr.f32.gmra.mxu0 %v1945
        %v2073 = vpop.f32.mrf.mxu0
        %v2074 = vadd.f32 0.0, %v2073
        %v2075 = vpop.f32.mrf.mxu0
        %2076 = vmatprep.mubr.f32.mxu0 0.0
        %2077 = vmatmul.mubr.f32.gmra.mxu0 %v1948
        %v2078 = vpop.f32.mrf.mxu0
        %v2079 = vadd.f32 0.0, %v2078
        %v2080 = vpop.f32.mrf.mxu0
        %2081 = vmatprep.mubr.f32.mxu0 0.0
        %2082 = vmatmul.mubr.f32.gmra.mxu0 %v1951
        %v2083 = vpop.f32.mrf.mxu0
        %v2084 = vadd.f32 0.0, %v2083
        %v2085 = vpop.f32.mrf.mxu0
        %2086 = vmatprep.mubr.f32.mxu0 0.0
        %2087 = vmatmul.mubr.f32.gmra.mxu0 %v1954
        %v2088 = vpop.f32.mrf.mxu0
        %v2089 = vadd.f32 0.0, %v2088
        %v2090 = vpop.f32.mrf.mxu0
        %2091 = vmatprep.mubr.f32.mxu0 0.0
        %2092 = vmatmul.mubr.f32.gmra.mxu0 %v1957
        %v2093 = vpop.f32.mrf.mxu0
        %v2094 = vadd.f32 0.0, %v2093
        %v2095 = vpop.f32.mrf.mxu0
        %2096 = vmatprep.mubr.f32.mxu0 0.0
        %2097 = vmatmul.mubr.f32.gmra.mxu0 %v1960
        %v2098 = vpop.f32.mrf.mxu0
        %v2099 = vadd.f32 0.0, %v2098
        %v2100 = vpop.f32.mrf.mxu0
        %2101 = vmatprep.mubr.f32.mxu0 0.0
        %2102 = vmatmul.mubr.f32.gmra.mxu0 %v1963
        %v2103 = vpop.f32.mrf.mxu0
        %v2104 = vadd.f32 0.0, %v2103
        %v2105 = vpop.f32.mrf.mxu0
        %2106 = vmatprep.mubr.f32.mxu0 0.0
        %2107 = vmatmul.mubr.f32.gmra.mxu0 %v1966
        %v2108 = vpop.f32.mrf.mxu0
        %v2109 = vadd.f32 0.0, %v2108
        %v2110 = vpop.f32.mrf.mxu0
        %2111 = vmatprep.mubr.f32.mxu0 0.0
        %2112 = vmatmul.mubr.f32.gmra.mxu0 %v1969
        %v2113 = vpop.f32.mrf.mxu0
        %v2114 = vadd.f32 0.0, %v2113
        %v2115 = vpop.f32.mrf.mxu0
        %2116 = vmatprep.mubr.f32.mxu0 0.0
        %2117 = vmatmul.mubr.f32.gmra.mxu0 %v1972
        %v2118 = vpop.f32.mrf.mxu0
        %v2119 = vadd.f32 0.0, %v2118
        %v2120 = vpop.f32.mrf.mxu0
        %2121 = vdwg.mxu0
        %v2122 = vadd.f32 %v1832, %v2044
        %v2123 = vadd.f32 %v1837, %v2049
        %v2124 = vadd.f32 %v1842, %v2054
        %v2125 = vadd.f32 %v1847, %v2059
        %v2126 = vadd.f32 %v1852, %v2064
        %v2127 = vadd.f32 %v1857, %v2069
        %v2128 = vadd.f32 %v1862, %v2074
        %v2129 = vadd.f32 %v1867, %v2079
        %v2130 = vadd.f32 %v1872, %v2084
        %v2131 = vadd.f32 %v1877, %v2089
        %v2132 = vadd.f32 %v1882, %v2094
        %v2133 = vadd.f32 %v1887, %v2099
        %v2134 = vadd.f32 %v1892, %v2104
        %v2135 = vadd.f32 %v1897, %v2109
        %v2136 = vadd.f32 %v1902, %v2114
        %v2137 = vadd.f32 %v1907, %v2119
        %v2138 = vld [vmem:[#allocation10] sm:$0xff]
        %vm2139 = vcmask 64512
        %v2141 = vsel %vm2139, %v1338, 0
        %2143 = vmatprep.subr.mxu0 0.0
        %2144 = vmatpush1.msra.mxu0 0.0
        %2145 = vmatprep.subr.mxu0 0.0
        %2146 = vmatpush1.msra.mxu0 0.0
        %2147 = vmatprep.subr.mxu0 0.0
        %2148 = vmatpush1.msra.mxu0 0.0
        %2149 = vmatprep.subr.mxu0 0.0
        %2150 = vmatpush1.msra.mxu0 0.0
        %2151 = vmatprep.subr.mxu0 0.0
        %2152 = vmatpush1.msra.mxu0 0.0
        %2153 = vmatprep.subr.mxu0 0.0
        %2154 = vmatpush1.msra.mxu0 0.0
        %2155 = vmatprep.subr.mxu0 0.0
        %2156 = vmatpush1.msra.mxu0 0.0
        %2157 = vmatprep.subr.mxu0 0.0
        %2158 = vmatpush1.msra.mxu0 0.0
        %2159 = vmatprep.subr.mxu0 0.0
        %2160 = vmatpush1.msra.mxu0 0.0
        %2161 = vmatprep.subr.mxu0 0.0
        %2162 = vmatpush1.msra.mxu0 0.0
        %2163 = vmatprep.subr.mxu0 0.0
        %2164 = vmatpush1.msra.mxu0 0.0
        %2165 = vmatprep.subr.mxu0 0.0
        %2166 = vmatpush1.msra.mxu0 0.0
        %2167 = vmatprep.subr.mxu0 0.0
        %2168 = vmatpush1.msra.mxu0 0.0
        %2169 = vmatprep.subr.mxu0 0.0
        %2170 = vmatpush1.msra.mxu0 0.0
        %2171 = vmatprep.subr.mxu0 0.0
        %2172 = vmatpush1.msra.mxu0 0.0
        %2173 = vmatprep.subr.mxu0 0.0
        %2174 = vmatpush1.msra.mxu0 %v2138
        %2175 = vmatprep.subr.mxu0 0.0
        %2176 = vmatpush2.msra.mxu0 0.0
        %2177 = vmatprep.subr.mxu0 0.0
        %2178 = vmatpush2.msra.mxu0 0.0
        %2179 = vmatprep.subr.mxu0 0.0
        %2180 = vmatpush2.msra.mxu0 0.0
        %2181 = vmatprep.subr.mxu0 0.0
        %2182 = vmatpush2.msra.mxu0 0.0
        %2183 = vmatprep.subr.mxu0 0.0
        %2184 = vmatpush2.msra.mxu0 0.0
        %2185 = vmatprep.subr.mxu0 0.0
        %2186 = vmatpush2.msra.mxu0 0.0
        %2187 = vmatprep.subr.mxu0 0.0
        %2188 = vmatpush2.msra.mxu0 0.0
        %2189 = vmatprep.subr.mxu0 0.0
        %2190 = vmatpush2.msra.mxu0 0.0
        %2191 = vmatprep.subr.mxu0 0.0
        %2192 = vmatpush2.msra.mxu0 0.0
        %2193 = vmatprep.subr.mxu0 0.0
        %2194 = vmatpush2.msra.mxu0 0.0
        %2195 = vmatprep.subr.mxu0 0.0
        %2196 = vmatpush2.msra.mxu0 0.0
        %2197 = vmatprep.subr.mxu0 0.0
        %2198 = vmatpush2.msra.mxu0 0.0
        %2199 = vmatprep.subr.mxu0 0.0
        %2200 = vmatpush2.msra.mxu0 0.0
        %2201 = vmatprep.subr.mxu0 0.0
        %2202 = vmatpush2.msra.mxu0 0.0
        %2203 = vmatprep.subr.mxu0 0.0
        %2204 = vmatpush2.msra.mxu0 0.0
        %2205 = vmatprep.subr.mxu0 0.0
        %2206 = vmatpush2.msra.mxu0 0.0
        %2207 = vmatprep.mubr.f32.mxu0 0.0
        %2208 = vmatmul.mubr.f32.gmra.mxu0 %v2141
        %v2209 = vpop.f32.mrf.mxu0
        %v2210 = vadd.f32 0.0, %v2209
        %v2211 = vpop.f32.mrf.mxu0
        %2212 = vdwg.mxu0
        %v2213 = vld [vmem:[#allocation11] sm:$0xff]
        %2214 = vmatprep.subr.mxu0 0.0
        %2215 = vmatpush1.msra.mxu0 0.0
        %2216 = vmatprep.subr.mxu0 0.0
        %2217 = vmatpush1.msra.mxu0 0.0
        %2218 = vmatprep.subr.mxu0 0.0
        %2219 = vmatpush1.msra.mxu0 0.0
        %2220 = vmatprep.subr.mxu0 0.0
        %2221 = vmatpush1.msra.mxu0 0.0
        %2222 = vmatprep.subr.mxu0 0.0
        %2223 = vmatpush1.msra.mxu0 0.0
        %2224 = vmatprep.subr.mxu0 0.0
        %2225 = vmatpush1.msra.mxu0 0.0
        %2226 = vmatprep.subr.mxu0 0.0
        %2227 = vmatpush1.msra.mxu0 0.0
        %2228 = vmatprep.subr.mxu0 0.0
        %2229 = vmatpush1.msra.mxu0 0.0
        %2230 = vmatprep.subr.mxu0 0.0
        %2231 = vmatpush1.msra.mxu0 0.0
        %2232 = vmatprep.subr.mxu0 0.0
        %2233 = vmatpush1.msra.mxu0 0.0
        %2234 = vmatprep.subr.mxu0 0.0
        %2235 = vmatpush1.msra.mxu0 0.0
        %2236 = vmatprep.subr.mxu0 0.0
        %2237 = vmatpush1.msra.mxu0 0.0
        %2238 = vmatprep.subr.mxu0 0.0
        %2239 = vmatpush1.msra.mxu0 0.0
        %2240 = vmatprep.subr.mxu0 0.0
        %2241 = vmatpush1.msra.mxu0 0.0
        %2242 = vmatprep.subr.mxu0 0.0
        %2243 = vmatpush1.msra.mxu0 0.0
        %2244 = vmatprep.subr.mxu0 0.0
        %2245 = vmatpush1.msra.mxu0 %v2213
        %2246 = vmatprep.subr.mxu0 0.0
        %2247 = vmatpush2.msra.mxu0 0.0
        %2248 = vmatprep.subr.mxu0 0.0
        %2249 = vmatpush2.msra.mxu0 0.0
        %2250 = vmatprep.subr.mxu0 0.0
        %2251 = vmatpush2.msra.mxu0 0.0
        %2252 = vmatprep.subr.mxu0 0.0
        %2253 = vmatpush2.msra.mxu0 0.0
        %2254 = vmatprep.subr.mxu0 0.0
        %2255 = vmatpush2.msra.mxu0 0.0
        %2256 = vmatprep.subr.mxu0 0.0
        %2257 = vmatpush2.msra.mxu0 0.0
        %2258 = vmatprep.subr.mxu0 0.0
        %2259 = vmatpush2.msra.mxu0 0.0
        %2260 = vmatprep.subr.mxu0 0.0
        %2261 = vmatpush2.msra.mxu0 0.0
        %2262 = vmatprep.subr.mxu0 0.0
        %2263 = vmatpush2.msra.mxu0 0.0
        %2264 = vmatprep.subr.mxu0 0.0
        %2265 = vmatpush2.msra.mxu0 0.0
        %2266 = vmatprep.subr.mxu0 0.0
        %2267 = vmatpush2.msra.mxu0 0.0
        %2268 = vmatprep.subr.mxu0 0.0
        %2269 = vmatpush2.msra.mxu0 0.0
        %2270 = vmatprep.subr.mxu0 0.0
        %2271 = vmatpush2.msra.mxu0 0.0
        %2272 = vmatprep.subr.mxu0 0.0
        %2273 = vmatpush2.msra.mxu0 0.0
        %2274 = vmatprep.subr.mxu0 0.0
        %2275 = vmatpush2.msra.mxu0 0.0
        %2276 = vmatprep.subr.mxu0 0.0
        %2277 = vmatpush2.msra.mxu0 0.0
        %2278 = vmatprep.mubr.f32.mxu0 0.0
        %2279 = vmatmul.mubr.f32.gmra.mxu0 %v2141
        %v2280 = vpop.f32.mrf.mxu0
        %v2281 = vadd.f32 0.0, %v2280
        %v2282 = vpop.f32.mrf.mxu0
        %2283 = vdwg.mxu0
        %v2284 = vsel %vm1566, %v1338, 0
        %2286 = vmatprep.subr.mxu0 0.0
        %2287 = vmatpush1.msra.mxu0 0.0
        %2288 = vmatprep.subr.mxu0 0.0
        %2289 = vmatpush1.msra.mxu0 0.0
        %2290 = vmatprep.subr.mxu0 0.0
        %2291 = vmatpush1.msra.mxu0 0.0
        %2292 = vmatprep.subr.mxu0 0.0
        %2293 = vmatpush1.msra.mxu0 0.0
        %2294 = vmatprep.subr.mxu0 0.0
        %2295 = vmatpush1.msra.mxu0 0.0
        %2296 = vmatprep.subr.mxu0 0.0
        %2297 = vmatpush1.msra.mxu0 0.0
        %2298 = vmatprep.subr.mxu0 0.0
        %2299 = vmatpush1.msra.mxu0 0.0
        %2300 = vmatprep.subr.mxu0 0.0
        %2301 = vmatpush1.msra.mxu0 0.0
        %2302 = vmatprep.subr.mxu0 0.0
        %2303 = vmatpush1.msra.mxu0 0.0
        %2304 = vmatprep.subr.mxu0 0.0
        %2305 = vmatpush1.msra.mxu0 0.0
        %2306 = vmatprep.subr.mxu0 0.0
        %2307 = vmatpush1.msra.mxu0 0.0
        %2308 = vmatprep.subr.mxu0 0.0
        %2309 = vmatpush1.msra.mxu0 0.0
        %2310 = vmatprep.subr.mxu0 0.0
        %2311 = vmatpush1.msra.mxu0 0.0
        %2312 = vmatprep.subr.mxu0 0.0
        %2313 = vmatpush1.msra.mxu0 0.0
        %2314 = vmatprep.subr.mxu0 0.0
        %2315 = vmatpush1.msra.mxu0 0.0
        %2316 = vmatprep.subr.mxu0 0.0
        %2317 = vmatpush1.msra.mxu0 %v2284
        %2318 = vmatprep.subr.mxu0 0.0
        %2319 = vmatpush2.msra.mxu0 0.0
        %2320 = vmatprep.subr.mxu0 0.0
        %2321 = vmatpush2.msra.mxu0 0.0
        %2322 = vmatprep.subr.mxu0 0.0
        %2323 = vmatpush2.msra.mxu0 0.0
        %2324 = vmatprep.subr.mxu0 0.0
        %2325 = vmatpush2.msra.mxu0 0.0
        %2326 = vmatprep.subr.mxu0 0.0
        %2327 = vmatpush2.msra.mxu0 0.0
        %2328 = vmatprep.subr.mxu0 0.0
        %2329 = vmatpush2.msra.mxu0 0.0
        %2330 = vmatprep.subr.mxu0 0.0
        %2331 = vmatpush2.msra.mxu0 0.0
        %2332 = vmatprep.subr.mxu0 0.0
        %2333 = vmatpush2.msra.mxu0 0.0
        %2334 = vmatprep.subr.mxu0 0.0
        %2335 = vmatpush2.msra.mxu0 0.0
        %2336 = vmatprep.subr.mxu0 0.0
        %2337 = vmatpush2.msra.mxu0 0.0
        %2338 = vmatprep.subr.mxu0 0.0
        %2339 = vmatpush2.msra.mxu0 0.0
        %2340 = vmatprep.subr.mxu0 0.0
        %2341 = vmatpush2.msra.mxu0 0.0
        %2342 = vmatprep.subr.mxu0 0.0
        %2343 = vmatpush2.msra.mxu0 0.0
        %2344 = vmatprep.subr.mxu0 0.0
        %2345 = vmatpush2.msra.mxu0 0.0
        %2346 = vmatprep.subr.mxu0 0.0
        %2347 = vmatpush2.msra.mxu0 0.0
        %2348 = vmatprep.subr.mxu0 0.0
        %2349 = vmatpush2.msra.mxu0 0.0
        %2350 = vmatprep.mubr.f32.mxu0 0.0
        %2351 = vmatmul.mubr.f32.gmra.mxu0 %v1519
        %v2352 = vpop.f32.mrf.mxu0
        %v2353 = vadd.f32 0.0, %v2352
        %v2354 = vpop.f32.mrf.mxu0
        %2355 = vmatprep.mubr.f32.mxu0 0.0
        %2356 = vmatmul.mubr.f32.gmra.mxu0 %v1522
        %v2357 = vpop.f32.mrf.mxu0
        %v2358 = vadd.f32 0.0, %v2357
        %v2359 = vpop.f32.mrf.mxu0
        %2360 = vmatprep.mubr.f32.mxu0 0.0
        %2361 = vmatmul.mubr.f32.gmra.mxu0 %v1525
        %v2362 = vpop.f32.mrf.mxu0
        %v2363 = vadd.f32 0.0, %v2362
        %v2364 = vpop.f32.mrf.mxu0
        %2365 = vmatprep.mubr.f32.mxu0 0.0
        %2366 = vmatmul.mubr.f32.gmra.mxu0 %v1528
        %v2367 = vpop.f32.mrf.mxu0
        %v2368 = vadd.f32 0.0, %v2367
        %v2369 = vpop.f32.mrf.mxu0
        %2370 = vmatprep.mubr.f32.mxu0 0.0
        %2371 = vmatmul.mubr.f32.gmra.mxu0 %v1531
        %v2372 = vpop.f32.mrf.mxu0
        %v2373 = vadd.f32 0.0, %v2372
        %v2374 = vpop.f32.mrf.mxu0
        %2375 = vmatprep.mubr.f32.mxu0 0.0
        %2376 = vmatmul.mubr.f32.gmra.mxu0 %v1534
        %v2377 = vpop.f32.mrf.mxu0
        %v2378 = vadd.f32 0.0, %v2377
        %v2379 = vpop.f32.mrf.mxu0
        %2380 = vmatprep.mubr.f32.mxu0 0.0
        %2381 = vmatmul.mubr.f32.gmra.mxu0 %v1537
        %v2382 = vpop.f32.mrf.mxu0
        %v2383 = vadd.f32 0.0, %v2382
        %v2384 = vpop.f32.mrf.mxu0
        %2385 = vmatprep.mubr.f32.mxu0 0.0
        %2386 = vmatmul.mubr.f32.gmra.mxu0 %v1540
        %v2387 = vpop.f32.mrf.mxu0
        %v2388 = vadd.f32 0.0, %v2387
        %v2389 = vpop.f32.mrf.mxu0
        %2390 = vmatprep.mubr.f32.mxu0 0.0
        %2391 = vmatmul.mubr.f32.gmra.mxu0 %v1543
        %v2392 = vpop.f32.mrf.mxu0
        %v2393 = vadd.f32 0.0, %v2392
        %v2394 = vpop.f32.mrf.mxu0
        %2395 = vmatprep.mubr.f32.mxu0 0.0
        %2396 = vmatmul.mubr.f32.gmra.mxu0 %v1546
        %v2397 = vpop.f32.mrf.mxu0
        %v2398 = vadd.f32 0.0, %v2397
        %v2399 = vpop.f32.mrf.mxu0
        %2400 = vmatprep.mubr.f32.mxu0 0.0
        %2401 = vmatmul.mubr.f32.gmra.mxu0 %v1549
        %v2402 = vpop.f32.mrf.mxu0
        %v2403 = vadd.f32 0.0, %v2402
        %v2404 = vpop.f32.mrf.mxu0
        %2405 = vmatprep.mubr.f32.mxu0 0.0
        %2406 = vmatmul.mubr.f32.gmra.mxu0 %v1552
        %v2407 = vpop.f32.mrf.mxu0
        %v2408 = vadd.f32 0.0, %v2407
        %v2409 = vpop.f32.mrf.mxu0
        %2410 = vmatprep.mubr.f32.mxu0 0.0
        %2411 = vmatmul.mubr.f32.gmra.mxu0 %v1555
        %v2412 = vpop.f32.mrf.mxu0
        %v2413 = vadd.f32 0.0, %v2412
        %v2414 = vpop.f32.mrf.mxu0
        %2415 = vmatprep.mubr.f32.mxu0 0.0
        %2416 = vmatmul.mubr.f32.gmra.mxu0 %v1558
        %v2417 = vpop.f32.mrf.mxu0
        %v2418 = vadd.f32 0.0, %v2417
        %v2419 = vpop.f32.mrf.mxu0
        %2420 = vmatprep.mubr.f32.mxu0 0.0
        %2421 = vmatmul.mubr.f32.gmra.mxu0 %v1561
        %v2422 = vpop.f32.mrf.mxu0
        %v2423 = vadd.f32 0.0, %v2422
        %v2424 = vpop.f32.mrf.mxu0
        %2425 = vmatprep.mubr.f32.mxu0 0.0
        %2426 = vmatmul.mubr.f32.gmra.mxu0 %v1564
        %v2427 = vpop.f32.mrf.mxu0
        %v2428 = vadd.f32 0.0, %v2427
        %v2429 = vpop.f32.mrf.mxu0
        %2430 = vdwg.mxu0
        %v2432 = vsel %vm1566, %v2210, 0
        %2434 = vmatprep.subr.mxu0 0.0
        %2435 = vmatpush1.msra.mxu0 0.0
        %2436 = vmatprep.subr.mxu0 0.0
        %2437 = vmatpush1.msra.mxu0 0.0
        %2438 = vmatprep.subr.mxu0 0.0
        %2439 = vmatpush1.msra.mxu0 0.0
        %2440 = vmatprep.subr.mxu0 0.0
        %2441 = vmatpush1.msra.mxu0 0.0
        %2442 = vmatprep.subr.mxu0 0.0
        %2443 = vmatpush1.msra.mxu0 0.0
        %2444 = vmatprep.subr.mxu0 0.0
        %2445 = vmatpush1.msra.mxu0 0.0
        %2446 = vmatprep.subr.mxu0 0.0
        %2447 = vmatpush1.msra.mxu0 0.0
        %2448 = vmatprep.subr.mxu0 0.0
        %2449 = vmatpush1.msra.mxu0 0.0
        %2450 = vmatprep.subr.mxu0 0.0
        %2451 = vmatpush1.msra.mxu0 0.0
        %2452 = vmatprep.subr.mxu0 0.0
        %2453 = vmatpush1.msra.mxu0 0.0
        %2454 = vmatprep.subr.mxu0 0.0
        %2455 = vmatpush1.msra.mxu0 0.0
        %2456 = vmatprep.subr.mxu0 0.0
        %2457 = vmatpush1.msra.mxu0 0.0
        %2458 = vmatprep.subr.mxu0 0.0
        %2459 = vmatpush1.msra.mxu0 0.0
        %2460 = vmatprep.subr.mxu0 0.0
        %2461 = vmatpush1.msra.mxu0 0.0
        %2462 = vmatprep.subr.mxu0 0.0
        %2463 = vmatpush1.msra.mxu0 0.0
        %2464 = vmatprep.subr.mxu0 0.0
        %2465 = vmatpush1.msra.mxu0 %v2432
        %2466 = vmatprep.subr.mxu0 0.0
        %2467 = vmatpush2.msra.mxu0 0.0
        %2468 = vmatprep.subr.mxu0 0.0
        %2469 = vmatpush2.msra.mxu0 0.0
        %2470 = vmatprep.subr.mxu0 0.0
        %2471 = vmatpush2.msra.mxu0 0.0
        %2472 = vmatprep.subr.mxu0 0.0
        %2473 = vmatpush2.msra.mxu0 0.0
        %2474 = vmatprep.subr.mxu0 0.0
        %2475 = vmatpush2.msra.mxu0 0.0
        %2476 = vmatprep.subr.mxu0 0.0
        %2477 = vmatpush2.msra.mxu0 0.0
        %2478 = vmatprep.subr.mxu0 0.0
        %2479 = vmatpush2.msra.mxu0 0.0
        %2480 = vmatprep.subr.mxu0 0.0
        %2481 = vmatpush2.msra.mxu0 0.0
        %2482 = vmatprep.subr.mxu0 0.0
        %2483 = vmatpush2.msra.mxu0 0.0
        %2484 = vmatprep.subr.mxu0 0.0
        %2485 = vmatpush2.msra.mxu0 0.0
        %2486 = vmatprep.subr.mxu0 0.0
        %2487 = vmatpush2.msra.mxu0 0.0
        %2488 = vmatprep.subr.mxu0 0.0
        %2489 = vmatpush2.msra.mxu0 0.0
        %2490 = vmatprep.subr.mxu0 0.0
        %2491 = vmatpush2.msra.mxu0 0.0
        %2492 = vmatprep.subr.mxu0 0.0
        %2493 = vmatpush2.msra.mxu0 0.0
        %2494 = vmatprep.subr.mxu0 0.0
        %2495 = vmatpush2.msra.mxu0 0.0
        %2496 = vmatprep.subr.mxu0 0.0
        %2497 = vmatpush2.msra.mxu0 0.0
        %2498 = vmatprep.mubr.f32.mxu0 0.0
        %2499 = vmatmul.mubr.f32.gmra.mxu0 %v1715
        %v2500 = vpop.f32.mrf.mxu0
        %v2501 = vadd.f32 %v2353, %v2500
        %v2502 = vpop.f32.mrf.mxu0
        %2503 = vmatprep.mubr.f32.mxu0 0.0
        %2504 = vmatmul.mubr.f32.gmra.mxu0 %v1718
        %v2505 = vpop.f32.mrf.mxu0
        %v2506 = vadd.f32 %v2358, %v2505
        %v2507 = vpop.f32.mrf.mxu0
        %2508 = vmatprep.mubr.f32.mxu0 0.0
        %2509 = vmatmul.mubr.f32.gmra.mxu0 %v1721
        %v2510 = vpop.f32.mrf.mxu0
        %v2511 = vadd.f32 %v2363, %v2510
        %v2512 = vpop.f32.mrf.mxu0
        %2513 = vmatprep.mubr.f32.mxu0 0.0
        %2514 = vmatmul.mubr.f32.gmra.mxu0 %v1724
        %v2515 = vpop.f32.mrf.mxu0
        %v2516 = vadd.f32 %v2368, %v2515
        %v2517 = vpop.f32.mrf.mxu0
        %2518 = vmatprep.mubr.f32.mxu0 0.0
        %2519 = vmatmul.mubr.f32.gmra.mxu0 %v1727
        %v2520 = vpop.f32.mrf.mxu0
        %v2521 = vadd.f32 %v2373, %v2520
        %v2522 = vpop.f32.mrf.mxu0
        %2523 = vmatprep.mubr.f32.mxu0 0.0
        %2524 = vmatmul.mubr.f32.gmra.mxu0 %v1730
        %v2525 = vpop.f32.mrf.mxu0
        %v2526 = vadd.f32 %v2378, %v2525
        %v2527 = vpop.f32.mrf.mxu0
        %2528 = vmatprep.mubr.f32.mxu0 0.0
        %2529 = vmatmul.mubr.f32.gmra.mxu0 %v1733
        %v2530 = vpop.f32.mrf.mxu0
        %v2531 = vadd.f32 %v2383, %v2530
        %v2532 = vpop.f32.mrf.mxu0
        %2533 = vmatprep.mubr.f32.mxu0 0.0
        %2534 = vmatmul.mubr.f32.gmra.mxu0 %v1736
        %v2535 = vpop.f32.mrf.mxu0
        %v2536 = vadd.f32 %v2388, %v2535
        %v2537 = vpop.f32.mrf.mxu0
        %2538 = vmatprep.mubr.f32.mxu0 0.0
        %2539 = vmatmul.mubr.f32.gmra.mxu0 %v1739
        %v2540 = vpop.f32.mrf.mxu0
        %v2541 = vadd.f32 %v2393, %v2540
        %v2542 = vpop.f32.mrf.mxu0
        %2543 = vmatprep.mubr.f32.mxu0 0.0
        %2544 = vmatmul.mubr.f32.gmra.mxu0 %v1742
        %v2545 = vpop.f32.mrf.mxu0
        %v2546 = vadd.f32 %v2398, %v2545
        %v2547 = vpop.f32.mrf.mxu0
        %2548 = vmatprep.mubr.f32.mxu0 0.0
        %2549 = vmatmul.mubr.f32.gmra.mxu0 %v1745
        %v2550 = vpop.f32.mrf.mxu0
        %v2551 = vadd.f32 %v2403, %v2550
        %v2552 = vpop.f32.mrf.mxu0
        %2553 = vmatprep.mubr.f32.mxu0 0.0
        %2554 = vmatmul.mubr.f32.gmra.mxu0 %v1748
        %v2555 = vpop.f32.mrf.mxu0
        %v2556 = vadd.f32 %v2408, %v2555
        %v2557 = vpop.f32.mrf.mxu0
        %2558 = vmatprep.mubr.f32.mxu0 0.0
        %2559 = vmatmul.mubr.f32.gmra.mxu0 %v1751
        %v2560 = vpop.f32.mrf.mxu0
        %v2561 = vadd.f32 %v2413, %v2560
        %v2562 = vpop.f32.mrf.mxu0
        %2563 = vmatprep.mubr.f32.mxu0 0.0
        %2564 = vmatmul.mubr.f32.gmra.mxu0 %v1754
        %v2565 = vpop.f32.mrf.mxu0
        %v2566 = vadd.f32 %v2418, %v2565
        %v2567 = vpop.f32.mrf.mxu0
        %2568 = vmatprep.mubr.f32.mxu0 0.0
        %2569 = vmatmul.mubr.f32.gmra.mxu0 %v1757
        %v2570 = vpop.f32.mrf.mxu0
        %v2571 = vadd.f32 %v2423, %v2570
        %v2572 = vpop.f32.mrf.mxu0
        %2573 = vmatprep.mubr.f32.mxu0 0.0
        %2574 = vmatmul.mubr.f32.gmra.mxu0 %v1760
        %v2575 = vpop.f32.mrf.mxu0
        %v2576 = vadd.f32 %v2428, %v2575
        %v2577 = vpop.f32.mrf.mxu0
        %2578 = vdwg.mxu0
        %v2580 = vsel %vm1566, %v2281, 0
        %2582 = vmatprep.subr.mxu0 0.0
        %2583 = vmatpush1.msra.mxu0 0.0
        %2584 = vmatprep.subr.mxu0 0.0
        %2585 = vmatpush1.msra.mxu0 0.0
        %2586 = vmatprep.subr.mxu0 0.0
        %2587 = vmatpush1.msra.mxu0 0.0
        %2588 = vmatprep.subr.mxu0 0.0
        %2589 = vmatpush1.msra.mxu0 0.0
        %2590 = vmatprep.subr.mxu0 0.0
        %2591 = vmatpush1.msra.mxu0 0.0
        %2592 = vmatprep.subr.mxu0 0.0
        %2593 = vmatpush1.msra.mxu0 0.0
        %2594 = vmatprep.subr.mxu0 0.0
        %2595 = vmatpush1.msra.mxu0 0.0
        %2596 = vmatprep.subr.mxu0 0.0
        %2597 = vmatpush1.msra.mxu0 0.0
        %2598 = vmatprep.subr.mxu0 0.0
        %2599 = vmatpush1.msra.mxu0 0.0
        %2600 = vmatprep.subr.mxu0 0.0
        %2601 = vmatpush1.msra.mxu0 0.0
        %2602 = vmatprep.subr.mxu0 0.0
        %2603 = vmatpush1.msra.mxu0 0.0
        %2604 = vmatprep.subr.mxu0 0.0
        %2605 = vmatpush1.msra.mxu0 0.0
        %2606 = vmatprep.subr.mxu0 0.0
        %2607 = vmatpush1.msra.mxu0 0.0
        %2608 = vmatprep.subr.mxu0 0.0
        %2609 = vmatpush1.msra.mxu0 0.0
        %2610 = vmatprep.subr.mxu0 0.0
        %2611 = vmatpush1.msra.mxu0 0.0
        %2612 = vmatprep.subr.mxu0 0.0
        %2613 = vmatpush1.msra.mxu0 %v2580
        %2614 = vmatprep.subr.mxu0 0.0
        %2615 = vmatpush2.msra.mxu0 0.0
        %2616 = vmatprep.subr.mxu0 0.0
        %2617 = vmatpush2.msra.mxu0 0.0
        %2618 = vmatprep.subr.mxu0 0.0
        %2619 = vmatpush2.msra.mxu0 0.0
        %2620 = vmatprep.subr.mxu0 0.0
        %2621 = vmatpush2.msra.mxu0 0.0
        %2622 = vmatprep.subr.mxu0 0.0
        %2623 = vmatpush2.msra.mxu0 0.0
        %2624 = vmatprep.subr.mxu0 0.0
        %2625 = vmatpush2.msra.mxu0 0.0
        %2626 = vmatprep.subr.mxu0 0.0
        %2627 = vmatpush2.msra.mxu0 0.0
        %2628 = vmatprep.subr.mxu0 0.0
        %2629 = vmatpush2.msra.mxu0 0.0
        %2630 = vmatprep.subr.mxu0 0.0
        %2631 = vmatpush2.msra.mxu0 0.0
        %2632 = vmatprep.subr.mxu0 0.0
        %2633 = vmatpush2.msra.mxu0 0.0
        %2634 = vmatprep.subr.mxu0 0.0
        %2635 = vmatpush2.msra.mxu0 0.0
        %2636 = vmatprep.subr.mxu0 0.0
        %2637 = vmatpush2.msra.mxu0 0.0
        %2638 = vmatprep.subr.mxu0 0.0
        %2639 = vmatpush2.msra.mxu0 0.0
        %2640 = vmatprep.subr.mxu0 0.0
        %2641 = vmatpush2.msra.mxu0 0.0
        %2642 = vmatprep.subr.mxu0 0.0
        %2643 = vmatpush2.msra.mxu0 0.0
        %2644 = vmatprep.subr.mxu0 0.0
        %2645 = vmatpush2.msra.mxu0 0.0
        %2646 = vmatprep.mubr.f32.mxu0 0.0
        %2647 = vmatmul.mubr.f32.gmra.mxu0 %v1927
        %v2648 = vpop.f32.mrf.mxu0
        %v2649 = vadd.f32 0.0, %v2648
        %v2650 = vpop.f32.mrf.mxu0
        %2651 = vmatprep.mubr.f32.mxu0 0.0
        %2652 = vmatmul.mubr.f32.gmra.mxu0 %v1930
        %v2653 = vpop.f32.mrf.mxu0
        %v2654 = vadd.f32 0.0, %v2653
        %v2655 = vpop.f32.mrf.mxu0
        %2656 = vmatprep.mubr.f32.mxu0 0.0
        %2657 = vmatmul.mubr.f32.gmra.mxu0 %v1933
        %v2658 = vpop.f32.mrf.mxu0
        %v2659 = vadd.f32 0.0, %v2658
        %v2660 = vpop.f32.mrf.mxu0
        %2661 = vmatprep.mubr.f32.mxu0 0.0
        %2662 = vmatmul.mubr.f32.gmra.mxu0 %v1936
        %v2663 = vpop.f32.mrf.mxu0
        %v2664 = vadd.f32 0.0, %v2663
        %v2665 = vpop.f32.mrf.mxu0
        %2666 = vmatprep.mubr.f32.mxu0 0.0
        %2667 = vmatmul.mubr.f32.gmra.mxu0 %v1939
        %v2668 = vpop.f32.mrf.mxu0
        %v2669 = vadd.f32 0.0, %v2668
        %v2670 = vpop.f32.mrf.mxu0
        %2671 = vmatprep.mubr.f32.mxu0 0.0
        %2672 = vmatmul.mubr.f32.gmra.mxu0 %v1942
        %v2673 = vpop.f32.mrf.mxu0
        %v2674 = vadd.f32 0.0, %v2673
        %v2675 = vpop.f32.mrf.mxu0
        %2676 = vmatprep.mubr.f32.mxu0 0.0
        %2677 = vmatmul.mubr.f32.gmra.mxu0 %v1945
        %v2678 = vpop.f32.mrf.mxu0
        %v2679 = vadd.f32 0.0, %v2678
        %v2680 = vpop.f32.mrf.mxu0
        %2681 = vmatprep.mubr.f32.mxu0 0.0
        %2682 = vmatmul.mubr.f32.gmra.mxu0 %v1948
        %v2683 = vpop.f32.mrf.mxu0
        %v2684 = vadd.f32 0.0, %v2683
        %v2685 = vpop.f32.mrf.mxu0
        %2686 = vmatprep.mubr.f32.mxu0 0.0
        %2687 = vmatmul.mubr.f32.gmra.mxu0 %v1951
        %v2688 = vpop.f32.mrf.mxu0
        %v2689 = vadd.f32 0.0, %v2688
        %v2690 = vpop.f32.mrf.mxu0
        %2691 = vmatprep.mubr.f32.mxu0 0.0
        %2692 = vmatmul.mubr.f32.gmra.mxu0 %v1954
        %v2693 = vpop.f32.mrf.mxu0
        %v2694 = vadd.f32 0.0, %v2693
        %v2695 = vpop.f32.mrf.mxu0
        %2696 = vmatprep.mubr.f32.mxu0 0.0
        %2697 = vmatmul.mubr.f32.gmra.mxu0 %v1957
        %v2698 = vpop.f32.mrf.mxu0
        %v2699 = vadd.f32 0.0, %v2698
        %v2700 = vpop.f32.mrf.mxu0
        %2701 = vmatprep.mubr.f32.mxu0 0.0
        %2702 = vmatmul.mubr.f32.gmra.mxu0 %v1960
        %v2703 = vpop.f32.mrf.mxu0
        %v2704 = vadd.f32 0.0, %v2703
        %v2705 = vpop.f32.mrf.mxu0
        %2706 = vmatprep.mubr.f32.mxu0 0.0
        %2707 = vmatmul.mubr.f32.gmra.mxu0 %v1963
        %v2708 = vpop.f32.mrf.mxu0
        %v2709 = vadd.f32 0.0, %v2708
        %v2710 = vpop.f32.mrf.mxu0
        %2711 = vmatprep.mubr.f32.mxu0 0.0
        %2712 = vmatmul.mubr.f32.gmra.mxu0 %v1966
        %v2713 = vpop.f32.mrf.mxu0
        %v2714 = vadd.f32 0.0, %v2713
        %v2715 = vpop.f32.mrf.mxu0
        %2716 = vmatprep.mubr.f32.mxu0 0.0
        %2717 = vmatmul.mubr.f32.gmra.mxu0 %v1969
        %v2718 = vpop.f32.mrf.mxu0
        %v2719 = vadd.f32 0.0, %v2718
        %v2720 = vpop.f32.mrf.mxu0
        %2721 = vmatprep.mubr.f32.mxu0 0.0
        %2722 = vmatmul.mubr.f32.gmra.mxu0 %v1972
        %v2723 = vpop.f32.mrf.mxu0
        %v2724 = vadd.f32 0.0, %v2723
        %v2725 = vpop.f32.mrf.mxu0
        %2726 = vdwg.mxu0
        %v2727 = vadd.f32 %v2501, %v2649
        %v2728 = vadd.f32 %v2506, %v2654
        %v2729 = vadd.f32 %v2511, %v2659
        %v2730 = vadd.f32 %v2516, %v2664
        %v2731 = vadd.f32 %v2521, %v2669
        %v2732 = vadd.f32 %v2526, %v2674
        %v2733 = vadd.f32 %v2531, %v2679
        %v2734 = vadd.f32 %v2536, %v2684
        %v2735 = vadd.f32 %v2541, %v2689
        %v2736 = vadd.f32 %v2546, %v2694
        %v2737 = vadd.f32 %v2551, %v2699
        %v2738 = vadd.f32 %v2556, %v2704
        %v2739 = vadd.f32 %v2561, %v2709
        %v2740 = vadd.f32 %v2566, %v2714
        %v2741 = vadd.f32 %v2571, %v2719
        %v2742 = vadd.f32 %v2576, %v2724
        %v2743 = vld [vmem:[#allocation17] sm:$0xff]
        %v2744 = vld [vmem:[#allocation17 + $0x8] sm:$0xff]
        %v2745 = vld [vmem:[#allocation19] sm:$0x1]
        %v2747 = vlaneseq
        %v2748 = vshrl.u32 %v2747, 7
        %v2749 = vsub.s32 0, %v2748
        %v2750 = vrot.slane %v2745, %v2749
        %v2753 = vsel %vm1267, %v2122, 0
        %v2756 = vsel %vm1267, %v2123, 0
        %v2759 = vsel %vm1267, %v2124, 0
        %v2762 = vsel %vm1267, %v2125, 0
        %v2765 = vsel %vm1267, %v2126, 0
        %v2768 = vsel %vm1267, %v2127, 0
        %v2771 = vsel %vm1267, %v2128, 0
        %v2774 = vsel %vm1267, %v2129, 0
        %v2777 = vsel %vm1267, %v2130, 0
        %v2780 = vsel %vm1267, %v2131, 0
        %v2783 = vsel %vm1267, %v2132, 0
        %v2786 = vsel %vm1267, %v2133, 0
        %v2789 = vsel %vm1267, %v2134, 0
        %v2792 = vsel %vm1267, %v2135, 0
        %v2795 = vsel %vm1267, %v2136, 0
        %v2798 = vsel %vm1267, %v2137, 0
        %2800 = vmatprep.subr.mxu0 0.0
        %2801 = vmatpush1.msra.mxu0 0.0
        %2802 = vmatprep.subr.mxu0 0.0
        %2803 = vmatpush1.msra.mxu0 0.0
        %2804 = vmatprep.subr.mxu0 0.0
        %2805 = vmatpush1.msra.mxu0 0.0
        %2806 = vmatprep.subr.mxu0 0.0
        %2807 = vmatpush1.msra.mxu0 0.0
        %2808 = vmatprep.subr.mxu0 0.0
        %2809 = vmatpush1.msra.mxu0 0.0
        %2810 = vmatprep.subr.mxu0 0.0
        %2811 = vmatpush1.msra.mxu0 0.0
        %2812 = vmatprep.subr.mxu0 0.0
        %2813 = vmatpush1.msra.mxu0 0.0
        %2814 = vmatprep.subr.mxu0 0.0
        %2815 = vmatpush1.msra.mxu0 0.0
        %2816 = vmatprep.subr.mxu0 0.0
        %2817 = vmatpush1.msra.mxu0 0.0
        %2818 = vmatprep.subr.mxu0 0.0
        %2819 = vmatpush1.msra.mxu0 0.0
        %2820 = vmatprep.subr.mxu0 0.0
        %2821 = vmatpush1.msra.mxu0 0.0
        %2822 = vmatprep.subr.mxu0 0.0
        %2823 = vmatpush1.msra.mxu0 0.0
        %2824 = vmatprep.subr.mxu0 0.0
        %2825 = vmatpush1.msra.mxu0 0.0
        %2826 = vmatprep.subr.mxu0 0.0
        %2827 = vmatpush1.msra.mxu0 0.0
        %2828 = vmatprep.subr.mxu0 0.0
        %2829 = vmatpush1.msra.mxu0 %v2744
        %2830 = vmatprep.subr.mxu0 0.0
        %2831 = vmatpush1.msra.mxu0 %v2743
        %2832 = vmatprep.subr.mxu0 0.0
        %2833 = vmatpush2.msra.mxu0 0.0
        %2834 = vmatprep.subr.mxu0 0.0
        %2835 = vmatpush2.msra.mxu0 0.0
        %2836 = vmatprep.subr.mxu0 0.0
        %2837 = vmatpush2.msra.mxu0 0.0
        %2838 = vmatprep.subr.mxu0 0.0
        %2839 = vmatpush2.msra.mxu0 0.0
        %2840 = vmatprep.subr.mxu0 0.0
        %2841 = vmatpush2.msra.mxu0 0.0
        %2842 = vmatprep.subr.mxu0 0.0
        %2843 = vmatpush2.msra.mxu0 0.0
        %2844 = vmatprep.subr.mxu0 0.0
        %2845 = vmatpush2.msra.mxu0 0.0
        %2846 = vmatprep.subr.mxu0 0.0
        %2847 = vmatpush2.msra.mxu0 0.0
        %2848 = vmatprep.subr.mxu0 0.0
        %2849 = vmatpush2.msra.mxu0 0.0
        %2850 = vmatprep.subr.mxu0 0.0
        %2851 = vmatpush2.msra.mxu0 0.0
        %2852 = vmatprep.subr.mxu0 0.0
        %2853 = vmatpush2.msra.mxu0 0.0
        %2854 = vmatprep.subr.mxu0 0.0
        %2855 = vmatpush2.msra.mxu0 0.0
        %2856 = vmatprep.subr.mxu0 0.0
        %2857 = vmatpush2.msra.mxu0 0.0
        %2858 = vmatprep.subr.mxu0 0.0
        %2859 = vmatpush2.msra.mxu0 0.0
        %2860 = vmatprep.subr.mxu0 0.0
        %2861 = vmatpush2.msra.mxu0 0.0
        %2862 = vmatprep.subr.mxu0 0.0
        %2863 = vmatpush2.msra.mxu0 0.0
        %2864 = vmatprep.mubr.f32.mxu0 0.0
        %2865 = vmatmul.mubr.f32.gmra.mxu0 %v2753
        %v2866 = vpop.f32.mrf.mxu0
        %v2867 = vadd.f32 %v2750, %v2866
        %v2868 = vpop.f32.mrf.mxu0
        %2869 = vmatprep.mubr.f32.mxu0 0.0
        %2870 = vmatmul.mubr.f32.gmra.mxu0 %v2756
        %v2871 = vpop.f32.mrf.mxu0
        %v2872 = vadd.f32 %v2750, %v2871
        %v2873 = vpop.f32.mrf.mxu0
        %2874 = vmatprep.mubr.f32.mxu0 0.0
        %2875 = vmatmul.mubr.f32.gmra.mxu0 %v2759
        %v2876 = vpop.f32.mrf.mxu0
        %v2877 = vadd.f32 %v2750, %v2876
        %v2878 = vpop.f32.mrf.mxu0
        %2879 = vmatprep.mubr.f32.mxu0 0.0
        %2880 = vmatmul.mubr.f32.gmra.mxu0 %v2762
        %v2881 = vpop.f32.mrf.mxu0
        %v2882 = vadd.f32 %v2750, %v2881
        %v2883 = vpop.f32.mrf.mxu0
        %2884 = vmatprep.mubr.f32.mxu0 0.0
        %2885 = vmatmul.mubr.f32.gmra.mxu0 %v2765
        %v2886 = vpop.f32.mrf.mxu0
        %v2887 = vadd.f32 %v2750, %v2886
        %v2888 = vpop.f32.mrf.mxu0
        %2889 = vmatprep.mubr.f32.mxu0 0.0
        %2890 = vmatmul.mubr.f32.gmra.mxu0 %v2768
        %v2891 = vpop.f32.mrf.mxu0
        %v2892 = vadd.f32 %v2750, %v2891
        %v2893 = vpop.f32.mrf.mxu0
        %2894 = vmatprep.mubr.f32.mxu0 0.0
        %2895 = vmatmul.mubr.f32.gmra.mxu0 %v2771
        %v2896 = vpop.f32.mrf.mxu0
        %v2897 = vadd.f32 %v2750, %v2896
        %v2898 = vpop.f32.mrf.mxu0
        %2899 = vmatprep.mubr.f32.mxu0 0.0
        %2900 = vmatmul.mubr.f32.gmra.mxu0 %v2774
        %v2901 = vpop.f32.mrf.mxu0
        %v2902 = vadd.f32 %v2750, %v2901
        %v2903 = vpop.f32.mrf.mxu0
        %2904 = vmatprep.mubr.f32.mxu0 0.0
        %2905 = vmatmul.mubr.f32.gmra.mxu0 %v2777
        %v2906 = vpop.f32.mrf.mxu0
        %v2907 = vadd.f32 %v2750, %v2906
        %v2908 = vpop.f32.mrf.mxu0
        %2909 = vmatprep.mubr.f32.mxu0 0.0
        %2910 = vmatmul.mubr.f32.gmra.mxu0 %v2780
        %v2911 = vpop.f32.mrf.mxu0
        %v2912 = vadd.f32 %v2750, %v2911
        %v2913 = vpop.f32.mrf.mxu0
        %2914 = vmatprep.mubr.f32.mxu0 0.0
        %2915 = vmatmul.mubr.f32.gmra.mxu0 %v2783
        %v2916 = vpop.f32.mrf.mxu0
        %v2917 = vadd.f32 %v2750, %v2916
        %v2918 = vpop.f32.mrf.mxu0
        %2919 = vmatprep.mubr.f32.mxu0 0.0
        %2920 = vmatmul.mubr.f32.gmra.mxu0 %v2786
        %v2921 = vpop.f32.mrf.mxu0
        %v2922 = vadd.f32 %v2750, %v2921
        %v2923 = vpop.f32.mrf.mxu0
        %2924 = vmatprep.mubr.f32.mxu0 0.0
        %2925 = vmatmul.mubr.f32.gmra.mxu0 %v2789
        %v2926 = vpop.f32.mrf.mxu0
        %v2927 = vadd.f32 %v2750, %v2926
        %v2928 = vpop.f32.mrf.mxu0
        %2929 = vmatprep.mubr.f32.mxu0 0.0
        %2930 = vmatmul.mubr.f32.gmra.mxu0 %v2792
        %v2931 = vpop.f32.mrf.mxu0
        %v2932 = vadd.f32 %v2750, %v2931
        %v2933 = vpop.f32.mrf.mxu0
        %2934 = vmatprep.mubr.f32.mxu0 0.0
        %2935 = vmatmul.mubr.f32.gmra.mxu0 %v2795
        %v2936 = vpop.f32.mrf.mxu0
        %v2937 = vadd.f32 %v2750, %v2936
        %v2938 = vpop.f32.mrf.mxu0
        %2939 = vmatprep.mubr.f32.mxu0 0.0
        %2940 = vmatmul.mubr.f32.gmra.mxu0 %v2798
        %v2941 = vpop.f32.mrf.mxu0
        %v2942 = vadd.f32 %v2750, %v2941
        %v2943 = vpop.f32.mrf.mxu0
        %2944 = vdwg.mxu0
        %v2945 = vmul.f32 %v2867, 0.5
        %v2946 = vmul.f32 %v2872, 0.5
        %v2947 = vmul.f32 %v2877, 0.5
        %v2948 = vmul.f32 %v2882, 0.5
        %v2949 = vmul.f32 %v2887, 0.5
        %v2950 = vmul.f32 %v2892, 0.5
        %v2951 = vmul.f32 %v2897, 0.5
        %v2952 = vmul.f32 %v2902, 0.5
        %v2953 = vmul.f32 %v2907, 0.5
        %v2954 = vmul.f32 %v2912, 0.5
        %v2955 = vmul.f32 %v2917, 0.5
        %v2956 = vmul.f32 %v2922, 0.5
        %v2957 = vmul.f32 %v2927, 0.5
        %v2958 = vmul.f32 %v2932, 0.5
        %v2959 = vmul.f32 %v2937, 0.5
        %v2960 = vmul.f32 %v2942, 0.5
        %v2961 = vmul.f32 %v2867, 0.70710677
        %v2962 = vmul.f32 %v2872, 0.70710677
        %v2963 = vmul.f32 %v2877, 0.70710677
        %v2964 = vmul.f32 %v2882, 0.70710677
        %v2965 = vmul.f32 %v2887, 0.70710677
        %v2966 = vmul.f32 %v2892, 0.70710677
        %v2967 = vmul.f32 %v2897, 0.70710677
        %v2968 = vmul.f32 %v2902, 0.70710677
        %v2969 = vmul.f32 %v2907, 0.70710677
        %v2970 = vmul.f32 %v2912, 0.70710677
        %v2971 = vmul.f32 %v2917, 0.70710677
        %v2972 = vmul.f32 %v2922, 0.70710677
        %v2973 = vmul.f32 %v2927, 0.70710677
        %v2974 = vmul.f32 %v2932, 0.70710677
        %v2975 = vmul.f32 %v2937, 0.70710677
        %v2976 = vmul.f32 %v2942, 0.70710677
        %v2977 = vand.u32 2147483647, %v2961
        %v2978 = vand.u32 2147483647, %v2962
        %v2979 = vand.u32 2147483647, %v2963
        %v2980 = vand.u32 2147483647, %v2964
        %v2981 = vand.u32 2147483647, %v2965
        %v2982 = vand.u32 2147483647, %v2966
        %v2983 = vand.u32 2147483647, %v2967
        %v2984 = vand.u32 2147483647, %v2968
        %v2985 = vand.u32 2147483647, %v2969
        %v2986 = vand.u32 2147483647, %v2970
        %v2987 = vand.u32 2147483647, %v2971
        %v2988 = vand.u32 2147483647, %v2972
        %v2989 = vand.u32 2147483647, %v2973
        %v2990 = vand.u32 2147483647, %v2974
        %v2991 = vand.u32 2147483647, %v2975
        %v2992 = vand.u32 2147483647, %v2976
        %v2993 = vmul.f32 %v2977, 0.3275911
        %v2994 = vmul.f32 %v2978, 0.3275911
        %v2995 = vmul.f32 %v2979, 0.3275911
        %v2996 = vmul.f32 %v2980, 0.3275911
        %v2997 = vmul.f32 %v2981, 0.3275911
        %v2998 = vmul.f32 %v2982, 0.3275911
        %v2999 = vmul.f32 %v2983, 0.3275911
        %v3000 = vmul.f32 %v2984, 0.3275911
        %v3001 = vmul.f32 %v2985, 0.3275911
        %v3002 = vmul.f32 %v2986, 0.3275911
        %v3003 = vmul.f32 %v2987, 0.3275911
        %v3004 = vmul.f32 %v2988, 0.3275911
        %v3005 = vmul.f32 %v2989, 0.3275911
        %v3006 = vmul.f32 %v2990, 0.3275911
        %v3007 = vmul.f32 %v2991, 0.3275911
        %v3008 = vmul.f32 %v2992, 0.3275911
        %v3009 = vadd.f32 %v2993, 1.0
        %v3010 = vadd.f32 %v2994, 1.0
        %v3011 = vadd.f32 %v2995, 1.0
        %v3012 = vadd.f32 %v2996, 1.0
        %v3013 = vadd.f32 %v2997, 1.0
        %v3014 = vadd.f32 %v2998, 1.0
        %v3015 = vadd.f32 %v2999, 1.0
        %v3016 = vadd.f32 %v3000, 1.0
        %v3017 = vadd.f32 %v3001, 1.0
        %v3018 = vadd.f32 %v3002, 1.0
        %v3019 = vadd.f32 %v3003, 1.0
        %v3020 = vadd.f32 %v3004, 1.0
        %v3021 = vadd.f32 %v3005, 1.0
        %v3022 = vadd.f32 %v3006, 1.0
        %v3023 = vadd.f32 %v3007, 1.0
        %v3024 = vadd.f32 %v3008, 1.0
        %v3025 = vrcp.pop %v3009
        %v3026 = vmul.f32 1.0, %v3025
        %v3027 = vrcp.pop %v3010
        %v3028 = vmul.f32 1.0, %v3027
        %v3029 = vrcp.pop %v3011
        %v3030 = vmul.f32 1.0, %v3029
        %v3031 = vrcp.pop %v3012
        %v3032 = vmul.f32 1.0, %v3031
        %v3033 = vrcp.pop %v3013
        %v3034 = vmul.f32 1.0, %v3033
        %v3035 = vrcp.pop %v3014
        %v3036 = vmul.f32 1.0, %v3035
        %v3037 = vrcp.pop %v3015
        %v3038 = vmul.f32 1.0, %v3037
        %v3039 = vrcp.pop %v3016
        %v3040 = vmul.f32 1.0, %v3039
        %v3041 = vrcp.pop %v3017
        %v3042 = vmul.f32 1.0, %v3041
        %v3043 = vrcp.pop %v3018
        %v3044 = vmul.f32 1.0, %v3043
        %v3045 = vrcp.pop %v3019
        %v3046 = vmul.f32 1.0, %v3045
        %v3047 = vrcp.pop %v3020
        %v3048 = vmul.f32 1.0, %v3047
        %v3049 = vrcp.pop %v3021
        %v3050 = vmul.f32 1.0, %v3049
        %v3051 = vrcp.pop %v3022
        %v3052 = vmul.f32 1.0, %v3051
        %v3053 = vrcp.pop %v3023
        %v3054 = vmul.f32 1.0, %v3053
        %v3055 = vrcp.pop %v3024
        %v3056 = vmul.f32 1.0, %v3055
        %v3057 = vmul.f32 %v3026, 1.0614054
        %v3058 = vmul.f32 %v3028, 1.0614054
        %v3059 = vmul.f32 %v3030, 1.0614054
        %v3060 = vmul.f32 %v3032, 1.0614054
        %v3061 = vmul.f32 %v3034, 1.0614054
        %v3062 = vmul.f32 %v3036, 1.0614054
        %v3063 = vmul.f32 %v3038, 1.0614054
        %v3064 = vmul.f32 %v3040, 1.0614054
        %v3065 = vmul.f32 %v3042, 1.0614054
        %v3066 = vmul.f32 %v3044, 1.0614054
        %v3067 = vmul.f32 %v3046, 1.0614054
        %v3068 = vmul.f32 %v3048, 1.0614054
        %v3069 = vmul.f32 %v3050, 1.0614054
        %v3070 = vmul.f32 %v3052, 1.0614054
        %v3071 = vmul.f32 %v3054, 1.0614054
        %v3072 = vmul.f32 %v3056, 1.0614054
        %v3073 = vadd.f32 %v3057, -1.4531521
        %v3074 = vadd.f32 %v3058, -1.4531521
        %v3075 = vadd.f32 %v3059, -1.4531521
        %v3076 = vadd.f32 %v3060, -1.4531521
        %v3077 = vadd.f32 %v3061, -1.4531521
        %v3078 = vadd.f32 %v3062, -1.4531521
        %v3079 = vadd.f32 %v3063, -1.4531521
        %v3080 = vadd.f32 %v3064, -1.4531521
        %v3081 = vadd.f32 %v3065, -1.4531521
        %v3082 = vadd.f32 %v3066, -1.4531521
        %v3083 = vadd.f32 %v3067, -1.4531521
        %v3084 = vadd.f32 %v3068, -1.4531521
        %v3085 = vadd.f32 %v3069, -1.4531521
        %v3086 = vadd.f32 %v3070, -1.4531521
        %v3087 = vadd.f32 %v3071, -1.4531521
        %v3088 = vadd.f32 %v3072, -1.4531521
        %v3089 = vmul.f32 %v3073, %v3026
        %v3090 = vmul.f32 %v3074, %v3028
        %v3091 = vmul.f32 %v3075, %v3030
        %v3092 = vmul.f32 %v3076, %v3032
        %v3093 = vmul.f32 %v3077, %v3034
        %v3094 = vmul.f32 %v3078, %v3036
        %v3095 = vmul.f32 %v3079, %v3038
        %v3096 = vmul.f32 %v3080, %v3040
        %v3097 = vmul.f32 %v3081, %v3042
        %v3098 = vmul.f32 %v3082, %v3044
        %v3099 = vmul.f32 %v3083, %v3046
        %v3100 = vmul.f32 %v3084, %v3048
        %v3101 = vmul.f32 %v3085, %v3050
        %v3102 = vmul.f32 %v3086, %v3052
        %v3103 = vmul.f32 %v3087, %v3054
        %v3104 = vmul.f32 %v3088, %v3056
        %v3105 = vadd.f32 %v3089, 1.4214138
        %v3106 = vadd.f32 %v3090, 1.4214138
        %v3107 = vadd.f32 %v3091, 1.4214138
        %v3108 = vadd.f32 %v3092, 1.4214138
        %v3109 = vadd.f32 %v3093, 1.4214138
        %v3110 = vadd.f32 %v3094, 1.4214138
        %v3111 = vadd.f32 %v3095, 1.4214138
        %v3112 = vadd.f32 %v3096, 1.4214138
        %v3113 = vadd.f32 %v3097, 1.4214138
        %v3114 = vadd.f32 %v3098, 1.4214138
        %v3115 = vadd.f32 %v3099, 1.4214138
        %v3116 = vadd.f32 %v3100, 1.4214138
        %v3117 = vadd.f32 %v3101, 1.4214138
        %v3118 = vadd.f32 %v3102, 1.4214138
        %v3119 = vadd.f32 %v3103, 1.4214138
        %v3120 = vadd.f32 %v3104, 1.4214138
        %v3121 = vmul.f32 %v3105, %v3026
        %v3122 = vmul.f32 %v3106, %v3028
        %v3123 = vmul.f32 %v3107, %v3030
        %v3124 = vmul.f32 %v3108, %v3032
        %v3125 = vmul.f32 %v3109, %v3034
        %v3126 = vmul.f32 %v3110, %v3036
        %v3127 = vmul.f32 %v3111, %v3038
        %v3128 = vmul.f32 %v3112, %v3040
        %v3129 = vmul.f32 %v3113, %v3042
        %v3130 = vmul.f32 %v3114, %v3044
        %v3131 = vmul.f32 %v3115, %v3046
        %v3132 = vmul.f32 %v3116, %v3048
        %v3133 = vmul.f32 %v3117, %v3050
        %v3134 = vmul.f32 %v3118, %v3052
        %v3135 = vmul.f32 %v3119, %v3054
        %v3136 = vmul.f32 %v3120, %v3056
        %v3137 = vadd.f32 %v3121, -0.28449672
        %v3138 = vadd.f32 %v3122, -0.28449672
        %v3139 = vadd.f32 %v3123, -0.28449672
        %v3140 = vadd.f32 %v3124, -0.28449672
        %v3141 = vadd.f32 %v3125, -0.28449672
        %v3142 = vadd.f32 %v3126, -0.28449672
        %v3143 = vadd.f32 %v3127, -0.28449672
        %v3144 = vadd.f32 %v3128, -0.28449672
        %v3145 = vadd.f32 %v3129, -0.28449672
        %v3146 = vadd.f32 %v3130, -0.28449672
        %v3147 = vadd.f32 %v3131, -0.28449672
        %v3148 = vadd.f32 %v3132, -0.28449672
        %v3149 = vadd.f32 %v3133, -0.28449672
        %v3150 = vadd.f32 %v3134, -0.28449672
        %v3151 = vadd.f32 %v3135, -0.28449672
        %v3152 = vadd.f32 %v3136, -0.28449672
        %v3153 = vmul.f32 %v3137, %v3026
        %v3154 = vmul.f32 %v3138, %v3028
        %v3155 = vmul.f32 %v3139, %v3030
        %v3156 = vmul.f32 %v3140, %v3032
        %v3157 = vmul.f32 %v3141, %v3034
        %v3158 = vmul.f32 %v3142, %v3036
        %v3159 = vmul.f32 %v3143, %v3038
        %v3160 = vmul.f32 %v3144, %v3040
        %v3161 = vmul.f32 %v3145, %v3042
        %v3162 = vmul.f32 %v3146, %v3044
        %v3163 = vmul.f32 %v3147, %v3046
        %v3164 = vmul.f32 %v3148, %v3048
        %v3165 = vmul.f32 %v3149, %v3050
        %v3166 = vmul.f32 %v3150, %v3052
        %v3167 = vmul.f32 %v3151, %v3054
        %v3168 = vmul.f32 %v3152, %v3056
        %v3169 = vadd.f32 %v3153, 0.2548296
        %v3170 = vadd.f32 %v3154, 0.2548296
        %v3171 = vadd.f32 %v3155, 0.2548296
        %v3172 = vadd.f32 %v3156, 0.2548296
        %v3173 = vadd.f32 %v3157, 0.2548296
        %v3174 = vadd.f32 %v3158, 0.2548296
        %v3175 = vadd.f32 %v3159, 0.2548296
        %v3176 = vadd.f32 %v3160, 0.2548296
        %v3177 = vadd.f32 %v3161, 0.2548296
        %v3178 = vadd.f32 %v3162, 0.2548296
        %v3179 = vadd.f32 %v3163, 0.2548296
        %v3180 = vadd.f32 %v3164, 0.2548296
        %v3181 = vadd.f32 %v3165, 0.2548296
        %v3182 = vadd.f32 %v3166, 0.2548296
        %v3183 = vadd.f32 %v3167, 0.2548296
        %v3184 = vadd.f32 %v3168, 0.2548296
        %v3185 = vmul.f32 %v3169, %v3026
        %v3186 = vmul.f32 %v3170, %v3028
        %v3187 = vmul.f32 %v3171, %v3030
        %v3188 = vmul.f32 %v3172, %v3032
        %v3189 = vmul.f32 %v3173, %v3034
        %v3190 = vmul.f32 %v3174, %v3036
        %v3191 = vmul.f32 %v3175, %v3038
        %v3192 = vmul.f32 %v3176, %v3040
        %v3193 = vmul.f32 %v3177, %v3042
        %v3194 = vmul.f32 %v3178, %v3044
        %v3195 = vmul.f32 %v3179, %v3046
        %v3196 = vmul.f32 %v3180, %v3048
        %v3197 = vmul.f32 %v3181, %v3050
        %v3198 = vmul.f32 %v3182, %v3052
        %v3199 = vmul.f32 %v3183, %v3054
        %v3200 = vmul.f32 %v3184, %v3056
        %v3201 = vsub.f32 0.0, %v2977
        %v3202 = vsub.f32 0.0, %v2978
        %v3203 = vsub.f32 0.0, %v2979
        %v3204 = vsub.f32 0.0, %v2980
        %v3205 = vsub.f32 0.0, %v2981
        %v3206 = vsub.f32 0.0, %v2982
        %v3207 = vsub.f32 0.0, %v2983
        %v3208 = vsub.f32 0.0, %v2984
        %v3209 = vsub.f32 0.0, %v2985
        %v3210 = vsub.f32 0.0, %v2986
        %v3211 = vsub.f32 0.0, %v2987
        %v3212 = vsub.f32 0.0, %v2988
        %v3213 = vsub.f32 0.0, %v2989
        %v3214 = vsub.f32 0.0, %v2990
        %v3215 = vsub.f32 0.0, %v2991
        %v3216 = vsub.f32 0.0, %v2992
        %v3217 = vmul.f32 %v3201, %v2977
        %v3218 = vmul.f32 %v3202, %v2978
        %v3219 = vmul.f32 %v3203, %v2979
        %v3220 = vmul.f32 %v3204, %v2980
        %v3221 = vmul.f32 %v3205, %v2981
        %v3222 = vmul.f32 %v3206, %v2982
        %v3223 = vmul.f32 %v3207, %v2983
        %v3224 = vmul.f32 %v3208, %v2984
        %v3225 = vmul.f32 %v3209, %v2985
        %v3226 = vmul.f32 %v3210, %v2986
        %v3227 = vmul.f32 %v3211, %v2987
        %v3228 = vmul.f32 %v3212, %v2988
        %v3229 = vmul.f32 %v3213, %v2989
        %v3230 = vmul.f32 %v3214, %v2990
        %v3231 = vmul.f32 %v3215, %v2991
        %v3232 = vmul.f32 %v3216, %v2992
        %v3233 = vmul.f32 %v3217, 1.442695
        %v3234 = vpow.pop %v3233
        %v3235 = vmul.f32 %v3218, 1.442695
        %v3236 = vpow.pop %v3235
        %v3237 = vmul.f32 %v3219, 1.442695
        %v3238 = vpow.pop %v3237
        %v3239 = vmul.f32 %v3220, 1.442695
        %v3240 = vpow.pop %v3239
        %v3241 = vmul.f32 %v3221, 1.442695
        %v3242 = vpow.pop %v3241
        %v3243 = vmul.f32 %v3222, 1.442695
        %v3244 = vpow.pop %v3243
        %v3245 = vmul.f32 %v3223, 1.442695
        %v3246 = vpow.pop %v3245
        %v3247 = vmul.f32 %v3224, 1.442695
        %v3248 = vpow.pop %v3247
        %v3249 = vmul.f32 %v3225, 1.442695
        %v3250 = vpow.pop %v3249
        %v3251 = vmul.f32 %v3226, 1.442695
        %v3252 = vpow.pop %v3251
        %v3253 = vmul.f32 %v3227, 1.442695
        %v3254 = vpow.pop %v3253
        %v3255 = vmul.f32 %v3228, 1.442695
        %v3256 = vpow.pop %v3255
        %v3257 = vmul.f32 %v3229, 1.442695
        %v3258 = vpow.pop %v3257
        %v3259 = vmul.f32 %v3230, 1.442695
        %v3260 = vpow.pop %v3259
        %v3261 = vmul.f32 %v3231, 1.442695
        %v3262 = vpow.pop %v3261
        %v3263 = vmul.f32 %v3232, 1.442695
        %v3264 = vpow.pop %v3263
        %v3265 = vmul.f32 %v3185, %v3234
        %v3266 = vmul.f32 %v3186, %v3236
        %v3267 = vmul.f32 %v3187, %v3238
        %v3268 = vmul.f32 %v3188, %v3240
        %v3269 = vmul.f32 %v3189, %v3242
        %v3270 = vmul.f32 %v3190, %v3244
        %v3271 = vmul.f32 %v3191, %v3246
        %v3272 = vmul.f32 %v3192, %v3248
        %v3273 = vmul.f32 %v3193, %v3250
        %v3274 = vmul.f32 %v3194, %v3252
        %v3275 = vmul.f32 %v3195, %v3254
        %v3276 = vmul.f32 %v3196, %v3256
        %v3277 = vmul.f32 %v3197, %v3258
        %v3278 = vmul.f32 %v3198, %v3260
        %v3279 = vmul.f32 %v3199, %v3262
        %v3280 = vmul.f32 %v3200, %v3264
        %v3281 = vsub.f32 1.0, %v3265
        %v3282 = vsub.f32 1.0, %v3266
        %v3283 = vsub.f32 1.0, %v3267
        %v3284 = vsub.f32 1.0, %v3268
        %v3285 = vsub.f32 1.0, %v3269
        %v3286 = vsub.f32 1.0, %v3270
        %v3287 = vsub.f32 1.0, %v3271
        %v3288 = vsub.f32 1.0, %v3272
        %v3289 = vsub.f32 1.0, %v3273
        %v3290 = vsub.f32 1.0, %v3274
        %v3291 = vsub.f32 1.0, %v3275
        %v3292 = vsub.f32 1.0, %v3276
        %v3293 = vsub.f32 1.0, %v3277
        %v3294 = vsub.f32 1.0, %v3278
        %v3295 = vsub.f32 1.0, %v3279
        %v3296 = vsub.f32 1.0, %v3280
        %vm3297 = vcmp.lt.f32.partialorder %v2961, 0.0
        %vm3298 = vcmp.lt.f32.partialorder %v2962, 0.0
        %vm3299 = vcmp.lt.f32.partialorder %v2963, 0.0
        %vm3300 = vcmp.lt.f32.partialorder %v2964, 0.0
        %vm3301 = vcmp.lt.f32.partialorder %v2965, 0.0
        %vm3302 = vcmp.lt.f32.partialorder %v2966, 0.0
        %vm3303 = vcmp.lt.f32.partialorder %v2967, 0.0
        %vm3304 = vcmp.lt.f32.partialorder %v2968, 0.0
        %vm3305 = vcmp.lt.f32.partialorder %v2969, 0.0
        %vm3306 = vcmp.lt.f32.partialorder %v2970, 0.0
        %vm3307 = vcmp.lt.f32.partialorder %v2971, 0.0
        %vm3308 = vcmp.lt.f32.partialorder %v2972, 0.0
        %vm3309 = vcmp.lt.f32.partialorder %v2973, 0.0
        %vm3310 = vcmp.lt.f32.partialorder %v2974, 0.0
        %vm3311 = vcmp.lt.f32.partialorder %v2975, 0.0
        %vm3312 = vcmp.lt.f32.partialorder %v2976, 0.0
        %v3313 = vsub.f32 0.0, %v3281
        %v3314 = vsub.f32 0.0, %v3282
        %v3315 = vsub.f32 0.0, %v3283
        %v3316 = vsub.f32 0.0, %v3284
        %v3317 = vsub.f32 0.0, %v3285
        %v3318 = vsub.f32 0.0, %v3286
        %v3319 = vsub.f32 0.0, %v3287
        %v3320 = vsub.f32 0.0, %v3288
        %v3321 = vsub.f32 0.0, %v3289
        %v3322 = vsub.f32 0.0, %v3290
        %v3323 = vsub.f32 0.0, %v3291
        %v3324 = vsub.f32 0.0, %v3292
        %v3325 = vsub.f32 0.0, %v3293
        %v3326 = vsub.f32 0.0, %v3294
        %v3327 = vsub.f32 0.0, %v3295
        %v3328 = vsub.f32 0.0, %v3296
        %v3329 = vsel %vm3297, %v3313, %v3281
        %v3330 = vsel %vm3298, %v3314, %v3282
        %v3331 = vsel %vm3299, %v3315, %v3283
        %v3332 = vsel %vm3300, %v3316, %v3284
        %v3333 = vsel %vm3301, %v3317, %v3285
        %v3334 = vsel %vm3302, %v3318, %v3286
        %v3335 = vsel %vm3303, %v3319, %v3287
        %v3336 = vsel %vm3304, %v3320, %v3288
        %v3337 = vsel %vm3305, %v3321, %v3289
        %v3338 = vsel %vm3306, %v3322, %v3290
        %v3339 = vsel %vm3307, %v3323, %v3291
        %v3340 = vsel %vm3308, %v3324, %v3292
        %v3341 = vsel %vm3309, %v3325, %v3293
        %v3342 = vsel %vm3310, %v3326, %v3294
        %v3343 = vsel %vm3311, %v3327, %v3295
        %v3344 = vsel %vm3312, %v3328, %v3296
        %v3345 = vadd.f32 %v3329, 1.0
        %v3346 = vadd.f32 %v3330, 1.0
        %v3347 = vadd.f32 %v3331, 1.0
        %v3348 = vadd.f32 %v3332, 1.0
        %v3349 = vadd.f32 %v3333, 1.0
        %v3350 = vadd.f32 %v3334, 1.0
        %v3351 = vadd.f32 %v3335, 1.0
        %v3352 = vadd.f32 %v3336, 1.0
        %v3353 = vadd.f32 %v3337, 1.0
        %v3354 = vadd.f32 %v3338, 1.0
        %v3355 = vadd.f32 %v3339, 1.0
        %v3356 = vadd.f32 %v3340, 1.0
        %v3357 = vadd.f32 %v3341, 1.0
        %v3358 = vadd.f32 %v3342, 1.0
        %v3359 = vadd.f32 %v3343, 1.0
        %v3360 = vadd.f32 %v3344, 1.0
        %v3361 = vmul.f32 %v2945, %v3345
        %v3362 = vmul.f32 %v2946, %v3346
        %v3363 = vmul.f32 %v2947, %v3347
        %v3364 = vmul.f32 %v2948, %v3348
        %v3365 = vmul.f32 %v2949, %v3349
        %v3366 = vmul.f32 %v2950, %v3350
        %v3367 = vmul.f32 %v2951, %v3351
        %v3368 = vmul.f32 %v2952, %v3352
        %v3369 = vmul.f32 %v2953, %v3353
        %v3370 = vmul.f32 %v2954, %v3354
        %v3371 = vmul.f32 %v2955, %v3355
        %v3372 = vmul.f32 %v2956, %v3356
        %v3373 = vmul.f32 %v2957, %v3357
        %v3374 = vmul.f32 %v2958, %v3358
        %v3375 = vmul.f32 %v2959, %v3359
        %v3376 = vmul.f32 %v2960, %v3360
        %v3377 = vld [vmem:[#allocation20] sm:$0xff]
        %v3378 = vld [vmem:[#allocation22] sm:$0x1]
        %v3380 = vlaneseq
        %v3381 = vshrl.u32 %v3380, 7
        %v3382 = vsub.s32 0, %v3381
        %v3383 = vrot.slane %v3378, %v3382
        %v3386 = vsel %vm2139, %v3361, 0
        %v3389 = vsel %vm2139, %v3362, 0
        %v3392 = vsel %vm2139, %v3363, 0
        %v3395 = vsel %vm2139, %v3364, 0
        %v3398 = vsel %vm2139, %v3365, 0
        %v3401 = vsel %vm2139, %v3366, 0
        %v3404 = vsel %vm2139, %v3367, 0
        %v3407 = vsel %vm2139, %v3368, 0
        %v3410 = vsel %vm2139, %v3369, 0
        %v3413 = vsel %vm2139, %v3370, 0
        %v3416 = vsel %vm2139, %v3371, 0
        %v3419 = vsel %vm2139, %v3372, 0
        %v3422 = vsel %vm2139, %v3373, 0
        %v3425 = vsel %vm2139, %v3374, 0
        %v3428 = vsel %vm2139, %v3375, 0
        %v3431 = vsel %vm2139, %v3376, 0
        %3433 = vmatprep.subr.mxu0 0.0
        %3434 = vmatpush1.msra.mxu0 0.0
        %3435 = vmatprep.subr.mxu0 0.0
        %3436 = vmatpush1.msra.mxu0 0.0
        %3437 = vmatprep.subr.mxu0 0.0
        %3438 = vmatpush1.msra.mxu0 0.0
        %3439 = vmatprep.subr.mxu0 0.0
        %3440 = vmatpush1.msra.mxu0 0.0
        %3441 = vmatprep.subr.mxu0 0.0
        %3442 = vmatpush1.msra.mxu0 0.0
        %3443 = vmatprep.subr.mxu0 0.0
        %3444 = vmatpush1.msra.mxu0 0.0
        %3445 = vmatprep.subr.mxu0 0.0
        %3446 = vmatpush1.msra.mxu0 0.0
        %3447 = vmatprep.subr.mxu0 0.0
        %3448 = vmatpush1.msra.mxu0 0.0
        %3449 = vmatprep.subr.mxu0 0.0
        %3450 = vmatpush1.msra.mxu0 0.0
        %3451 = vmatprep.subr.mxu0 0.0
        %3452 = vmatpush1.msra.mxu0 0.0
        %3453 = vmatprep.subr.mxu0 0.0
        %3454 = vmatpush1.msra.mxu0 0.0
        %3455 = vmatprep.subr.mxu0 0.0
        %3456 = vmatpush1.msra.mxu0 0.0
        %3457 = vmatprep.subr.mxu0 0.0
        %3458 = vmatpush1.msra.mxu0 0.0
        %3459 = vmatprep.subr.mxu0 0.0
        %3460 = vmatpush1.msra.mxu0 0.0
        %3461 = vmatprep.subr.mxu0 0.0
        %3462 = vmatpush1.msra.mxu0 0.0
        %3463 = vmatprep.subr.mxu0 0.0
        %3464 = vmatpush1.msra.mxu0 %v3377
        %3465 = vmatprep.subr.mxu0 0.0
        %3466 = vmatpush2.msra.mxu0 0.0
        %3467 = vmatprep.subr.mxu0 0.0
        %3468 = vmatpush2.msra.mxu0 0.0
        %3469 = vmatprep.subr.mxu0 0.0
        %3470 = vmatpush2.msra.mxu0 0.0
        %3471 = vmatprep.subr.mxu0 0.0
        %3472 = vmatpush2.msra.mxu0 0.0
        %3473 = vmatprep.subr.mxu0 0.0
        %3474 = vmatpush2.msra.mxu0 0.0
        %3475 = vmatprep.subr.mxu0 0.0
        %3476 = vmatpush2.msra.mxu0 0.0
        %3477 = vmatprep.subr.mxu0 0.0
        %3478 = vmatpush2.msra.mxu0 0.0
        %3479 = vmatprep.subr.mxu0 0.0
        %3480 = vmatpush2.msra.mxu0 0.0
        %3481 = vmatprep.subr.mxu0 0.0
        %3482 = vmatpush2.msra.mxu0 0.0
        %3483 = vmatprep.subr.mxu0 0.0
        %3484 = vmatpush2.msra.mxu0 0.0
        %3485 = vmatprep.subr.mxu0 0.0
        %3486 = vmatpush2.msra.mxu0 0.0
        %3487 = vmatprep.subr.mxu0 0.0
        %3488 = vmatpush2.msra.mxu0 0.0
        %3489 = vmatprep.subr.mxu0 0.0
        %3490 = vmatpush2.msra.mxu0 0.0
        %3491 = vmatprep.subr.mxu0 0.0
        %3492 = vmatpush2.msra.mxu0 0.0
        %3493 = vmatprep.subr.mxu0 0.0
        %3494 = vmatpush2.msra.mxu0 0.0
        %3495 = vmatprep.subr.mxu0 0.0
        %3496 = vmatpush2.msra.mxu0 0.0
        %3497 = vmatprep.mubr.f32.mxu0 0.0
        %3498 = vmatmul.mubr.f32.gmra.mxu0 %v3386
        %v3499 = vpop.f32.mrf.mxu0
        %v3500 = vadd.f32 %v3383, %v3499
        %v3501 = vpop.f32.mrf.mxu0
        %3502 = vmatprep.mubr.f32.mxu0 0.0
        %3503 = vmatmul.mubr.f32.gmra.mxu0 %v3389
        %v3504 = vpop.f32.mrf.mxu0
        %v3505 = vadd.f32 %v3383, %v3504
        %v3506 = vpop.f32.mrf.mxu0
        %3507 = vmatprep.mubr.f32.mxu0 0.0
        %3508 = vmatmul.mubr.f32.gmra.mxu0 %v3392
        %v3509 = vpop.f32.mrf.mxu0
        %v3510 = vadd.f32 %v3383, %v3509
        %v3511 = vpop.f32.mrf.mxu0
        %3512 = vmatprep.mubr.f32.mxu0 0.0
        %3513 = vmatmul.mubr.f32.gmra.mxu0 %v3395
        %v3514 = vpop.f32.mrf.mxu0
        %v3515 = vadd.f32 %v3383, %v3514
        %v3516 = vpop.f32.mrf.mxu0
        %3517 = vmatprep.mubr.f32.mxu0 0.0
        %3518 = vmatmul.mubr.f32.gmra.mxu0 %v3398
        %v3519 = vpop.f32.mrf.mxu0
        %v3520 = vadd.f32 %v3383, %v3519
        %v3521 = vpop.f32.mrf.mxu0
        %3522 = vmatprep.mubr.f32.mxu0 0.0
        %3523 = vmatmul.mubr.f32.gmra.mxu0 %v3401
        %v3524 = vpop.f32.mrf.mxu0
        %v3525 = vadd.f32 %v3383, %v3524
        %v3526 = vpop.f32.mrf.mxu0
        %3527 = vmatprep.mubr.f32.mxu0 0.0
        %3528 = vmatmul.mubr.f32.gmra.mxu0 %v3404
        %v3529 = vpop.f32.mrf.mxu0
        %v3530 = vadd.f32 %v3383, %v3529
        %v3531 = vpop.f32.mrf.mxu0
        %3532 = vmatprep.mubr.f32.mxu0 0.0
        %3533 = vmatmul.mubr.f32.gmra.mxu0 %v3407
        %v3534 = vpop.f32.mrf.mxu0
        %v3535 = vadd.f32 %v3383, %v3534
        %v3536 = vpop.f32.mrf.mxu0
        %3537 = vmatprep.mubr.f32.mxu0 0.0
        %3538 = vmatmul.mubr.f32.gmra.mxu0 %v3410
        %v3539 = vpop.f32.mrf.mxu0
        %v3540 = vadd.f32 %v3383, %v3539
        %v3541 = vpop.f32.mrf.mxu0
        %3542 = vmatprep.mubr.f32.mxu0 0.0
        %3543 = vmatmul.mubr.f32.gmra.mxu0 %v3413
        %v3544 = vpop.f32.mrf.mxu0
        %v3545 = vadd.f32 %v3383, %v3544
        %v3546 = vpop.f32.mrf.mxu0
        %3547 = vmatprep.mubr.f32.mxu0 0.0
        %3548 = vmatmul.mubr.f32.gmra.mxu0 %v3416
        %v3549 = vpop.f32.mrf.mxu0
        %v3550 = vadd.f32 %v3383, %v3549
        %v3551 = vpop.f32.mrf.mxu0
        %3552 = vmatprep.mubr.f32.mxu0 0.0
        %3553 = vmatmul.mubr.f32.gmra.mxu0 %v3419
        %v3554 = vpop.f32.mrf.mxu0
        %v3555 = vadd.f32 %v3383, %v3554
        %v3556 = vpop.f32.mrf.mxu0
        %3557 = vmatprep.mubr.f32.mxu0 0.0
        %3558 = vmatmul.mubr.f32.gmra.mxu0 %v3422
        %v3559 = vpop.f32.mrf.mxu0
        %v3560 = vadd.f32 %v3383, %v3559
        %v3561 = vpop.f32.mrf.mxu0
        %3562 = vmatprep.mubr.f32.mxu0 0.0
        %3563 = vmatmul.mubr.f32.gmra.mxu0 %v3425
        %v3564 = vpop.f32.mrf.mxu0
        %v3565 = vadd.f32 %v3383, %v3564
        %v3566 = vpop.f32.mrf.mxu0
        %3567 = vmatprep.mubr.f32.mxu0 0.0
        %3568 = vmatmul.mubr.f32.gmra.mxu0 %v3428
        %v3569 = vpop.f32.mrf.mxu0
        %v3570 = vadd.f32 %v3383, %v3569
        %v3571 = vpop.f32.mrf.mxu0
        %3572 = vmatprep.mubr.f32.mxu0 0.0
        %3573 = vmatmul.mubr.f32.gmra.mxu0 %v3431
        %v3574 = vpop.f32.mrf.mxu0
        %v3575 = vadd.f32 %v3383, %v3574
        %v3576 = vpop.f32.mrf.mxu0
        %3577 = vdwg.mxu0
        %v3578 = vadd.f32 %v2727, %v3500
        %v3579 = vadd.f32 %v2728, %v3505
        %v3580 = vadd.f32 %v2729, %v3510
        %v3581 = vadd.f32 %v2730, %v3515
        %v3582 = vadd.f32 %v2731, %v3520
        %v3583 = vadd.f32 %v2732, %v3525
        %v3584 = vadd.f32 %v2733, %v3530
        %v3585 = vadd.f32 %v2734, %v3535
        %v3586 = vadd.f32 %v2735, %v3540
        %v3587 = vadd.f32 %v2736, %v3545
        %v3588 = vadd.f32 %v2737, %v3550
        %v3589 = vadd.f32 %v2738, %v3555
        %v3590 = vadd.f32 %v2739, %v3560
        %v3591 = vadd.f32 %v2740, %v3565
        %v3592 = vadd.f32 %v2741, %v3570
        %v3593 = vadd.f32 %v2742, %v3575
        %v3594 = vld [vmem:[#allocation23] sm:$0xff]
        %v3595 = vld [vmem:[#allocation23 + $0x8] sm:$0xff]
        %v3596 = vld [vmem:[#allocation23 + $0x10] sm:$0xff]
        %v3597 = vld [vmem:[#allocation23 + $0x18] sm:$0xff]
        %v3598 = vld [vmem:[#allocation23 + $0x20] sm:$0xff]
        %v3599 = vld [vmem:[#allocation23 + $0x28] sm:$0xff]
        %v3600 = vld [vmem:[#allocation23 + $0x30] sm:$0xff]
        %v3601 = vld [vmem:[#allocation23 + $0x38] sm:$0xff]
        %v3602 = vld [vmem:[#allocation23 + $0x40] sm:$0xff]
        %v3603 = vld [vmem:[#allocation23 + $0x48] sm:$0xff]
        %v3604 = vld [vmem:[#allocation23 + $0x50] sm:$0xff]
        %v3605 = vld [vmem:[#allocation23 + $0x58] sm:$0xff]
        %v3606 = vld [vmem:[#allocation23 + $0x60] sm:$0xff]
        %v3607 = vld [vmem:[#allocation23 + $0x68] sm:$0xff]
        %v3608 = vld [vmem:[#allocation23 + $0x70] sm:$0xff]
        %v3609 = vld [vmem:[#allocation23 + $0x78] sm:$0xff]
        %v3610 = vld [vmem:[#allocation25] sm:$0xff]
        %v3611 = vld [vmem:[#allocation25 + $0x8] sm:$0xff]
        %v3612 = vld [vmem:[#allocation25 + $0x10] sm:$0xff]
        %v3613 = vld [vmem:[#allocation25 + $0x18] sm:$0xff]
        %v3614 = vld [vmem:[#allocation25 + $0x20] sm:$0xff]
        %v3615 = vld [vmem:[#allocation25 + $0x28] sm:$0xff]
        %v3616 = vld [vmem:[#allocation25 + $0x30] sm:$0xff]
        %v3617 = vld [vmem:[#allocation25 + $0x38] sm:$0xff]
        %v3618 = vld [vmem:[#allocation25 + $0x40] sm:$0xff]
        %v3619 = vld [vmem:[#allocation25 + $0x48] sm:$0xff]
        %v3620 = vld [vmem:[#allocation25 + $0x50] sm:$0xff]
        %v3621 = vld [vmem:[#allocation25 + $0x58] sm:$0xff]
        %v3622 = vld [vmem:[#allocation25 + $0x60] sm:$0xff]
        %v3623 = vld [vmem:[#allocation25 + $0x68] sm:$0xff]
        %v3624 = vld [vmem:[#allocation25 + $0x70] sm:$0xff]
        %v3625 = vld [vmem:[#allocation25 + $0x78] sm:$0xff]
        %v3626 = vld [vmem:[#allocation26] sm:$0xff]
        %v3627 = vld [vmem:[#allocation26 + $0x8] sm:$0xff]
        %v3628 = vld [vmem:[#allocation26 + $0x10] sm:$0xff]
        %v3629 = vld [vmem:[#allocation26 + $0x18] sm:$0xff]
        %v3630 = vld [vmem:[#allocation26 + $0x20] sm:$0xff]
        %v3631 = vld [vmem:[#allocation26 + $0x28] sm:$0xff]
        %v3632 = vld [vmem:[#allocation26 + $0x30] sm:$0xff]
        %v3633 = vld [vmem:[#allocation26 + $0x38] sm:$0xff]
        %v3634 = vld [vmem:[#allocation26 + $0x40] sm:$0xff]
        %v3635 = vld [vmem:[#allocation26 + $0x48] sm:$0xff]
        %v3636 = vld [vmem:[#allocation26 + $0x50] sm:$0xff]
        %v3637 = vld [vmem:[#allocation26 + $0x58] sm:$0xff]
        %v3638 = vld [vmem:[#allocation26 + $0x60] sm:$0xff]
        %v3639 = vld [vmem:[#allocation26 + $0x68] sm:$0xff]
        %v3640 = vld [vmem:[#allocation26 + $0x70] sm:$0xff]
        %v3641 = vld [vmem:[#allocation26 + $0x78] sm:$0xff]
        %v3642 = vld [vmem:[#allocation28] sm:$0xff]
        %v3643 = vld [vmem:[#allocation28 + $0x8] sm:$0xff]
        %v3644 = vld [vmem:[#allocation28 + $0x10] sm:$0xff]
        %v3645 = vld [vmem:[#allocation28 + $0x18] sm:$0xff]
        %v3646 = vld [vmem:[#allocation28 + $0x20] sm:$0xff]
        %v3647 = vld [vmem:[#allocation28 + $0x28] sm:$0xff]
        %v3648 = vld [vmem:[#allocation28 + $0x30] sm:$0xff]
        %v3649 = vld [vmem:[#allocation28 + $0x38] sm:$0xff]
        %v3650 = vld [vmem:[#allocation28 + $0x40] sm:$0xff]
        %v3651 = vld [vmem:[#allocation28 + $0x48] sm:$0xff]
        %v3652 = vld [vmem:[#allocation28 + $0x50] sm:$0xff]
        %v3653 = vld [vmem:[#allocation28 + $0x58] sm:$0xff]
        %v3654 = vld [vmem:[#allocation28 + $0x60] sm:$0xff]
        %v3655 = vld [vmem:[#allocation28 + $0x68] sm:$0xff]
        %v3656 = vld [vmem:[#allocation28 + $0x70] sm:$0xff]
        %v3657 = vld [vmem:[#allocation28 + $0x78] sm:$0xff]
        %3659 = vset.pattern.permute.xlu0 0
        %3660 = vperm.xlu0 %3659, %v3610
        %v3661 = vpop.permute.xlu0 %3660
        %3664 = vset.pattern.permute.xlu0 0
        %3665 = vperm.xlu0 %3664, %v3611
        %v3666 = vpop.permute.xlu0 %3665
        %3669 = vset.pattern.permute.xlu0 0
        %3670 = vperm.xlu0 %3669, %v3612
        %v3671 = vpop.permute.xlu0 %3670
        %3674 = vset.pattern.permute.xlu0 0
        %3675 = vperm.xlu0 %3674, %v3613
        %v3676 = vpop.permute.xlu0 %3675
        %3679 = vset.pattern.permute.xlu0 0
        %3680 = vperm.xlu0 %3679, %v3614
        %v3681 = vpop.permute.xlu0 %3680
        %3684 = vset.pattern.permute.xlu0 0
        %3685 = vperm.xlu0 %3684, %v3615
        %v3686 = vpop.permute.xlu0 %3685
        %3689 = vset.pattern.permute.xlu0 0
        %3690 = vperm.xlu0 %3689, %v3616
        %v3691 = vpop.permute.xlu0 %3690
        %3694 = vset.pattern.permute.xlu0 0
        %3695 = vperm.xlu0 %3694, %v3617
        %v3696 = vpop.permute.xlu0 %3695
        %3699 = vset.pattern.permute.xlu0 0
        %3700 = vperm.xlu0 %3699, %v3618
        %v3701 = vpop.permute.xlu0 %3700
        %3704 = vset.pattern.permute.xlu0 0
        %3705 = vperm.xlu0 %3704, %v3619
        %v3706 = vpop.permute.xlu0 %3705
        %3709 = vset.pattern.permute.xlu0 0
        %3710 = vperm.xlu0 %3709, %v3620
        %v3711 = vpop.permute.xlu0 %3710
        %3714 = vset.pattern.permute.xlu0 0
        %3715 = vperm.xlu0 %3714, %v3621
        %v3716 = vpop.permute.xlu0 %3715
        %3719 = vset.pattern.permute.xlu0 0
        %3720 = vperm.xlu0 %3719, %v3622
        %v3721 = vpop.permute.xlu0 %3720
        %3724 = vset.pattern.permute.xlu0 0
        %3725 = vperm.xlu0 %3724, %v3623
        %v3726 = vpop.permute.xlu0 %3725
        %3729 = vset.pattern.permute.xlu0 0
        %3730 = vperm.xlu0 %3729, %v3624
        %v3731 = vpop.permute.xlu0 %3730
        %3734 = vset.pattern.permute.xlu0 0
        %3735 = vperm.xlu0 %3734, %v3625
        %v3736 = vpop.permute.xlu0 %3735
        %3738 = vmatprep.subr.mxu0 0.0
        %3739 = vmatpush1.msra.mxu0 %v2137
        %3740 = vmatprep.subr.mxu0 0.0
        %3741 = vmatpush1.msra.mxu0 %v2136
        %3742 = vmatprep.subr.mxu0 0.0
        %3743 = vmatpush1.msra.mxu0 %v2135
        %3744 = vmatprep.subr.mxu0 0.0
        %3745 = vmatpush1.msra.mxu0 %v2134
        %3746 = vmatprep.subr.mxu0 0.0
        %3747 = vmatpush1.msra.mxu0 %v2133
        %3748 = vmatprep.subr.mxu0 0.0
        %3749 = vmatpush1.msra.mxu0 %v2132
        %3750 = vmatprep.subr.mxu0 0.0
        %3751 = vmatpush1.msra.mxu0 %v2131
        %3752 = vmatprep.subr.mxu0 0.0
        %3753 = vmatpush1.msra.mxu0 %v2130
        %3754 = vmatprep.subr.mxu0 0.0
        %3755 = vmatpush1.msra.mxu0 %v2129
        %3756 = vmatprep.subr.mxu0 0.0
        %3757 = vmatpush1.msra.mxu0 %v2128
        %3758 = vmatprep.subr.mxu0 0.0
        %3759 = vmatpush1.msra.mxu0 %v2127
        %3760 = vmatprep.subr.mxu0 0.0
        %3761 = vmatpush1.msra.mxu0 %v2126
        %3762 = vmatprep.subr.mxu0 0.0
        %3763 = vmatpush1.msra.mxu0 %v2125
        %3764 = vmatprep.subr.mxu0 0.0
        %3765 = vmatpush1.msra.mxu0 %v2124
        %3766 = vmatprep.subr.mxu0 0.0
        %3767 = vmatpush1.msra.mxu0 %v2123
        %3768 = vmatprep.subr.mxu0 0.0
        %3769 = vmatpush1.msra.mxu0 %v2122
        %3770 = vmatprep.subr.mxu0 0.0
        %3771 = vmatpush2.msra.mxu0 0.0
        %3772 = vmatprep.subr.mxu0 0.0
        %3773 = vmatpush2.msra.mxu0 0.0
        %3774 = vmatprep.subr.mxu0 0.0
        %3775 = vmatpush2.msra.mxu0 0.0
        %3776 = vmatprep.subr.mxu0 0.0
        %3777 = vmatpush2.msra.mxu0 0.0
        %3778 = vmatprep.subr.mxu0 0.0
        %3779 = vmatpush2.msra.mxu0 0.0
        %3780 = vmatprep.subr.mxu0 0.0
        %3781 = vmatpush2.msra.mxu0 0.0
        %3782 = vmatprep.subr.mxu0 0.0
        %3783 = vmatpush2.msra.mxu0 0.0
        %3784 = vmatprep.subr.mxu0 0.0
        %3785 = vmatpush2.msra.mxu0 0.0
        %3786 = vmatprep.subr.mxu0 0.0
        %3787 = vmatpush2.msra.mxu0 0.0
        %3788 = vmatprep.subr.mxu0 0.0
        %3789 = vmatpush2.msra.mxu0 0.0
        %3790 = vmatprep.subr.mxu0 0.0
        %3791 = vmatpush2.msra.mxu0 0.0
        %3792 = vmatprep.subr.mxu0 0.0
        %3793 = vmatpush2.msra.mxu0 0.0
        %3794 = vmatprep.subr.mxu0 0.0
        %3795 = vmatpush2.msra.mxu0 0.0
        %3796 = vmatprep.subr.mxu0 0.0
        %3797 = vmatpush2.msra.mxu0 0.0
        %3798 = vmatprep.subr.mxu0 0.0
        %3799 = vmatpush2.msra.mxu0 0.0
        %3800 = vmatprep.subr.mxu0 0.0
        %3801 = vmatpush2.msra.mxu0 0.0
        %3802 = vmatprep.mubr.f32.mxu0 0.0
        %3803 = vmatmul.mubr.f32.gmra.mxu0 %v3594
        %v3804 = vpop.f32.mrf.mxu0
        %v3805 = vadd.f32 %v3661, %v3804
        %v3806 = vpop.f32.mrf.mxu0
        %3807 = vmatprep.mubr.f32.mxu0 0.0
        %3808 = vmatmul.mubr.f32.gmra.mxu0 %v3595
        %v3809 = vpop.f32.mrf.mxu0
        %v3810 = vadd.f32 %v3666, %v3809
        %v3811 = vpop.f32.mrf.mxu0
        %3812 = vmatprep.mubr.f32.mxu0 0.0
        %3813 = vmatmul.mubr.f32.gmra.mxu0 %v3596
        %v3814 = vpop.f32.mrf.mxu0
        %v3815 = vadd.f32 %v3671, %v3814
        %v3816 = vpop.f32.mrf.mxu0
        %3817 = vmatprep.mubr.f32.mxu0 0.0
        %3818 = vmatmul.mubr.f32.gmra.mxu0 %v3597
        %v3819 = vpop.f32.mrf.mxu0
        %v3820 = vadd.f32 %v3676, %v3819
        %v3821 = vpop.f32.mrf.mxu0
        %3822 = vmatprep.mubr.f32.mxu0 0.0
        %3823 = vmatmul.mubr.f32.gmra.mxu0 %v3598
        %v3824 = vpop.f32.mrf.mxu0
        %v3825 = vadd.f32 %v3681, %v3824
        %v3826 = vpop.f32.mrf.mxu0
        %3827 = vmatprep.mubr.f32.mxu0 0.0
        %3828 = vmatmul.mubr.f32.gmra.mxu0 %v3599
        %v3829 = vpop.f32.mrf.mxu0
        %v3830 = vadd.f32 %v3686, %v3829
        %v3831 = vpop.f32.mrf.mxu0
        %3832 = vmatprep.mubr.f32.mxu0 0.0
        %3833 = vmatmul.mubr.f32.gmra.mxu0 %v3600
        %v3834 = vpop.f32.mrf.mxu0
        %v3835 = vadd.f32 %v3691, %v3834
        %v3836 = vpop.f32.mrf.mxu0
        %3837 = vmatprep.mubr.f32.mxu0 0.0
        %3838 = vmatmul.mubr.f32.gmra.mxu0 %v3601
        %v3839 = vpop.f32.mrf.mxu0
        %v3840 = vadd.f32 %v3696, %v3839
        %v3841 = vpop.f32.mrf.mxu0
        %3842 = vmatprep.mubr.f32.mxu0 0.0
        %3843 = vmatmul.mubr.f32.gmra.mxu0 %v3602
        %v3844 = vpop.f32.mrf.mxu0
        %v3845 = vadd.f32 %v3701, %v3844
        %v3846 = vpop.f32.mrf.mxu0
        %3847 = vmatprep.mubr.f32.mxu0 0.0
        %3848 = vmatmul.mubr.f32.gmra.mxu0 %v3603
        %v3849 = vpop.f32.mrf.mxu0
        %v3850 = vadd.f32 %v3706, %v3849
        %v3851 = vpop.f32.mrf.mxu0
        %3852 = vmatprep.mubr.f32.mxu0 0.0
        %3853 = vmatmul.mubr.f32.gmra.mxu0 %v3604
        %v3854 = vpop.f32.mrf.mxu0
        %v3855 = vadd.f32 %v3711, %v3854
        %v3856 = vpop.f32.mrf.mxu0
        %3857 = vmatprep.mubr.f32.mxu0 0.0
        %3858 = vmatmul.mubr.f32.gmra.mxu0 %v3605
        %v3859 = vpop.f32.mrf.mxu0
        %v3860 = vadd.f32 %v3716, %v3859
        %v3861 = vpop.f32.mrf.mxu0
        %3862 = vmatprep.mubr.f32.mxu0 0.0
        %3863 = vmatmul.mubr.f32.gmra.mxu0 %v3606
        %v3864 = vpop.f32.mrf.mxu0
        %v3865 = vadd.f32 %v3721, %v3864
        %v3866 = vpop.f32.mrf.mxu0
        %3867 = vmatprep.mubr.f32.mxu0 0.0
        %3868 = vmatmul.mubr.f32.gmra.mxu0 %v3607
        %v3869 = vpop.f32.mrf.mxu0
        %v3870 = vadd.f32 %v3726, %v3869
        %v3871 = vpop.f32.mrf.mxu0
        %3872 = vmatprep.mubr.f32.mxu0 0.0
        %3873 = vmatmul.mubr.f32.gmra.mxu0 %v3608
        %v3874 = vpop.f32.mrf.mxu0
        %v3875 = vadd.f32 %v3731, %v3874
        %v3876 = vpop.f32.mrf.mxu0
        %3877 = vmatprep.mubr.f32.mxu0 0.0
        %3878 = vmatmul.mubr.f32.gmra.mxu0 %v3609
        %v3879 = vpop.f32.mrf.mxu0
        %v3880 = vadd.f32 %v3736, %v3879
        %v3881 = vpop.f32.mrf.mxu0
        %3882 = vdwg.mxu0
        %v3883 = vmul.f32 %v3805, 0.5
        %v3884 = vmul.f32 %v3810, 0.5
        %v3885 = vmul.f32 %v3815, 0.5
        %v3886 = vmul.f32 %v3820, 0.5
        %v3887 = vmul.f32 %v3825, 0.5
        %v3888 = vmul.f32 %v3830, 0.5
        %v3889 = vmul.f32 %v3835, 0.5
        %v3890 = vmul.f32 %v3840, 0.5
        %v3891 = vmul.f32 %v3845, 0.5
        %v3892 = vmul.f32 %v3850, 0.5
        %v3893 = vmul.f32 %v3855, 0.5
        %v3894 = vmul.f32 %v3860, 0.5
        %v3895 = vmul.f32 %v3865, 0.5
        %v3896 = vmul.f32 %v3870, 0.5
        %v3897 = vmul.f32 %v3875, 0.5
        %v3898 = vmul.f32 %v3880, 0.5
        %v3899 = vmul.f32 %v3805, 0.70710677
        %v3900 = vmul.f32 %v3810, 0.70710677
        %v3901 = vmul.f32 %v3815, 0.70710677
        %v3902 = vmul.f32 %v3820, 0.70710677
        %v3903 = vmul.f32 %v3825, 0.70710677
        %v3904 = vmul.f32 %v3830, 0.70710677
        %v3905 = vmul.f32 %v3835, 0.70710677
        %v3906 = vmul.f32 %v3840, 0.70710677
        %v3907 = vmul.f32 %v3845, 0.70710677
        %v3908 = vmul.f32 %v3850, 0.70710677
        %v3909 = vmul.f32 %v3855, 0.70710677
        %v3910 = vmul.f32 %v3860, 0.70710677
        %v3911 = vmul.f32 %v3865, 0.70710677
        %v3912 = vmul.f32 %v3870, 0.70710677
        %v3913 = vmul.f32 %v3875, 0.70710677
        %v3914 = vmul.f32 %v3880, 0.70710677
        %v3915 = vand.u32 2147483647, %v3899
        %v3916 = vand.u32 2147483647, %v3900
        %v3917 = vand.u32 2147483647, %v3901
        %v3918 = vand.u32 2147483647, %v3902
        %v3919 = vand.u32 2147483647, %v3903
        %v3920 = vand.u32 2147483647, %v3904
        %v3921 = vand.u32 2147483647, %v3905
        %v3922 = vand.u32 2147483647, %v3906
        %v3923 = vand.u32 2147483647, %v3907
        %v3924 = vand.u32 2147483647, %v3908
        %v3925 = vand.u32 2147483647, %v3909
        %v3926 = vand.u32 2147483647, %v3910
        %v3927 = vand.u32 2147483647, %v3911
        %v3928 = vand.u32 2147483647, %v3912
        %v3929 = vand.u32 2147483647, %v3913
        %v3930 = vand.u32 2147483647, %v3914
        %v3931 = vmul.f32 %v3915, 0.3275911
        %v3932 = vmul.f32 %v3916, 0.3275911
        %v3933 = vmul.f32 %v3917, 0.3275911
        %v3934 = vmul.f32 %v3918, 0.3275911
        %v3935 = vmul.f32 %v3919, 0.3275911
        %v3936 = vmul.f32 %v3920, 0.3275911
        %v3937 = vmul.f32 %v3921, 0.3275911
        %v3938 = vmul.f32 %v3922, 0.3275911
        %v3939 = vmul.f32 %v3923, 0.3275911
        %v3940 = vmul.f32 %v3924, 0.3275911
        %v3941 = vmul.f32 %v3925, 0.3275911
        %v3942 = vmul.f32 %v3926, 0.3275911
        %v3943 = vmul.f32 %v3927, 0.3275911
        %v3944 = vmul.f32 %v3928, 0.3275911
        %v3945 = vmul.f32 %v3929, 0.3275911
        %v3946 = vmul.f32 %v3930, 0.3275911
        %v3947 = vadd.f32 %v3931, 1.0
        %v3948 = vadd.f32 %v3932, 1.0
        %v3949 = vadd.f32 %v3933, 1.0
        %v3950 = vadd.f32 %v3934, 1.0
        %v3951 = vadd.f32 %v3935, 1.0
        %v3952 = vadd.f32 %v3936, 1.0
        %v3953 = vadd.f32 %v3937, 1.0
        %v3954 = vadd.f32 %v3938, 1.0
        %v3955 = vadd.f32 %v3939, 1.0
        %v3956 = vadd.f32 %v3940, 1.0
        %v3957 = vadd.f32 %v3941, 1.0
        %v3958 = vadd.f32 %v3942, 1.0
        %v3959 = vadd.f32 %v3943, 1.0
        %v3960 = vadd.f32 %v3944, 1.0
        %v3961 = vadd.f32 %v3945, 1.0
        %v3962 = vadd.f32 %v3946, 1.0
        %v3963 = vrcp.pop %v3947
        %v3964 = vmul.f32 1.0, %v3963
        %v3965 = vrcp.pop %v3948
        %v3966 = vmul.f32 1.0, %v3965
        %v3967 = vrcp.pop %v3949
        %v3968 = vmul.f32 1.0, %v3967
        %v3969 = vrcp.pop %v3950
        %v3970 = vmul.f32 1.0, %v3969
        %v3971 = vrcp.pop %v3951
        %v3972 = vmul.f32 1.0, %v3971
        %v3973 = vrcp.pop %v3952
        %v3974 = vmul.f32 1.0, %v3973
        %v3975 = vrcp.pop %v3953
        %v3976 = vmul.f32 1.0, %v3975
        %v3977 = vrcp.pop %v3954
        %v3978 = vmul.f32 1.0, %v3977
        %v3979 = vrcp.pop %v3955
        %v3980 = vmul.f32 1.0, %v3979
        %v3981 = vrcp.pop %v3956
        %v3982 = vmul.f32 1.0, %v3981
        %v3983 = vrcp.pop %v3957
        %v3984 = vmul.f32 1.0, %v3983
        %v3985 = vrcp.pop %v3958
        %v3986 = vmul.f32 1.0, %v3985
        %v3987 = vrcp.pop %v3959
        %v3988 = vmul.f32 1.0, %v3987
        %v3989 = vrcp.pop %v3960
        %v3990 = vmul.f32 1.0, %v3989
        %v3991 = vrcp.pop %v3961
        %v3992 = vmul.f32 1.0, %v3991
        %v3993 = vrcp.pop %v3962
        %v3994 = vmul.f32 1.0, %v3993
        %v3995 = vmul.f32 %v3964, 1.0614054
        %v3996 = vmul.f32 %v3966, 1.0614054
        %v3997 = vmul.f32 %v3968, 1.0614054
        %v3998 = vmul.f32 %v3970, 1.0614054
        %v3999 = vmul.f32 %v3972, 1.0614054
        %v4000 = vmul.f32 %v3974, 1.0614054
        %v4001 = vmul.f32 %v3976, 1.0614054
        %v4002 = vmul.f32 %v3978, 1.0614054
        %v4003 = vmul.f32 %v3980, 1.0614054
        %v4004 = vmul.f32 %v3982, 1.0614054
        %v4005 = vmul.f32 %v3984, 1.0614054
        %v4006 = vmul.f32 %v3986, 1.0614054
        %v4007 = vmul.f32 %v3988, 1.0614054
        %v4008 = vmul.f32 %v3990, 1.0614054
        %v4009 = vmul.f32 %v3992, 1.0614054
        %v4010 = vmul.f32 %v3994, 1.0614054
        %v4011 = vadd.f32 %v3995, -1.4531521
        %v4012 = vadd.f32 %v3996, -1.4531521
        %v4013 = vadd.f32 %v3997, -1.4531521
        %v4014 = vadd.f32 %v3998, -1.4531521
        %v4015 = vadd.f32 %v3999, -1.4531521
        %v4016 = vadd.f32 %v4000, -1.4531521
        %v4017 = vadd.f32 %v4001, -1.4531521
        %v4018 = vadd.f32 %v4002, -1.4531521
        %v4019 = vadd.f32 %v4003, -1.4531521
        %v4020 = vadd.f32 %v4004, -1.4531521
        %v4021 = vadd.f32 %v4005, -1.4531521
        %v4022 = vadd.f32 %v4006, -1.4531521
        %v4023 = vadd.f32 %v4007, -1.4531521
        %v4024 = vadd.f32 %v4008, -1.4531521
        %v4025 = vadd.f32 %v4009, -1.4531521
        %v4026 = vadd.f32 %v4010, -1.4531521
        %v4027 = vmul.f32 %v4011, %v3964
        %v4028 = vmul.f32 %v4012, %v3966
        %v4029 = vmul.f32 %v4013, %v3968
        %v4030 = vmul.f32 %v4014, %v3970
        %v4031 = vmul.f32 %v4015, %v3972
        %v4032 = vmul.f32 %v4016, %v3974
        %v4033 = vmul.f32 %v4017, %v3976
        %v4034 = vmul.f32 %v4018, %v3978
        %v4035 = vmul.f32 %v4019, %v3980
        %v4036 = vmul.f32 %v4020, %v3982
        %v4037 = vmul.f32 %v4021, %v3984
        %v4038 = vmul.f32 %v4022, %v3986
        %v4039 = vmul.f32 %v4023, %v3988
        %v4040 = vmul.f32 %v4024, %v3990
        %v4041 = vmul.f32 %v4025, %v3992
        %v4042 = vmul.f32 %v4026, %v3994
        %v4043 = vadd.f32 %v4027, 1.4214138
        %v4044 = vadd.f32 %v4028, 1.4214138
        %v4045 = vadd.f32 %v4029, 1.4214138
        %v4046 = vadd.f32 %v4030, 1.4214138
        %v4047 = vadd.f32 %v4031, 1.4214138
        %v4048 = vadd.f32 %v4032, 1.4214138
        %v4049 = vadd.f32 %v4033, 1.4214138
        %v4050 = vadd.f32 %v4034, 1.4214138
        %v4051 = vadd.f32 %v4035, 1.4214138
        %v4052 = vadd.f32 %v4036, 1.4214138
        %v4053 = vadd.f32 %v4037, 1.4214138
        %v4054 = vadd.f32 %v4038, 1.4214138
        %v4055 = vadd.f32 %v4039, 1.4214138
        %v4056 = vadd.f32 %v4040, 1.4214138
        %v4057 = vadd.f32 %v4041, 1.4214138
        %v4058 = vadd.f32 %v4042, 1.4214138
        %v4059 = vmul.f32 %v4043, %v3964
        %v4060 = vmul.f32 %v4044, %v3966
        %v4061 = vmul.f32 %v4045, %v3968
        %v4062 = vmul.f32 %v4046, %v3970
        %v4063 = vmul.f32 %v4047, %v3972
        %v4064 = vmul.f32 %v4048, %v3974
        %v4065 = vmul.f32 %v4049, %v3976
        %v4066 = vmul.f32 %v4050, %v3978
        %v4067 = vmul.f32 %v4051, %v3980
        %v4068 = vmul.f32 %v4052, %v3982
        %v4069 = vmul.f32 %v4053, %v3984
        %v4070 = vmul.f32 %v4054, %v3986
        %v4071 = vmul.f32 %v4055, %v3988
        %v4072 = vmul.f32 %v4056, %v3990
        %v4073 = vmul.f32 %v4057, %v3992
        %v4074 = vmul.f32 %v4058, %v3994
        %v4075 = vadd.f32 %v4059, -0.28449672
        %v4076 = vadd.f32 %v4060, -0.28449672
        %v4077 = vadd.f32 %v4061, -0.28449672
        %v4078 = vadd.f32 %v4062, -0.28449672
        %v4079 = vadd.f32 %v4063, -0.28449672
        %v4080 = vadd.f32 %v4064, -0.28449672
        %v4081 = vadd.f32 %v4065, -0.28449672
        %v4082 = vadd.f32 %v4066, -0.28449672
        %v4083 = vadd.f32 %v4067, -0.28449672
        %v4084 = vadd.f32 %v4068, -0.28449672
        %v4085 = vadd.f32 %v4069, -0.28449672
        %v4086 = vadd.f32 %v4070, -0.28449672
        %v4087 = vadd.f32 %v4071, -0.28449672
        %v4088 = vadd.f32 %v4072, -0.28449672
        %v4089 = vadd.f32 %v4073, -0.28449672
        %v4090 = vadd.f32 %v4074, -0.28449672
        %v4091 = vmul.f32 %v4075, %v3964
        %v4092 = vmul.f32 %v4076, %v3966
        %v4093 = vmul.f32 %v4077, %v3968
        %v4094 = vmul.f32 %v4078, %v3970
        %v4095 = vmul.f32 %v4079, %v3972
        %v4096 = vmul.f32 %v4080, %v3974
        %v4097 = vmul.f32 %v4081, %v3976
        %v4098 = vmul.f32 %v4082, %v3978
        %v4099 = vmul.f32 %v4083, %v3980
        %v4100 = vmul.f32 %v4084, %v3982
        %v4101 = vmul.f32 %v4085, %v3984
        %v4102 = vmul.f32 %v4086, %v3986
        %v4103 = vmul.f32 %v4087, %v3988
        %v4104 = vmul.f32 %v4088, %v3990
        %v4105 = vmul.f32 %v4089, %v3992
        %v4106 = vmul.f32 %v4090, %v3994
        %v4107 = vadd.f32 %v4091, 0.2548296
        %v4108 = vadd.f32 %v4092, 0.2548296
        %v4109 = vadd.f32 %v4093, 0.2548296
        %v4110 = vadd.f32 %v4094, 0.2548296
        %v4111 = vadd.f32 %v4095, 0.2548296
        %v4112 = vadd.f32 %v4096, 0.2548296
        %v4113 = vadd.f32 %v4097, 0.2548296
        %v4114 = vadd.f32 %v4098, 0.2548296
        %v4115 = vadd.f32 %v4099, 0.2548296
        %v4116 = vadd.f32 %v4100, 0.2548296
        %v4117 = vadd.f32 %v4101, 0.2548296
        %v4118 = vadd.f32 %v4102, 0.2548296
        %v4119 = vadd.f32 %v4103, 0.2548296
        %v4120 = vadd.f32 %v4104, 0.2548296
        %v4121 = vadd.f32 %v4105, 0.2548296
        %v4122 = vadd.f32 %v4106, 0.2548296
        %v4123 = vmul.f32 %v4107, %v3964
        %v4124 = vmul.f32 %v4108, %v3966
        %v4125 = vmul.f32 %v4109, %v3968
        %v4126 = vmul.f32 %v4110, %v3970
        %v4127 = vmul.f32 %v4111, %v3972
        %v4128 = vmul.f32 %v4112, %v3974
        %v4129 = vmul.f32 %v4113, %v3976
        %v4130 = vmul.f32 %v4114, %v3978
        %v4131 = vmul.f32 %v4115, %v3980
        %v4132 = vmul.f32 %v4116, %v3982
        %v4133 = vmul.f32 %v4117, %v3984
        %v4134 = vmul.f32 %v4118, %v3986
        %v4135 = vmul.f32 %v4119, %v3988
        %v4136 = vmul.f32 %v4120, %v3990
        %v4137 = vmul.f32 %v4121, %v3992
        %v4138 = vmul.f32 %v4122, %v3994
        %v4139 = vsub.f32 0.0, %v3915
        %v4140 = vsub.f32 0.0, %v3916
        %v4141 = vsub.f32 0.0, %v3917
        %v4142 = vsub.f32 0.0, %v3918
        %v4143 = vsub.f32 0.0, %v3919
        %v4144 = vsub.f32 0.0, %v3920
        %v4145 = vsub.f32 0.0, %v3921
        %v4146 = vsub.f32 0.0, %v3922
        %v4147 = vsub.f32 0.0, %v3923
        %v4148 = vsub.f32 0.0, %v3924
        %v4149 = vsub.f32 0.0, %v3925
        %v4150 = vsub.f32 0.0, %v3926
        %v4151 = vsub.f32 0.0, %v3927
        %v4152 = vsub.f32 0.0, %v3928
        %v4153 = vsub.f32 0.0, %v3929
        %v4154 = vsub.f32 0.0, %v3930
        %v4155 = vmul.f32 %v4139, %v3915
        %v4156 = vmul.f32 %v4140, %v3916
        %v4157 = vmul.f32 %v4141, %v3917
        %v4158 = vmul.f32 %v4142, %v3918
        %v4159 = vmul.f32 %v4143, %v3919
        %v4160 = vmul.f32 %v4144, %v3920
        %v4161 = vmul.f32 %v4145, %v3921
        %v4162 = vmul.f32 %v4146, %v3922
        %v4163 = vmul.f32 %v4147, %v3923
        %v4164 = vmul.f32 %v4148, %v3924
        %v4165 = vmul.f32 %v4149, %v3925
        %v4166 = vmul.f32 %v4150, %v3926
        %v4167 = vmul.f32 %v4151, %v3927
        %v4168 = vmul.f32 %v4152, %v3928
        %v4169 = vmul.f32 %v4153, %v3929
        %v4170 = vmul.f32 %v4154, %v3930
        %v4171 = vmul.f32 %v4155, 1.442695
        %v4172 = vpow.pop %v4171
        %v4173 = vmul.f32 %v4156, 1.442695
        %v4174 = vpow.pop %v4173
        %v4175 = vmul.f32 %v4157, 1.442695
        %v4176 = vpow.pop %v4175
        %v4177 = vmul.f32 %v4158, 1.442695
        %v4178 = vpow.pop %v4177
        %v4179 = vmul.f32 %v4159, 1.442695
        %v4180 = vpow.pop %v4179
        %v4181 = vmul.f32 %v4160, 1.442695
        %v4182 = vpow.pop %v4181
        %v4183 = vmul.f32 %v4161, 1.442695
        %v4184 = vpow.pop %v4183
        %v4185 = vmul.f32 %v4162, 1.442695
        %v4186 = vpow.pop %v4185
        %v4187 = vmul.f32 %v4163, 1.442695
        %v4188 = vpow.pop %v4187
        %v4189 = vmul.f32 %v4164, 1.442695
        %v4190 = vpow.pop %v4189
        %v4191 = vmul.f32 %v4165, 1.442695
        %v4192 = vpow.pop %v4191
        %v4193 = vmul.f32 %v4166, 1.442695
        %v4194 = vpow.pop %v4193
        %v4195 = vmul.f32 %v4167, 1.442695
        %v4196 = vpow.pop %v4195
        %v4197 = vmul.f32 %v4168, 1.442695
        %v4198 = vpow.pop %v4197
        %v4199 = vmul.f32 %v4169, 1.442695
        %v4200 = vpow.pop %v4199
        %v4201 = vmul.f32 %v4170, 1.442695
        %v4202 = vpow.pop %v4201
        %v4203 = vmul.f32 %v4123, %v4172
        %v4204 = vmul.f32 %v4124, %v4174
        %v4205 = vmul.f32 %v4125, %v4176
        %v4206 = vmul.f32 %v4126, %v4178
        %v4207 = vmul.f32 %v4127, %v4180
        %v4208 = vmul.f32 %v4128, %v4182
        %v4209 = vmul.f32 %v4129, %v4184
        %v4210 = vmul.f32 %v4130, %v4186
        %v4211 = vmul.f32 %v4131, %v4188
        %v4212 = vmul.f32 %v4132, %v4190
        %v4213 = vmul.f32 %v4133, %v4192
        %v4214 = vmul.f32 %v4134, %v4194
        %v4215 = vmul.f32 %v4135, %v4196
        %v4216 = vmul.f32 %v4136, %v4198
        %v4217 = vmul.f32 %v4137, %v4200
        %v4218 = vmul.f32 %v4138, %v4202
        %v4219 = vsub.f32 1.0, %v4203
        %v4220 = vsub.f32 1.0, %v4204
        %v4221 = vsub.f32 1.0, %v4205
        %v4222 = vsub.f32 1.0, %v4206
        %v4223 = vsub.f32 1.0, %v4207
        %v4224 = vsub.f32 1.0, %v4208
        %v4225 = vsub.f32 1.0, %v4209
        %v4226 = vsub.f32 1.0, %v4210
        %v4227 = vsub.f32 1.0, %v4211
        %v4228 = vsub.f32 1.0, %v4212
        %v4229 = vsub.f32 1.0, %v4213
        %v4230 = vsub.f32 1.0, %v4214
        %v4231 = vsub.f32 1.0, %v4215
        %v4232 = vsub.f32 1.0, %v4216
        %v4233 = vsub.f32 1.0, %v4217
        %v4234 = vsub.f32 1.0, %v4218
        %vm4235 = vcmp.lt.f32.partialorder %v3899, 0.0
        %vm4236 = vcmp.lt.f32.partialorder %v3900, 0.0
        %vm4237 = vcmp.lt.f32.partialorder %v3901, 0.0
        %vm4238 = vcmp.lt.f32.partialorder %v3902, 0.0
        %vm4239 = vcmp.lt.f32.partialorder %v3903, 0.0
        %vm4240 = vcmp.lt.f32.partialorder %v3904, 0.0
        %vm4241 = vcmp.lt.f32.partialorder %v3905, 0.0
        %vm4242 = vcmp.lt.f32.partialorder %v3906, 0.0
        %vm4243 = vcmp.lt.f32.partialorder %v3907, 0.0
        %vm4244 = vcmp.lt.f32.partialorder %v3908, 0.0
        %vm4245 = vcmp.lt.f32.partialorder %v3909, 0.0
        %vm4246 = vcmp.lt.f32.partialorder %v3910, 0.0
        %vm4247 = vcmp.lt.f32.partialorder %v3911, 0.0
        %vm4248 = vcmp.lt.f32.partialorder %v3912, 0.0
        %vm4249 = vcmp.lt.f32.partialorder %v3913, 0.0
        %vm4250 = vcmp.lt.f32.partialorder %v3914, 0.0
        %v4251 = vsub.f32 0.0, %v4219
        %v4252 = vsub.f32 0.0, %v4220
        %v4253 = vsub.f32 0.0, %v4221
        %v4254 = vsub.f32 0.0, %v4222
        %v4255 = vsub.f32 0.0, %v4223
        %v4256 = vsub.f32 0.0, %v4224
        %v4257 = vsub.f32 0.0, %v4225
        %v4258 = vsub.f32 0.0, %v4226
        %v4259 = vsub.f32 0.0, %v4227
        %v4260 = vsub.f32 0.0, %v4228
        %v4261 = vsub.f32 0.0, %v4229
        %v4262 = vsub.f32 0.0, %v4230
        %v4263 = vsub.f32 0.0, %v4231
        %v4264 = vsub.f32 0.0, %v4232
        %v4265 = vsub.f32 0.0, %v4233
        %v4266 = vsub.f32 0.0, %v4234
        %v4267 = vsel %vm4235, %v4251, %v4219
        %v4268 = vsel %vm4236, %v4252, %v4220
        %v4269 = vsel %vm4237, %v4253, %v4221
        %v4270 = vsel %vm4238, %v4254, %v4222
        %v4271 = vsel %vm4239, %v4255, %v4223
        %v4272 = vsel %vm4240, %v4256, %v4224
        %v4273 = vsel %vm4241, %v4257, %v4225
        %v4274 = vsel %vm4242, %v4258, %v4226
        %v4275 = vsel %vm4243, %v4259, %v4227
        %v4276 = vsel %vm4244, %v4260, %v4228
        %v4277 = vsel %vm4245, %v4261, %v4229
        %v4278 = vsel %vm4246, %v4262, %v4230
        %v4279 = vsel %vm4247, %v4263, %v4231
        %v4280 = vsel %vm4248, %v4264, %v4232
        %v4281 = vsel %vm4249, %v4265, %v4233
        %v4282 = vsel %vm4250, %v4266, %v4234
        %v4283 = vadd.f32 %v4267, 1.0
        %v4284 = vadd.f32 %v4268, 1.0
        %v4285 = vadd.f32 %v4269, 1.0
        %v4286 = vadd.f32 %v4270, 1.0
        %v4287 = vadd.f32 %v4271, 1.0
        %v4288 = vadd.f32 %v4272, 1.0
        %v4289 = vadd.f32 %v4273, 1.0
        %v4290 = vadd.f32 %v4274, 1.0
        %v4291 = vadd.f32 %v4275, 1.0
        %v4292 = vadd.f32 %v4276, 1.0
        %v4293 = vadd.f32 %v4277, 1.0
        %v4294 = vadd.f32 %v4278, 1.0
        %v4295 = vadd.f32 %v4279, 1.0
        %v4296 = vadd.f32 %v4280, 1.0
        %v4297 = vadd.f32 %v4281, 1.0
        %v4298 = vadd.f32 %v4282, 1.0
        %v4299 = vmul.f32 %v3883, %v4283
        %v4300 = vmul.f32 %v3884, %v4284
        %v4301 = vmul.f32 %v3885, %v4285
        %v4302 = vmul.f32 %v3886, %v4286
        %v4303 = vmul.f32 %v3887, %v4287
        %v4304 = vmul.f32 %v3888, %v4288
        %v4305 = vmul.f32 %v3889, %v4289
        %v4306 = vmul.f32 %v3890, %v4290
        %v4307 = vmul.f32 %v3891, %v4291
        %v4308 = vmul.f32 %v3892, %v4292
        %v4309 = vmul.f32 %v3893, %v4293
        %v4310 = vmul.f32 %v3894, %v4294
        %v4311 = vmul.f32 %v3895, %v4295
        %v4312 = vmul.f32 %v3896, %v4296
        %v4313 = vmul.f32 %v3897, %v4297
        %v4314 = vmul.f32 %v3898, %v4298
        %4316 = vset.pattern.permute.xlu0 0
        %4317 = vperm.xlu0 %4316, %v3642
        %v4318 = vpop.permute.xlu0 %4317
        %4321 = vset.pattern.permute.xlu0 0
        %4322 = vperm.xlu0 %4321, %v3643
        %v4323 = vpop.permute.xlu0 %4322
        %4326 = vset.pattern.permute.xlu0 0
        %4327 = vperm.xlu0 %4326, %v3644
        %v4328 = vpop.permute.xlu0 %4327
        %4331 = vset.pattern.permute.xlu0 0
        %4332 = vperm.xlu0 %4331, %v3645
        %v4333 = vpop.permute.xlu0 %4332
        %4336 = vset.pattern.permute.xlu0 0
        %4337 = vperm.xlu0 %4336, %v3646
        %v4338 = vpop.permute.xlu0 %4337
        %4341 = vset.pattern.permute.xlu0 0
        %4342 = vperm.xlu0 %4341, %v3647
        %v4343 = vpop.permute.xlu0 %4342
        %4346 = vset.pattern.permute.xlu0 0
        %4347 = vperm.xlu0 %4346, %v3648
        %v4348 = vpop.permute.xlu0 %4347
        %4351 = vset.pattern.permute.xlu0 0
        %4352 = vperm.xlu0 %4351, %v3649
        %v4353 = vpop.permute.xlu0 %4352
        %4356 = vset.pattern.permute.xlu0 0
        %4357 = vperm.xlu0 %4356, %v3650
        %v4358 = vpop.permute.xlu0 %4357
        %4361 = vset.pattern.permute.xlu0 0
        %4362 = vperm.xlu0 %4361, %v3651
        %v4363 = vpop.permute.xlu0 %4362
        %4366 = vset.pattern.permute.xlu0 0
        %4367 = vperm.xlu0 %4366, %v3652
        %v4368 = vpop.permute.xlu0 %4367
        %4371 = vset.pattern.permute.xlu0 0
        %4372 = vperm.xlu0 %4371, %v3653
        %v4373 = vpop.permute.xlu0 %4372
        %4376 = vset.pattern.permute.xlu0 0
        %4377 = vperm.xlu0 %4376, %v3654
        %v4378 = vpop.permute.xlu0 %4377
        %4381 = vset.pattern.permute.xlu0 0
        %4382 = vperm.xlu0 %4381, %v3655
        %v4383 = vpop.permute.xlu0 %4382
        %4386 = vset.pattern.permute.xlu0 0
        %4387 = vperm.xlu0 %4386, %v3656
        %v4388 = vpop.permute.xlu0 %4387
        %4391 = vset.pattern.permute.xlu0 0
        %4392 = vperm.xlu0 %4391, %v3657
        %v4393 = vpop.permute.xlu0 %4392
        %4395 = vmatprep.subr.mxu0 0.0
        %4396 = vmatpush1.msra.mxu0 %v4314
        %4397 = vmatprep.subr.mxu0 0.0
        %4398 = vmatpush1.msra.mxu0 %v4313
        %4399 = vmatprep.subr.mxu0 0.0
        %4400 = vmatpush1.msra.mxu0 %v4312
        %4401 = vmatprep.subr.mxu0 0.0
        %4402 = vmatpush1.msra.mxu0 %v4311
        %4403 = vmatprep.subr.mxu0 0.0
        %4404 = vmatpush1.msra.mxu0 %v4310
        %4405 = vmatprep.subr.mxu0 0.0
        %4406 = vmatpush1.msra.mxu0 %v4309
        %4407 = vmatprep.subr.mxu0 0.0
        %4408 = vmatpush1.msra.mxu0 %v4308
        %4409 = vmatprep.subr.mxu0 0.0
        %4410 = vmatpush1.msra.mxu0 %v4307
        %4411 = vmatprep.subr.mxu0 0.0
        %4412 = vmatpush1.msra.mxu0 %v4306
        %4413 = vmatprep.subr.mxu0 0.0
        %4414 = vmatpush1.msra.mxu0 %v4305
        %4415 = vmatprep.subr.mxu0 0.0
        %4416 = vmatpush1.msra.mxu0 %v4304
        %4417 = vmatprep.subr.mxu0 0.0
        %4418 = vmatpush1.msra.mxu0 %v4303
        %4419 = vmatprep.subr.mxu0 0.0
        %4420 = vmatpush1.msra.mxu0 %v4302
        %4421 = vmatprep.subr.mxu0 0.0
        %4422 = vmatpush1.msra.mxu0 %v4301
        %4423 = vmatprep.subr.mxu0 0.0
        %4424 = vmatpush1.msra.mxu0 %v4300
        %4425 = vmatprep.subr.mxu0 0.0
        %4426 = vmatpush1.msra.mxu0 %v4299
        %4427 = vmatprep.subr.mxu0 0.0
        %4428 = vmatpush2.msra.mxu0 0.0
        %4429 = vmatprep.subr.mxu0 0.0
        %4430 = vmatpush2.msra.mxu0 0.0
        %4431 = vmatprep.subr.mxu0 0.0
        %4432 = vmatpush2.msra.mxu0 0.0
        %4433 = vmatprep.subr.mxu0 0.0
        %4434 = vmatpush2.msra.mxu0 0.0
        %4435 = vmatprep.subr.mxu0 0.0
        %4436 = vmatpush2.msra.mxu0 0.0
        %4437 = vmatprep.subr.mxu0 0.0
        %4438 = vmatpush2.msra.mxu0 0.0
        %4439 = vmatprep.subr.mxu0 0.0
        %4440 = vmatpush2.msra.mxu0 0.0
        %4441 = vmatprep.subr.mxu0 0.0
        %4442 = vmatpush2.msra.mxu0 0.0
        %4443 = vmatprep.subr.mxu0 0.0
        %4444 = vmatpush2.msra.mxu0 0.0
        %4445 = vmatprep.subr.mxu0 0.0
        %4446 = vmatpush2.msra.mxu0 0.0
        %4447 = vmatprep.subr.mxu0 0.0
        %4448 = vmatpush2.msra.mxu0 0.0
        %4449 = vmatprep.subr.mxu0 0.0
        %4450 = vmatpush2.msra.mxu0 0.0
        %4451 = vmatprep.subr.mxu0 0.0
        %4452 = vmatpush2.msra.mxu0 0.0
        %4453 = vmatprep.subr.mxu0 0.0
        %4454 = vmatpush2.msra.mxu0 0.0
        %4455 = vmatprep.subr.mxu0 0.0
        %4456 = vmatpush2.msra.mxu0 0.0
        %4457 = vmatprep.subr.mxu0 0.0
        %4458 = vmatpush2.msra.mxu0 0.0
        %4459 = vmatprep.mubr.f32.mxu0 0.0
        %4460 = vmatmul.mubr.f32.gmra.mxu0 %v3626
        %v4461 = vpop.f32.mrf.mxu0
        %v4462 = vadd.f32 %v4318, %v4461
        %v4463 = vpop.f32.mrf.mxu0
        %4464 = vmatprep.mubr.f32.mxu0 0.0
        %4465 = vmatmul.mubr.f32.gmra.mxu0 %v3627
        %v4466 = vpop.f32.mrf.mxu0
        %v4467 = vadd.f32 %v4323, %v4466
        %v4468 = vpop.f32.mrf.mxu0
        %4469 = vmatprep.mubr.f32.mxu0 0.0
        %4470 = vmatmul.mubr.f32.gmra.mxu0 %v3628
        %v4471 = vpop.f32.mrf.mxu0
        %v4472 = vadd.f32 %v4328, %v4471
        %v4473 = vpop.f32.mrf.mxu0
        %4474 = vmatprep.mubr.f32.mxu0 0.0
        %4475 = vmatmul.mubr.f32.gmra.mxu0 %v3629
        %v4476 = vpop.f32.mrf.mxu0
        %v4477 = vadd.f32 %v4333, %v4476
        %v4478 = vpop.f32.mrf.mxu0
        %4479 = vmatprep.mubr.f32.mxu0 0.0
        %4480 = vmatmul.mubr.f32.gmra.mxu0 %v3630
        %v4481 = vpop.f32.mrf.mxu0
        %v4482 = vadd.f32 %v4338, %v4481
        %v4483 = vpop.f32.mrf.mxu0
        %4484 = vmatprep.mubr.f32.mxu0 0.0
        %4485 = vmatmul.mubr.f32.gmra.mxu0 %v3631
        %v4486 = vpop.f32.mrf.mxu0
        %v4487 = vadd.f32 %v4343, %v4486
        %v4488 = vpop.f32.mrf.mxu0
        %4489 = vmatprep.mubr.f32.mxu0 0.0
        %4490 = vmatmul.mubr.f32.gmra.mxu0 %v3632
        %v4491 = vpop.f32.mrf.mxu0
        %v4492 = vadd.f32 %v4348, %v4491
        %v4493 = vpop.f32.mrf.mxu0
        %4494 = vmatprep.mubr.f32.mxu0 0.0
        %4495 = vmatmul.mubr.f32.gmra.mxu0 %v3633
        %v4496 = vpop.f32.mrf.mxu0
        %v4497 = vadd.f32 %v4353, %v4496
        %v4498 = vpop.f32.mrf.mxu0
        %4499 = vmatprep.mubr.f32.mxu0 0.0
        %4500 = vmatmul.mubr.f32.gmra.mxu0 %v3634
        %v4501 = vpop.f32.mrf.mxu0
        %v4502 = vadd.f32 %v4358, %v4501
        %v4503 = vpop.f32.mrf.mxu0
        %4504 = vmatprep.mubr.f32.mxu0 0.0
        %4505 = vmatmul.mubr.f32.gmra.mxu0 %v3635
        %v4506 = vpop.f32.mrf.mxu0
        %v4507 = vadd.f32 %v4363, %v4506
        %v4508 = vpop.f32.mrf.mxu0
        %4509 = vmatprep.mubr.f32.mxu0 0.0
        %4510 = vmatmul.mubr.f32.gmra.mxu0 %v3636
        %v4511 = vpop.f32.mrf.mxu0
        %v4512 = vadd.f32 %v4368, %v4511
        %v4513 = vpop.f32.mrf.mxu0
        %4514 = vmatprep.mubr.f32.mxu0 0.0
        %4515 = vmatmul.mubr.f32.gmra.mxu0 %v3637
        %v4516 = vpop.f32.mrf.mxu0
        %v4517 = vadd.f32 %v4373, %v4516
        %v4518 = vpop.f32.mrf.mxu0
        %4519 = vmatprep.mubr.f32.mxu0 0.0
        %4520 = vmatmul.mubr.f32.gmra.mxu0 %v3638
        %v4521 = vpop.f32.mrf.mxu0
        %v4522 = vadd.f32 %v4378, %v4521
        %v4523 = vpop.f32.mrf.mxu0
        %4524 = vmatprep.mubr.f32.mxu0 0.0
        %4525 = vmatmul.mubr.f32.gmra.mxu0 %v3639
        %v4526 = vpop.f32.mrf.mxu0
        %v4527 = vadd.f32 %v4383, %v4526
        %v4528 = vpop.f32.mrf.mxu0
        %4529 = vmatprep.mubr.f32.mxu0 0.0
        %4530 = vmatmul.mubr.f32.gmra.mxu0 %v3640
        %v4531 = vpop.f32.mrf.mxu0
        %v4532 = vadd.f32 %v4388, %v4531
        %v4533 = vpop.f32.mrf.mxu0
        %4534 = vmatprep.mubr.f32.mxu0 0.0
        %4535 = vmatmul.mubr.f32.gmra.mxu0 %v3641
        %v4536 = vpop.f32.mrf.mxu0
        %v4537 = vadd.f32 %v4393, %v4536
        %v4538 = vpop.f32.mrf.mxu0
        %4539 = vdwg.mxu0
        %v4540 = vadd.f32 %v2122, %v4462
        %v4541 = vadd.f32 %v2123, %v4467
        %v4542 = vadd.f32 %v2124, %v4472
        %v4543 = vadd.f32 %v2125, %v4477
        %v4544 = vadd.f32 %v2126, %v4482
        %v4545 = vadd.f32 %v2127, %v4487
        %v4546 = vadd.f32 %v2128, %v4492
        %v4547 = vadd.f32 %v2129, %v4497
        %v4548 = vadd.f32 %v2130, %v4502
        %v4549 = vadd.f32 %v2131, %v4507
        %v4550 = vadd.f32 %v2132, %v4512
        %v4551 = vadd.f32 %v2133, %v4517
        %v4552 = vadd.f32 %v2134, %v4522
        %v4553 = vadd.f32 %v2135, %v4527
        %v4554 = vadd.f32 %v2136, %v4532
        %v4555 = vadd.f32 %v2137, %v4537
        %4556 = vmatprep.subr.mxu0 0.0
        %4557 = vmatpush1.msra.mxu0 %v3593
        %4558 = vmatprep.subr.mxu0 0.0
        %4559 = vmatpush1.msra.mxu0 %v3592
        %4560 = vmatprep.subr.mxu0 0.0
        %4561 = vmatpush1.msra.mxu0 %v3591
        %4562 = vmatprep.subr.mxu0 0.0
        %4563 = vmatpush1.msra.mxu0 %v3590
        %4564 = vmatprep.subr.mxu0 0.0
        %4565 = vmatpush1.msra.mxu0 %v3589
        %4566 = vmatprep.subr.mxu0 0.0
        %4567 = vmatpush1.msra.mxu0 %v3588
        %4568 = vmatprep.subr.mxu0 0.0
        %4569 = vmatpush1.msra.mxu0 %v3587
        %4570 = vmatprep.subr.mxu0 0.0
        %4571 = vmatpush1.msra.mxu0 %v3586
        %4572 = vmatprep.subr.mxu0 0.0
        %4573 = vmatpush1.msra.mxu0 %v3585
        %4574 = vmatprep.subr.mxu0 0.0
        %4575 = vmatpush1.msra.mxu0 %v3584
        %4576 = vmatprep.subr.mxu0 0.0
        %4577 = vmatpush1.msra.mxu0 %v3583
        %4578 = vmatprep.subr.mxu0 0.0
        %4579 = vmatpush1.msra.mxu0 %v3582
        %4580 = vmatprep.subr.mxu0 0.0
        %4581 = vmatpush1.msra.mxu0 %v3581
        %4582 = vmatprep.subr.mxu0 0.0
        %4583 = vmatpush1.msra.mxu0 %v3580
        %4584 = vmatprep.subr.mxu0 0.0
        %4585 = vmatpush1.msra.mxu0 %v3579
        %4586 = vmatprep.subr.mxu0 0.0
        %4587 = vmatpush1.msra.mxu0 %v3578
        %4588 = vmatprep.subr.mxu0 0.0
        %4589 = vmatpush2.msra.mxu0 0.0
        %4590 = vmatprep.subr.mxu0 0.0
        %4591 = vmatpush2.msra.mxu0 0.0
        %4592 = vmatprep.subr.mxu0 0.0
        %4593 = vmatpush2.msra.mxu0 0.0
        %4594 = vmatprep.subr.mxu0 0.0
        %4595 = vmatpush2.msra.mxu0 0.0
        %4596 = vmatprep.subr.mxu0 0.0
        %4597 = vmatpush2.msra.mxu0 0.0
        %4598 = vmatprep.subr.mxu0 0.0
        %4599 = vmatpush2.msra.mxu0 0.0
        %4600 = vmatprep.subr.mxu0 0.0
        %4601 = vmatpush2.msra.mxu0 0.0
        %4602 = vmatprep.subr.mxu0 0.0
        %4603 = vmatpush2.msra.mxu0 0.0
        %4604 = vmatprep.subr.mxu0 0.0
        %4605 = vmatpush2.msra.mxu0 0.0
        %4606 = vmatprep.subr.mxu0 0.0
        %4607 = vmatpush2.msra.mxu0 0.0
        %4608 = vmatprep.subr.mxu0 0.0
        %4609 = vmatpush2.msra.mxu0 0.0
        %4610 = vmatprep.subr.mxu0 0.0
        %4611 = vmatpush2.msra.mxu0 0.0
        %4612 = vmatprep.subr.mxu0 0.0
        %4613 = vmatpush2.msra.mxu0 0.0
        %4614 = vmatprep.subr.mxu0 0.0
        %4615 = vmatpush2.msra.mxu0 0.0
        %4616 = vmatprep.subr.mxu0 0.0
        %4617 = vmatpush2.msra.mxu0 0.0
        %4618 = vmatprep.subr.mxu0 0.0
        %4619 = vmatpush2.msra.mxu0 0.0
        %4620 = vmatprep.mubr.f32.mxu0 0.0
        %4621 = vmatmul.mubr.f32.gmra.mxu0 %v3594
        %v4622 = vpop.f32.mrf.mxu0
        %v4623 = vadd.f32 %v3661, %v4622
        %v4624 = vpop.f32.mrf.mxu0
        %4625 = vmatprep.mubr.f32.mxu0 0.0
        %4626 = vmatmul.mubr.f32.gmra.mxu0 %v3595
        %v4627 = vpop.f32.mrf.mxu0
        %v4628 = vadd.f32 %v3666, %v4627
        %v4629 = vpop.f32.mrf.mxu0
        %4630 = vmatprep.mubr.f32.mxu0 0.0
        %4631 = vmatmul.mubr.f32.gmra.mxu0 %v3596
        %v4632 = vpop.f32.mrf.mxu0
        %v4633 = vadd.f32 %v3671, %v4632
        %v4634 = vpop.f32.mrf.mxu0
        %4635 = vmatprep.mubr.f32.mxu0 0.0
        %4636 = vmatmul.mubr.f32.gmra.mxu0 %v3597
        %v4637 = vpop.f32.mrf.mxu0
        %v4638 = vadd.f32 %v3676, %v4637
        %v4639 = vpop.f32.mrf.mxu0
        %4640 = vmatprep.mubr.f32.mxu0 0.0
        %4641 = vmatmul.mubr.f32.gmra.mxu0 %v3598
        %v4642 = vpop.f32.mrf.mxu0
        %v4643 = vadd.f32 %v3681, %v4642
        %v4644 = vpop.f32.mrf.mxu0
        %4645 = vmatprep.mubr.f32.mxu0 0.0
        %4646 = vmatmul.mubr.f32.gmra.mxu0 %v3599
        %v4647 = vpop.f32.mrf.mxu0
        %v4648 = vadd.f32 %v3686, %v4647
        %v4649 = vpop.f32.mrf.mxu0
        %4650 = vmatprep.mubr.f32.mxu0 0.0
        %4651 = vmatmul.mubr.f32.gmra.mxu0 %v3600
        %v4652 = vpop.f32.mrf.mxu0
        %v4653 = vadd.f32 %v3691, %v4652
        %v4654 = vpop.f32.mrf.mxu0
        %4655 = vmatprep.mubr.f32.mxu0 0.0
        %4656 = vmatmul.mubr.f32.gmra.mxu0 %v3601
        %v4657 = vpop.f32.mrf.mxu0
        %v4658 = vadd.f32 %v3696, %v4657
        %v4659 = vpop.f32.mrf.mxu0
        %4660 = vmatprep.mubr.f32.mxu0 0.0
        %4661 = vmatmul.mubr.f32.gmra.mxu0 %v3602
        %v4662 = vpop.f32.mrf.mxu0
        %v4663 = vadd.f32 %v3701, %v4662
        %v4664 = vpop.f32.mrf.mxu0
        %4665 = vmatprep.mubr.f32.mxu0 0.0
        %4666 = vmatmul.mubr.f32.gmra.mxu0 %v3603
        %v4667 = vpop.f32.mrf.mxu0
        %v4668 = vadd.f32 %v3706, %v4667
        %v4669 = vpop.f32.mrf.mxu0
        %4670 = vmatprep.mubr.f32.mxu0 0.0
        %4671 = vmatmul.mubr.f32.gmra.mxu0 %v3604
        %v4672 = vpop.f32.mrf.mxu0
        %v4673 = vadd.f32 %v3711, %v4672
        %v4674 = vpop.f32.mrf.mxu0
        %4675 = vmatprep.mubr.f32.mxu0 0.0
        %4676 = vmatmul.mubr.f32.gmra.mxu0 %v3605
        %v4677 = vpop.f32.mrf.mxu0
        %v4678 = vadd.f32 %v3716, %v4677
        %v4679 = vpop.f32.mrf.mxu0
        %4680 = vmatprep.mubr.f32.mxu0 0.0
        %4681 = vmatmul.mubr.f32.gmra.mxu0 %v3606
        %v4682 = vpop.f32.mrf.mxu0
        %v4683 = vadd.f32 %v3721, %v4682
        %v4684 = vpop.f32.mrf.mxu0
        %4685 = vmatprep.mubr.f32.mxu0 0.0
        %4686 = vmatmul.mubr.f32.gmra.mxu0 %v3607
        %v4687 = vpop.f32.mrf.mxu0
        %v4688 = vadd.f32 %v3726, %v4687
        %v4689 = vpop.f32.mrf.mxu0
        %4690 = vmatprep.mubr.f32.mxu0 0.0
        %4691 = vmatmul.mubr.f32.gmra.mxu0 %v3608
        %v4692 = vpop.f32.mrf.mxu0
        %v4693 = vadd.f32 %v3731, %v4692
        %v4694 = vpop.f32.mrf.mxu0
        %4695 = vmatprep.mubr.f32.mxu0 0.0
        %4696 = vmatmul.mubr.f32.gmra.mxu0 %v3609
        %v4697 = vpop.f32.mrf.mxu0
        %v4698 = vadd.f32 %v3736, %v4697
        %v4699 = vpop.f32.mrf.mxu0
        %4700 = vdwg.mxu0
        %v4701 = vmul.f32 %v4623, 0.5
        %v4702 = vmul.f32 %v4628, 0.5
        %v4703 = vmul.f32 %v4633, 0.5
        %v4704 = vmul.f32 %v4638, 0.5
        %v4705 = vmul.f32 %v4643, 0.5
        %v4706 = vmul.f32 %v4648, 0.5
        %v4707 = vmul.f32 %v4653, 0.5
        %v4708 = vmul.f32 %v4658, 0.5
        %v4709 = vmul.f32 %v4663, 0.5
        %v4710 = vmul.f32 %v4668, 0.5
        %v4711 = vmul.f32 %v4673, 0.5
        %v4712 = vmul.f32 %v4678, 0.5
        %v4713 = vmul.f32 %v4683, 0.5
        %v4714 = vmul.f32 %v4688, 0.5
        %v4715 = vmul.f32 %v4693, 0.5
        %v4716 = vmul.f32 %v4698, 0.5
        %v4717 = vmul.f32 %v4623, 0.70710677
        %v4718 = vmul.f32 %v4628, 0.70710677
        %v4719 = vmul.f32 %v4633, 0.70710677
        %v4720 = vmul.f32 %v4638, 0.70710677
        %v4721 = vmul.f32 %v4643, 0.70710677
        %v4722 = vmul.f32 %v4648, 0.70710677
        %v4723 = vmul.f32 %v4653, 0.70710677
        %v4724 = vmul.f32 %v4658, 0.70710677
        %v4725 = vmul.f32 %v4663, 0.70710677
        %v4726 = vmul.f32 %v4668, 0.70710677
        %v4727 = vmul.f32 %v4673, 0.70710677
        %v4728 = vmul.f32 %v4678, 0.70710677
        %v4729 = vmul.f32 %v4683, 0.70710677
        %v4730 = vmul.f32 %v4688, 0.70710677
        %v4731 = vmul.f32 %v4693, 0.70710677
        %v4732 = vmul.f32 %v4698, 0.70710677
        %v4733 = vand.u32 2147483647, %v4717
        %v4734 = vand.u32 2147483647, %v4718
        %v4735 = vand.u32 2147483647, %v4719
        %v4736 = vand.u32 2147483647, %v4720
        %v4737 = vand.u32 2147483647, %v4721
        %v4738 = vand.u32 2147483647, %v4722
        %v4739 = vand.u32 2147483647, %v4723
        %v4740 = vand.u32 2147483647, %v4724
        %v4741 = vand.u32 2147483647, %v4725
        %v4742 = vand.u32 2147483647, %v4726
        %v4743 = vand.u32 2147483647, %v4727
        %v4744 = vand.u32 2147483647, %v4728
        %v4745 = vand.u32 2147483647, %v4729
        %v4746 = vand.u32 2147483647, %v4730
        %v4747 = vand.u32 2147483647, %v4731
        %v4748 = vand.u32 2147483647, %v4732
        %v4749 = vmul.f32 %v4733, 0.3275911
        %v4750 = vmul.f32 %v4734, 0.3275911
        %v4751 = vmul.f32 %v4735, 0.3275911
        %v4752 = vmul.f32 %v4736, 0.3275911
        %v4753 = vmul.f32 %v4737, 0.3275911
        %v4754 = vmul.f32 %v4738, 0.3275911
        %v4755 = vmul.f32 %v4739, 0.3275911
        %v4756 = vmul.f32 %v4740, 0.3275911
        %v4757 = vmul.f32 %v4741, 0.3275911
        %v4758 = vmul.f32 %v4742, 0.3275911
        %v4759 = vmul.f32 %v4743, 0.3275911
        %v4760 = vmul.f32 %v4744, 0.3275911
        %v4761 = vmul.f32 %v4745, 0.3275911
        %v4762 = vmul.f32 %v4746, 0.3275911
        %v4763 = vmul.f32 %v4747, 0.3275911
        %v4764 = vmul.f32 %v4748, 0.3275911
        %v4765 = vadd.f32 %v4749, 1.0
        %v4766 = vadd.f32 %v4750, 1.0
        %v4767 = vadd.f32 %v4751, 1.0
        %v4768 = vadd.f32 %v4752, 1.0
        %v4769 = vadd.f32 %v4753, 1.0
        %v4770 = vadd.f32 %v4754, 1.0
        %v4771 = vadd.f32 %v4755, 1.0
        %v4772 = vadd.f32 %v4756, 1.0
        %v4773 = vadd.f32 %v4757, 1.0
        %v4774 = vadd.f32 %v4758, 1.0
        %v4775 = vadd.f32 %v4759, 1.0
        %v4776 = vadd.f32 %v4760, 1.0
        %v4777 = vadd.f32 %v4761, 1.0
        %v4778 = vadd.f32 %v4762, 1.0
        %v4779 = vadd.f32 %v4763, 1.0
        %v4780 = vadd.f32 %v4764, 1.0
        %v4781 = vrcp.pop %v4765
        %v4782 = vmul.f32 1.0, %v4781
        %v4783 = vrcp.pop %v4766
        %v4784 = vmul.f32 1.0, %v4783
        %v4785 = vrcp.pop %v4767
        %v4786 = vmul.f32 1.0, %v4785
        %v4787 = vrcp.pop %v4768
        %v4788 = vmul.f32 1.0, %v4787
        %v4789 = vrcp.pop %v4769
        %v4790 = vmul.f32 1.0, %v4789
        %v4791 = vrcp.pop %v4770
        %v4792 = vmul.f32 1.0, %v4791
        %v4793 = vrcp.pop %v4771
        %v4794 = vmul.f32 1.0, %v4793
        %v4795 = vrcp.pop %v4772
        %v4796 = vmul.f32 1.0, %v4795
        %v4797 = vrcp.pop %v4773
        %v4798 = vmul.f32 1.0, %v4797
        %v4799 = vrcp.pop %v4774
        %v4800 = vmul.f32 1.0, %v4799
        %v4801 = vrcp.pop %v4775
        %v4802 = vmul.f32 1.0, %v4801
        %v4803 = vrcp.pop %v4776
        %v4804 = vmul.f32 1.0, %v4803
        %v4805 = vrcp.pop %v4777
        %v4806 = vmul.f32 1.0, %v4805
        %v4807 = vrcp.pop %v4778
        %v4808 = vmul.f32 1.0, %v4807
        %v4809 = vrcp.pop %v4779
        %v4810 = vmul.f32 1.0, %v4809
        %v4811 = vrcp.pop %v4780
        %v4812 = vmul.f32 1.0, %v4811
        %v4813 = vmul.f32 %v4782, 1.0614054
        %v4814 = vmul.f32 %v4784, 1.0614054
        %v4815 = vmul.f32 %v4786, 1.0614054
        %v4816 = vmul.f32 %v4788, 1.0614054
        %v4817 = vmul.f32 %v4790, 1.0614054
        %v4818 = vmul.f32 %v4792, 1.0614054
        %v4819 = vmul.f32 %v4794, 1.0614054
        %v4820 = vmul.f32 %v4796, 1.0614054
        %v4821 = vmul.f32 %v4798, 1.0614054
        %v4822 = vmul.f32 %v4800, 1.0614054
        %v4823 = vmul.f32 %v4802, 1.0614054
        %v4824 = vmul.f32 %v4804, 1.0614054
        %v4825 = vmul.f32 %v4806, 1.0614054
        %v4826 = vmul.f32 %v4808, 1.0614054
        %v4827 = vmul.f32 %v4810, 1.0614054
        %v4828 = vmul.f32 %v4812, 1.0614054
        %v4829 = vadd.f32 %v4813, -1.4531521
        %v4830 = vadd.f32 %v4814, -1.4531521
        %v4831 = vadd.f32 %v4815, -1.4531521
        %v4832 = vadd.f32 %v4816, -1.4531521
        %v4833 = vadd.f32 %v4817, -1.4531521
        %v4834 = vadd.f32 %v4818, -1.4531521
        %v4835 = vadd.f32 %v4819, -1.4531521
        %v4836 = vadd.f32 %v4820, -1.4531521
        %v4837 = vadd.f32 %v4821, -1.4531521
        %v4838 = vadd.f32 %v4822, -1.4531521
        %v4839 = vadd.f32 %v4823, -1.4531521
        %v4840 = vadd.f32 %v4824, -1.4531521
        %v4841 = vadd.f32 %v4825, -1.4531521
        %v4842 = vadd.f32 %v4826, -1.4531521
        %v4843 = vadd.f32 %v4827, -1.4531521
        %v4844 = vadd.f32 %v4828, -1.4531521
        %v4845 = vmul.f32 %v4829, %v4782
        %v4846 = vmul.f32 %v4830, %v4784
        %v4847 = vmul.f32 %v4831, %v4786
        %v4848 = vmul.f32 %v4832, %v4788
        %v4849 = vmul.f32 %v4833, %v4790
        %v4850 = vmul.f32 %v4834, %v4792
        %v4851 = vmul.f32 %v4835, %v4794
        %v4852 = vmul.f32 %v4836, %v4796
        %v4853 = vmul.f32 %v4837, %v4798
        %v4854 = vmul.f32 %v4838, %v4800
        %v4855 = vmul.f32 %v4839, %v4802
        %v4856 = vmul.f32 %v4840, %v4804
        %v4857 = vmul.f32 %v4841, %v4806
        %v4858 = vmul.f32 %v4842, %v4808
        %v4859 = vmul.f32 %v4843, %v4810
        %v4860 = vmul.f32 %v4844, %v4812
        %v4861 = vadd.f32 %v4845, 1.4214138
        %v4862 = vadd.f32 %v4846, 1.4214138
        %v4863 = vadd.f32 %v4847, 1.4214138
        %v4864 = vadd.f32 %v4848, 1.4214138
        %v4865 = vadd.f32 %v4849, 1.4214138
        %v4866 = vadd.f32 %v4850, 1.4214138
        %v4867 = vadd.f32 %v4851, 1.4214138
        %v4868 = vadd.f32 %v4852, 1.4214138
        %v4869 = vadd.f32 %v4853, 1.4214138
        %v4870 = vadd.f32 %v4854, 1.4214138
        %v4871 = vadd.f32 %v4855, 1.4214138
        %v4872 = vadd.f32 %v4856, 1.4214138
        %v4873 = vadd.f32 %v4857, 1.4214138
        %v4874 = vadd.f32 %v4858, 1.4214138
        %v4875 = vadd.f32 %v4859, 1.4214138
        %v4876 = vadd.f32 %v4860, 1.4214138
        %v4877 = vmul.f32 %v4861, %v4782
        %v4878 = vmul.f32 %v4862, %v4784
        %v4879 = vmul.f32 %v4863, %v4786
        %v4880 = vmul.f32 %v4864, %v4788
        %v4881 = vmul.f32 %v4865, %v4790
        %v4882 = vmul.f32 %v4866, %v4792
        %v4883 = vmul.f32 %v4867, %v4794
        %v4884 = vmul.f32 %v4868, %v4796
        %v4885 = vmul.f32 %v4869, %v4798
        %v4886 = vmul.f32 %v4870, %v4800
        %v4887 = vmul.f32 %v4871, %v4802
        %v4888 = vmul.f32 %v4872, %v4804
        %v4889 = vmul.f32 %v4873, %v4806
        %v4890 = vmul.f32 %v4874, %v4808
        %v4891 = vmul.f32 %v4875, %v4810
        %v4892 = vmul.f32 %v4876, %v4812
        %v4893 = vadd.f32 %v4877, -0.28449672
        %v4894 = vadd.f32 %v4878, -0.28449672
        %v4895 = vadd.f32 %v4879, -0.28449672
        %v4896 = vadd.f32 %v4880, -0.28449672
        %v4897 = vadd.f32 %v4881, -0.28449672
        %v4898 = vadd.f32 %v4882, -0.28449672
        %v4899 = vadd.f32 %v4883, -0.28449672
        %v4900 = vadd.f32 %v4884, -0.28449672
        %v4901 = vadd.f32 %v4885, -0.28449672
        %v4902 = vadd.f32 %v4886, -0.28449672
        %v4903 = vadd.f32 %v4887, -0.28449672
        %v4904 = vadd.f32 %v4888, -0.28449672
        %v4905 = vadd.f32 %v4889, -0.28449672
        %v4906 = vadd.f32 %v4890, -0.28449672
        %v4907 = vadd.f32 %v4891, -0.28449672
        %v4908 = vadd.f32 %v4892, -0.28449672
        %v4909 = vmul.f32 %v4893, %v4782
        %v4910 = vmul.f32 %v4894, %v4784
        %v4911 = vmul.f32 %v4895, %v4786
        %v4912 = vmul.f32 %v4896, %v4788
        %v4913 = vmul.f32 %v4897, %v4790
        %v4914 = vmul.f32 %v4898, %v4792
        %v4915 = vmul.f32 %v4899, %v4794
        %v4916 = vmul.f32 %v4900, %v4796
        %v4917 = vmul.f32 %v4901, %v4798
        %v4918 = vmul.f32 %v4902, %v4800
        %v4919 = vmul.f32 %v4903, %v4802
        %v4920 = vmul.f32 %v4904, %v4804
        %v4921 = vmul.f32 %v4905, %v4806
        %v4922 = vmul.f32 %v4906, %v4808
        %v4923 = vmul.f32 %v4907, %v4810
        %v4924 = vmul.f32 %v4908, %v4812
        %v4925 = vadd.f32 %v4909, 0.2548296
        %v4926 = vadd.f32 %v4910, 0.2548296
        %v4927 = vadd.f32 %v4911, 0.2548296
        %v4928 = vadd.f32 %v4912, 0.2548296
        %v4929 = vadd.f32 %v4913, 0.2548296
        %v4930 = vadd.f32 %v4914, 0.2548296
        %v4931 = vadd.f32 %v4915, 0.2548296
        %v4932 = vadd.f32 %v4916, 0.2548296
        %v4933 = vadd.f32 %v4917, 0.2548296
        %v4934 = vadd.f32 %v4918, 0.2548296
        %v4935 = vadd.f32 %v4919, 0.2548296
        %v4936 = vadd.f32 %v4920, 0.2548296
        %v4937 = vadd.f32 %v4921, 0.2548296
        %v4938 = vadd.f32 %v4922, 0.2548296
        %v4939 = vadd.f32 %v4923, 0.2548296
        %v4940 = vadd.f32 %v4924, 0.2548296
        %v4941 = vmul.f32 %v4925, %v4782
        %v4942 = vmul.f32 %v4926, %v4784
        %v4943 = vmul.f32 %v4927, %v4786
        %v4944 = vmul.f32 %v4928, %v4788
        %v4945 = vmul.f32 %v4929, %v4790
        %v4946 = vmul.f32 %v4930, %v4792
        %v4947 = vmul.f32 %v4931, %v4794
        %v4948 = vmul.f32 %v4932, %v4796
        %v4949 = vmul.f32 %v4933, %v4798
        %v4950 = vmul.f32 %v4934, %v4800
        %v4951 = vmul.f32 %v4935, %v4802
        %v4952 = vmul.f32 %v4936, %v4804
        %v4953 = vmul.f32 %v4937, %v4806
        %v4954 = vmul.f32 %v4938, %v4808
        %v4955 = vmul.f32 %v4939, %v4810
        %v4956 = vmul.f32 %v4940, %v4812
        %v4957 = vsub.f32 0.0, %v4733
        %v4958 = vsub.f32 0.0, %v4734
        %v4959 = vsub.f32 0.0, %v4735
        %v4960 = vsub.f32 0.0, %v4736
        %v4961 = vsub.f32 0.0, %v4737
        %v4962 = vsub.f32 0.0, %v4738
        %v4963 = vsub.f32 0.0, %v4739
        %v4964 = vsub.f32 0.0, %v4740
        %v4965 = vsub.f32 0.0, %v4741
        %v4966 = vsub.f32 0.0, %v4742
        %v4967 = vsub.f32 0.0, %v4743
        %v4968 = vsub.f32 0.0, %v4744
        %v4969 = vsub.f32 0.0, %v4745
        %v4970 = vsub.f32 0.0, %v4746
        %v4971 = vsub.f32 0.0, %v4747
        %v4972 = vsub.f32 0.0, %v4748
        %v4973 = vmul.f32 %v4957, %v4733
        %v4974 = vmul.f32 %v4958, %v4734
        %v4975 = vmul.f32 %v4959, %v4735
        %v4976 = vmul.f32 %v4960, %v4736
        %v4977 = vmul.f32 %v4961, %v4737
        %v4978 = vmul.f32 %v4962, %v4738
        %v4979 = vmul.f32 %v4963, %v4739
        %v4980 = vmul.f32 %v4964, %v4740
        %v4981 = vmul.f32 %v4965, %v4741
        %v4982 = vmul.f32 %v4966, %v4742
        %v4983 = vmul.f32 %v4967, %v4743
        %v4984 = vmul.f32 %v4968, %v4744
        %v4985 = vmul.f32 %v4969, %v4745
        %v4986 = vmul.f32 %v4970, %v4746
        %v4987 = vmul.f32 %v4971, %v4747
        %v4988 = vmul.f32 %v4972, %v4748
        %v4989 = vmul.f32 %v4973, 1.442695
        %v4990 = vpow.pop %v4989
        %v4991 = vmul.f32 %v4974, 1.442695
        %v4992 = vpow.pop %v4991
        %v4993 = vmul.f32 %v4975, 1.442695
        %v4994 = vpow.pop %v4993
        %v4995 = vmul.f32 %v4976, 1.442695
        %v4996 = vpow.pop %v4995
        %v4997 = vmul.f32 %v4977, 1.442695
        %v4998 = vpow.pop %v4997
        %v4999 = vmul.f32 %v4978, 1.442695
        %v5000 = vpow.pop %v4999
        %v5001 = vmul.f32 %v4979, 1.442695
        %v5002 = vpow.pop %v5001
        %v5003 = vmul.f32 %v4980, 1.442695
        %v5004 = vpow.pop %v5003
        %v5005 = vmul.f32 %v4981, 1.442695
        %v5006 = vpow.pop %v5005
        %v5007 = vmul.f32 %v4982, 1.442695
        %v5008 = vpow.pop %v5007
        %v5009 = vmul.f32 %v4983, 1.442695
        %v5010 = vpow.pop %v5009
        %v5011 = vmul.f32 %v4984, 1.442695
        %v5012 = vpow.pop %v5011
        %v5013 = vmul.f32 %v4985, 1.442695
        %v5014 = vpow.pop %v5013
        %v5015 = vmul.f32 %v4986, 1.442695
        %v5016 = vpow.pop %v5015
        %v5017 = vmul.f32 %v4987, 1.442695
        %v5018 = vpow.pop %v5017
        %v5019 = vmul.f32 %v4988, 1.442695
        %v5020 = vpow.pop %v5019
        %v5021 = vmul.f32 %v4941, %v4990
        %v5022 = vmul.f32 %v4942, %v4992
        %v5023 = vmul.f32 %v4943, %v4994
        %v5024 = vmul.f32 %v4944, %v4996
        %v5025 = vmul.f32 %v4945, %v4998
        %v5026 = vmul.f32 %v4946, %v5000
        %v5027 = vmul.f32 %v4947, %v5002
        %v5028 = vmul.f32 %v4948, %v5004
        %v5029 = vmul.f32 %v4949, %v5006
        %v5030 = vmul.f32 %v4950, %v5008
        %v5031 = vmul.f32 %v4951, %v5010
        %v5032 = vmul.f32 %v4952, %v5012
        %v5033 = vmul.f32 %v4953, %v5014
        %v5034 = vmul.f32 %v4954, %v5016
        %v5035 = vmul.f32 %v4955, %v5018
        %v5036 = vmul.f32 %v4956, %v5020
        %v5037 = vsub.f32 1.0, %v5021
        %v5038 = vsub.f32 1.0, %v5022
        %v5039 = vsub.f32 1.0, %v5023
        %v5040 = vsub.f32 1.0, %v5024
        %v5041 = vsub.f32 1.0, %v5025
        %v5042 = vsub.f32 1.0, %v5026
        %v5043 = vsub.f32 1.0, %v5027
        %v5044 = vsub.f32 1.0, %v5028
        %v5045 = vsub.f32 1.0, %v5029
        %v5046 = vsub.f32 1.0, %v5030
        %v5047 = vsub.f32 1.0, %v5031
        %v5048 = vsub.f32 1.0, %v5032
        %v5049 = vsub.f32 1.0, %v5033
        %v5050 = vsub.f32 1.0, %v5034
        %v5051 = vsub.f32 1.0, %v5035
        %v5052 = vsub.f32 1.0, %v5036
        %vm5053 = vcmp.lt.f32.partialorder %v4717, 0.0
        %vm5054 = vcmp.lt.f32.partialorder %v4718, 0.0
        %vm5055 = vcmp.lt.f32.partialorder %v4719, 0.0
        %vm5056 = vcmp.lt.f32.partialorder %v4720, 0.0
        %vm5057 = vcmp.lt.f32.partialorder %v4721, 0.0
        %vm5058 = vcmp.lt.f32.partialorder %v4722, 0.0
        %vm5059 = vcmp.lt.f32.partialorder %v4723, 0.0
        %vm5060 = vcmp.lt.f32.partialorder %v4724, 0.0
        %vm5061 = vcmp.lt.f32.partialorder %v4725, 0.0
        %vm5062 = vcmp.lt.f32.partialorder %v4726, 0.0
        %vm5063 = vcmp.lt.f32.partialorder %v4727, 0.0
        %vm5064 = vcmp.lt.f32.partialorder %v4728, 0.0
        %vm5065 = vcmp.lt.f32.partialorder %v4729, 0.0
        %vm5066 = vcmp.lt.f32.partialorder %v4730, 0.0
        %vm5067 = vcmp.lt.f32.partialorder %v4731, 0.0
        %vm5068 = vcmp.lt.f32.partialorder %v4732, 0.0
        %v5069 = vsub.f32 0.0, %v5037
        %v5070 = vsub.f32 0.0, %v5038
        %v5071 = vsub.f32 0.0, %v5039
        %v5072 = vsub.f32 0.0, %v5040
        %v5073 = vsub.f32 0.0, %v5041
        %v5074 = vsub.f32 0.0, %v5042
        %v5075 = vsub.f32 0.0, %v5043
        %v5076 = vsub.f32 0.0, %v5044
        %v5077 = vsub.f32 0.0, %v5045
        %v5078 = vsub.f32 0.0, %v5046
        %v5079 = vsub.f32 0.0, %v5047
        %v5080 = vsub.f32 0.0, %v5048
        %v5081 = vsub.f32 0.0, %v5049
        %v5082 = vsub.f32 0.0, %v5050
        %v5083 = vsub.f32 0.0, %v5051
        %v5084 = vsub.f32 0.0, %v5052
        %v5085 = vsel %vm5053, %v5069, %v5037
        %v5086 = vsel %vm5054, %v5070, %v5038
        %v5087 = vsel %vm5055, %v5071, %v5039
        %v5088 = vsel %vm5056, %v5072, %v5040
        %v5089 = vsel %vm5057, %v5073, %v5041
        %v5090 = vsel %vm5058, %v5074, %v5042
        %v5091 = vsel %vm5059, %v5075, %v5043
        %v5092 = vsel %vm5060, %v5076, %v5044
        %v5093 = vsel %vm5061, %v5077, %v5045
        %v5094 = vsel %vm5062, %v5078, %v5046
        %v5095 = vsel %vm5063, %v5079, %v5047
        %v5096 = vsel %vm5064, %v5080, %v5048
        %v5097 = vsel %vm5065, %v5081, %v5049
        %v5098 = vsel %vm5066, %v5082, %v5050
        %v5099 = vsel %vm5067, %v5083, %v5051
        %v5100 = vsel %vm5068, %v5084, %v5052
        %v5101 = vadd.f32 %v5085, 1.0
        %v5102 = vadd.f32 %v5086, 1.0
        %v5103 = vadd.f32 %v5087, 1.0
        %v5104 = vadd.f32 %v5088, 1.0
        %v5105 = vadd.f32 %v5089, 1.0
        %v5106 = vadd.f32 %v5090, 1.0
        %v5107 = vadd.f32 %v5091, 1.0
        %v5108 = vadd.f32 %v5092, 1.0
        %v5109 = vadd.f32 %v5093, 1.0
        %v5110 = vadd.f32 %v5094, 1.0
        %v5111 = vadd.f32 %v5095, 1.0
        %v5112 = vadd.f32 %v5096, 1.0
        %v5113 = vadd.f32 %v5097, 1.0
        %v5114 = vadd.f32 %v5098, 1.0
        %v5115 = vadd.f32 %v5099, 1.0
        %v5116 = vadd.f32 %v5100, 1.0
        %v5117 = vmul.f32 %v4701, %v5101
        %v5118 = vmul.f32 %v4702, %v5102
        %v5119 = vmul.f32 %v4703, %v5103
        %v5120 = vmul.f32 %v4704, %v5104
        %v5121 = vmul.f32 %v4705, %v5105
        %v5122 = vmul.f32 %v4706, %v5106
        %v5123 = vmul.f32 %v4707, %v5107
        %v5124 = vmul.f32 %v4708, %v5108
        %v5125 = vmul.f32 %v4709, %v5109
        %v5126 = vmul.f32 %v4710, %v5110
        %v5127 = vmul.f32 %v4711, %v5111
        %v5128 = vmul.f32 %v4712, %v5112
        %v5129 = vmul.f32 %v4713, %v5113
        %v5130 = vmul.f32 %v4714, %v5114
        %v5131 = vmul.f32 %v4715, %v5115
        %v5132 = vmul.f32 %v4716, %v5116
        %5133 = vmatprep.subr.mxu0 0.0
        %5134 = vmatpush1.msra.mxu0 %v5132
        %5135 = vmatprep.subr.mxu0 0.0
        %5136 = vmatpush1.msra.mxu0 %v5131
        %5137 = vmatprep.subr.mxu0 0.0
        %5138 = vmatpush1.msra.mxu0 %v5130
        %5139 = vmatprep.subr.mxu0 0.0
        %5140 = vmatpush1.msra.mxu0 %v5129
        %5141 = vmatprep.subr.mxu0 0.0
        %5142 = vmatpush1.msra.mxu0 %v5128
        %5143 = vmatprep.subr.mxu0 0.0
        %5144 = vmatpush1.msra.mxu0 %v5127
        %5145 = vmatprep.subr.mxu0 0.0
        %5146 = vmatpush1.msra.mxu0 %v5126
        %5147 = vmatprep.subr.mxu0 0.0
        %5148 = vmatpush1.msra.mxu0 %v5125
        %5149 = vmatprep.subr.mxu0 0.0
        %5150 = vmatpush1.msra.mxu0 %v5124
        %5151 = vmatprep.subr.mxu0 0.0
        %5152 = vmatpush1.msra.mxu0 %v5123
        %5153 = vmatprep.subr.mxu0 0.0
        %5154 = vmatpush1.msra.mxu0 %v5122
        %5155 = vmatprep.subr.mxu0 0.0
        %5156 = vmatpush1.msra.mxu0 %v5121
        %5157 = vmatprep.subr.mxu0 0.0
        %5158 = vmatpush1.msra.mxu0 %v5120
        %5159 = vmatprep.subr.mxu0 0.0
        %5160 = vmatpush1.msra.mxu0 %v5119
        %5161 = vmatprep.subr.mxu0 0.0
        %5162 = vmatpush1.msra.mxu0 %v5118
        %5163 = vmatprep.subr.mxu0 0.0
        %5164 = vmatpush1.msra.mxu0 %v5117
        %5165 = vmatprep.subr.mxu0 0.0
        %5166 = vmatpush2.msra.mxu0 0.0
        %5167 = vmatprep.subr.mxu0 0.0
        %5168 = vmatpush2.msra.mxu0 0.0
        %5169 = vmatprep.subr.mxu0 0.0
        %5170 = vmatpush2.msra.mxu0 0.0
        %5171 = vmatprep.subr.mxu0 0.0
        %5172 = vmatpush2.msra.mxu0 0.0
        %5173 = vmatprep.subr.mxu0 0.0
        %5174 = vmatpush2.msra.mxu0 0.0
        %5175 = vmatprep.subr.mxu0 0.0
        %5176 = vmatpush2.msra.mxu0 0.0
        %5177 = vmatprep.subr.mxu0 0.0
        %5178 = vmatpush2.msra.mxu0 0.0
        %5179 = vmatprep.subr.mxu0 0.0
        %5180 = vmatpush2.msra.mxu0 0.0
        %5181 = vmatprep.subr.mxu0 0.0
        %5182 = vmatpush2.msra.mxu0 0.0
        %5183 = vmatprep.subr.mxu0 0.0
        %5184 = vmatpush2.msra.mxu0 0.0
        %5185 = vmatprep.subr.mxu0 0.0
        %5186 = vmatpush2.msra.mxu0 0.0
        %5187 = vmatprep.subr.mxu0 0.0
        %5188 = vmatpush2.msra.mxu0 0.0
        %5189 = vmatprep.subr.mxu0 0.0
        %5190 = vmatpush2.msra.mxu0 0.0
        %5191 = vmatprep.subr.mxu0 0.0
        %5192 = vmatpush2.msra.mxu0 0.0
        %5193 = vmatprep.subr.mxu0 0.0
        %5194 = vmatpush2.msra.mxu0 0.0
        %5195 = vmatprep.subr.mxu0 0.0
        %5196 = vmatpush2.msra.mxu0 0.0
        %5197 = vmatprep.mubr.f32.mxu0 0.0
        %5198 = vmatmul.mubr.f32.gmra.mxu0 %v3626
        %v5199 = vpop.f32.mrf.mxu0
        %v5200 = vadd.f32 %v4318, %v5199
        %v5201 = vpop.f32.mrf.mxu0
        %5202 = vmatprep.mubr.f32.mxu0 0.0
        %5203 = vmatmul.mubr.f32.gmra.mxu0 %v3627
        %v5204 = vpop.f32.mrf.mxu0
        %v5205 = vadd.f32 %v4323, %v5204
        %v5206 = vpop.f32.mrf.mxu0
        %5207 = vmatprep.mubr.f32.mxu0 0.0
        %5208 = vmatmul.mubr.f32.gmra.mxu0 %v3628
        %v5209 = vpop.f32.mrf.mxu0
        %v5210 = vadd.f32 %v4328, %v5209
        %v5211 = vpop.f32.mrf.mxu0
        %5212 = vmatprep.mubr.f32.mxu0 0.0
        %5213 = vmatmul.mubr.f32.gmra.mxu0 %v3629
        %v5214 = vpop.f32.mrf.mxu0
        %v5215 = vadd.f32 %v4333, %v5214
        %v5216 = vpop.f32.mrf.mxu0
        %5217 = vmatprep.mubr.f32.mxu0 0.0
        %5218 = vmatmul.mubr.f32.gmra.mxu0 %v3630
        %v5219 = vpop.f32.mrf.mxu0
        %v5220 = vadd.f32 %v4338, %v5219
        %v5221 = vpop.f32.mrf.mxu0
        %5222 = vmatprep.mubr.f32.mxu0 0.0
        %5223 = vmatmul.mubr.f32.gmra.mxu0 %v3631
        %v5224 = vpop.f32.mrf.mxu0
        %v5225 = vadd.f32 %v4343, %v5224
        %v5226 = vpop.f32.mrf.mxu0
        %5227 = vmatprep.mubr.f32.mxu0 0.0
        %5228 = vmatmul.mubr.f32.gmra.mxu0 %v3632
        %v5229 = vpop.f32.mrf.mxu0
        %v5230 = vadd.f32 %v4348, %v5229
        %v5231 = vpop.f32.mrf.mxu0
        %5232 = vmatprep.mubr.f32.mxu0 0.0
        %5233 = vmatmul.mubr.f32.gmra.mxu0 %v3633
        %v5234 = vpop.f32.mrf.mxu0
        %v5235 = vadd.f32 %v4353, %v5234
        %v5236 = vpop.f32.mrf.mxu0
        %5237 = vmatprep.mubr.f32.mxu0 0.0
        %5238 = vmatmul.mubr.f32.gmra.mxu0 %v3634
        %v5239 = vpop.f32.mrf.mxu0
        %v5240 = vadd.f32 %v4358, %v5239
        %v5241 = vpop.f32.mrf.mxu0
        %5242 = vmatprep.mubr.f32.mxu0 0.0
        %5243 = vmatmul.mubr.f32.gmra.mxu0 %v3635
        %v5244 = vpop.f32.mrf.mxu0
        %v5245 = vadd.f32 %v4363, %v5244
        %v5246 = vpop.f32.mrf.mxu0
        %5247 = vmatprep.mubr.f32.mxu0 0.0
        %5248 = vmatmul.mubr.f32.gmra.mxu0 %v3636
        %v5249 = vpop.f32.mrf.mxu0
        %v5250 = vadd.f32 %v4368, %v5249
        %v5251 = vpop.f32.mrf.mxu0
        %5252 = vmatprep.mubr.f32.mxu0 0.0
        %5253 = vmatmul.mubr.f32.gmra.mxu0 %v3637
        %v5254 = vpop.f32.mrf.mxu0
        %v5255 = vadd.f32 %v4373, %v5254
        %v5256 = vpop.f32.mrf.mxu0
        %5257 = vmatprep.mubr.f32.mxu0 0.0
        %5258 = vmatmul.mubr.f32.gmra.mxu0 %v3638
        %v5259 = vpop.f32.mrf.mxu0
        %v5260 = vadd.f32 %v4378, %v5259
        %v5261 = vpop.f32.mrf.mxu0
        %5262 = vmatprep.mubr.f32.mxu0 0.0
        %5263 = vmatmul.mubr.f32.gmra.mxu0 %v3639
        %v5264 = vpop.f32.mrf.mxu0
        %v5265 = vadd.f32 %v4383, %v5264
        %v5266 = vpop.f32.mrf.mxu0
        %5267 = vmatprep.mubr.f32.mxu0 0.0
        %5268 = vmatmul.mubr.f32.gmra.mxu0 %v3640
        %v5269 = vpop.f32.mrf.mxu0
        %v5270 = vadd.f32 %v4388, %v5269
        %v5271 = vpop.f32.mrf.mxu0
        %5272 = vmatprep.mubr.f32.mxu0 0.0
        %5273 = vmatmul.mubr.f32.gmra.mxu0 %v3641
        %v5274 = vpop.f32.mrf.mxu0
        %v5275 = vadd.f32 %v4393, %v5274
        %v5276 = vpop.f32.mrf.mxu0
        %5277 = vdwg.mxu0
        %v5278 = vadd.f32 %v2727, %v5200
        %v5279 = vadd.f32 %v2728, %v5205
        %v5280 = vadd.f32 %v2729, %v5210
        %v5281 = vadd.f32 %v2730, %v5215
        %v5282 = vadd.f32 %v2731, %v5220
        %v5283 = vadd.f32 %v2732, %v5225
        %v5284 = vadd.f32 %v2733, %v5230
        %v5285 = vadd.f32 %v2734, %v5235
        %v5286 = vadd.f32 %v2735, %v5240
        %v5287 = vadd.f32 %v2736, %v5245
        %v5288 = vadd.f32 %v2737, %v5250
        %v5289 = vadd.f32 %v2738, %v5255
        %v5290 = vadd.f32 %v2739, %v5260
        %v5291 = vadd.f32 %v2740, %v5265
        %v5292 = vadd.f32 %v2741, %v5270
        %v5293 = vadd.f32 %v2742, %v5275
        %v5294 = vld [vmem:[%s35] sm:$0xff]
        %v5295 = vld [vmem:[%s35 + $0x8] sm:$0xff]
        %v5296 = vld [vmem:[#allocation29] sm:$0x1]
        %v5298 = vlaneseq
        %v5299 = vshrl.u32 %v5298, 7
        %v5300 = vsub.s32 0, %v5299
        %v5301 = vrot.slane %v5296, %v5300
        %v5304 = vsel %vm1267, %v4540, 0
        %v5307 = vsel %vm1267, %v4541, 0
        %v5310 = vsel %vm1267, %v4542, 0
        %v5313 = vsel %vm1267, %v4543, 0
        %v5316 = vsel %vm1267, %v4544, 0
        %v5319 = vsel %vm1267, %v4545, 0
        %v5322 = vsel %vm1267, %v4546, 0
        %v5325 = vsel %vm1267, %v4547, 0
        %v5328 = vsel %vm1267, %v4548, 0
        %v5331 = vsel %vm1267, %v4549, 0
        %v5334 = vsel %vm1267, %v4550, 0
        %v5337 = vsel %vm1267, %v4551, 0
        %v5340 = vsel %vm1267, %v4552, 0
        %v5343 = vsel %vm1267, %v4553, 0
        %v5346 = vsel %vm1267, %v4554, 0
        %v5349 = vsel %vm1267, %v4555, 0
        %5351 = vmatprep.subr.mxu0 0.0
        %5352 = vmatpush1.msra.mxu0 0.0
        %5353 = vmatprep.subr.mxu0 0.0
        %5354 = vmatpush1.msra.mxu0 0.0
        %5355 = vmatprep.subr.mxu0 0.0
        %5356 = vmatpush1.msra.mxu0 0.0
        %5357 = vmatprep.subr.mxu0 0.0
        %5358 = vmatpush1.msra.mxu0 0.0
        %5359 = vmatprep.subr.mxu0 0.0
        %5360 = vmatpush1.msra.mxu0 0.0
        %5361 = vmatprep.subr.mxu0 0.0
        %5362 = vmatpush1.msra.mxu0 0.0
        %5363 = vmatprep.subr.mxu0 0.0
        %5364 = vmatpush1.msra.mxu0 0.0
        %5365 = vmatprep.subr.mxu0 0.0
        %5366 = vmatpush1.msra.mxu0 0.0
        %5367 = vmatprep.subr.mxu0 0.0
        %5368 = vmatpush1.msra.mxu0 0.0
        %5369 = vmatprep.subr.mxu0 0.0
        %5370 = vmatpush1.msra.mxu0 0.0
        %5371 = vmatprep.subr.mxu0 0.0
        %5372 = vmatpush1.msra.mxu0 0.0
        %5373 = vmatprep.subr.mxu0 0.0
        %5374 = vmatpush1.msra.mxu0 0.0
        %5375 = vmatprep.subr.mxu0 0.0
        %5376 = vmatpush1.msra.mxu0 0.0
        %5377 = vmatprep.subr.mxu0 0.0
        %5378 = vmatpush1.msra.mxu0 0.0
        %5379 = vmatprep.subr.mxu0 0.0
        %5380 = vmatpush1.msra.mxu0 %v5295
        %5381 = vmatprep.subr.mxu0 0.0
        %5382 = vmatpush1.msra.mxu0 %v5294
        %5383 = vmatprep.subr.mxu0 0.0
        %5384 = vmatpush2.msra.mxu0 0.0
        %5385 = vmatprep.subr.mxu0 0.0
        %5386 = vmatpush2.msra.mxu0 0.0
        %5387 = vmatprep.subr.mxu0 0.0
        %5388 = vmatpush2.msra.mxu0 0.0
        %5389 = vmatprep.subr.mxu0 0.0
        %5390 = vmatpush2.msra.mxu0 0.0
        %5391 = vmatprep.subr.mxu0 0.0
        %5392 = vmatpush2.msra.mxu0 0.0
        %5393 = vmatprep.subr.mxu0 0.0
        %5394 = vmatpush2.msra.mxu0 0.0
        %5395 = vmatprep.subr.mxu0 0.0
        %5396 = vmatpush2.msra.mxu0 0.0
        %5397 = vmatprep.subr.mxu0 0.0
        %5398 = vmatpush2.msra.mxu0 0.0
        %5399 = vmatprep.subr.mxu0 0.0
        %5400 = vmatpush2.msra.mxu0 0.0
        %5401 = vmatprep.subr.mxu0 0.0
        %5402 = vmatpush2.msra.mxu0 0.0
        %5403 = vmatprep.subr.mxu0 0.0
        %5404 = vmatpush2.msra.mxu0 0.0
        %5405 = vmatprep.subr.mxu0 0.0
        %5406 = vmatpush2.msra.mxu0 0.0
        %5407 = vmatprep.subr.mxu0 0.0
        %5408 = vmatpush2.msra.mxu0 0.0
        %5409 = vmatprep.subr.mxu0 0.0
        %5410 = vmatpush2.msra.mxu0 0.0
        %5411 = vmatprep.subr.mxu0 0.0
        %5412 = vmatpush2.msra.mxu0 0.0
        %5413 = vmatprep.subr.mxu0 0.0
        %5414 = vmatpush2.msra.mxu0 0.0
        %5415 = vmatprep.mubr.f32.mxu0 0.0
        %5416 = vmatmul.mubr.f32.gmra.mxu0 %v5304
        %v5417 = vpop.f32.mrf.mxu0
        %v5418 = vadd.f32 %v5301, %v5417
        %v5419 = vpop.f32.mrf.mxu0
        %5420 = vmatprep.mubr.f32.mxu0 0.0
        %5421 = vmatmul.mubr.f32.gmra.mxu0 %v5307
        %v5422 = vpop.f32.mrf.mxu0
        %v5423 = vadd.f32 %v5301, %v5422
        %v5424 = vpop.f32.mrf.mxu0
        %5425 = vmatprep.mubr.f32.mxu0 0.0
        %5426 = vmatmul.mubr.f32.gmra.mxu0 %v5310
        %v5427 = vpop.f32.mrf.mxu0
        %v5428 = vadd.f32 %v5301, %v5427
        %v5429 = vpop.f32.mrf.mxu0
        %5430 = vmatprep.mubr.f32.mxu0 0.0
        %5431 = vmatmul.mubr.f32.gmra.mxu0 %v5313
        %v5432 = vpop.f32.mrf.mxu0
        %v5433 = vadd.f32 %v5301, %v5432
        %v5434 = vpop.f32.mrf.mxu0
        %5435 = vmatprep.mubr.f32.mxu0 0.0
        %5436 = vmatmul.mubr.f32.gmra.mxu0 %v5316
        %v5437 = vpop.f32.mrf.mxu0
        %v5438 = vadd.f32 %v5301, %v5437
        %v5439 = vpop.f32.mrf.mxu0
        %5440 = vmatprep.mubr.f32.mxu0 0.0
        %5441 = vmatmul.mubr.f32.gmra.mxu0 %v5319
        %v5442 = vpop.f32.mrf.mxu0
        %v5443 = vadd.f32 %v5301, %v5442
        %v5444 = vpop.f32.mrf.mxu0
        %5445 = vmatprep.mubr.f32.mxu0 0.0
        %5446 = vmatmul.mubr.f32.gmra.mxu0 %v5322
        %v5447 = vpop.f32.mrf.mxu0
        %v5448 = vadd.f32 %v5301, %v5447
        %v5449 = vpop.f32.mrf.mxu0
        %5450 = vmatprep.mubr.f32.mxu0 0.0
        %5451 = vmatmul.mubr.f32.gmra.mxu0 %v5325
        %v5452 = vpop.f32.mrf.mxu0
        %v5453 = vadd.f32 %v5301, %v5452
        %v5454 = vpop.f32.mrf.mxu0
        %5455 = vmatprep.mubr.f32.mxu0 0.0
        %5456 = vmatmul.mubr.f32.gmra.mxu0 %v5328
        %v5457 = vpop.f32.mrf.mxu0
        %v5458 = vadd.f32 %v5301, %v5457
        %v5459 = vpop.f32.mrf.mxu0
        %5460 = vmatprep.mubr.f32.mxu0 0.0
        %5461 = vmatmul.mubr.f32.gmra.mxu0 %v5331
        %v5462 = vpop.f32.mrf.mxu0
        %v5463 = vadd.f32 %v5301, %v5462
        %v5464 = vpop.f32.mrf.mxu0
        %5465 = vmatprep.mubr.f32.mxu0 0.0
        %5466 = vmatmul.mubr.f32.gmra.mxu0 %v5334
        %v5467 = vpop.f32.mrf.mxu0
        %v5468 = vadd.f32 %v5301, %v5467
        %v5469 = vpop.f32.mrf.mxu0
        %5470 = vmatprep.mubr.f32.mxu0 0.0
        %5471 = vmatmul.mubr.f32.gmra.mxu0 %v5337
        %v5472 = vpop.f32.mrf.mxu0
        %v5473 = vadd.f32 %v5301, %v5472
        %v5474 = vpop.f32.mrf.mxu0
        %5475 = vmatprep.mubr.f32.mxu0 0.0
        %5476 = vmatmul.mubr.f32.gmra.mxu0 %v5340
        %v5477 = vpop.f32.mrf.mxu0
        %v5478 = vadd.f32 %v5301, %v5477
        %v5479 = vpop.f32.mrf.mxu0
        %5480 = vmatprep.mubr.f32.mxu0 0.0
        %5481 = vmatmul.mubr.f32.gmra.mxu0 %v5343
        %v5482 = vpop.f32.mrf.mxu0
        %v5483 = vadd.f32 %v5301, %v5482
        %v5484 = vpop.f32.mrf.mxu0
        %5485 = vmatprep.mubr.f32.mxu0 0.0
        %5486 = vmatmul.mubr.f32.gmra.mxu0 %v5346
        %v5487 = vpop.f32.mrf.mxu0
        %v5488 = vadd.f32 %v5301, %v5487
        %v5489 = vpop.f32.mrf.mxu0
        %5490 = vmatprep.mubr.f32.mxu0 0.0
        %5491 = vmatmul.mubr.f32.gmra.mxu0 %v5349
        %v5492 = vpop.f32.mrf.mxu0
        %v5493 = vadd.f32 %v5301, %v5492
        %v5494 = vpop.f32.mrf.mxu0
        %5495 = vdwg.mxu0
        %v5496 = vmul.f32 %v5418, 0.5
        %v5497 = vmul.f32 %v5423, 0.5
        %v5498 = vmul.f32 %v5428, 0.5
        %v5499 = vmul.f32 %v5433, 0.5
        %v5500 = vmul.f32 %v5438, 0.5
        %v5501 = vmul.f32 %v5443, 0.5
        %v5502 = vmul.f32 %v5448, 0.5
        %v5503 = vmul.f32 %v5453, 0.5
        %v5504 = vmul.f32 %v5458, 0.5
        %v5505 = vmul.f32 %v5463, 0.5
        %v5506 = vmul.f32 %v5468, 0.5
        %v5507 = vmul.f32 %v5473, 0.5
        %v5508 = vmul.f32 %v5478, 0.5
        %v5509 = vmul.f32 %v5483, 0.5
        %v5510 = vmul.f32 %v5488, 0.5
        %v5511 = vmul.f32 %v5493, 0.5
        %v5512 = vmul.f32 %v5418, 0.70710677
        %v5513 = vmul.f32 %v5423, 0.70710677
        %v5514 = vmul.f32 %v5428, 0.70710677
        %v5515 = vmul.f32 %v5433, 0.70710677
        %v5516 = vmul.f32 %v5438, 0.70710677
        %v5517 = vmul.f32 %v5443, 0.70710677
        %v5518 = vmul.f32 %v5448, 0.70710677
        %v5519 = vmul.f32 %v5453, 0.70710677
        %v5520 = vmul.f32 %v5458, 0.70710677
        %v5521 = vmul.f32 %v5463, 0.70710677
        %v5522 = vmul.f32 %v5468, 0.70710677
        %v5523 = vmul.f32 %v5473, 0.70710677
        %v5524 = vmul.f32 %v5478, 0.70710677
        %v5525 = vmul.f32 %v5483, 0.70710677
        %v5526 = vmul.f32 %v5488, 0.70710677
        %v5527 = vmul.f32 %v5493, 0.70710677
        %v5528 = vand.u32 2147483647, %v5512
        %v5529 = vand.u32 2147483647, %v5513
        %v5530 = vand.u32 2147483647, %v5514
        %v5531 = vand.u32 2147483647, %v5515
        %v5532 = vand.u32 2147483647, %v5516
        %v5533 = vand.u32 2147483647, %v5517
        %v5534 = vand.u32 2147483647, %v5518
        %v5535 = vand.u32 2147483647, %v5519
        %v5536 = vand.u32 2147483647, %v5520
        %v5537 = vand.u32 2147483647, %v5521
        %v5538 = vand.u32 2147483647, %v5522
        %v5539 = vand.u32 2147483647, %v5523
        %v5540 = vand.u32 2147483647, %v5524
        %v5541 = vand.u32 2147483647, %v5525
        %v5542 = vand.u32 2147483647, %v5526
        %v5543 = vand.u32 2147483647, %v5527
        %v5544 = vmul.f32 %v5528, 0.3275911
        %v5545 = vmul.f32 %v5529, 0.3275911
        %v5546 = vmul.f32 %v5530, 0.3275911
        %v5547 = vmul.f32 %v5531, 0.3275911
        %v5548 = vmul.f32 %v5532, 0.3275911
        %v5549 = vmul.f32 %v5533, 0.3275911
        %v5550 = vmul.f32 %v5534, 0.3275911
        %v5551 = vmul.f32 %v5535, 0.3275911
        %v5552 = vmul.f32 %v5536, 0.3275911
        %v5553 = vmul.f32 %v5537, 0.3275911
        %v5554 = vmul.f32 %v5538, 0.3275911
        %v5555 = vmul.f32 %v5539, 0.3275911
        %v5556 = vmul.f32 %v5540, 0.3275911
        %v5557 = vmul.f32 %v5541, 0.3275911
        %v5558 = vmul.f32 %v5542, 0.3275911
        %v5559 = vmul.f32 %v5543, 0.3275911
        %v5560 = vadd.f32 %v5544, 1.0
        %v5561 = vadd.f32 %v5545, 1.0
        %v5562 = vadd.f32 %v5546, 1.0
        %v5563 = vadd.f32 %v5547, 1.0
        %v5564 = vadd.f32 %v5548, 1.0
        %v5565 = vadd.f32 %v5549, 1.0
        %v5566 = vadd.f32 %v5550, 1.0
        %v5567 = vadd.f32 %v5551, 1.0
        %v5568 = vadd.f32 %v5552, 1.0
        %v5569 = vadd.f32 %v5553, 1.0
        %v5570 = vadd.f32 %v5554, 1.0
        %v5571 = vadd.f32 %v5555, 1.0
        %v5572 = vadd.f32 %v5556, 1.0
        %v5573 = vadd.f32 %v5557, 1.0
        %v5574 = vadd.f32 %v5558, 1.0
        %v5575 = vadd.f32 %v5559, 1.0
        %v5576 = vrcp.pop %v5560
        %v5577 = vmul.f32 1.0, %v5576
        %v5578 = vrcp.pop %v5561
        %v5579 = vmul.f32 1.0, %v5578
        %v5580 = vrcp.pop %v5562
        %v5581 = vmul.f32 1.0, %v5580
        %v5582 = vrcp.pop %v5563
        %v5583 = vmul.f32 1.0, %v5582
        %v5584 = vrcp.pop %v5564
        %v5585 = vmul.f32 1.0, %v5584
        %v5586 = vrcp.pop %v5565
        %v5587 = vmul.f32 1.0, %v5586
        %v5588 = vrcp.pop %v5566
        %v5589 = vmul.f32 1.0, %v5588
        %v5590 = vrcp.pop %v5567
        %v5591 = vmul.f32 1.0, %v5590
        %v5592 = vrcp.pop %v5568
        %v5593 = vmul.f32 1.0, %v5592
        %v5594 = vrcp.pop %v5569
        %v5595 = vmul.f32 1.0, %v5594
        %v5596 = vrcp.pop %v5570
        %v5597 = vmul.f32 1.0, %v5596
        %v5598 = vrcp.pop %v5571
        %v5599 = vmul.f32 1.0, %v5598
        %v5600 = vrcp.pop %v5572
        %v5601 = vmul.f32 1.0, %v5600
        %v5602 = vrcp.pop %v5573
        %v5603 = vmul.f32 1.0, %v5602
        %v5604 = vrcp.pop %v5574
        %v5605 = vmul.f32 1.0, %v5604
        %v5606 = vrcp.pop %v5575
        %v5607 = vmul.f32 1.0, %v5606
        %v5608 = vmul.f32 %v5577, 1.0614054
        %v5609 = vmul.f32 %v5579, 1.0614054
        %v5610 = vmul.f32 %v5581, 1.0614054
        %v5611 = vmul.f32 %v5583, 1.0614054
        %v5612 = vmul.f32 %v5585, 1.0614054
        %v5613 = vmul.f32 %v5587, 1.0614054
        %v5614 = vmul.f32 %v5589, 1.0614054
        %v5615 = vmul.f32 %v5591, 1.0614054
        %v5616 = vmul.f32 %v5593, 1.0614054
        %v5617 = vmul.f32 %v5595, 1.0614054
        %v5618 = vmul.f32 %v5597, 1.0614054
        %v5619 = vmul.f32 %v5599, 1.0614054
        %v5620 = vmul.f32 %v5601, 1.0614054
        %v5621 = vmul.f32 %v5603, 1.0614054
        %v5622 = vmul.f32 %v5605, 1.0614054
        %v5623 = vmul.f32 %v5607, 1.0614054
        %v5624 = vadd.f32 %v5608, -1.4531521
        %v5625 = vadd.f32 %v5609, -1.4531521
        %v5626 = vadd.f32 %v5610, -1.4531521
        %v5627 = vadd.f32 %v5611, -1.4531521
        %v5628 = vadd.f32 %v5612, -1.4531521
        %v5629 = vadd.f32 %v5613, -1.4531521
        %v5630 = vadd.f32 %v5614, -1.4531521
        %v5631 = vadd.f32 %v5615, -1.4531521
        %v5632 = vadd.f32 %v5616, -1.4531521
        %v5633 = vadd.f32 %v5617, -1.4531521
        %v5634 = vadd.f32 %v5618, -1.4531521
        %v5635 = vadd.f32 %v5619, -1.4531521
        %v5636 = vadd.f32 %v5620, -1.4531521
        %v5637 = vadd.f32 %v5621, -1.4531521
        %v5638 = vadd.f32 %v5622, -1.4531521
        %v5639 = vadd.f32 %v5623, -1.4531521
        %v5640 = vmul.f32 %v5624, %v5577
        %v5641 = vmul.f32 %v5625, %v5579
        %v5642 = vmul.f32 %v5626, %v5581
        %v5643 = vmul.f32 %v5627, %v5583
        %v5644 = vmul.f32 %v5628, %v5585
        %v5645 = vmul.f32 %v5629, %v5587
        %v5646 = vmul.f32 %v5630, %v5589
        %v5647 = vmul.f32 %v5631, %v5591
        %v5648 = vmul.f32 %v5632, %v5593
        %v5649 = vmul.f32 %v5633, %v5595
        %v5650 = vmul.f32 %v5634, %v5597
        %v5651 = vmul.f32 %v5635, %v5599
        %v5652 = vmul.f32 %v5636, %v5601
        %v5653 = vmul.f32 %v5637, %v5603
        %v5654 = vmul.f32 %v5638, %v5605
        %v5655 = vmul.f32 %v5639, %v5607
        %v5656 = vadd.f32 %v5640, 1.4214138
        %v5657 = vadd.f32 %v5641, 1.4214138
        %v5658 = vadd.f32 %v5642, 1.4214138
        %v5659 = vadd.f32 %v5643, 1.4214138
        %v5660 = vadd.f32 %v5644, 1.4214138
        %v5661 = vadd.f32 %v5645, 1.4214138
        %v5662 = vadd.f32 %v5646, 1.4214138
        %v5663 = vadd.f32 %v5647, 1.4214138
        %v5664 = vadd.f32 %v5648, 1.4214138
        %v5665 = vadd.f32 %v5649, 1.4214138
        %v5666 = vadd.f32 %v5650, 1.4214138
        %v5667 = vadd.f32 %v5651, 1.4214138
        %v5668 = vadd.f32 %v5652, 1.4214138
        %v5669 = vadd.f32 %v5653, 1.4214138
        %v5670 = vadd.f32 %v5654, 1.4214138
        %v5671 = vadd.f32 %v5655, 1.4214138
        %v5672 = vmul.f32 %v5656, %v5577
        %v5673 = vmul.f32 %v5657, %v5579
        %v5674 = vmul.f32 %v5658, %v5581
        %v5675 = vmul.f32 %v5659, %v5583
        %v5676 = vmul.f32 %v5660, %v5585
        %v5677 = vmul.f32 %v5661, %v5587
        %v5678 = vmul.f32 %v5662, %v5589
        %v5679 = vmul.f32 %v5663, %v5591
        %v5680 = vmul.f32 %v5664, %v5593
        %v5681 = vmul.f32 %v5665, %v5595
        %v5682 = vmul.f32 %v5666, %v5597
        %v5683 = vmul.f32 %v5667, %v5599
        %v5684 = vmul.f32 %v5668, %v5601
        %v5685 = vmul.f32 %v5669, %v5603
        %v5686 = vmul.f32 %v5670, %v5605
        %v5687 = vmul.f32 %v5671, %v5607
        %v5688 = vadd.f32 %v5672, -0.28449672
        %v5689 = vadd.f32 %v5673, -0.28449672
        %v5690 = vadd.f32 %v5674, -0.28449672
        %v5691 = vadd.f32 %v5675, -0.28449672
        %v5692 = vadd.f32 %v5676, -0.28449672
        %v5693 = vadd.f32 %v5677, -0.28449672
        %v5694 = vadd.f32 %v5678, -0.28449672
        %v5695 = vadd.f32 %v5679, -0.28449672
        %v5696 = vadd.f32 %v5680, -0.28449672
        %v5697 = vadd.f32 %v5681, -0.28449672
        %v5698 = vadd.f32 %v5682, -0.28449672
        %v5699 = vadd.f32 %v5683, -0.28449672
        %v5700 = vadd.f32 %v5684, -0.28449672
        %v5701 = vadd.f32 %v5685, -0.28449672
        %v5702 = vadd.f32 %v5686, -0.28449672
        %v5703 = vadd.f32 %v5687, -0.28449672
        %v5704 = vmul.f32 %v5688, %v5577
        %v5705 = vmul.f32 %v5689, %v5579
        %v5706 = vmul.f32 %v5690, %v5581
        %v5707 = vmul.f32 %v5691, %v5583
        %v5708 = vmul.f32 %v5692, %v5585
        %v5709 = vmul.f32 %v5693, %v5587
        %v5710 = vmul.f32 %v5694, %v5589
        %v5711 = vmul.f32 %v5695, %v5591
        %v5712 = vmul.f32 %v5696, %v5593
        %v5713 = vmul.f32 %v5697, %v5595
        %v5714 = vmul.f32 %v5698, %v5597
        %v5715 = vmul.f32 %v5699, %v5599
        %v5716 = vmul.f32 %v5700, %v5601
        %v5717 = vmul.f32 %v5701, %v5603
        %v5718 = vmul.f32 %v5702, %v5605
        %v5719 = vmul.f32 %v5703, %v5607
        %v5720 = vadd.f32 %v5704, 0.2548296
        %v5721 = vadd.f32 %v5705, 0.2548296
        %v5722 = vadd.f32 %v5706, 0.2548296
        %v5723 = vadd.f32 %v5707, 0.2548296
        %v5724 = vadd.f32 %v5708, 0.2548296
        %v5725 = vadd.f32 %v5709, 0.2548296
        %v5726 = vadd.f32 %v5710, 0.2548296
        %v5727 = vadd.f32 %v5711, 0.2548296
        %v5728 = vadd.f32 %v5712, 0.2548296
        %v5729 = vadd.f32 %v5713, 0.2548296
        %v5730 = vadd.f32 %v5714, 0.2548296
        %v5731 = vadd.f32 %v5715, 0.2548296
        %v5732 = vadd.f32 %v5716, 0.2548296
        %v5733 = vadd.f32 %v5717, 0.2548296
        %v5734 = vadd.f32 %v5718, 0.2548296
        %v5735 = vadd.f32 %v5719, 0.2548296
        %v5736 = vmul.f32 %v5720, %v5577
        %v5737 = vmul.f32 %v5721, %v5579
        %v5738 = vmul.f32 %v5722, %v5581
        %v5739 = vmul.f32 %v5723, %v5583
        %v5740 = vmul.f32 %v5724, %v5585
        %v5741 = vmul.f32 %v5725, %v5587
        %v5742 = vmul.f32 %v5726, %v5589
        %v5743 = vmul.f32 %v5727, %v5591
        %v5744 = vmul.f32 %v5728, %v5593
        %v5745 = vmul.f32 %v5729, %v5595
        %v5746 = vmul.f32 %v5730, %v5597
        %v5747 = vmul.f32 %v5731, %v5599
        %v5748 = vmul.f32 %v5732, %v5601
        %v5749 = vmul.f32 %v5733, %v5603
        %v5750 = vmul.f32 %v5734, %v5605
        %v5751 = vmul.f32 %v5735, %v5607
        %v5752 = vsub.f32 0.0, %v5528
        %v5753 = vsub.f32 0.0, %v5529
        %v5754 = vsub.f32 0.0, %v5530
        %v5755 = vsub.f32 0.0, %v5531
        %v5756 = vsub.f32 0.0, %v5532
        %v5757 = vsub.f32 0.0, %v5533
        %v5758 = vsub.f32 0.0, %v5534
        %v5759 = vsub.f32 0.0, %v5535
        %v5760 = vsub.f32 0.0, %v5536
        %v5761 = vsub.f32 0.0, %v5537
        %v5762 = vsub.f32 0.0, %v5538
        %v5763 = vsub.f32 0.0, %v5539
        %v5764 = vsub.f32 0.0, %v5540
        %v5765 = vsub.f32 0.0, %v5541
        %v5766 = vsub.f32 0.0, %v5542
        %v5767 = vsub.f32 0.0, %v5543
        %v5768 = vmul.f32 %v5752, %v5528
        %v5769 = vmul.f32 %v5753, %v5529
        %v5770 = vmul.f32 %v5754, %v5530
        %v5771 = vmul.f32 %v5755, %v5531
        %v5772 = vmul.f32 %v5756, %v5532
        %v5773 = vmul.f32 %v5757, %v5533
        %v5774 = vmul.f32 %v5758, %v5534
        %v5775 = vmul.f32 %v5759, %v5535
        %v5776 = vmul.f32 %v5760, %v5536
        %v5777 = vmul.f32 %v5761, %v5537
        %v5778 = vmul.f32 %v5762, %v5538
        %v5779 = vmul.f32 %v5763, %v5539
        %v5780 = vmul.f32 %v5764, %v5540
        %v5781 = vmul.f32 %v5765, %v5541
        %v5782 = vmul.f32 %v5766, %v5542
        %v5783 = vmul.f32 %v5767, %v5543
        %v5784 = vmul.f32 %v5768, 1.442695
        %v5785 = vpow.pop %v5784
        %v5786 = vmul.f32 %v5769, 1.442695
        %v5787 = vpow.pop %v5786
        %v5788 = vmul.f32 %v5770, 1.442695
        %v5789 = vpow.pop %v5788
        %v5790 = vmul.f32 %v5771, 1.442695
        %v5791 = vpow.pop %v5790
        %v5792 = vmul.f32 %v5772, 1.442695
        %v5793 = vpow.pop %v5792
        %v5794 = vmul.f32 %v5773, 1.442695
        %v5795 = vpow.pop %v5794
        %v5796 = vmul.f32 %v5774, 1.442695
        %v5797 = vpow.pop %v5796
        %v5798 = vmul.f32 %v5775, 1.442695
        %v5799 = vpow.pop %v5798
        %v5800 = vmul.f32 %v5776, 1.442695
        %v5801 = vpow.pop %v5800
        %v5802 = vmul.f32 %v5777, 1.442695
        %v5803 = vpow.pop %v5802
        %v5804 = vmul.f32 %v5778, 1.442695
        %v5805 = vpow.pop %v5804
        %v5806 = vmul.f32 %v5779, 1.442695
        %v5807 = vpow.pop %v5806
        %v5808 = vmul.f32 %v5780, 1.442695
        %v5809 = vpow.pop %v5808
        %v5810 = vmul.f32 %v5781, 1.442695
        %v5811 = vpow.pop %v5810
        %v5812 = vmul.f32 %v5782, 1.442695
        %v5813 = vpow.pop %v5812
        %v5814 = vmul.f32 %v5783, 1.442695
        %v5815 = vpow.pop %v5814
        %v5816 = vmul.f32 %v5736, %v5785
        %v5817 = vmul.f32 %v5737, %v5787
        %v5818 = vmul.f32 %v5738, %v5789
        %v5819 = vmul.f32 %v5739, %v5791
        %v5820 = vmul.f32 %v5740, %v5793
        %v5821 = vmul.f32 %v5741, %v5795
        %v5822 = vmul.f32 %v5742, %v5797
        %v5823 = vmul.f32 %v5743, %v5799
        %v5824 = vmul.f32 %v5744, %v5801
        %v5825 = vmul.f32 %v5745, %v5803
        %v5826 = vmul.f32 %v5746, %v5805
        %v5827 = vmul.f32 %v5747, %v5807
        %v5828 = vmul.f32 %v5748, %v5809
        %v5829 = vmul.f32 %v5749, %v5811
        %v5830 = vmul.f32 %v5750, %v5813
        %v5831 = vmul.f32 %v5751, %v5815
        %v5832 = vsub.f32 1.0, %v5816
        %v5833 = vsub.f32 1.0, %v5817
        %v5834 = vsub.f32 1.0, %v5818
        %v5835 = vsub.f32 1.0, %v5819
        %v5836 = vsub.f32 1.0, %v5820
        %v5837 = vsub.f32 1.0, %v5821
        %v5838 = vsub.f32 1.0, %v5822
        %v5839 = vsub.f32 1.0, %v5823
        %v5840 = vsub.f32 1.0, %v5824
        %v5841 = vsub.f32 1.0, %v5825
        %v5842 = vsub.f32 1.0, %v5826
        %v5843 = vsub.f32 1.0, %v5827
        %v5844 = vsub.f32 1.0, %v5828
        %v5845 = vsub.f32 1.0, %v5829
        %v5846 = vsub.f32 1.0, %v5830
        %v5847 = vsub.f32 1.0, %v5831
        %vm5848 = vcmp.lt.f32.partialorder %v5512, 0.0
        %vm5849 = vcmp.lt.f32.partialorder %v5513, 0.0
        %vm5850 = vcmp.lt.f32.partialorder %v5514, 0.0
        %vm5851 = vcmp.lt.f32.partialorder %v5515, 0.0
        %vm5852 = vcmp.lt.f32.partialorder %v5516, 0.0
        %vm5853 = vcmp.lt.f32.partialorder %v5517, 0.0
        %vm5854 = vcmp.lt.f32.partialorder %v5518, 0.0
        %vm5855 = vcmp.lt.f32.partialorder %v5519, 0.0
        %vm5856 = vcmp.lt.f32.partialorder %v5520, 0.0
        %vm5857 = vcmp.lt.f32.partialorder %v5521, 0.0
        %vm5858 = vcmp.lt.f32.partialorder %v5522, 0.0
        %vm5859 = vcmp.lt.f32.partialorder %v5523, 0.0
        %vm5860 = vcmp.lt.f32.partialorder %v5524, 0.0
        %vm5861 = vcmp.lt.f32.partialorder %v5525, 0.0
        %vm5862 = vcmp.lt.f32.partialorder %v5526, 0.0
        %vm5863 = vcmp.lt.f32.partialorder %v5527, 0.0
        %v5864 = vsub.f32 0.0, %v5832
        %v5865 = vsub.f32 0.0, %v5833
        %v5866 = vsub.f32 0.0, %v5834
        %v5867 = vsub.f32 0.0, %v5835
        %v5868 = vsub.f32 0.0, %v5836
        %v5869 = vsub.f32 0.0, %v5837
        %v5870 = vsub.f32 0.0, %v5838
        %v5871 = vsub.f32 0.0, %v5839
        %v5872 = vsub.f32 0.0, %v5840
        %v5873 = vsub.f32 0.0, %v5841
        %v5874 = vsub.f32 0.0, %v5842
        %v5875 = vsub.f32 0.0, %v5843
        %v5876 = vsub.f32 0.0, %v5844
        %v5877 = vsub.f32 0.0, %v5845
        %v5878 = vsub.f32 0.0, %v5846
        %v5879 = vsub.f32 0.0, %v5847
        %v5880 = vsel %vm5848, %v5864, %v5832
        %v5881 = vsel %vm5849, %v5865, %v5833
        %v5882 = vsel %vm5850, %v5866, %v5834
        %v5883 = vsel %vm5851, %v5867, %v5835
        %v5884 = vsel %vm5852, %v5868, %v5836
        %v5885 = vsel %vm5853, %v5869, %v5837
        %v5886 = vsel %vm5854, %v5870, %v5838
        %v5887 = vsel %vm5855, %v5871, %v5839
        %v5888 = vsel %vm5856, %v5872, %v5840
        %v5889 = vsel %vm5857, %v5873, %v5841
        %v5890 = vsel %vm5858, %v5874, %v5842
        %v5891 = vsel %vm5859, %v5875, %v5843
        %v5892 = vsel %vm5860, %v5876, %v5844
        %v5893 = vsel %vm5861, %v5877, %v5845
        %v5894 = vsel %vm5862, %v5878, %v5846
        %v5895 = vsel %vm5863, %v5879, %v5847
        %v5896 = vadd.f32 %v5880, 1.0
        %v5897 = vadd.f32 %v5881, 1.0
        %v5898 = vadd.f32 %v5882, 1.0
        %v5899 = vadd.f32 %v5883, 1.0
        %v5900 = vadd.f32 %v5884, 1.0
        %v5901 = vadd.f32 %v5885, 1.0
        %v5902 = vadd.f32 %v5886, 1.0
        %v5903 = vadd.f32 %v5887, 1.0
        %v5904 = vadd.f32 %v5888, 1.0
        %v5905 = vadd.f32 %v5889, 1.0
        %v5906 = vadd.f32 %v5890, 1.0
        %v5907 = vadd.f32 %v5891, 1.0
        %v5908 = vadd.f32 %v5892, 1.0
        %v5909 = vadd.f32 %v5893, 1.0
        %v5910 = vadd.f32 %v5894, 1.0
        %v5911 = vadd.f32 %v5895, 1.0
        %v5912 = vmul.f32 %v5496, %v5896
        %v5913 = vmul.f32 %v5497, %v5897
        %v5914 = vmul.f32 %v5498, %v5898
        %v5915 = vmul.f32 %v5499, %v5899
        %v5916 = vmul.f32 %v5500, %v5900
        %v5917 = vmul.f32 %v5501, %v5901
        %v5918 = vmul.f32 %v5502, %v5902
        %v5919 = vmul.f32 %v5503, %v5903
        %v5920 = vmul.f32 %v5504, %v5904
        %v5921 = vmul.f32 %v5505, %v5905
        %v5922 = vmul.f32 %v5506, %v5906
        %v5923 = vmul.f32 %v5507, %v5907
        %v5924 = vmul.f32 %v5508, %v5908
        %v5925 = vmul.f32 %v5509, %v5909
        %v5926 = vmul.f32 %v5510, %v5910
        %v5927 = vmul.f32 %v5511, %v5911
        %v5928 = vld [vmem:[#allocation31] sm:$0xff]
        %v5929 = vld [vmem:[#allocation32] sm:$0x1]
        %v5931 = vlaneseq
        %v5932 = vshrl.u32 %v5931, 7
        %v5933 = vsub.s32 0, %v5932
        %v5934 = vrot.slane %v5929, %v5933
        %v5937 = vsel %vm2139, %v5912, 0
        %v5940 = vsel %vm2139, %v5913, 0
        %v5943 = vsel %vm2139, %v5914, 0
        %v5946 = vsel %vm2139, %v5915, 0
        %v5949 = vsel %vm2139, %v5916, 0
        %v5952 = vsel %vm2139, %v5917, 0
        %v5955 = vsel %vm2139, %v5918, 0
        %v5958 = vsel %vm2139, %v5919, 0
        %v5961 = vsel %vm2139, %v5920, 0
        %v5964 = vsel %vm2139, %v5921, 0
        %v5967 = vsel %vm2139, %v5922, 0
        %v5970 = vsel %vm2139, %v5923, 0
        %v5973 = vsel %vm2139, %v5924, 0
        %v5976 = vsel %vm2139, %v5925, 0
        %v5979 = vsel %vm2139, %v5926, 0
        %v5982 = vsel %vm2139, %v5927, 0
        %5984 = vmatprep.subr.mxu0 0.0
        %5985 = vmatpush1.msra.mxu0 0.0
        %5986 = vmatprep.subr.mxu0 0.0
        %5987 = vmatpush1.msra.mxu0 0.0
        %5988 = vmatprep.subr.mxu0 0.0
        %5989 = vmatpush1.msra.mxu0 0.0
        %5990 = vmatprep.subr.mxu0 0.0
        %5991 = vmatpush1.msra.mxu0 0.0
        %5992 = vmatprep.subr.mxu0 0.0
        %5993 = vmatpush1.msra.mxu0 0.0
        %5994 = vmatprep.subr.mxu0 0.0
        %5995 = vmatpush1.msra.mxu0 0.0
        %5996 = vmatprep.subr.mxu0 0.0
        %5997 = vmatpush1.msra.mxu0 0.0
        %5998 = vmatprep.subr.mxu0 0.0
        %5999 = vmatpush1.msra.mxu0 0.0
        %6000 = vmatprep.subr.mxu0 0.0
        %6001 = vmatpush1.msra.mxu0 0.0
        %6002 = vmatprep.subr.mxu0 0.0
        %6003 = vmatpush1.msra.mxu0 0.0
        %6004 = vmatprep.subr.mxu0 0.0
        %6005 = vmatpush1.msra.mxu0 0.0
        %6006 = vmatprep.subr.mxu0 0.0
        %6007 = vmatpush1.msra.mxu0 0.0
        %6008 = vmatprep.subr.mxu0 0.0
        %6009 = vmatpush1.msra.mxu0 0.0
        %6010 = vmatprep.subr.mxu0 0.0
        %6011 = vmatpush1.msra.mxu0 0.0
        %6012 = vmatprep.subr.mxu0 0.0
        %6013 = vmatpush1.msra.mxu0 0.0
        %6014 = vmatprep.subr.mxu0 0.0
        %6015 = vmatpush1.msra.mxu0 %v5928
        %6016 = vmatprep.subr.mxu0 0.0
        %6017 = vmatpush2.msra.mxu0 0.0
        %6018 = vmatprep.subr.mxu0 0.0
        %6019 = vmatpush2.msra.mxu0 0.0
        %6020 = vmatprep.subr.mxu0 0.0
        %6021 = vmatpush2.msra.mxu0 0.0
        %6022 = vmatprep.subr.mxu0 0.0
        %6023 = vmatpush2.msra.mxu0 0.0
        %6024 = vmatprep.subr.mxu0 0.0
        %6025 = vmatpush2.msra.mxu0 0.0
        %6026 = vmatprep.subr.mxu0 0.0
        %6027 = vmatpush2.msra.mxu0 0.0
        %6028 = vmatprep.subr.mxu0 0.0
        %6029 = vmatpush2.msra.mxu0 0.0
        %6030 = vmatprep.subr.mxu0 0.0
        %6031 = vmatpush2.msra.mxu0 0.0
        %6032 = vmatprep.subr.mxu0 0.0
        %6033 = vmatpush2.msra.mxu0 0.0
        %6034 = vmatprep.subr.mxu0 0.0
        %6035 = vmatpush2.msra.mxu0 0.0
        %6036 = vmatprep.subr.mxu0 0.0
        %6037 = vmatpush2.msra.mxu0 0.0
        %6038 = vmatprep.subr.mxu0 0.0
        %6039 = vmatpush2.msra.mxu0 0.0
        %6040 = vmatprep.subr.mxu0 0.0
        %6041 = vmatpush2.msra.mxu0 0.0
        %6042 = vmatprep.subr.mxu0 0.0
        %6043 = vmatpush2.msra.mxu0 0.0
        %6044 = vmatprep.subr.mxu0 0.0
        %6045 = vmatpush2.msra.mxu0 0.0
        %6046 = vmatprep.subr.mxu0 0.0
        %6047 = vmatpush2.msra.mxu0 0.0
        %6048 = vmatprep.mubr.f32.mxu0 0.0
        %6049 = vmatmul.mubr.f32.gmra.mxu0 %v5937
        %v6050 = vpop.f32.mrf.mxu0
        %v6051 = vadd.f32 %v5934, %v6050
        %v6052 = vpop.f32.mrf.mxu0
        %6053 = vmatprep.mubr.f32.mxu0 0.0
        %6054 = vmatmul.mubr.f32.gmra.mxu0 %v5940
        %v6055 = vpop.f32.mrf.mxu0
        %v6056 = vadd.f32 %v5934, %v6055
        %v6057 = vpop.f32.mrf.mxu0
        %6058 = vmatprep.mubr.f32.mxu0 0.0
        %6059 = vmatmul.mubr.f32.gmra.mxu0 %v5943
        %v6060 = vpop.f32.mrf.mxu0
        %v6061 = vadd.f32 %v5934, %v6060
        %v6062 = vpop.f32.mrf.mxu0
        %6063 = vmatprep.mubr.f32.mxu0 0.0
        %6064 = vmatmul.mubr.f32.gmra.mxu0 %v5946
        %v6065 = vpop.f32.mrf.mxu0
        %v6066 = vadd.f32 %v5934, %v6065
        %v6067 = vpop.f32.mrf.mxu0
        %6068 = vmatprep.mubr.f32.mxu0 0.0
        %6069 = vmatmul.mubr.f32.gmra.mxu0 %v5949
        %v6070 = vpop.f32.mrf.mxu0
        %v6071 = vadd.f32 %v5934, %v6070
        %v6072 = vpop.f32.mrf.mxu0
        %6073 = vmatprep.mubr.f32.mxu0 0.0
        %6074 = vmatmul.mubr.f32.gmra.mxu0 %v5952
        %v6075 = vpop.f32.mrf.mxu0
        %v6076 = vadd.f32 %v5934, %v6075
        %v6077 = vpop.f32.mrf.mxu0
        %6078 = vmatprep.mubr.f32.mxu0 0.0
        %6079 = vmatmul.mubr.f32.gmra.mxu0 %v5955
        %v6080 = vpop.f32.mrf.mxu0
        %v6081 = vadd.f32 %v5934, %v6080
        %v6082 = vpop.f32.mrf.mxu0
        %6083 = vmatprep.mubr.f32.mxu0 0.0
        %6084 = vmatmul.mubr.f32.gmra.mxu0 %v5958
        %v6085 = vpop.f32.mrf.mxu0
        %v6086 = vadd.f32 %v5934, %v6085
        %v6087 = vpop.f32.mrf.mxu0
        %6088 = vmatprep.mubr.f32.mxu0 0.0
        %6089 = vmatmul.mubr.f32.gmra.mxu0 %v5961
        %v6090 = vpop.f32.mrf.mxu0
        %v6091 = vadd.f32 %v5934, %v6090
        %v6092 = vpop.f32.mrf.mxu0
        %6093 = vmatprep.mubr.f32.mxu0 0.0
        %6094 = vmatmul.mubr.f32.gmra.mxu0 %v5964
        %v6095 = vpop.f32.mrf.mxu0
        %v6096 = vadd.f32 %v5934, %v6095
        %v6097 = vpop.f32.mrf.mxu0
        %6098 = vmatprep.mubr.f32.mxu0 0.0
        %6099 = vmatmul.mubr.f32.gmra.mxu0 %v5967
        %v6100 = vpop.f32.mrf.mxu0
        %v6101 = vadd.f32 %v5934, %v6100
        %v6102 = vpop.f32.mrf.mxu0
        %6103 = vmatprep.mubr.f32.mxu0 0.0
        %6104 = vmatmul.mubr.f32.gmra.mxu0 %v5970
        %v6105 = vpop.f32.mrf.mxu0
        %v6106 = vadd.f32 %v5934, %v6105
        %v6107 = vpop.f32.mrf.mxu0
        %6108 = vmatprep.mubr.f32.mxu0 0.0
        %6109 = vmatmul.mubr.f32.gmra.mxu0 %v5973
        %v6110 = vpop.f32.mrf.mxu0
        %v6111 = vadd.f32 %v5934, %v6110
        %v6112 = vpop.f32.mrf.mxu0
        %6113 = vmatprep.mubr.f32.mxu0 0.0
        %6114 = vmatmul.mubr.f32.gmra.mxu0 %v5976
        %v6115 = vpop.f32.mrf.mxu0
        %v6116 = vadd.f32 %v5934, %v6115
        %v6117 = vpop.f32.mrf.mxu0
        %6118 = vmatprep.mubr.f32.mxu0 0.0
        %6119 = vmatmul.mubr.f32.gmra.mxu0 %v5979
        %v6120 = vpop.f32.mrf.mxu0
        %v6121 = vadd.f32 %v5934, %v6120
        %v6122 = vpop.f32.mrf.mxu0
        %6123 = vmatprep.mubr.f32.mxu0 0.0
        %6124 = vmatmul.mubr.f32.gmra.mxu0 %v5982
        %v6125 = vpop.f32.mrf.mxu0
        %v6126 = vadd.f32 %v5934, %v6125
        %v6127 = vpop.f32.mrf.mxu0
        %6128 = vdwg.mxu0
        %v6129 = vadd.f32 %v5278, %v6051
        %v6130 = vadd.f32 %v5279, %v6056
        %v6131 = vadd.f32 %v5280, %v6061
        %v6132 = vadd.f32 %v5281, %v6066
        %v6133 = vadd.f32 %v5282, %v6071
        %v6134 = vadd.f32 %v5283, %v6076
        %v6135 = vadd.f32 %v5284, %v6081
        %v6136 = vadd.f32 %v5285, %v6086
        %v6137 = vadd.f32 %v5286, %v6091
        %v6138 = vadd.f32 %v5287, %v6096
        %v6139 = vadd.f32 %v5288, %v6101
        %v6140 = vadd.f32 %v5289, %v6106
        %v6141 = vadd.f32 %v5290, %v6111
        %v6142 = vadd.f32 %v5291, %v6116
        %v6143 = vadd.f32 %v5292, %v6121
        %v6144 = vadd.f32 %v5293, %v6126
        %v6145 = vld [vmem:[#allocation34] sm:$0xff]
        %v6146 = vld [vmem:[#allocation34 + $0x8] sm:$0xff]
        %v6147 = vld [vmem:[#allocation34 + $0x10] sm:$0xff]
        %v6148 = vld [vmem:[#allocation34 + $0x18] sm:$0xff]
        %v6149 = vld [vmem:[#allocation34 + $0x20] sm:$0xff]
        %v6150 = vld [vmem:[#allocation34 + $0x28] sm:$0xff]
        %v6151 = vld [vmem:[#allocation34 + $0x30] sm:$0xff]
        %v6152 = vld [vmem:[#allocation34 + $0x38] sm:$0xff]
        %v6153 = vld [vmem:[#allocation34 + $0x40] sm:$0xff]
        %v6154 = vld [vmem:[#allocation34 + $0x48] sm:$0xff]
        %v6155 = vld [vmem:[#allocation34 + $0x50] sm:$0xff]
        %v6156 = vld [vmem:[#allocation34 + $0x58] sm:$0xff]
        %v6157 = vld [vmem:[#allocation34 + $0x60] sm:$0xff]
        %v6158 = vld [vmem:[#allocation34 + $0x68] sm:$0xff]
        %v6159 = vld [vmem:[#allocation34 + $0x70] sm:$0xff]
        %v6160 = vld [vmem:[#allocation34 + $0x78] sm:$0xff]
        %v6161 = vld [vmem:[#allocation35] sm:$0xff]
        %v6162 = vld [vmem:[#allocation35 + $0x8] sm:$0xff]
        %v6163 = vld [vmem:[#allocation35 + $0x10] sm:$0xff]
        %v6164 = vld [vmem:[#allocation35 + $0x18] sm:$0xff]
        %v6165 = vld [vmem:[#allocation35 + $0x20] sm:$0xff]
        %v6166 = vld [vmem:[#allocation35 + $0x28] sm:$0xff]
        %v6167 = vld [vmem:[#allocation35 + $0x30] sm:$0xff]
        %v6168 = vld [vmem:[#allocation35 + $0x38] sm:$0xff]
        %v6169 = vld [vmem:[#allocation35 + $0x40] sm:$0xff]
        %v6170 = vld [vmem:[#allocation35 + $0x48] sm:$0xff]
        %v6171 = vld [vmem:[#allocation35 + $0x50] sm:$0xff]
        %v6172 = vld [vmem:[#allocation35 + $0x58] sm:$0xff]
        %v6173 = vld [vmem:[#allocation35 + $0x60] sm:$0xff]
        %v6174 = vld [vmem:[#allocation35 + $0x68] sm:$0xff]
        %v6175 = vld [vmem:[#allocation35 + $0x70] sm:$0xff]
        %v6176 = vld [vmem:[#allocation35 + $0x78] sm:$0xff]
        %v6177 = vld [vmem:[#allocation37] sm:$0xff]
        %v6178 = vld [vmem:[#allocation37 + $0x8] sm:$0xff]
        %v6179 = vld [vmem:[#allocation37 + $0x10] sm:$0xff]
        %v6180 = vld [vmem:[#allocation37 + $0x18] sm:$0xff]
        %v6181 = vld [vmem:[#allocation37 + $0x20] sm:$0xff]
        %v6182 = vld [vmem:[#allocation37 + $0x28] sm:$0xff]
        %v6183 = vld [vmem:[#allocation37 + $0x30] sm:$0xff]
        %v6184 = vld [vmem:[#allocation37 + $0x38] sm:$0xff]
        %v6185 = vld [vmem:[#allocation37 + $0x40] sm:$0xff]
        %v6186 = vld [vmem:[#allocation37 + $0x48] sm:$0xff]
        %v6187 = vld [vmem:[#allocation37 + $0x50] sm:$0xff]
        %v6188 = vld [vmem:[#allocation37 + $0x58] sm:$0xff]
        %v6189 = vld [vmem:[#allocation37 + $0x60] sm:$0xff]
        %v6190 = vld [vmem:[#allocation37 + $0x68] sm:$0xff]
        %v6191 = vld [vmem:[#allocation37 + $0x70] sm:$0xff]
        %v6192 = vld [vmem:[#allocation37 + $0x78] sm:$0xff]
        %v6193 = vld [vmem:[#allocation38] sm:$0xff]
        %v6194 = vld [vmem:[#allocation38 + $0x8] sm:$0xff]
        %v6195 = vld [vmem:[#allocation38 + $0x10] sm:$0xff]
        %v6196 = vld [vmem:[#allocation38 + $0x18] sm:$0xff]
        %v6197 = vld [vmem:[#allocation38 + $0x20] sm:$0xff]
        %v6198 = vld [vmem:[#allocation38 + $0x28] sm:$0xff]
        %v6199 = vld [vmem:[#allocation38 + $0x30] sm:$0xff]
        %v6200 = vld [vmem:[#allocation38 + $0x38] sm:$0xff]
        %v6201 = vld [vmem:[#allocation38 + $0x40] sm:$0xff]
        %v6202 = vld [vmem:[#allocation38 + $0x48] sm:$0xff]
        %v6203 = vld [vmem:[#allocation38 + $0x50] sm:$0xff]
        %v6204 = vld [vmem:[#allocation38 + $0x58] sm:$0xff]
        %v6205 = vld [vmem:[#allocation38 + $0x60] sm:$0xff]
        %v6206 = vld [vmem:[#allocation38 + $0x68] sm:$0xff]
        %v6207 = vld [vmem:[#allocation38 + $0x70] sm:$0xff]
        %v6208 = vld [vmem:[#allocation38 + $0x78] sm:$0xff]
        %6210 = vset.pattern.permute.xlu0 0
        %6211 = vperm.xlu0 %6210, %v6161
        %v6212 = vpop.permute.xlu0 %6211
        %6215 = vset.pattern.permute.xlu0 0
        %6216 = vperm.xlu0 %6215, %v6162
        %v6217 = vpop.permute.xlu0 %6216
        %6220 = vset.pattern.permute.xlu0 0
        %6221 = vperm.xlu0 %6220, %v6163
        %v6222 = vpop.permute.xlu0 %6221
        %6225 = vset.pattern.permute.xlu0 0
        %6226 = vperm.xlu0 %6225, %v6164
        %v6227 = vpop.permute.xlu0 %6226
        %6230 = vset.pattern.permute.xlu0 0
        %6231 = vperm.xlu0 %6230, %v6165
        %v6232 = vpop.permute.xlu0 %6231
        %6235 = vset.pattern.permute.xlu0 0
        %6236 = vperm.xlu0 %6235, %v6166
        %v6237 = vpop.permute.xlu0 %6236
        %6240 = vset.pattern.permute.xlu0 0
        %6241 = vperm.xlu0 %6240, %v6167
        %v6242 = vpop.permute.xlu0 %6241
        %6245 = vset.pattern.permute.xlu0 0
        %6246 = vperm.xlu0 %6245, %v6168
        %v6247 = vpop.permute.xlu0 %6246
        %6250 = vset.pattern.permute.xlu0 0
        %6251 = vperm.xlu0 %6250, %v6169
        %v6252 = vpop.permute.xlu0 %6251
        %6255 = vset.pattern.permute.xlu0 0
        %6256 = vperm.xlu0 %6255, %v6170
        %v6257 = vpop.permute.xlu0 %6256
        %6260 = vset.pattern.permute.xlu0 0
        %6261 = vperm.xlu0 %6260, %v6171
        %v6262 = vpop.permute.xlu0 %6261
        %6265 = vset.pattern.permute.xlu0 0
        %6266 = vperm.xlu0 %6265, %v6172
        %v6267 = vpop.permute.xlu0 %6266
        %6270 = vset.pattern.permute.xlu0 0
        %6271 = vperm.xlu0 %6270, %v6173
        %v6272 = vpop.permute.xlu0 %6271
        %6275 = vset.pattern.permute.xlu0 0
        %6276 = vperm.xlu0 %6275, %v6174
        %v6277 = vpop.permute.xlu0 %6276
        %6280 = vset.pattern.permute.xlu0 0
        %6281 = vperm.xlu0 %6280, %v6175
        %v6282 = vpop.permute.xlu0 %6281
        %6285 = vset.pattern.permute.xlu0 0
        %6286 = vperm.xlu0 %6285, %v6176
        %v6287 = vpop.permute.xlu0 %6286
        %6289 = vmatprep.subr.mxu0 0.0
        %6290 = vmatpush1.msra.mxu0 %v4555
        %6291 = vmatprep.subr.mxu0 0.0
        %6292 = vmatpush1.msra.mxu0 %v4554
        %6293 = vmatprep.subr.mxu0 0.0
        %6294 = vmatpush1.msra.mxu0 %v4553
        %6295 = vmatprep.subr.mxu0 0.0
        %6296 = vmatpush1.msra.mxu0 %v4552
        %6297 = vmatprep.subr.mxu0 0.0
        %6298 = vmatpush1.msra.mxu0 %v4551
        %6299 = vmatprep.subr.mxu0 0.0
        %6300 = vmatpush1.msra.mxu0 %v4550
        %6301 = vmatprep.subr.mxu0 0.0
        %6302 = vmatpush1.msra.mxu0 %v4549
        %6303 = vmatprep.subr.mxu0 0.0
        %6304 = vmatpush1.msra.mxu0 %v4548
        %6305 = vmatprep.subr.mxu0 0.0
        %6306 = vmatpush1.msra.mxu0 %v4547
        %6307 = vmatprep.subr.mxu0 0.0
        %6308 = vmatpush1.msra.mxu0 %v4546
        %6309 = vmatprep.subr.mxu0 0.0
        %6310 = vmatpush1.msra.mxu0 %v4545
        %6311 = vmatprep.subr.mxu0 0.0
        %6312 = vmatpush1.msra.mxu0 %v4544
        %6313 = vmatprep.subr.mxu0 0.0
        %6314 = vmatpush1.msra.mxu0 %v4543
        %6315 = vmatprep.subr.mxu0 0.0
        %6316 = vmatpush1.msra.mxu0 %v4542
        %6317 = vmatprep.subr.mxu0 0.0
        %6318 = vmatpush1.msra.mxu0 %v4541
        %6319 = vmatprep.subr.mxu0 0.0
        %6320 = vmatpush1.msra.mxu0 %v4540
        %6321 = vmatprep.subr.mxu0 0.0
        %6322 = vmatpush2.msra.mxu0 0.0
        %6323 = vmatprep.subr.mxu0 0.0
        %6324 = vmatpush2.msra.mxu0 0.0
        %6325 = vmatprep.subr.mxu0 0.0
        %6326 = vmatpush2.msra.mxu0 0.0
        %6327 = vmatprep.subr.mxu0 0.0
        %6328 = vmatpush2.msra.mxu0 0.0
        %6329 = vmatprep.subr.mxu0 0.0
        %6330 = vmatpush2.msra.mxu0 0.0
        %6331 = vmatprep.subr.mxu0 0.0
        %6332 = vmatpush2.msra.mxu0 0.0
        %6333 = vmatprep.subr.mxu0 0.0
        %6334 = vmatpush2.msra.mxu0 0.0
        %6335 = vmatprep.subr.mxu0 0.0
        %6336 = vmatpush2.msra.mxu0 0.0
        %6337 = vmatprep.subr.mxu0 0.0
        %6338 = vmatpush2.msra.mxu0 0.0
        %6339 = vmatprep.subr.mxu0 0.0
        %6340 = vmatpush2.msra.mxu0 0.0
        %6341 = vmatprep.subr.mxu0 0.0
        %6342 = vmatpush2.msra.mxu0 0.0
        %6343 = vmatprep.subr.mxu0 0.0
        %6344 = vmatpush2.msra.mxu0 0.0
        %6345 = vmatprep.subr.mxu0 0.0
        %6346 = vmatpush2.msra.mxu0 0.0
        %6347 = vmatprep.subr.mxu0 0.0
        %6348 = vmatpush2.msra.mxu0 0.0
        %6349 = vmatprep.subr.mxu0 0.0
        %6350 = vmatpush2.msra.mxu0 0.0
        %6351 = vmatprep.subr.mxu0 0.0
        %6352 = vmatpush2.msra.mxu0 0.0
        %6353 = vmatprep.mubr.f32.mxu0 0.0
        %6354 = vmatmul.mubr.f32.gmra.mxu0 %v6145
        %v6355 = vpop.f32.mrf.mxu0
        %v6356 = vadd.f32 %v6212, %v6355
        %v6357 = vpop.f32.mrf.mxu0
        %6358 = vmatprep.mubr.f32.mxu0 0.0
        %6359 = vmatmul.mubr.f32.gmra.mxu0 %v6146
        %v6360 = vpop.f32.mrf.mxu0
        %v6361 = vadd.f32 %v6217, %v6360
        %v6362 = vpop.f32.mrf.mxu0
        %6363 = vmatprep.mubr.f32.mxu0 0.0
        %6364 = vmatmul.mubr.f32.gmra.mxu0 %v6147
        %v6365 = vpop.f32.mrf.mxu0
        %v6366 = vadd.f32 %v6222, %v6365
        %v6367 = vpop.f32.mrf.mxu0
        %6368 = vmatprep.mubr.f32.mxu0 0.0
        %6369 = vmatmul.mubr.f32.gmra.mxu0 %v6148
        %v6370 = vpop.f32.mrf.mxu0
        %v6371 = vadd.f32 %v6227, %v6370
        %v6372 = vpop.f32.mrf.mxu0
        %6373 = vmatprep.mubr.f32.mxu0 0.0
        %6374 = vmatmul.mubr.f32.gmra.mxu0 %v6149
        %v6375 = vpop.f32.mrf.mxu0
        %v6376 = vadd.f32 %v6232, %v6375
        %v6377 = vpop.f32.mrf.mxu0
        %6378 = vmatprep.mubr.f32.mxu0 0.0
        %6379 = vmatmul.mubr.f32.gmra.mxu0 %v6150
        %v6380 = vpop.f32.mrf.mxu0
        %v6381 = vadd.f32 %v6237, %v6380
        %v6382 = vpop.f32.mrf.mxu0
        %6383 = vmatprep.mubr.f32.mxu0 0.0
        %6384 = vmatmul.mubr.f32.gmra.mxu0 %v6151
        %v6385 = vpop.f32.mrf.mxu0
        %v6386 = vadd.f32 %v6242, %v6385
        %v6387 = vpop.f32.mrf.mxu0
        %6388 = vmatprep.mubr.f32.mxu0 0.0
        %6389 = vmatmul.mubr.f32.gmra.mxu0 %v6152
        %v6390 = vpop.f32.mrf.mxu0
        %v6391 = vadd.f32 %v6247, %v6390
        %v6392 = vpop.f32.mrf.mxu0
        %6393 = vmatprep.mubr.f32.mxu0 0.0
        %6394 = vmatmul.mubr.f32.gmra.mxu0 %v6153
        %v6395 = vpop.f32.mrf.mxu0
        %v6396 = vadd.f32 %v6252, %v6395
        %v6397 = vpop.f32.mrf.mxu0
        %6398 = vmatprep.mubr.f32.mxu0 0.0
        %6399 = vmatmul.mubr.f32.gmra.mxu0 %v6154
        %v6400 = vpop.f32.mrf.mxu0
        %v6401 = vadd.f32 %v6257, %v6400
        %v6402 = vpop.f32.mrf.mxu0
        %6403 = vmatprep.mubr.f32.mxu0 0.0
        %6404 = vmatmul.mubr.f32.gmra.mxu0 %v6155
        %v6405 = vpop.f32.mrf.mxu0
        %v6406 = vadd.f32 %v6262, %v6405
        %v6407 = vpop.f32.mrf.mxu0
        %6408 = vmatprep.mubr.f32.mxu0 0.0
        %6409 = vmatmul.mubr.f32.gmra.mxu0 %v6156
        %v6410 = vpop.f32.mrf.mxu0
        %v6411 = vadd.f32 %v6267, %v6410
        %v6412 = vpop.f32.mrf.mxu0
        %6413 = vmatprep.mubr.f32.mxu0 0.0
        %6414 = vmatmul.mubr.f32.gmra.mxu0 %v6157
        %v6415 = vpop.f32.mrf.mxu0
        %v6416 = vadd.f32 %v6272, %v6415
        %v6417 = vpop.f32.mrf.mxu0
        %6418 = vmatprep.mubr.f32.mxu0 0.0
        %6419 = vmatmul.mubr.f32.gmra.mxu0 %v6158
        %v6420 = vpop.f32.mrf.mxu0
        %v6421 = vadd.f32 %v6277, %v6420
        %v6422 = vpop.f32.mrf.mxu0
        %6423 = vmatprep.mubr.f32.mxu0 0.0
        %6424 = vmatmul.mubr.f32.gmra.mxu0 %v6159
        %v6425 = vpop.f32.mrf.mxu0
        %v6426 = vadd.f32 %v6282, %v6425
        %v6427 = vpop.f32.mrf.mxu0
        %6428 = vmatprep.mubr.f32.mxu0 0.0
        %6429 = vmatmul.mubr.f32.gmra.mxu0 %v6160
        %v6430 = vpop.f32.mrf.mxu0
        %v6431 = vadd.f32 %v6287, %v6430
        %v6432 = vpop.f32.mrf.mxu0
        %6433 = vdwg.mxu0
        %v6434 = vmul.f32 %v6356, 0.5
        %v6435 = vmul.f32 %v6361, 0.5
        %v6436 = vmul.f32 %v6366, 0.5
        %v6437 = vmul.f32 %v6371, 0.5
        %v6438 = vmul.f32 %v6376, 0.5
        %v6439 = vmul.f32 %v6381, 0.5
        %v6440 = vmul.f32 %v6386, 0.5
        %v6441 = vmul.f32 %v6391, 0.5
        %v6442 = vmul.f32 %v6396, 0.5
        %v6443 = vmul.f32 %v6401, 0.5
        %v6444 = vmul.f32 %v6406, 0.5
        %v6445 = vmul.f32 %v6411, 0.5
        %v6446 = vmul.f32 %v6416, 0.5
        %v6447 = vmul.f32 %v6421, 0.5
        %v6448 = vmul.f32 %v6426, 0.5
        %v6449 = vmul.f32 %v6431, 0.5
        %v6450 = vmul.f32 %v6356, 0.70710677
        %v6451 = vmul.f32 %v6361, 0.70710677
        %v6452 = vmul.f32 %v6366, 0.70710677
        %v6453 = vmul.f32 %v6371, 0.70710677
        %v6454 = vmul.f32 %v6376, 0.70710677
        %v6455 = vmul.f32 %v6381, 0.70710677
        %v6456 = vmul.f32 %v6386, 0.70710677
        %v6457 = vmul.f32 %v6391, 0.70710677
        %v6458 = vmul.f32 %v6396, 0.70710677
        %v6459 = vmul.f32 %v6401, 0.70710677
        %v6460 = vmul.f32 %v6406, 0.70710677
        %v6461 = vmul.f32 %v6411, 0.70710677
        %v6462 = vmul.f32 %v6416, 0.70710677
        %v6463 = vmul.f32 %v6421, 0.70710677
        %v6464 = vmul.f32 %v6426, 0.70710677
        %v6465 = vmul.f32 %v6431, 0.70710677
        %v6466 = vand.u32 2147483647, %v6450
        %v6467 = vand.u32 2147483647, %v6451
        %v6468 = vand.u32 2147483647, %v6452
        %v6469 = vand.u32 2147483647, %v6453
        %v6470 = vand.u32 2147483647, %v6454
        %v6471 = vand.u32 2147483647, %v6455
        %v6472 = vand.u32 2147483647, %v6456
        %v6473 = vand.u32 2147483647, %v6457
        %v6474 = vand.u32 2147483647, %v6458
        %v6475 = vand.u32 2147483647, %v6459
        %v6476 = vand.u32 2147483647, %v6460
        %v6477 = vand.u32 2147483647, %v6461
        %v6478 = vand.u32 2147483647, %v6462
        %v6479 = vand.u32 2147483647, %v6463
        %v6480 = vand.u32 2147483647, %v6464
        %v6481 = vand.u32 2147483647, %v6465
        %v6482 = vmul.f32 %v6466, 0.3275911
        %v6483 = vmul.f32 %v6467, 0.3275911
        %v6484 = vmul.f32 %v6468, 0.3275911
        %v6485 = vmul.f32 %v6469, 0.3275911
        %v6486 = vmul.f32 %v6470, 0.3275911
        %v6487 = vmul.f32 %v6471, 0.3275911
        %v6488 = vmul.f32 %v6472, 0.3275911
        %v6489 = vmul.f32 %v6473, 0.3275911
        %v6490 = vmul.f32 %v6474, 0.3275911
        %v6491 = vmul.f32 %v6475, 0.3275911
        %v6492 = vmul.f32 %v6476, 0.3275911
        %v6493 = vmul.f32 %v6477, 0.3275911
        %v6494 = vmul.f32 %v6478, 0.3275911
        %v6495 = vmul.f32 %v6479, 0.3275911
        %v6496 = vmul.f32 %v6480, 0.3275911
        %v6497 = vmul.f32 %v6481, 0.3275911
        %v6498 = vadd.f32 %v6482, 1.0
        %v6499 = vadd.f32 %v6483, 1.0
        %v6500 = vadd.f32 %v6484, 1.0
        %v6501 = vadd.f32 %v6485, 1.0
        %v6502 = vadd.f32 %v6486, 1.0
        %v6503 = vadd.f32 %v6487, 1.0
        %v6504 = vadd.f32 %v6488, 1.0
        %v6505 = vadd.f32 %v6489, 1.0
        %v6506 = vadd.f32 %v6490, 1.0
        %v6507 = vadd.f32 %v6491, 1.0
        %v6508 = vadd.f32 %v6492, 1.0
        %v6509 = vadd.f32 %v6493, 1.0
        %v6510 = vadd.f32 %v6494, 1.0
        %v6511 = vadd.f32 %v6495, 1.0
        %v6512 = vadd.f32 %v6496, 1.0
        %v6513 = vadd.f32 %v6497, 1.0
        %v6514 = vrcp.pop %v6498
        %v6515 = vmul.f32 1.0, %v6514
        %v6516 = vrcp.pop %v6499
        %v6517 = vmul.f32 1.0, %v6516
        %v6518 = vrcp.pop %v6500
        %v6519 = vmul.f32 1.0, %v6518
        %v6520 = vrcp.pop %v6501
        %v6521 = vmul.f32 1.0, %v6520
        %v6522 = vrcp.pop %v6502
        %v6523 = vmul.f32 1.0, %v6522
        %v6524 = vrcp.pop %v6503
        %v6525 = vmul.f32 1.0, %v6524
        %v6526 = vrcp.pop %v6504
        %v6527 = vmul.f32 1.0, %v6526
        %v6528 = vrcp.pop %v6505
        %v6529 = vmul.f32 1.0, %v6528
        %v6530 = vrcp.pop %v6506
        %v6531 = vmul.f32 1.0, %v6530
        %v6532 = vrcp.pop %v6507
        %v6533 = vmul.f32 1.0, %v6532
        %v6534 = vrcp.pop %v6508
        %v6535 = vmul.f32 1.0, %v6534
        %v6536 = vrcp.pop %v6509
        %v6537 = vmul.f32 1.0, %v6536
        %v6538 = vrcp.pop %v6510
        %v6539 = vmul.f32 1.0, %v6538
        %v6540 = vrcp.pop %v6511
        %v6541 = vmul.f32 1.0, %v6540
        %v6542 = vrcp.pop %v6512
        %v6543 = vmul.f32 1.0, %v6542
        %v6544 = vrcp.pop %v6513
        %v6545 = vmul.f32 1.0, %v6544
        %v6546 = vmul.f32 %v6515, 1.0614054
        %v6547 = vmul.f32 %v6517, 1.0614054
        %v6548 = vmul.f32 %v6519, 1.0614054
        %v6549 = vmul.f32 %v6521, 1.0614054
        %v6550 = vmul.f32 %v6523, 1.0614054
        %v6551 = vmul.f32 %v6525, 1.0614054
        %v6552 = vmul.f32 %v6527, 1.0614054
        %v6553 = vmul.f32 %v6529, 1.0614054
        %v6554 = vmul.f32 %v6531, 1.0614054
        %v6555 = vmul.f32 %v6533, 1.0614054
        %v6556 = vmul.f32 %v6535, 1.0614054
        %v6557 = vmul.f32 %v6537, 1.0614054
        %v6558 = vmul.f32 %v6539, 1.0614054
        %v6559 = vmul.f32 %v6541, 1.0614054
        %v6560 = vmul.f32 %v6543, 1.0614054
        %v6561 = vmul.f32 %v6545, 1.0614054
        %v6562 = vadd.f32 %v6546, -1.4531521
        %v6563 = vadd.f32 %v6547, -1.4531521
        %v6564 = vadd.f32 %v6548, -1.4531521
        %v6565 = vadd.f32 %v6549, -1.4531521
        %v6566 = vadd.f32 %v6550, -1.4531521
        %v6567 = vadd.f32 %v6551, -1.4531521
        %v6568 = vadd.f32 %v6552, -1.4531521
        %v6569 = vadd.f32 %v6553, -1.4531521
        %v6570 = vadd.f32 %v6554, -1.4531521
        %v6571 = vadd.f32 %v6555, -1.4531521
        %v6572 = vadd.f32 %v6556, -1.4531521
        %v6573 = vadd.f32 %v6557, -1.4531521
        %v6574 = vadd.f32 %v6558, -1.4531521
        %v6575 = vadd.f32 %v6559, -1.4531521
        %v6576 = vadd.f32 %v6560, -1.4531521
        %v6577 = vadd.f32 %v6561, -1.4531521
        %v6578 = vmul.f32 %v6562, %v6515
        %v6579 = vmul.f32 %v6563, %v6517
        %v6580 = vmul.f32 %v6564, %v6519
        %v6581 = vmul.f32 %v6565, %v6521
        %v6582 = vmul.f32 %v6566, %v6523
        %v6583 = vmul.f32 %v6567, %v6525
        %v6584 = vmul.f32 %v6568, %v6527
        %v6585 = vmul.f32 %v6569, %v6529
        %v6586 = vmul.f32 %v6570, %v6531
        %v6587 = vmul.f32 %v6571, %v6533
        %v6588 = vmul.f32 %v6572, %v6535
        %v6589 = vmul.f32 %v6573, %v6537
        %v6590 = vmul.f32 %v6574, %v6539
        %v6591 = vmul.f32 %v6575, %v6541
        %v6592 = vmul.f32 %v6576, %v6543
        %v6593 = vmul.f32 %v6577, %v6545
        %v6594 = vadd.f32 %v6578, 1.4214138
        %v6595 = vadd.f32 %v6579, 1.4214138
        %v6596 = vadd.f32 %v6580, 1.4214138
        %v6597 = vadd.f32 %v6581, 1.4214138
        %v6598 = vadd.f32 %v6582, 1.4214138
        %v6599 = vadd.f32 %v6583, 1.4214138
        %v6600 = vadd.f32 %v6584, 1.4214138
        %v6601 = vadd.f32 %v6585, 1.4214138
        %v6602 = vadd.f32 %v6586, 1.4214138
        %v6603 = vadd.f32 %v6587, 1.4214138
        %v6604 = vadd.f32 %v6588, 1.4214138
        %v6605 = vadd.f32 %v6589, 1.4214138
        %v6606 = vadd.f32 %v6590, 1.4214138
        %v6607 = vadd.f32 %v6591, 1.4214138
        %v6608 = vadd.f32 %v6592, 1.4214138
        %v6609 = vadd.f32 %v6593, 1.4214138
        %v6610 = vmul.f32 %v6594, %v6515
        %v6611 = vmul.f32 %v6595, %v6517
        %v6612 = vmul.f32 %v6596, %v6519
        %v6613 = vmul.f32 %v6597, %v6521
        %v6614 = vmul.f32 %v6598, %v6523
        %v6615 = vmul.f32 %v6599, %v6525
        %v6616 = vmul.f32 %v6600, %v6527
        %v6617 = vmul.f32 %v6601, %v6529
        %v6618 = vmul.f32 %v6602, %v6531
        %v6619 = vmul.f32 %v6603, %v6533
        %v6620 = vmul.f32 %v6604, %v6535
        %v6621 = vmul.f32 %v6605, %v6537
        %v6622 = vmul.f32 %v6606, %v6539
        %v6623 = vmul.f32 %v6607, %v6541
        %v6624 = vmul.f32 %v6608, %v6543
        %v6625 = vmul.f32 %v6609, %v6545
        %v6626 = vadd.f32 %v6610, -0.28449672
        %v6627 = vadd.f32 %v6611, -0.28449672
        %v6628 = vadd.f32 %v6612, -0.28449672
        %v6629 = vadd.f32 %v6613, -0.28449672
        %v6630 = vadd.f32 %v6614, -0.28449672
        %v6631 = vadd.f32 %v6615, -0.28449672
        %v6632 = vadd.f32 %v6616, -0.28449672
        %v6633 = vadd.f32 %v6617, -0.28449672
        %v6634 = vadd.f32 %v6618, -0.28449672
        %v6635 = vadd.f32 %v6619, -0.28449672
        %v6636 = vadd.f32 %v6620, -0.28449672
        %v6637 = vadd.f32 %v6621, -0.28449672
        %v6638 = vadd.f32 %v6622, -0.28449672
        %v6639 = vadd.f32 %v6623, -0.28449672
        %v6640 = vadd.f32 %v6624, -0.28449672
        %v6641 = vadd.f32 %v6625, -0.28449672
        %v6642 = vmul.f32 %v6626, %v6515
        %v6643 = vmul.f32 %v6627, %v6517
        %v6644 = vmul.f32 %v6628, %v6519
        %v6645 = vmul.f32 %v6629, %v6521
        %v6646 = vmul.f32 %v6630, %v6523
        %v6647 = vmul.f32 %v6631, %v6525
        %v6648 = vmul.f32 %v6632, %v6527
        %v6649 = vmul.f32 %v6633, %v6529
        %v6650 = vmul.f32 %v6634, %v6531
        %v6651 = vmul.f32 %v6635, %v6533
        %v6652 = vmul.f32 %v6636, %v6535
        %v6653 = vmul.f32 %v6637, %v6537
        %v6654 = vmul.f32 %v6638, %v6539
        %v6655 = vmul.f32 %v6639, %v6541
        %v6656 = vmul.f32 %v6640, %v6543
        %v6657 = vmul.f32 %v6641, %v6545
        %v6658 = vadd.f32 %v6642, 0.2548296
        %v6659 = vadd.f32 %v6643, 0.2548296
        %v6660 = vadd.f32 %v6644, 0.2548296
        %v6661 = vadd.f32 %v6645, 0.2548296
        %v6662 = vadd.f32 %v6646, 0.2548296
        %v6663 = vadd.f32 %v6647, 0.2548296
        %v6664 = vadd.f32 %v6648, 0.2548296
        %v6665 = vadd.f32 %v6649, 0.2548296
        %v6666 = vadd.f32 %v6650, 0.2548296
        %v6667 = vadd.f32 %v6651, 0.2548296
        %v6668 = vadd.f32 %v6652, 0.2548296
        %v6669 = vadd.f32 %v6653, 0.2548296
        %v6670 = vadd.f32 %v6654, 0.2548296
        %v6671 = vadd.f32 %v6655, 0.2548296
        %v6672 = vadd.f32 %v6656, 0.2548296
        %v6673 = vadd.f32 %v6657, 0.2548296
        %v6674 = vmul.f32 %v6658, %v6515
        %v6675 = vmul.f32 %v6659, %v6517
        %v6676 = vmul.f32 %v6660, %v6519
        %v6677 = vmul.f32 %v6661, %v6521
        %v6678 = vmul.f32 %v6662, %v6523
        %v6679 = vmul.f32 %v6663, %v6525
        %v6680 = vmul.f32 %v6664, %v6527
        %v6681 = vmul.f32 %v6665, %v6529
        %v6682 = vmul.f32 %v6666, %v6531
        %v6683 = vmul.f32 %v6667, %v6533
        %v6684 = vmul.f32 %v6668, %v6535
        %v6685 = vmul.f32 %v6669, %v6537
        %v6686 = vmul.f32 %v6670, %v6539
        %v6687 = vmul.f32 %v6671, %v6541
        %v6688 = vmul.f32 %v6672, %v6543
        %v6689 = vmul.f32 %v6673, %v6545
        %v6690 = vsub.f32 0.0, %v6466
        %v6691 = vsub.f32 0.0, %v6467
        %v6692 = vsub.f32 0.0, %v6468
        %v6693 = vsub.f32 0.0, %v6469
        %v6694 = vsub.f32 0.0, %v6470
        %v6695 = vsub.f32 0.0, %v6471
        %v6696 = vsub.f32 0.0, %v6472
        %v6697 = vsub.f32 0.0, %v6473
        %v6698 = vsub.f32 0.0, %v6474
        %v6699 = vsub.f32 0.0, %v6475
        %v6700 = vsub.f32 0.0, %v6476
        %v6701 = vsub.f32 0.0, %v6477
        %v6702 = vsub.f32 0.0, %v6478
        %v6703 = vsub.f32 0.0, %v6479
        %v6704 = vsub.f32 0.0, %v6480
        %v6705 = vsub.f32 0.0, %v6481
        %v6706 = vmul.f32 %v6690, %v6466
        %v6707 = vmul.f32 %v6691, %v6467
        %v6708 = vmul.f32 %v6692, %v6468
        %v6709 = vmul.f32 %v6693, %v6469
        %v6710 = vmul.f32 %v6694, %v6470
        %v6711 = vmul.f32 %v6695, %v6471
        %v6712 = vmul.f32 %v6696, %v6472
        %v6713 = vmul.f32 %v6697, %v6473
        %v6714 = vmul.f32 %v6698, %v6474
        %v6715 = vmul.f32 %v6699, %v6475
        %v6716 = vmul.f32 %v6700, %v6476
        %v6717 = vmul.f32 %v6701, %v6477
        %v6718 = vmul.f32 %v6702, %v6478
        %v6719 = vmul.f32 %v6703, %v6479
        %v6720 = vmul.f32 %v6704, %v6480
        %v6721 = vmul.f32 %v6705, %v6481
        %v6722 = vmul.f32 %v6706, 1.442695
        %v6723 = vpow.pop %v6722
        %v6724 = vmul.f32 %v6707, 1.442695
        %v6725 = vpow.pop %v6724
        %v6726 = vmul.f32 %v6708, 1.442695
        %v6727 = vpow.pop %v6726
        %v6728 = vmul.f32 %v6709, 1.442695
        %v6729 = vpow.pop %v6728
        %v6730 = vmul.f32 %v6710, 1.442695
        %v6731 = vpow.pop %v6730
        %v6732 = vmul.f32 %v6711, 1.442695
        %v6733 = vpow.pop %v6732
        %v6734 = vmul.f32 %v6712, 1.442695
        %v6735 = vpow.pop %v6734
        %v6736 = vmul.f32 %v6713, 1.442695
        %v6737 = vpow.pop %v6736
        %v6738 = vmul.f32 %v6714, 1.442695
        %v6739 = vpow.pop %v6738
        %v6740 = vmul.f32 %v6715, 1.442695
        %v6741 = vpow.pop %v6740
        %v6742 = vmul.f32 %v6716, 1.442695
        %v6743 = vpow.pop %v6742
        %v6744 = vmul.f32 %v6717, 1.442695
        %v6745 = vpow.pop %v6744
        %v6746 = vmul.f32 %v6718, 1.442695
        %v6747 = vpow.pop %v6746
        %v6748 = vmul.f32 %v6719, 1.442695
        %v6749 = vpow.pop %v6748
        %v6750 = vmul.f32 %v6720, 1.442695
        %v6751 = vpow.pop %v6750
        %v6752 = vmul.f32 %v6721, 1.442695
        %v6753 = vpow.pop %v6752
        %v6754 = vmul.f32 %v6674, %v6723
        %v6755 = vmul.f32 %v6675, %v6725
        %v6756 = vmul.f32 %v6676, %v6727
        %v6757 = vmul.f32 %v6677, %v6729
        %v6758 = vmul.f32 %v6678, %v6731
        %v6759 = vmul.f32 %v6679, %v6733
        %v6760 = vmul.f32 %v6680, %v6735
        %v6761 = vmul.f32 %v6681, %v6737
        %v6762 = vmul.f32 %v6682, %v6739
        %v6763 = vmul.f32 %v6683, %v6741
        %v6764 = vmul.f32 %v6684, %v6743
        %v6765 = vmul.f32 %v6685, %v6745
        %v6766 = vmul.f32 %v6686, %v6747
        %v6767 = vmul.f32 %v6687, %v6749
        %v6768 = vmul.f32 %v6688, %v6751
        %v6769 = vmul.f32 %v6689, %v6753
        %v6770 = vsub.f32 1.0, %v6754
        %v6771 = vsub.f32 1.0, %v6755
        %v6772 = vsub.f32 1.0, %v6756
        %v6773 = vsub.f32 1.0, %v6757
        %v6774 = vsub.f32 1.0, %v6758
        %v6775 = vsub.f32 1.0, %v6759
        %v6776 = vsub.f32 1.0, %v6760
        %v6777 = vsub.f32 1.0, %v6761
        %v6778 = vsub.f32 1.0, %v6762
        %v6779 = vsub.f32 1.0, %v6763
        %v6780 = vsub.f32 1.0, %v6764
        %v6781 = vsub.f32 1.0, %v6765
        %v6782 = vsub.f32 1.0, %v6766
        %v6783 = vsub.f32 1.0, %v6767
        %v6784 = vsub.f32 1.0, %v6768
        %v6785 = vsub.f32 1.0, %v6769
        %vm6786 = vcmp.lt.f32.partialorder %v6450, 0.0
        %vm6787 = vcmp.lt.f32.partialorder %v6451, 0.0
        %vm6788 = vcmp.lt.f32.partialorder %v6452, 0.0
        %vm6789 = vcmp.lt.f32.partialorder %v6453, 0.0
        %vm6790 = vcmp.lt.f32.partialorder %v6454, 0.0
        %vm6791 = vcmp.lt.f32.partialorder %v6455, 0.0
        %vm6792 = vcmp.lt.f32.partialorder %v6456, 0.0
        %vm6793 = vcmp.lt.f32.partialorder %v6457, 0.0
        %vm6794 = vcmp.lt.f32.partialorder %v6458, 0.0
        %vm6795 = vcmp.lt.f32.partialorder %v6459, 0.0
        %vm6796 = vcmp.lt.f32.partialorder %v6460, 0.0
        %vm6797 = vcmp.lt.f32.partialorder %v6461, 0.0
        %vm6798 = vcmp.lt.f32.partialorder %v6462, 0.0
        %vm6799 = vcmp.lt.f32.partialorder %v6463, 0.0
        %vm6800 = vcmp.lt.f32.partialorder %v6464, 0.0
        %vm6801 = vcmp.lt.f32.partialorder %v6465, 0.0
        %v6802 = vsub.f32 0.0, %v6770
        %v6803 = vsub.f32 0.0, %v6771
        %v6804 = vsub.f32 0.0, %v6772
        %v6805 = vsub.f32 0.0, %v6773
        %v6806 = vsub.f32 0.0, %v6774
        %v6807 = vsub.f32 0.0, %v6775
        %v6808 = vsub.f32 0.0, %v6776
        %v6809 = vsub.f32 0.0, %v6777
        %v6810 = vsub.f32 0.0, %v6778
        %v6811 = vsub.f32 0.0, %v6779
        %v6812 = vsub.f32 0.0, %v6780
        %v6813 = vsub.f32 0.0, %v6781
        %v6814 = vsub.f32 0.0, %v6782
        %v6815 = vsub.f32 0.0, %v6783
        %v6816 = vsub.f32 0.0, %v6784
        %v6817 = vsub.f32 0.0, %v6785
        %v6818 = vsel %vm6786, %v6802, %v6770
        %v6819 = vsel %vm6787, %v6803, %v6771
        %v6820 = vsel %vm6788, %v6804, %v6772
        %v6821 = vsel %vm6789, %v6805, %v6773
        %v6822 = vsel %vm6790, %v6806, %v6774
        %v6823 = vsel %vm6791, %v6807, %v6775
        %v6824 = vsel %vm6792, %v6808, %v6776
        %v6825 = vsel %vm6793, %v6809, %v6777
        %v6826 = vsel %vm6794, %v6810, %v6778
        %v6827 = vsel %vm6795, %v6811, %v6779
        %v6828 = vsel %vm6796, %v6812, %v6780
        %v6829 = vsel %vm6797, %v6813, %v6781
        %v6830 = vsel %vm6798, %v6814, %v6782
        %v6831 = vsel %vm6799, %v6815, %v6783
        %v6832 = vsel %vm6800, %v6816, %v6784
        %v6833 = vsel %vm6801, %v6817, %v6785
        %v6834 = vadd.f32 %v6818, 1.0
        %v6835 = vadd.f32 %v6819, 1.0
        %v6836 = vadd.f32 %v6820, 1.0
        %v6837 = vadd.f32 %v6821, 1.0
        %v6838 = vadd.f32 %v6822, 1.0
        %v6839 = vadd.f32 %v6823, 1.0
        %v6840 = vadd.f32 %v6824, 1.0
        %v6841 = vadd.f32 %v6825, 1.0
        %v6842 = vadd.f32 %v6826, 1.0
        %v6843 = vadd.f32 %v6827, 1.0
        %v6844 = vadd.f32 %v6828, 1.0
        %v6845 = vadd.f32 %v6829, 1.0
        %v6846 = vadd.f32 %v6830, 1.0
        %v6847 = vadd.f32 %v6831, 1.0
        %v6848 = vadd.f32 %v6832, 1.0
        %v6849 = vadd.f32 %v6833, 1.0
        %v6850 = vmul.f32 %v6434, %v6834
        %v6851 = vmul.f32 %v6435, %v6835
        %v6852 = vmul.f32 %v6436, %v6836
        %v6853 = vmul.f32 %v6437, %v6837
        %v6854 = vmul.f32 %v6438, %v6838
        %v6855 = vmul.f32 %v6439, %v6839
        %v6856 = vmul.f32 %v6440, %v6840
        %v6857 = vmul.f32 %v6441, %v6841
        %v6858 = vmul.f32 %v6442, %v6842
        %v6859 = vmul.f32 %v6443, %v6843
        %v6860 = vmul.f32 %v6444, %v6844
        %v6861 = vmul.f32 %v6445, %v6845
        %v6862 = vmul.f32 %v6446, %v6846
        %v6863 = vmul.f32 %v6447, %v6847
        %v6864 = vmul.f32 %v6448, %v6848
        %v6865 = vmul.f32 %v6449, %v6849
        %6867 = vset.pattern.permute.xlu0 0
        %6868 = vperm.xlu0 %6867, %v6193
        %v6869 = vpop.permute.xlu0 %6868
        %6872 = vset.pattern.permute.xlu0 0
        %6873 = vperm.xlu0 %6872, %v6194
        %v6874 = vpop.permute.xlu0 %6873
        %6877 = vset.pattern.permute.xlu0 0
        %6878 = vperm.xlu0 %6877, %v6195
        %v6879 = vpop.permute.xlu0 %6878
        %6882 = vset.pattern.permute.xlu0 0
        %6883 = vperm.xlu0 %6882, %v6196
        %v6884 = vpop.permute.xlu0 %6883
        %6887 = vset.pattern.permute.xlu0 0
        %6888 = vperm.xlu0 %6887, %v6197
        %v6889 = vpop.permute.xlu0 %6888
        %6892 = vset.pattern.permute.xlu0 0
        %6893 = vperm.xlu0 %6892, %v6198
        %v6894 = vpop.permute.xlu0 %6893
        %6897 = vset.pattern.permute.xlu0 0
        %6898 = vperm.xlu0 %6897, %v6199
        %v6899 = vpop.permute.xlu0 %6898
        %6902 = vset.pattern.permute.xlu0 0
        %6903 = vperm.xlu0 %6902, %v6200
        %v6904 = vpop.permute.xlu0 %6903
        %6907 = vset.pattern.permute.xlu0 0
        %6908 = vperm.xlu0 %6907, %v6201
        %v6909 = vpop.permute.xlu0 %6908
        %6912 = vset.pattern.permute.xlu0 0
        %6913 = vperm.xlu0 %6912, %v6202
        %v6914 = vpop.permute.xlu0 %6913
        %6917 = vset.pattern.permute.xlu0 0
        %6918 = vperm.xlu0 %6917, %v6203
        %v6919 = vpop.permute.xlu0 %6918
        %6922 = vset.pattern.permute.xlu0 0
        %6923 = vperm.xlu0 %6922, %v6204
        %v6924 = vpop.permute.xlu0 %6923
        %6927 = vset.pattern.permute.xlu0 0
        %6928 = vperm.xlu0 %6927, %v6205
        %v6929 = vpop.permute.xlu0 %6928
        %6932 = vset.pattern.permute.xlu0 0
        %6933 = vperm.xlu0 %6932, %v6206
        %v6934 = vpop.permute.xlu0 %6933
        %6937 = vset.pattern.permute.xlu0 0
        %6938 = vperm.xlu0 %6937, %v6207
        %v6939 = vpop.permute.xlu0 %6938
        %6942 = vset.pattern.permute.xlu0 0
        %6943 = vperm.xlu0 %6942, %v6208
        %v6944 = vpop.permute.xlu0 %6943
        %6946 = vmatprep.subr.mxu0 0.0
        %6947 = vmatpush1.msra.mxu0 %v6865
        %6948 = vmatprep.subr.mxu0 0.0
        %6949 = vmatpush1.msra.mxu0 %v6864
        %6950 = vmatprep.subr.mxu0 0.0
        %6951 = vmatpush1.msra.mxu0 %v6863
        %6952 = vmatprep.subr.mxu0 0.0
        %6953 = vmatpush1.msra.mxu0 %v6862
        %6954 = vmatprep.subr.mxu0 0.0
        %6955 = vmatpush1.msra.mxu0 %v6861
        %6956 = vmatprep.subr.mxu0 0.0
        %6957 = vmatpush1.msra.mxu0 %v6860
        %6958 = vmatprep.subr.mxu0 0.0
        %6959 = vmatpush1.msra.mxu0 %v6859
        %6960 = vmatprep.subr.mxu0 0.0
        %6961 = vmatpush1.msra.mxu0 %v6858
        %6962 = vmatprep.subr.mxu0 0.0
        %6963 = vmatpush1.msra.mxu0 %v6857
        %6964 = vmatprep.subr.mxu0 0.0
        %6965 = vmatpush1.msra.mxu0 %v6856
        %6966 = vmatprep.subr.mxu0 0.0
        %6967 = vmatpush1.msra.mxu0 %v6855
        %6968 = vmatprep.subr.mxu0 0.0
        %6969 = vmatpush1.msra.mxu0 %v6854
        %6970 = vmatprep.subr.mxu0 0.0
        %6971 = vmatpush1.msra.mxu0 %v6853
        %6972 = vmatprep.subr.mxu0 0.0
        %6973 = vmatpush1.msra.mxu0 %v6852
        %6974 = vmatprep.subr.mxu0 0.0
        %6975 = vmatpush1.msra.mxu0 %v6851
        %6976 = vmatprep.subr.mxu0 0.0
        %6977 = vmatpush1.msra.mxu0 %v6850
        %6978 = vmatprep.subr.mxu0 0.0
        %6979 = vmatpush2.msra.mxu0 0.0
        %6980 = vmatprep.subr.mxu0 0.0
        %6981 = vmatpush2.msra.mxu0 0.0
        %6982 = vmatprep.subr.mxu0 0.0
        %6983 = vmatpush2.msra.mxu0 0.0
        %6984 = vmatprep.subr.mxu0 0.0
        %6985 = vmatpush2.msra.mxu0 0.0
        %6986 = vmatprep.subr.mxu0 0.0
        %6987 = vmatpush2.msra.mxu0 0.0
        %6988 = vmatprep.subr.mxu0 0.0
        %6989 = vmatpush2.msra.mxu0 0.0
        %6990 = vmatprep.subr.mxu0 0.0
        %6991 = vmatpush2.msra.mxu0 0.0
        %6992 = vmatprep.subr.mxu0 0.0
        %6993 = vmatpush2.msra.mxu0 0.0
        %6994 = vmatprep.subr.mxu0 0.0
        %6995 = vmatpush2.msra.mxu0 0.0
        %6996 = vmatprep.subr.mxu0 0.0
        %6997 = vmatpush2.msra.mxu0 0.0
        %6998 = vmatprep.subr.mxu0 0.0
        %6999 = vmatpush2.msra.mxu0 0.0
        %7000 = vmatprep.subr.mxu0 0.0
        %7001 = vmatpush2.msra.mxu0 0.0
        %7002 = vmatprep.subr.mxu0 0.0
        %7003 = vmatpush2.msra.mxu0 0.0
        %7004 = vmatprep.subr.mxu0 0.0
        %7005 = vmatpush2.msra.mxu0 0.0
        %7006 = vmatprep.subr.mxu0 0.0
        %7007 = vmatpush2.msra.mxu0 0.0
        %7008 = vmatprep.subr.mxu0 0.0
        %7009 = vmatpush2.msra.mxu0 0.0
        %7010 = vmatprep.mubr.f32.mxu0 0.0
        %7011 = vmatmul.mubr.f32.gmra.mxu0 %v6177
        %v7012 = vpop.f32.mrf.mxu0
        %v7013 = vadd.f32 %v6869, %v7012
        %v7014 = vpop.f32.mrf.mxu0
        %7015 = vmatprep.mubr.f32.mxu0 0.0
        %7016 = vmatmul.mubr.f32.gmra.mxu0 %v6178
        %v7017 = vpop.f32.mrf.mxu0
        %v7018 = vadd.f32 %v6874, %v7017
        %v7019 = vpop.f32.mrf.mxu0
        %7020 = vmatprep.mubr.f32.mxu0 0.0
        %7021 = vmatmul.mubr.f32.gmra.mxu0 %v6179
        %v7022 = vpop.f32.mrf.mxu0
        %v7023 = vadd.f32 %v6879, %v7022
        %v7024 = vpop.f32.mrf.mxu0
        %7025 = vmatprep.mubr.f32.mxu0 0.0
        %7026 = vmatmul.mubr.f32.gmra.mxu0 %v6180
        %v7027 = vpop.f32.mrf.mxu0
        %v7028 = vadd.f32 %v6884, %v7027
        %v7029 = vpop.f32.mrf.mxu0
        %7030 = vmatprep.mubr.f32.mxu0 0.0
        %7031 = vmatmul.mubr.f32.gmra.mxu0 %v6181
        %v7032 = vpop.f32.mrf.mxu0
        %v7033 = vadd.f32 %v6889, %v7032
        %v7034 = vpop.f32.mrf.mxu0
        %7035 = vmatprep.mubr.f32.mxu0 0.0
        %7036 = vmatmul.mubr.f32.gmra.mxu0 %v6182
        %v7037 = vpop.f32.mrf.mxu0
        %v7038 = vadd.f32 %v6894, %v7037
        %v7039 = vpop.f32.mrf.mxu0
        %7040 = vmatprep.mubr.f32.mxu0 0.0
        %7041 = vmatmul.mubr.f32.gmra.mxu0 %v6183
        %v7042 = vpop.f32.mrf.mxu0
        %v7043 = vadd.f32 %v6899, %v7042
        %v7044 = vpop.f32.mrf.mxu0
        %7045 = vmatprep.mubr.f32.mxu0 0.0
        %7046 = vmatmul.mubr.f32.gmra.mxu0 %v6184
        %v7047 = vpop.f32.mrf.mxu0
        %v7048 = vadd.f32 %v6904, %v7047
        %v7049 = vpop.f32.mrf.mxu0
        %7050 = vmatprep.mubr.f32.mxu0 0.0
        %7051 = vmatmul.mubr.f32.gmra.mxu0 %v6185
        %v7052 = vpop.f32.mrf.mxu0
        %v7053 = vadd.f32 %v6909, %v7052
        %v7054 = vpop.f32.mrf.mxu0
        %7055 = vmatprep.mubr.f32.mxu0 0.0
        %7056 = vmatmul.mubr.f32.gmra.mxu0 %v6186
        %v7057 = vpop.f32.mrf.mxu0
        %v7058 = vadd.f32 %v6914, %v7057
        %v7059 = vpop.f32.mrf.mxu0
        %7060 = vmatprep.mubr.f32.mxu0 0.0
        %7061 = vmatmul.mubr.f32.gmra.mxu0 %v6187
        %v7062 = vpop.f32.mrf.mxu0
        %v7063 = vadd.f32 %v6919, %v7062
        %v7064 = vpop.f32.mrf.mxu0
        %7065 = vmatprep.mubr.f32.mxu0 0.0
        %7066 = vmatmul.mubr.f32.gmra.mxu0 %v6188
        %v7067 = vpop.f32.mrf.mxu0
        %v7068 = vadd.f32 %v6924, %v7067
        %v7069 = vpop.f32.mrf.mxu0
        %7070 = vmatprep.mubr.f32.mxu0 0.0
        %7071 = vmatmul.mubr.f32.gmra.mxu0 %v6189
        %v7072 = vpop.f32.mrf.mxu0
        %v7073 = vadd.f32 %v6929, %v7072
        %v7074 = vpop.f32.mrf.mxu0
        %7075 = vmatprep.mubr.f32.mxu0 0.0
        %7076 = vmatmul.mubr.f32.gmra.mxu0 %v6190
        %v7077 = vpop.f32.mrf.mxu0
        %v7078 = vadd.f32 %v6934, %v7077
        %v7079 = vpop.f32.mrf.mxu0
        %7080 = vmatprep.mubr.f32.mxu0 0.0
        %7081 = vmatmul.mubr.f32.gmra.mxu0 %v6191
        %v7082 = vpop.f32.mrf.mxu0
        %v7083 = vadd.f32 %v6939, %v7082
        %v7084 = vpop.f32.mrf.mxu0
        %7085 = vmatprep.mubr.f32.mxu0 0.0
        %7086 = vmatmul.mubr.f32.gmra.mxu0 %v6192
        %v7087 = vpop.f32.mrf.mxu0
        %v7088 = vadd.f32 %v6944, %v7087
        %v7089 = vpop.f32.mrf.mxu0
        %7090 = vdwg.mxu0
        %v7091 = vadd.f32 %v4540, %v7013
        %v7092 = vadd.f32 %v4541, %v7018
        %v7093 = vadd.f32 %v4542, %v7023
        %v7094 = vadd.f32 %v4543, %v7028
        %v7095 = vadd.f32 %v4544, %v7033
        %v7096 = vadd.f32 %v4545, %v7038
        %v7097 = vadd.f32 %v4546, %v7043
        %v7098 = vadd.f32 %v4547, %v7048
        %v7099 = vadd.f32 %v4548, %v7053
        %v7100 = vadd.f32 %v4549, %v7058
        %v7101 = vadd.f32 %v4550, %v7063
        %v7102 = vadd.f32 %v4551, %v7068
        %v7103 = vadd.f32 %v4552, %v7073
        %v7104 = vadd.f32 %v4553, %v7078
        %v7105 = vadd.f32 %v4554, %v7083
        %v7106 = vadd.f32 %v4555, %v7088
        %7107 = vmatprep.subr.mxu0 0.0
        %7108 = vmatpush1.msra.mxu0 %v6144
        %7109 = vmatprep.subr.mxu0 0.0
        %7110 = vmatpush1.msra.mxu0 %v6143
        %7111 = vmatprep.subr.mxu0 0.0
        %7112 = vmatpush1.msra.mxu0 %v6142
        %7113 = vmatprep.subr.mxu0 0.0
        %7114 = vmatpush1.msra.mxu0 %v6141
        %7115 = vmatprep.subr.mxu0 0.0
        %7116 = vmatpush1.msra.mxu0 %v6140
        %7117 = vmatprep.subr.mxu0 0.0
        %7118 = vmatpush1.msra.mxu0 %v6139
        %7119 = vmatprep.subr.mxu0 0.0
        %7120 = vmatpush1.msra.mxu0 %v6138
        %7121 = vmatprep.subr.mxu0 0.0
        %7122 = vmatpush1.msra.mxu0 %v6137
        %7123 = vmatprep.subr.mxu0 0.0
        %7124 = vmatpush1.msra.mxu0 %v6136
        %7125 = vmatprep.subr.mxu0 0.0
        %7126 = vmatpush1.msra.mxu0 %v6135
        %7127 = vmatprep.subr.mxu0 0.0
        %7128 = vmatpush1.msra.mxu0 %v6134
        %7129 = vmatprep.subr.mxu0 0.0
        %7130 = vmatpush1.msra.mxu0 %v6133
        %7131 = vmatprep.subr.mxu0 0.0
        %7132 = vmatpush1.msra.mxu0 %v6132
        %7133 = vmatprep.subr.mxu0 0.0
        %7134 = vmatpush1.msra.mxu0 %v6131
        %7135 = vmatprep.subr.mxu0 0.0
        %7136 = vmatpush1.msra.mxu0 %v6130
        %7137 = vmatprep.subr.mxu0 0.0
        %7138 = vmatpush1.msra.mxu0 %v6129
        %7139 = vmatprep.subr.mxu0 0.0
        %7140 = vmatpush2.msra.mxu0 0.0
        %7141 = vmatprep.subr.mxu0 0.0
        %7142 = vmatpush2.msra.mxu0 0.0
        %7143 = vmatprep.subr.mxu0 0.0
        %7144 = vmatpush2.msra.mxu0 0.0
        %7145 = vmatprep.subr.mxu0 0.0
        %7146 = vmatpush2.msra.mxu0 0.0
        %7147 = vmatprep.subr.mxu0 0.0
        %7148 = vmatpush2.msra.mxu0 0.0
        %7149 = vmatprep.subr.mxu0 0.0
        %7150 = vmatpush2.msra.mxu0 0.0
        %7151 = vmatprep.subr.mxu0 0.0
        %7152 = vmatpush2.msra.mxu0 0.0
        %7153 = vmatprep.subr.mxu0 0.0
        %7154 = vmatpush2.msra.mxu0 0.0
        %7155 = vmatprep.subr.mxu0 0.0
        %7156 = vmatpush2.msra.mxu0 0.0
        %7157 = vmatprep.subr.mxu0 0.0
        %7158 = vmatpush2.msra.mxu0 0.0
        %7159 = vmatprep.subr.mxu0 0.0
        %7160 = vmatpush2.msra.mxu0 0.0
        %7161 = vmatprep.subr.mxu0 0.0
        %7162 = vmatpush2.msra.mxu0 0.0
        %7163 = vmatprep.subr.mxu0 0.0
        %7164 = vmatpush2.msra.mxu0 0.0
        %7165 = vmatprep.subr.mxu0 0.0
        %7166 = vmatpush2.msra.mxu0 0.0
        %7167 = vmatprep.subr.mxu0 0.0
        %7168 = vmatpush2.msra.mxu0 0.0
        %7169 = vmatprep.subr.mxu0 0.0
        %7170 = vmatpush2.msra.mxu0 0.0
        %7171 = vmatprep.mubr.f32.mxu0 0.0
        %7172 = vmatmul.mubr.f32.gmra.mxu0 %v6145
        %v7173 = vpop.f32.mrf.mxu0
        %v7174 = vadd.f32 %v6212, %v7173
        %v7175 = vpop.f32.mrf.mxu0
        %7176 = vmatprep.mubr.f32.mxu0 0.0
        %7177 = vmatmul.mubr.f32.gmra.mxu0 %v6146
        %v7178 = vpop.f32.mrf.mxu0
        %v7179 = vadd.f32 %v6217, %v7178
        %v7180 = vpop.f32.mrf.mxu0
        %7181 = vmatprep.mubr.f32.mxu0 0.0
        %7182 = vmatmul.mubr.f32.gmra.mxu0 %v6147
        %v7183 = vpop.f32.mrf.mxu0
        %v7184 = vadd.f32 %v6222, %v7183
        %v7185 = vpop.f32.mrf.mxu0
        %7186 = vmatprep.mubr.f32.mxu0 0.0
        %7187 = vmatmul.mubr.f32.gmra.mxu0 %v6148
        %v7188 = vpop.f32.mrf.mxu0
        %v7189 = vadd.f32 %v6227, %v7188
        %v7190 = vpop.f32.mrf.mxu0
        %7191 = vmatprep.mubr.f32.mxu0 0.0
        %7192 = vmatmul.mubr.f32.gmra.mxu0 %v6149
        %v7193 = vpop.f32.mrf.mxu0
        %v7194 = vadd.f32 %v6232, %v7193
        %v7195 = vpop.f32.mrf.mxu0
        %7196 = vmatprep.mubr.f32.mxu0 0.0
        %7197 = vmatmul.mubr.f32.gmra.mxu0 %v6150
        %v7198 = vpop.f32.mrf.mxu0
        %v7199 = vadd.f32 %v6237, %v7198
        %v7200 = vpop.f32.mrf.mxu0
        %7201 = vmatprep.mubr.f32.mxu0 0.0
        %7202 = vmatmul.mubr.f32.gmra.mxu0 %v6151
        %v7203 = vpop.f32.mrf.mxu0
        %v7204 = vadd.f32 %v6242, %v7203
        %v7205 = vpop.f32.mrf.mxu0
        %7206 = vmatprep.mubr.f32.mxu0 0.0
        %7207 = vmatmul.mubr.f32.gmra.mxu0 %v6152
        %v7208 = vpop.f32.mrf.mxu0
        %v7209 = vadd.f32 %v6247, %v7208
        %v7210 = vpop.f32.mrf.mxu0
        %7211 = vmatprep.mubr.f32.mxu0 0.0
        %7212 = vmatmul.mubr.f32.gmra.mxu0 %v6153
        %v7213 = vpop.f32.mrf.mxu0
        %v7214 = vadd.f32 %v6252, %v7213
        %v7215 = vpop.f32.mrf.mxu0
        %7216 = vmatprep.mubr.f32.mxu0 0.0
        %7217 = vmatmul.mubr.f32.gmra.mxu0 %v6154
        %v7218 = vpop.f32.mrf.mxu0
        %v7219 = vadd.f32 %v6257, %v7218
        %v7220 = vpop.f32.mrf.mxu0
        %7221 = vmatprep.mubr.f32.mxu0 0.0
        %7222 = vmatmul.mubr.f32.gmra.mxu0 %v6155
        %v7223 = vpop.f32.mrf.mxu0
        %v7224 = vadd.f32 %v6262, %v7223
        %v7225 = vpop.f32.mrf.mxu0
        %7226 = vmatprep.mubr.f32.mxu0 0.0
        %7227 = vmatmul.mubr.f32.gmra.mxu0 %v6156
        %v7228 = vpop.f32.mrf.mxu0
        %v7229 = vadd.f32 %v6267, %v7228
        %v7230 = vpop.f32.mrf.mxu0
        %7231 = vmatprep.mubr.f32.mxu0 0.0
        %7232 = vmatmul.mubr.f32.gmra.mxu0 %v6157
        %v7233 = vpop.f32.mrf.mxu0
        %v7234 = vadd.f32 %v6272, %v7233
        %v7235 = vpop.f32.mrf.mxu0
        %7236 = vmatprep.mubr.f32.mxu0 0.0
        %7237 = vmatmul.mubr.f32.gmra.mxu0 %v6158
        %v7238 = vpop.f32.mrf.mxu0
        %v7239 = vadd.f32 %v6277, %v7238
        %v7240 = vpop.f32.mrf.mxu0
        %7241 = vmatprep.mubr.f32.mxu0 0.0
        %7242 = vmatmul.mubr.f32.gmra.mxu0 %v6159
        %v7243 = vpop.f32.mrf.mxu0
        %v7244 = vadd.f32 %v6282, %v7243
        %v7245 = vpop.f32.mrf.mxu0
        %7246 = vmatprep.mubr.f32.mxu0 0.0
        %7247 = vmatmul.mubr.f32.gmra.mxu0 %v6160
        %v7248 = vpop.f32.mrf.mxu0
        %v7249 = vadd.f32 %v6287, %v7248
        %v7250 = vpop.f32.mrf.mxu0
        %7251 = vdwg.mxu0
        %v7252 = vmul.f32 %v7174, 0.5
        %v7253 = vmul.f32 %v7179, 0.5
        %v7254 = vmul.f32 %v7184, 0.5
        %v7255 = vmul.f32 %v7189, 0.5
        %v7256 = vmul.f32 %v7194, 0.5
        %v7257 = vmul.f32 %v7199, 0.5
        %v7258 = vmul.f32 %v7204, 0.5
        %v7259 = vmul.f32 %v7209, 0.5
        %v7260 = vmul.f32 %v7214, 0.5
        %v7261 = vmul.f32 %v7219, 0.5
        %v7262 = vmul.f32 %v7224, 0.5
        %v7263 = vmul.f32 %v7229, 0.5
        %v7264 = vmul.f32 %v7234, 0.5
        %v7265 = vmul.f32 %v7239, 0.5
        %v7266 = vmul.f32 %v7244, 0.5
        %v7267 = vmul.f32 %v7249, 0.5
        %v7268 = vmul.f32 %v7174, 0.70710677
        %v7269 = vmul.f32 %v7179, 0.70710677
        %v7270 = vmul.f32 %v7184, 0.70710677
        %v7271 = vmul.f32 %v7189, 0.70710677
        %v7272 = vmul.f32 %v7194, 0.70710677
        %v7273 = vmul.f32 %v7199, 0.70710677
        %v7274 = vmul.f32 %v7204, 0.70710677
        %v7275 = vmul.f32 %v7209, 0.70710677
        %v7276 = vmul.f32 %v7214, 0.70710677
        %v7277 = vmul.f32 %v7219, 0.70710677
        %v7278 = vmul.f32 %v7224, 0.70710677
        %v7279 = vmul.f32 %v7229, 0.70710677
        %v7280 = vmul.f32 %v7234, 0.70710677
        %v7281 = vmul.f32 %v7239, 0.70710677
        %v7282 = vmul.f32 %v7244, 0.70710677
        %v7283 = vmul.f32 %v7249, 0.70710677
        %v7284 = vand.u32 2147483647, %v7268
        %v7285 = vand.u32 2147483647, %v7269
        %v7286 = vand.u32 2147483647, %v7270
        %v7287 = vand.u32 2147483647, %v7271
        %v7288 = vand.u32 2147483647, %v7272
        %v7289 = vand.u32 2147483647, %v7273
        %v7290 = vand.u32 2147483647, %v7274
        %v7291 = vand.u32 2147483647, %v7275
        %v7292 = vand.u32 2147483647, %v7276
        %v7293 = vand.u32 2147483647, %v7277
        %v7294 = vand.u32 2147483647, %v7278
        %v7295 = vand.u32 2147483647, %v7279
        %v7296 = vand.u32 2147483647, %v7280
        %v7297 = vand.u32 2147483647, %v7281
        %v7298 = vand.u32 2147483647, %v7282
        %v7299 = vand.u32 2147483647, %v7283
        %v7300 = vmul.f32 %v7284, 0.3275911
        %v7301 = vmul.f32 %v7285, 0.3275911
        %v7302 = vmul.f32 %v7286, 0.3275911
        %v7303 = vmul.f32 %v7287, 0.3275911
        %v7304 = vmul.f32 %v7288, 0.3275911
        %v7305 = vmul.f32 %v7289, 0.3275911
        %v7306 = vmul.f32 %v7290, 0.3275911
        %v7307 = vmul.f32 %v7291, 0.3275911
        %v7308 = vmul.f32 %v7292, 0.3275911
        %v7309 = vmul.f32 %v7293, 0.3275911
        %v7310 = vmul.f32 %v7294, 0.3275911
        %v7311 = vmul.f32 %v7295, 0.3275911
        %v7312 = vmul.f32 %v7296, 0.3275911
        %v7313 = vmul.f32 %v7297, 0.3275911
        %v7314 = vmul.f32 %v7298, 0.3275911
        %v7315 = vmul.f32 %v7299, 0.3275911
        %v7316 = vadd.f32 %v7300, 1.0
        %v7317 = vadd.f32 %v7301, 1.0
        %v7318 = vadd.f32 %v7302, 1.0
        %v7319 = vadd.f32 %v7303, 1.0
        %v7320 = vadd.f32 %v7304, 1.0
        %v7321 = vadd.f32 %v7305, 1.0
        %v7322 = vadd.f32 %v7306, 1.0
        %v7323 = vadd.f32 %v7307, 1.0
        %v7324 = vadd.f32 %v7308, 1.0
        %v7325 = vadd.f32 %v7309, 1.0
        %v7326 = vadd.f32 %v7310, 1.0
        %v7327 = vadd.f32 %v7311, 1.0
        %v7328 = vadd.f32 %v7312, 1.0
        %v7329 = vadd.f32 %v7313, 1.0
        %v7330 = vadd.f32 %v7314, 1.0
        %v7331 = vadd.f32 %v7315, 1.0
        %v7332 = vrcp.pop %v7316
        %v7333 = vmul.f32 1.0, %v7332
        %v7334 = vrcp.pop %v7317
        %v7335 = vmul.f32 1.0, %v7334
        %v7336 = vrcp.pop %v7318
        %v7337 = vmul.f32 1.0, %v7336
        %v7338 = vrcp.pop %v7319
        %v7339 = vmul.f32 1.0, %v7338
        %v7340 = vrcp.pop %v7320
        %v7341 = vmul.f32 1.0, %v7340
        %v7342 = vrcp.pop %v7321
        %v7343 = vmul.f32 1.0, %v7342
        %v7344 = vrcp.pop %v7322
        %v7345 = vmul.f32 1.0, %v7344
        %v7346 = vrcp.pop %v7323
        %v7347 = vmul.f32 1.0, %v7346
        %v7348 = vrcp.pop %v7324
        %v7349 = vmul.f32 1.0, %v7348
        %v7350 = vrcp.pop %v7325
        %v7351 = vmul.f32 1.0, %v7350
        %v7352 = vrcp.pop %v7326
        %v7353 = vmul.f32 1.0, %v7352
        %v7354 = vrcp.pop %v7327
        %v7355 = vmul.f32 1.0, %v7354
        %v7356 = vrcp.pop %v7328
        %v7357 = vmul.f32 1.0, %v7356
        %v7358 = vrcp.pop %v7329
        %v7359 = vmul.f32 1.0, %v7358
        %v7360 = vrcp.pop %v7330
        %v7361 = vmul.f32 1.0, %v7360
        %v7362 = vrcp.pop %v7331
        %v7363 = vmul.f32 1.0, %v7362
        %v7364 = vmul.f32 %v7333, 1.0614054
        %v7365 = vmul.f32 %v7335, 1.0614054
        %v7366 = vmul.f32 %v7337, 1.0614054
        %v7367 = vmul.f32 %v7339, 1.0614054
        %v7368 = vmul.f32 %v7341, 1.0614054
        %v7369 = vmul.f32 %v7343, 1.0614054
        %v7370 = vmul.f32 %v7345, 1.0614054
        %v7371 = vmul.f32 %v7347, 1.0614054
        %v7372 = vmul.f32 %v7349, 1.0614054
        %v7373 = vmul.f32 %v7351, 1.0614054
        %v7374 = vmul.f32 %v7353, 1.0614054
        %v7375 = vmul.f32 %v7355, 1.0614054
        %v7376 = vmul.f32 %v7357, 1.0614054
        %v7377 = vmul.f32 %v7359, 1.0614054
        %v7378 = vmul.f32 %v7361, 1.0614054
        %v7379 = vmul.f32 %v7363, 1.0614054
        %v7380 = vadd.f32 %v7364, -1.4531521
        %v7381 = vadd.f32 %v7365, -1.4531521
        %v7382 = vadd.f32 %v7366, -1.4531521
        %v7383 = vadd.f32 %v7367, -1.4531521
        %v7384 = vadd.f32 %v7368, -1.4531521
        %v7385 = vadd.f32 %v7369, -1.4531521
        %v7386 = vadd.f32 %v7370, -1.4531521
        %v7387 = vadd.f32 %v7371, -1.4531521
        %v7388 = vadd.f32 %v7372, -1.4531521
        %v7389 = vadd.f32 %v7373, -1.4531521
        %v7390 = vadd.f32 %v7374, -1.4531521
        %v7391 = vadd.f32 %v7375, -1.4531521
        %v7392 = vadd.f32 %v7376, -1.4531521
        %v7393 = vadd.f32 %v7377, -1.4531521
        %v7394 = vadd.f32 %v7378, -1.4531521
        %v7395 = vadd.f32 %v7379, -1.4531521
        %v7396 = vmul.f32 %v7380, %v7333
        %v7397 = vmul.f32 %v7381, %v7335
        %v7398 = vmul.f32 %v7382, %v7337
        %v7399 = vmul.f32 %v7383, %v7339
        %v7400 = vmul.f32 %v7384, %v7341
        %v7401 = vmul.f32 %v7385, %v7343
        %v7402 = vmul.f32 %v7386, %v7345
        %v7403 = vmul.f32 %v7387, %v7347
        %v7404 = vmul.f32 %v7388, %v7349
        %v7405 = vmul.f32 %v7389, %v7351
        %v7406 = vmul.f32 %v7390, %v7353
        %v7407 = vmul.f32 %v7391, %v7355
        %v7408 = vmul.f32 %v7392, %v7357
        %v7409 = vmul.f32 %v7393, %v7359
        %v7410 = vmul.f32 %v7394, %v7361
        %v7411 = vmul.f32 %v7395, %v7363
        %v7412 = vadd.f32 %v7396, 1.4214138
        %v7413 = vadd.f32 %v7397, 1.4214138
        %v7414 = vadd.f32 %v7398, 1.4214138
        %v7415 = vadd.f32 %v7399, 1.4214138
        %v7416 = vadd.f32 %v7400, 1.4214138
        %v7417 = vadd.f32 %v7401, 1.4214138
        %v7418 = vadd.f32 %v7402, 1.4214138
        %v7419 = vadd.f32 %v7403, 1.4214138
        %v7420 = vadd.f32 %v7404, 1.4214138
        %v7421 = vadd.f32 %v7405, 1.4214138
        %v7422 = vadd.f32 %v7406, 1.4214138
        %v7423 = vadd.f32 %v7407, 1.4214138
        %v7424 = vadd.f32 %v7408, 1.4214138
        %v7425 = vadd.f32 %v7409, 1.4214138
        %v7426 = vadd.f32 %v7410, 1.4214138
        %v7427 = vadd.f32 %v7411, 1.4214138
        %v7428 = vmul.f32 %v7412, %v7333
        %v7429 = vmul.f32 %v7413, %v7335
        %v7430 = vmul.f32 %v7414, %v7337
        %v7431 = vmul.f32 %v7415, %v7339
        %v7432 = vmul.f32 %v7416, %v7341
        %v7433 = vmul.f32 %v7417, %v7343
        %v7434 = vmul.f32 %v7418, %v7345
        %v7435 = vmul.f32 %v7419, %v7347
        %v7436 = vmul.f32 %v7420, %v7349
        %v7437 = vmul.f32 %v7421, %v7351
        %v7438 = vmul.f32 %v7422, %v7353
        %v7439 = vmul.f32 %v7423, %v7355
        %v7440 = vmul.f32 %v7424, %v7357
        %v7441 = vmul.f32 %v7425, %v7359
        %v7442 = vmul.f32 %v7426, %v7361
        %v7443 = vmul.f32 %v7427, %v7363
        %v7444 = vadd.f32 %v7428, -0.28449672
        %v7445 = vadd.f32 %v7429, -0.28449672
        %v7446 = vadd.f32 %v7430, -0.28449672
        %v7447 = vadd.f32 %v7431, -0.28449672
        %v7448 = vadd.f32 %v7432, -0.28449672
        %v7449 = vadd.f32 %v7433, -0.28449672
        %v7450 = vadd.f32 %v7434, -0.28449672
        %v7451 = vadd.f32 %v7435, -0.28449672
        %v7452 = vadd.f32 %v7436, -0.28449672
        %v7453 = vadd.f32 %v7437, -0.28449672
        %v7454 = vadd.f32 %v7438, -0.28449672
        %v7455 = vadd.f32 %v7439, -0.28449672
        %v7456 = vadd.f32 %v7440, -0.28449672
        %v7457 = vadd.f32 %v7441, -0.28449672
        %v7458 = vadd.f32 %v7442, -0.28449672
        %v7459 = vadd.f32 %v7443, -0.28449672
        %v7460 = vmul.f32 %v7444, %v7333
        %v7461 = vmul.f32 %v7445, %v7335
        %v7462 = vmul.f32 %v7446, %v7337
        %v7463 = vmul.f32 %v7447, %v7339
        %v7464 = vmul.f32 %v7448, %v7341
        %v7465 = vmul.f32 %v7449, %v7343
        %v7466 = vmul.f32 %v7450, %v7345
        %v7467 = vmul.f32 %v7451, %v7347
        %v7468 = vmul.f32 %v7452, %v7349
        %v7469 = vmul.f32 %v7453, %v7351
        %v7470 = vmul.f32 %v7454, %v7353
        %v7471 = vmul.f32 %v7455, %v7355
        %v7472 = vmul.f32 %v7456, %v7357
        %v7473 = vmul.f32 %v7457, %v7359
        %v7474 = vmul.f32 %v7458, %v7361
        %v7475 = vmul.f32 %v7459, %v7363
        %v7476 = vadd.f32 %v7460, 0.2548296
        %v7477 = vadd.f32 %v7461, 0.2548296
        %v7478 = vadd.f32 %v7462, 0.2548296
        %v7479 = vadd.f32 %v7463, 0.2548296
        %v7480 = vadd.f32 %v7464, 0.2548296
        %v7481 = vadd.f32 %v7465, 0.2548296
        %v7482 = vadd.f32 %v7466, 0.2548296
        %v7483 = vadd.f32 %v7467, 0.2548296
        %v7484 = vadd.f32 %v7468, 0.2548296
        %v7485 = vadd.f32 %v7469, 0.2548296
        %v7486 = vadd.f32 %v7470, 0.2548296
        %v7487 = vadd.f32 %v7471, 0.2548296
        %v7488 = vadd.f32 %v7472, 0.2548296
        %v7489 = vadd.f32 %v7473, 0.2548296
        %v7490 = vadd.f32 %v7474, 0.2548296
        %v7491 = vadd.f32 %v7475, 0.2548296
        %v7492 = vmul.f32 %v7476, %v7333
        %v7493 = vmul.f32 %v7477, %v7335
        %v7494 = vmul.f32 %v7478, %v7337
        %v7495 = vmul.f32 %v7479, %v7339
        %v7496 = vmul.f32 %v7480, %v7341
        %v7497 = vmul.f32 %v7481, %v7343
        %v7498 = vmul.f32 %v7482, %v7345
        %v7499 = vmul.f32 %v7483, %v7347
        %v7500 = vmul.f32 %v7484, %v7349
        %v7501 = vmul.f32 %v7485, %v7351
        %v7502 = vmul.f32 %v7486, %v7353
        %v7503 = vmul.f32 %v7487, %v7355
        %v7504 = vmul.f32 %v7488, %v7357
        %v7505 = vmul.f32 %v7489, %v7359
        %v7506 = vmul.f32 %v7490, %v7361
        %v7507 = vmul.f32 %v7491, %v7363
        %v7508 = vsub.f32 0.0, %v7284
        %v7509 = vsub.f32 0.0, %v7285
        %v7510 = vsub.f32 0.0, %v7286
        %v7511 = vsub.f32 0.0, %v7287
        %v7512 = vsub.f32 0.0, %v7288
        %v7513 = vsub.f32 0.0, %v7289
        %v7514 = vsub.f32 0.0, %v7290
        %v7515 = vsub.f32 0.0, %v7291
        %v7516 = vsub.f32 0.0, %v7292
        %v7517 = vsub.f32 0.0, %v7293
        %v7518 = vsub.f32 0.0, %v7294
        %v7519 = vsub.f32 0.0, %v7295
        %v7520 = vsub.f32 0.0, %v7296
        %v7521 = vsub.f32 0.0, %v7297
        %v7522 = vsub.f32 0.0, %v7298
        %v7523 = vsub.f32 0.0, %v7299
        %v7524 = vmul.f32 %v7508, %v7284
        %v7525 = vmul.f32 %v7509, %v7285
        %v7526 = vmul.f32 %v7510, %v7286
        %v7527 = vmul.f32 %v7511, %v7287
        %v7528 = vmul.f32 %v7512, %v7288
        %v7529 = vmul.f32 %v7513, %v7289
        %v7530 = vmul.f32 %v7514, %v7290
        %v7531 = vmul.f32 %v7515, %v7291
        %v7532 = vmul.f32 %v7516, %v7292
        %v7533 = vmul.f32 %v7517, %v7293
        %v7534 = vmul.f32 %v7518, %v7294
        %v7535 = vmul.f32 %v7519, %v7295
        %v7536 = vmul.f32 %v7520, %v7296
        %v7537 = vmul.f32 %v7521, %v7297
        %v7538 = vmul.f32 %v7522, %v7298
        %v7539 = vmul.f32 %v7523, %v7299
        %v7540 = vmul.f32 %v7524, 1.442695
        %v7541 = vpow.pop %v7540
        %v7542 = vmul.f32 %v7525, 1.442695
        %v7543 = vpow.pop %v7542
        %v7544 = vmul.f32 %v7526, 1.442695
        %v7545 = vpow.pop %v7544
        %v7546 = vmul.f32 %v7527, 1.442695
        %v7547 = vpow.pop %v7546
        %v7548 = vmul.f32 %v7528, 1.442695
        %v7549 = vpow.pop %v7548
        %v7550 = vmul.f32 %v7529, 1.442695
        %v7551 = vpow.pop %v7550
        %v7552 = vmul.f32 %v7530, 1.442695
        %v7553 = vpow.pop %v7552
        %v7554 = vmul.f32 %v7531, 1.442695
        %v7555 = vpow.pop %v7554
        %v7556 = vmul.f32 %v7532, 1.442695
        %v7557 = vpow.pop %v7556
        %v7558 = vmul.f32 %v7533, 1.442695
        %v7559 = vpow.pop %v7558
        %v7560 = vmul.f32 %v7534, 1.442695
        %v7561 = vpow.pop %v7560
        %v7562 = vmul.f32 %v7535, 1.442695
        %v7563 = vpow.pop %v7562
        %v7564 = vmul.f32 %v7536, 1.442695
        %v7565 = vpow.pop %v7564
        %v7566 = vmul.f32 %v7537, 1.442695
        %v7567 = vpow.pop %v7566
        %v7568 = vmul.f32 %v7538, 1.442695
        %v7569 = vpow.pop %v7568
        %v7570 = vmul.f32 %v7539, 1.442695
        %v7571 = vpow.pop %v7570
        %v7572 = vmul.f32 %v7492, %v7541
        %v7573 = vmul.f32 %v7493, %v7543
        %v7574 = vmul.f32 %v7494, %v7545
        %v7575 = vmul.f32 %v7495, %v7547
        %v7576 = vmul.f32 %v7496, %v7549
        %v7577 = vmul.f32 %v7497, %v7551
        %v7578 = vmul.f32 %v7498, %v7553
        %v7579 = vmul.f32 %v7499, %v7555
        %v7580 = vmul.f32 %v7500, %v7557
        %v7581 = vmul.f32 %v7501, %v7559
        %v7582 = vmul.f32 %v7502, %v7561
        %v7583 = vmul.f32 %v7503, %v7563
        %v7584 = vmul.f32 %v7504, %v7565
        %v7585 = vmul.f32 %v7505, %v7567
        %v7586 = vmul.f32 %v7506, %v7569
        %v7587 = vmul.f32 %v7507, %v7571
        %v7588 = vsub.f32 1.0, %v7572
        %v7589 = vsub.f32 1.0, %v7573
        %v7590 = vsub.f32 1.0, %v7574
        %v7591 = vsub.f32 1.0, %v7575
        %v7592 = vsub.f32 1.0, %v7576
        %v7593 = vsub.f32 1.0, %v7577
        %v7594 = vsub.f32 1.0, %v7578
        %v7595 = vsub.f32 1.0, %v7579
        %v7596 = vsub.f32 1.0, %v7580
        %v7597 = vsub.f32 1.0, %v7581
        %v7598 = vsub.f32 1.0, %v7582
        %v7599 = vsub.f32 1.0, %v7583
        %v7600 = vsub.f32 1.0, %v7584
        %v7601 = vsub.f32 1.0, %v7585
        %v7602 = vsub.f32 1.0, %v7586
        %v7603 = vsub.f32 1.0, %v7587
        %vm7604 = vcmp.lt.f32.partialorder %v7268, 0.0
        %vm7605 = vcmp.lt.f32.partialorder %v7269, 0.0
        %vm7606 = vcmp.lt.f32.partialorder %v7270, 0.0
        %vm7607 = vcmp.lt.f32.partialorder %v7271, 0.0
        %vm7608 = vcmp.lt.f32.partialorder %v7272, 0.0
        %vm7609 = vcmp.lt.f32.partialorder %v7273, 0.0
        %vm7610 = vcmp.lt.f32.partialorder %v7274, 0.0
        %vm7611 = vcmp.lt.f32.partialorder %v7275, 0.0
        %vm7612 = vcmp.lt.f32.partialorder %v7276, 0.0
        %vm7613 = vcmp.lt.f32.partialorder %v7277, 0.0
        %vm7614 = vcmp.lt.f32.partialorder %v7278, 0.0
        %vm7615 = vcmp.lt.f32.partialorder %v7279, 0.0
        %vm7616 = vcmp.lt.f32.partialorder %v7280, 0.0
        %vm7617 = vcmp.lt.f32.partialorder %v7281, 0.0
        %vm7618 = vcmp.lt.f32.partialorder %v7282, 0.0
        %vm7619 = vcmp.lt.f32.partialorder %v7283, 0.0
        %v7620 = vsub.f32 0.0, %v7588
        %v7621 = vsub.f32 0.0, %v7589
        %v7622 = vsub.f32 0.0, %v7590
        %v7623 = vsub.f32 0.0, %v7591
        %v7624 = vsub.f32 0.0, %v7592
        %v7625 = vsub.f32 0.0, %v7593
        %v7626 = vsub.f32 0.0, %v7594
        %v7627 = vsub.f32 0.0, %v7595
        %v7628 = vsub.f32 0.0, %v7596
        %v7629 = vsub.f32 0.0, %v7597
        %v7630 = vsub.f32 0.0, %v7598
        %v7631 = vsub.f32 0.0, %v7599
        %v7632 = vsub.f32 0.0, %v7600
        %v7633 = vsub.f32 0.0, %v7601
        %v7634 = vsub.f32 0.0, %v7602
        %v7635 = vsub.f32 0.0, %v7603
        %v7636 = vsel %vm7604, %v7620, %v7588
        %v7637 = vsel %vm7605, %v7621, %v7589
        %v7638 = vsel %vm7606, %v7622, %v7590
        %v7639 = vsel %vm7607, %v7623, %v7591
        %v7640 = vsel %vm7608, %v7624, %v7592
        %v7641 = vsel %vm7609, %v7625, %v7593
        %v7642 = vsel %vm7610, %v7626, %v7594
        %v7643 = vsel %vm7611, %v7627, %v7595
        %v7644 = vsel %vm7612, %v7628, %v7596
        %v7645 = vsel %vm7613, %v7629, %v7597
        %v7646 = vsel %vm7614, %v7630, %v7598
        %v7647 = vsel %vm7615, %v7631, %v7599
        %v7648 = vsel %vm7616, %v7632, %v7600
        %v7649 = vsel %vm7617, %v7633, %v7601
        %v7650 = vsel %vm7618, %v7634, %v7602
        %v7651 = vsel %vm7619, %v7635, %v7603
        %v7652 = vadd.f32 %v7636, 1.0
        %v7653 = vadd.f32 %v7637, 1.0
        %v7654 = vadd.f32 %v7638, 1.0
        %v7655 = vadd.f32 %v7639, 1.0
        %v7656 = vadd.f32 %v7640, 1.0
        %v7657 = vadd.f32 %v7641, 1.0
        %v7658 = vadd.f32 %v7642, 1.0
        %v7659 = vadd.f32 %v7643, 1.0
        %v7660 = vadd.f32 %v7644, 1.0
        %v7661 = vadd.f32 %v7645, 1.0
        %v7662 = vadd.f32 %v7646, 1.0
        %v7663 = vadd.f32 %v7647, 1.0
        %v7664 = vadd.f32 %v7648, 1.0
        %v7665 = vadd.f32 %v7649, 1.0
        %v7666 = vadd.f32 %v7650, 1.0
        %v7667 = vadd.f32 %v7651, 1.0
        %v7668 = vmul.f32 %v7252, %v7652
        %v7669 = vmul.f32 %v7253, %v7653
        %v7670 = vmul.f32 %v7254, %v7654
        %v7671 = vmul.f32 %v7255, %v7655
        %v7672 = vmul.f32 %v7256, %v7656
        %v7673 = vmul.f32 %v7257, %v7657
        %v7674 = vmul.f32 %v7258, %v7658
        %v7675 = vmul.f32 %v7259, %v7659
        %v7676 = vmul.f32 %v7260, %v7660
        %v7677 = vmul.f32 %v7261, %v7661
        %v7678 = vmul.f32 %v7262, %v7662
        %v7679 = vmul.f32 %v7263, %v7663
        %v7680 = vmul.f32 %v7264, %v7664
        %v7681 = vmul.f32 %v7265, %v7665
        %v7682 = vmul.f32 %v7266, %v7666
        %v7683 = vmul.f32 %v7267, %v7667
        %7684 = vmatprep.subr.mxu0 0.0
        %7685 = vmatpush1.msra.mxu0 %v7683
        %7686 = vmatprep.subr.mxu0 0.0
        %7687 = vmatpush1.msra.mxu0 %v7682
        %7688 = vmatprep.subr.mxu0 0.0
        %7689 = vmatpush1.msra.mxu0 %v7681
        %7690 = vmatprep.subr.mxu0 0.0
        %7691 = vmatpush1.msra.mxu0 %v7680
        %7692 = vmatprep.subr.mxu0 0.0
        %7693 = vmatpush1.msra.mxu0 %v7679
        %7694 = vmatprep.subr.mxu0 0.0
        %7695 = vmatpush1.msra.mxu0 %v7678
        %7696 = vmatprep.subr.mxu0 0.0
        %7697 = vmatpush1.msra.mxu0 %v7677
        %7698 = vmatprep.subr.mxu0 0.0
        %7699 = vmatpush1.msra.mxu0 %v7676
        %7700 = vmatprep.subr.mxu0 0.0
        %7701 = vmatpush1.msra.mxu0 %v7675
        %7702 = vmatprep.subr.mxu0 0.0
        %7703 = vmatpush1.msra.mxu0 %v7674
        %7704 = vmatprep.subr.mxu0 0.0
        %7705 = vmatpush1.msra.mxu0 %v7673
        %7706 = vmatprep.subr.mxu0 0.0
        %7707 = vmatpush1.msra.mxu0 %v7672
        %7708 = vmatprep.subr.mxu0 0.0
        %7709 = vmatpush1.msra.mxu0 %v7671
        %7710 = vmatprep.subr.mxu0 0.0
        %7711 = vmatpush1.msra.mxu0 %v7670
        %7712 = vmatprep.subr.mxu0 0.0
        %7713 = vmatpush1.msra.mxu0 %v7669
        %7714 = vmatprep.subr.mxu0 0.0
        %7715 = vmatpush1.msra.mxu0 %v7668
        %7716 = vmatprep.subr.mxu0 0.0
        %7717 = vmatpush2.msra.mxu0 0.0
        %7718 = vmatprep.subr.mxu0 0.0
        %7719 = vmatpush2.msra.mxu0 0.0
        %7720 = vmatprep.subr.mxu0 0.0
        %7721 = vmatpush2.msra.mxu0 0.0
        %7722 = vmatprep.subr.mxu0 0.0
        %7723 = vmatpush2.msra.mxu0 0.0
        %7724 = vmatprep.subr.mxu0 0.0
        %7725 = vmatpush2.msra.mxu0 0.0
        %7726 = vmatprep.subr.mxu0 0.0
        %7727 = vmatpush2.msra.mxu0 0.0
        %7728 = vmatprep.subr.mxu0 0.0
        %7729 = vmatpush2.msra.mxu0 0.0
        %7730 = vmatprep.subr.mxu0 0.0
        %7731 = vmatpush2.msra.mxu0 0.0
        %7732 = vmatprep.subr.mxu0 0.0
        %7733 = vmatpush2.msra.mxu0 0.0
        %7734 = vmatprep.subr.mxu0 0.0
        %7735 = vmatpush2.msra.mxu0 0.0
        %7736 = vmatprep.subr.mxu0 0.0
        %7737 = vmatpush2.msra.mxu0 0.0
        %7738 = vmatprep.subr.mxu0 0.0
        %7739 = vmatpush2.msra.mxu0 0.0
        %7740 = vmatprep.subr.mxu0 0.0
        %7741 = vmatpush2.msra.mxu0 0.0
        %7742 = vmatprep.subr.mxu0 0.0
        %7743 = vmatpush2.msra.mxu0 0.0
        %7744 = vmatprep.subr.mxu0 0.0
        %7745 = vmatpush2.msra.mxu0 0.0
        %7746 = vmatprep.subr.mxu0 0.0
        %7747 = vmatpush2.msra.mxu0 0.0
        %7748 = vmatprep.mubr.f32.mxu0 0.0
        %7749 = vmatmul.mubr.f32.gmra.mxu0 %v6177
        %v7750 = vpop.f32.mrf.mxu0
        %v7751 = vadd.f32 %v6869, %v7750
        %v7752 = vpop.f32.mrf.mxu0
        %7753 = vmatprep.mubr.f32.mxu0 0.0
        %7754 = vmatmul.mubr.f32.gmra.mxu0 %v6178
        %v7755 = vpop.f32.mrf.mxu0
        %v7756 = vadd.f32 %v6874, %v7755
        %v7757 = vpop.f32.mrf.mxu0
        %7758 = vmatprep.mubr.f32.mxu0 0.0
        %7759 = vmatmul.mubr.f32.gmra.mxu0 %v6179
        %v7760 = vpop.f32.mrf.mxu0
        %v7761 = vadd.f32 %v6879, %v7760
        %v7762 = vpop.f32.mrf.mxu0
        %7763 = vmatprep.mubr.f32.mxu0 0.0
        %7764 = vmatmul.mubr.f32.gmra.mxu0 %v6180
        %v7765 = vpop.f32.mrf.mxu0
        %v7766 = vadd.f32 %v6884, %v7765
        %v7767 = vpop.f32.mrf.mxu0
        %7768 = vmatprep.mubr.f32.mxu0 0.0
        %7769 = vmatmul.mubr.f32.gmra.mxu0 %v6181
        %v7770 = vpop.f32.mrf.mxu0
        %v7771 = vadd.f32 %v6889, %v7770
        %v7772 = vpop.f32.mrf.mxu0
        %7773 = vmatprep.mubr.f32.mxu0 0.0
        %7774 = vmatmul.mubr.f32.gmra.mxu0 %v6182
        %v7775 = vpop.f32.mrf.mxu0
        %v7776 = vadd.f32 %v6894, %v7775
        %v7777 = vpop.f32.mrf.mxu0
        %7778 = vmatprep.mubr.f32.mxu0 0.0
        %7779 = vmatmul.mubr.f32.gmra.mxu0 %v6183
        %v7780 = vpop.f32.mrf.mxu0
        %v7781 = vadd.f32 %v6899, %v7780
        %v7782 = vpop.f32.mrf.mxu0
        %7783 = vmatprep.mubr.f32.mxu0 0.0
        %7784 = vmatmul.mubr.f32.gmra.mxu0 %v6184
        %v7785 = vpop.f32.mrf.mxu0
        %v7786 = vadd.f32 %v6904, %v7785
        %v7787 = vpop.f32.mrf.mxu0
        %7788 = vmatprep.mubr.f32.mxu0 0.0
        %7789 = vmatmul.mubr.f32.gmra.mxu0 %v6185
        %v7790 = vpop.f32.mrf.mxu0
        %v7791 = vadd.f32 %v6909, %v7790
        %v7792 = vpop.f32.mrf.mxu0
        %7793 = vmatprep.mubr.f32.mxu0 0.0
        %7794 = vmatmul.mubr.f32.gmra.mxu0 %v6186
        %v7795 = vpop.f32.mrf.mxu0
        %v7796 = vadd.f32 %v6914, %v7795
        %v7797 = vpop.f32.mrf.mxu0
        %7798 = vmatprep.mubr.f32.mxu0 0.0
        %7799 = vmatmul.mubr.f32.gmra.mxu0 %v6187
        %v7800 = vpop.f32.mrf.mxu0
        %v7801 = vadd.f32 %v6919, %v7800
        %v7802 = vpop.f32.mrf.mxu0
        %7803 = vmatprep.mubr.f32.mxu0 0.0
        %7804 = vmatmul.mubr.f32.gmra.mxu0 %v6188
        %v7805 = vpop.f32.mrf.mxu0
        %v7806 = vadd.f32 %v6924, %v7805
        %v7807 = vpop.f32.mrf.mxu0
        %7808 = vmatprep.mubr.f32.mxu0 0.0
        %7809 = vmatmul.mubr.f32.gmra.mxu0 %v6189
        %v7810 = vpop.f32.mrf.mxu0
        %v7811 = vadd.f32 %v6929, %v7810
        %v7812 = vpop.f32.mrf.mxu0
        %7813 = vmatprep.mubr.f32.mxu0 0.0
        %7814 = vmatmul.mubr.f32.gmra.mxu0 %v6190
        %v7815 = vpop.f32.mrf.mxu0
        %v7816 = vadd.f32 %v6934, %v7815
        %v7817 = vpop.f32.mrf.mxu0
        %7818 = vmatprep.mubr.f32.mxu0 0.0
        %7819 = vmatmul.mubr.f32.gmra.mxu0 %v6191
        %v7820 = vpop.f32.mrf.mxu0
        %v7821 = vadd.f32 %v6939, %v7820
        %v7822 = vpop.f32.mrf.mxu0
        %7823 = vmatprep.mubr.f32.mxu0 0.0
        %7824 = vmatmul.mubr.f32.gmra.mxu0 %v6192
        %v7825 = vpop.f32.mrf.mxu0
        %v7826 = vadd.f32 %v6944, %v7825
        %v7827 = vpop.f32.mrf.mxu0
        %7828 = vdwg.mxu0
        %v7829 = vadd.f32 %v5278, %v7751
        %v7830 = vadd.f32 %v5279, %v7756
        %v7831 = vadd.f32 %v5280, %v7761
        %v7832 = vadd.f32 %v5281, %v7766
        %v7833 = vadd.f32 %v5282, %v7771
        %v7834 = vadd.f32 %v5283, %v7776
        %v7835 = vadd.f32 %v5284, %v7781
        %v7836 = vadd.f32 %v5285, %v7786
        %v7837 = vadd.f32 %v5286, %v7791
        %v7838 = vadd.f32 %v5287, %v7796
        %v7839 = vadd.f32 %v5288, %v7801
        %v7840 = vadd.f32 %v5289, %v7806
        %v7841 = vadd.f32 %v5290, %v7811
        %v7842 = vadd.f32 %v5291, %v7816
        %v7843 = vadd.f32 %v5292, %v7821
        %v7844 = vadd.f32 %v5293, %v7826
        %v7845 = vld [vmem:[%s51] sm:$0xf]
        %7846 = vmatprep.subr.mxu0 0.0
        %7847 = vmatpush1.msra.mxu0 %v7106
        %7848 = vmatprep.subr.mxu0 0.0
        %7849 = vmatpush1.msra.mxu0 %v7105
        %7850 = vmatprep.subr.mxu0 0.0
        %7851 = vmatpush1.msra.mxu0 %v7104
        %7852 = vmatprep.subr.mxu0 0.0
        %7853 = vmatpush1.msra.mxu0 %v7103
        %7854 = vmatprep.subr.mxu0 0.0
        %7855 = vmatpush1.msra.mxu0 %v7102
        %7856 = vmatprep.subr.mxu0 0.0
        %7857 = vmatpush1.msra.mxu0 %v7101
        %7858 = vmatprep.subr.mxu0 0.0
        %7859 = vmatpush1.msra.mxu0 %v7100
        %7860 = vmatprep.subr.mxu0 0.0
        %7861 = vmatpush1.msra.mxu0 %v7099
        %7862 = vmatprep.subr.mxu0 0.0
        %7863 = vmatpush1.msra.mxu0 %v7098
        %7864 = vmatprep.subr.mxu0 0.0
        %7865 = vmatpush1.msra.mxu0 %v7097
        %7866 = vmatprep.subr.mxu0 0.0
        %7867 = vmatpush1.msra.mxu0 %v7096
        %7868 = vmatprep.subr.mxu0 0.0
        %7869 = vmatpush1.msra.mxu0 %v7095
        %7870 = vmatprep.subr.mxu0 0.0
        %7871 = vmatpush1.msra.mxu0 %v7094
        %7872 = vmatprep.subr.mxu0 0.0
        %7873 = vmatpush1.msra.mxu0 %v7093
        %7874 = vmatprep.subr.mxu0 0.0
        %7875 = vmatpush1.msra.mxu0 %v7092
        %7876 = vmatprep.subr.mxu0 0.0
        %7877 = vmatpush1.msra.mxu0 %v7091
        %7878 = vmatprep.subr.mxu0 0.0
        %7879 = vmatpush2.msra.mxu0 0.0
        %7880 = vmatprep.subr.mxu0 0.0
        %7881 = vmatpush2.msra.mxu0 0.0
        %7882 = vmatprep.subr.mxu0 0.0
        %7883 = vmatpush2.msra.mxu0 0.0
        %7884 = vmatprep.subr.mxu0 0.0
        %7885 = vmatpush2.msra.mxu0 0.0
        %7886 = vmatprep.subr.mxu0 0.0
        %7887 = vmatpush2.msra.mxu0 0.0
        %7888 = vmatprep.subr.mxu0 0.0
        %7889 = vmatpush2.msra.mxu0 0.0
        %7890 = vmatprep.subr.mxu0 0.0
        %7891 = vmatpush2.msra.mxu0 0.0
        %7892 = vmatprep.subr.mxu0 0.0
        %7893 = vmatpush2.msra.mxu0 0.0
        %7894 = vmatprep.subr.mxu0 0.0
        %7895 = vmatpush2.msra.mxu0 0.0
        %7896 = vmatprep.subr.mxu0 0.0
        %7897 = vmatpush2.msra.mxu0 0.0
        %7898 = vmatprep.subr.mxu0 0.0
        %7899 = vmatpush2.msra.mxu0 0.0
        %7900 = vmatprep.subr.mxu0 0.0
        %7901 = vmatpush2.msra.mxu0 0.0
        %7902 = vmatprep.subr.mxu0 0.0
        %7903 = vmatpush2.msra.mxu0 0.0
        %7904 = vmatprep.subr.mxu0 0.0
        %7905 = vmatpush2.msra.mxu0 0.0
        %7906 = vmatprep.subr.mxu0 0.0
        %7907 = vmatpush2.msra.mxu0 0.0
        %7908 = vmatprep.subr.mxu0 0.0
        %7909 = vmatpush2.msra.mxu0 0.0
        %7910 = vmatprep.mubr.f32.mxu0 0.0
        %7911 = vmatmul.mubr.f32.gmra.mxu0 %v7845
        %v7912 = vpop.f32.mrf.mxu0
        %v7913 = vadd.f32 0.0, %v7912
        %v7914 = vpop.f32.mrf.mxu0
        %7915 = vdwg.mxu0
        %v7916 = vld [vmem:[%s53] sm:$0xff]
        %v7917 = vld [vmem:[%s53 + $0x8] sm:$0xff]
        %v7918 = vld [vmem:[%s55] sm:$0x1]
        %v7920 = vlaneseq
        %v7921 = vshrl.u32 %v7920, 7
        %v7922 = vsub.s32 0, %v7921
        %v7923 = vrot.slane %v7918, %v7922
        %v7926 = vsel %vm1267, %v7913, 0
        %7928 = vmatprep.subr.mxu0 0.0
        %7929 = vmatpush1.msra.mxu0 0.0
        %7930 = vmatprep.subr.mxu0 0.0
        %7931 = vmatpush1.msra.mxu0 0.0
        %7932 = vmatprep.subr.mxu0 0.0
        %7933 = vmatpush1.msra.mxu0 0.0
        %7934 = vmatprep.subr.mxu0 0.0
        %7935 = vmatpush1.msra.mxu0 0.0
        %7936 = vmatprep.subr.mxu0 0.0
        %7937 = vmatpush1.msra.mxu0 0.0
        %7938 = vmatprep.subr.mxu0 0.0
        %7939 = vmatpush1.msra.mxu0 0.0
        %7940 = vmatprep.subr.mxu0 0.0
        %7941 = vmatpush1.msra.mxu0 0.0
        %7942 = vmatprep.subr.mxu0 0.0
        %7943 = vmatpush1.msra.mxu0 0.0
        %7944 = vmatprep.subr.mxu0 0.0
        %7945 = vmatpush1.msra.mxu0 0.0
        %7946 = vmatprep.subr.mxu0 0.0
        %7947 = vmatpush1.msra.mxu0 0.0
        %7948 = vmatprep.subr.mxu0 0.0
        %7949 = vmatpush1.msra.mxu0 0.0
        %7950 = vmatprep.subr.mxu0 0.0
        %7951 = vmatpush1.msra.mxu0 0.0
        %7952 = vmatprep.subr.mxu0 0.0
        %7953 = vmatpush1.msra.mxu0 0.0
        %7954 = vmatprep.subr.mxu0 0.0
        %7955 = vmatpush1.msra.mxu0 0.0
        %7956 = vmatprep.subr.mxu0 0.0
        %7957 = vmatpush1.msra.mxu0 %v7917
        %7958 = vmatprep.subr.mxu0 0.0
        %7959 = vmatpush1.msra.mxu0 %v7916
        %7960 = vmatprep.subr.mxu0 0.0
        %7961 = vmatpush2.msra.mxu0 0.0
        %7962 = vmatprep.subr.mxu0 0.0
        %7963 = vmatpush2.msra.mxu0 0.0
        %7964 = vmatprep.subr.mxu0 0.0
        %7965 = vmatpush2.msra.mxu0 0.0
        %7966 = vmatprep.subr.mxu0 0.0
        %7967 = vmatpush2.msra.mxu0 0.0
        %7968 = vmatprep.subr.mxu0 0.0
        %7969 = vmatpush2.msra.mxu0 0.0
        %7970 = vmatprep.subr.mxu0 0.0
        %7971 = vmatpush2.msra.mxu0 0.0
        %7972 = vmatprep.subr.mxu0 0.0
        %7973 = vmatpush2.msra.mxu0 0.0
        %7974 = vmatprep.subr.mxu0 0.0
        %7975 = vmatpush2.msra.mxu0 0.0
        %7976 = vmatprep.subr.mxu0 0.0
        %7977 = vmatpush2.msra.mxu0 0.0
        %7978 = vmatprep.subr.mxu0 0.0
        %7979 = vmatpush2.msra.mxu0 0.0
        %7980 = vmatprep.subr.mxu0 0.0
        %7981 = vmatpush2.msra.mxu0 0.0
        %7982 = vmatprep.subr.mxu0 0.0
        %7983 = vmatpush2.msra.mxu0 0.0
        %7984 = vmatprep.subr.mxu0 0.0
        %7985 = vmatpush2.msra.mxu0 0.0
        %7986 = vmatprep.subr.mxu0 0.0
        %7987 = vmatpush2.msra.mxu0 0.0
        %7988 = vmatprep.subr.mxu0 0.0
        %7989 = vmatpush2.msra.mxu0 0.0
        %7990 = vmatprep.subr.mxu0 0.0
        %7991 = vmatpush2.msra.mxu0 0.0
        %7992 = vmatprep.mubr.f32.mxu0 0.0
        %7993 = vmatmul.mubr.f32.gmra.mxu0 %v7926
        %v7994 = vpop.f32.mrf.mxu0
        %v7995 = vadd.f32 %v7923, %v7994
        %v7996 = vpop.f32.mrf.mxu0
        %7997 = vdwg.mxu0
        %7998 = vmatprep.subr.mxu0 0.0
        %7999 = vmatpush1.msra.mxu0 %v7844
        %8000 = vmatprep.subr.mxu0 0.0
        %8001 = vmatpush1.msra.mxu0 %v7843
        %8002 = vmatprep.subr.mxu0 0.0
        %8003 = vmatpush1.msra.mxu0 %v7842
        %8004 = vmatprep.subr.mxu0 0.0
        %8005 = vmatpush1.msra.mxu0 %v7841
        %8006 = vmatprep.subr.mxu0 0.0
        %8007 = vmatpush1.msra.mxu0 %v7840
        %8008 = vmatprep.subr.mxu0 0.0
        %8009 = vmatpush1.msra.mxu0 %v7839
        %8010 = vmatprep.subr.mxu0 0.0
        %8011 = vmatpush1.msra.mxu0 %v7838
        %8012 = vmatprep.subr.mxu0 0.0
        %8013 = vmatpush1.msra.mxu0 %v7837
        %8014 = vmatprep.subr.mxu0 0.0
        %8015 = vmatpush1.msra.mxu0 %v7836
        %8016 = vmatprep.subr.mxu0 0.0
        %8017 = vmatpush1.msra.mxu0 %v7835
        %8018 = vmatprep.subr.mxu0 0.0
        %8019 = vmatpush1.msra.mxu0 %v7834
        %8020 = vmatprep.subr.mxu0 0.0
        %8021 = vmatpush1.msra.mxu0 %v7833
        %8022 = vmatprep.subr.mxu0 0.0
        %8023 = vmatpush1.msra.mxu0 %v7832
        %8024 = vmatprep.subr.mxu0 0.0
        %8025 = vmatpush1.msra.mxu0 %v7831
        %8026 = vmatprep.subr.mxu0 0.0
        %8027 = vmatpush1.msra.mxu0 %v7830
        %8028 = vmatprep.subr.mxu0 0.0
        %8029 = vmatpush1.msra.mxu0 %v7829
        %8030 = vmatprep.subr.mxu0 0.0
        %8031 = vmatpush2.msra.mxu0 0.0
        %8032 = vmatprep.subr.mxu0 0.0
        %8033 = vmatpush2.msra.mxu0 0.0
        %8034 = vmatprep.subr.mxu0 0.0
        %8035 = vmatpush2.msra.mxu0 0.0
        %8036 = vmatprep.subr.mxu0 0.0
        %8037 = vmatpush2.msra.mxu0 0.0
        %8038 = vmatprep.subr.mxu0 0.0
        %8039 = vmatpush2.msra.mxu0 0.0
        %8040 = vmatprep.subr.mxu0 0.0
        %8041 = vmatpush2.msra.mxu0 0.0
        %8042 = vmatprep.subr.mxu0 0.0
        %8043 = vmatpush2.msra.mxu0 0.0
        %8044 = vmatprep.subr.mxu0 0.0
        %8045 = vmatpush2.msra.mxu0 0.0
        %8046 = vmatprep.subr.mxu0 0.0
        %8047 = vmatpush2.msra.mxu0 0.0
        %8048 = vmatprep.subr.mxu0 0.0
        %8049 = vmatpush2.msra.mxu0 0.0
        %8050 = vmatprep.subr.mxu0 0.0
        %8051 = vmatpush2.msra.mxu0 0.0
        %8052 = vmatprep.subr.mxu0 0.0
        %8053 = vmatpush2.msra.mxu0 0.0
        %8054 = vmatprep.subr.mxu0 0.0
        %8055 = vmatpush2.msra.mxu0 0.0
        %8056 = vmatprep.subr.mxu0 0.0
        %8057 = vmatpush2.msra.mxu0 0.0
        %8058 = vmatprep.subr.mxu0 0.0
        %8059 = vmatpush2.msra.mxu0 0.0
        %8060 = vmatprep.subr.mxu0 0.0
        %8061 = vmatpush2.msra.mxu0 0.0
        %8062 = vmatprep.mubr.f32.mxu0 0.0
        %8063 = vmatmul.mubr.f32.gmra.mxu0 %v7845
        %v8064 = vpop.f32.mrf.mxu0
        %v8065 = vadd.f32 0.0, %v8064
        %v8066 = vpop.f32.mrf.mxu0
        %8067 = vdwg.mxu0
        %v8068 = vld [vmem:[%s57] sm:$0xff]
        %v8070 = vsel %vm2139, %v8065, 0
        %8072 = vmatprep.subr.mxu0 0.0
        %8073 = vmatpush1.msra.mxu0 0.0
        %8074 = vmatprep.subr.mxu0 0.0
        %8075 = vmatpush1.msra.mxu0 0.0
        %8076 = vmatprep.subr.mxu0 0.0
        %8077 = vmatpush1.msra.mxu0 0.0
        %8078 = vmatprep.subr.mxu0 0.0
        %8079 = vmatpush1.msra.mxu0 0.0
        %8080 = vmatprep.subr.mxu0 0.0
        %8081 = vmatpush1.msra.mxu0 0.0
        %8082 = vmatprep.subr.mxu0 0.0
        %8083 = vmatpush1.msra.mxu0 0.0
        %8084 = vmatprep.subr.mxu0 0.0
        %8085 = vmatpush1.msra.mxu0 0.0
        %8086 = vmatprep.subr.mxu0 0.0
        %8087 = vmatpush1.msra.mxu0 0.0
        %8088 = vmatprep.subr.mxu0 0.0
        %8089 = vmatpush1.msra.mxu0 0.0
        %8090 = vmatprep.subr.mxu0 0.0
        %8091 = vmatpush1.msra.mxu0 0.0
        %8092 = vmatprep.subr.mxu0 0.0
        %8093 = vmatpush1.msra.mxu0 0.0
        %8094 = vmatprep.subr.mxu0 0.0
        %8095 = vmatpush1.msra.mxu0 0.0
        %8096 = vmatprep.subr.mxu0 0.0
        %8097 = vmatpush1.msra.mxu0 0.0
        %8098 = vmatprep.subr.mxu0 0.0
        %8099 = vmatpush1.msra.mxu0 0.0
        %8100 = vmatprep.subr.mxu0 0.0
        %8101 = vmatpush1.msra.mxu0 0.0
        %8102 = vmatprep.subr.mxu0 0.0
        %8103 = vmatpush1.msra.mxu0 %v8068
        %8104 = vmatprep.subr.mxu0 0.0
        %8105 = vmatpush2.msra.mxu0 0.0
        %8106 = vmatprep.subr.mxu0 0.0
        %8107 = vmatpush2.msra.mxu0 0.0
        %8108 = vmatprep.subr.mxu0 0.0
        %8109 = vmatpush2.msra.mxu0 0.0
        %8110 = vmatprep.subr.mxu0 0.0
        %8111 = vmatpush2.msra.mxu0 0.0
        %8112 = vmatprep.subr.mxu0 0.0
        %8113 = vmatpush2.msra.mxu0 0.0
        %8114 = vmatprep.subr.mxu0 0.0
        %8115 = vmatpush2.msra.mxu0 0.0
        %8116 = vmatprep.subr.mxu0 0.0
        %8117 = vmatpush2.msra.mxu0 0.0
        %8118 = vmatprep.subr.mxu0 0.0
        %8119 = vmatpush2.msra.mxu0 0.0
        %8120 = vmatprep.subr.mxu0 0.0
        %8121 = vmatpush2.msra.mxu0 0.0
        %8122 = vmatprep.subr.mxu0 0.0
        %8123 = vmatpush2.msra.mxu0 0.0
        %8124 = vmatprep.subr.mxu0 0.0
        %8125 = vmatpush2.msra.mxu0 0.0
        %8126 = vmatprep.subr.mxu0 0.0
        %8127 = vmatpush2.msra.mxu0 0.0
        %8128 = vmatprep.subr.mxu0 0.0
        %8129 = vmatpush2.msra.mxu0 0.0
        %8130 = vmatprep.subr.mxu0 0.0
        %8131 = vmatpush2.msra.mxu0 0.0
        %8132 = vmatprep.subr.mxu0 0.0
        %8133 = vmatpush2.msra.mxu0 0.0
        %8134 = vmatprep.subr.mxu0 0.0
        %8135 = vmatpush2.msra.mxu0 0.0
        %8136 = vmatprep.mubr.f32.mxu0 0.0
        %8137 = vmatmul.mubr.f32.gmra.mxu0 %v8070
        %v8138 = vpop.f32.mrf.mxu0
        %v8139 = vadd.f32 0.0, %v8138
        %v8140 = vpop.f32.mrf.mxu0
        %8141 = vdwg.mxu0
        %v8142 = vadd.f32 %v7995, %v8139
        %v8143 = vld [vmem:[%s59] sm:$0x1]
        %v8145 = vlaneseq
        %v8146 = vshrl.u32 %v8145, 7
        %v8147 = vsub.s32 0, %v8146
        %v8148 = vrot.slane %v8143, %v8147
        %v8150 = vadd.f32 %v8142, %v8148
        %vm8151 = vcmask 60416
        %8152 = vst.msk [vmem:[%s1263] sm:$0xf] %vm8151, %v8150
        %s8153 = sand.u32 %s733, 1
        %s8154 = scalar_lea.sflag [#allocation4], %s8153
        %s8155 = sand.u32 %s733, 1
        %s8156 = smul.addr %s8155, 4
        %s8157 = scalar_lea.vmem [#allocation40], %s8156
        // Predicated region
        $region237: #{forward.1} parent=139 // pred_check
          %p8158 = pneg %p743
        $region238: #{forward.1} parent=139 // pred_check_branch
          %8160 = sbr.rel (%p8158) target = $region240
        $region239: #{forward.1} parent=139 // pred_region
          %s8162 = ssub.s32 64, 64
          %8163 = vsyncadd %s8154, %s8162
          %s8164 = smul.addr %s90, 64
          %s8165 = scalar_lea.hbm %s61, %s8164
          %s8167 = sshll.u32 %s8157, 4
          %s8168 = int_to_ptr.vmem [resolvable:$true] %s8167
          %8170 = dma.vmem_to_hbm [thread:$0]  %s8168, 64, %s8165, %s8154
        $region240: #{forward.1} parent=139 // pred_fallthru
          _
      $region140: #{forward.1} parent=5 // pred_fallthru
        _
      %p8171 = scmp.le.s32.totalorder 2, %s85
      // Predicated region
      $region241: #{forward.1} parent=5 // pred_check
        %p8172 = pneg %p8171
      $region242: #{forward.1} parent=5 // pred_check_branch
        %8174 = sbr.rel (%p8172) target = $region244
      $region243: #{forward.1} parent=5 // pred_region
        %s8175 = ssub.s32 %s85, 2
        // Predicated region
        $region245: #{forward.1} parent=243 // pred_check
          %p8176 = pneg %p749
        $region246: #{forward.1} parent=243 // pred_check_branch
          %8178 = sbr.rel (%p8176) target = $region248
        $region247: #{forward.1} parent=243 // pred_region
          %s8179 = sand.u32 %s734, 1
          %s8180 = scalar_lea.sflag [#allocation4], %s8179
          %s8181 = sand.u32 %s734, 1
          %s8182 = smul.addr %s8181, 4
          %s8183 = scalar_lea.vmem [#allocation40], %s8182
          %8184 = dma.done %s8180, 64
        $region248: #{forward.1} parent=243 // pred_fallthru
          _
      $region244: #{forward.1} parent=5 // pred_fallthru
        _
    $region6: #{forward.1} parent=1 // loop_footer
      %s89 = sadd.s32 1, %s85
    $region7: #{forward.1} parent=1 // loop_footer_branch
      %84 = sbr.rel target = $region3
    $region8: #{forward.1} parent=1 // loop_exit
      _
    %8185 = vsyncpa [#allocation3], 1
    %s8186 = scalar_lea.sflag [#allocation3], 1
    %8187 = vsyncpa %s8186, 1
    %8188 = vsyncpa [#allocation6], 1
    %8189 = vsyncpa [#allocation9], 1
    %8190 = vsyncpa [#allocation12], 1
    %8191 = vsyncpa [#allocation15], 1
    %8192 = vsyncpa [#allocation18], 1
    %8193 = vsyncpa [#allocation21], 1
    %8194 = vsyncpa [#allocation24], 1
    %8195 = vsyncpa [#allocation27], 1
    %8196 = vsyncpa [#allocation30], 1
    %8197 = vsyncpa [#allocation33], 1
    %8198 = vsyncpa [#allocation36], 1
    %8199 = vsyncpa [#allocation39], 1
    %8200 = vsyncpa [#allocation4], 1
    %s8201 = scalar_lea.sflag [#allocation4], 1
    %8202 = vsyncpa %s8201, 1

</llo_original>
